<compile_context>
chip_gen: v7x
topology: tpu7x:2x2x1
jax: 0.10.0
libtpu: 0.0.40
codegen_flags: <defaults>
</compile_context>

<pallas_src>
import functools
import math

import jax
import jax.numpy as jnp
from jax.experimental import pallas as pl
from jax.experimental.pallas import tpu as pltpu


# -----------------------------------------------------------------------------
# Kernel
# -----------------------------------------------------------------------------
def t10_net_kernel(
    # inputs
    x_flat_ref,       # (T*B, 1)     X_fa, time-major flattened
    w_ih0_ref,        # (1, 3H)      layer-0 input weight (input size 1), transposed
    w_ih_ref,         # (L-1, H, 3H) layers>=1 input weights, transposed
    w_hh_ref,         # (L, H, 3H)   hidden weights, transposed
    b_ih_ref,         # (L, 1, 3H)
    b_hh_ref,         # (L, 1, 3H)
    w_score_ref,      # (H, 2)       [score_T10 | score_S0]
    b_score_ref,      # (1, 2)
    w1h_t10_ref,      # (H, 2*D1)    encoder_T10 hidden rows (right block zero)
    w1h_s0_ref,       # (H, 2*D1)    encoder_S0 hidden rows (left block zero)
    w1f_ref,          # (F, 2*D1)    [enc_T10 fa rows | enc_S0 fa rows]
    b1_ref,           # (1, 2*D1)
    w2_ref,           # (2*D1, 2)    block-diag second layers
    b2_ref,           # (1, 2)
    bounds_lo_ref,    # (1, 2)       [T10_lo, S0_lo]
    bounds_diff_ref,  # (1, 2)       [T10_hi - T10_lo, S0_hi - S0_lo]
    fa_vals_ref,      # (B, F)
    sin_fa_ref,       # (B, F)
    cos_fa_ref,       # (B, F)
    tr_vals_ref,      # (B, 1)
    x_dce_ref,        # (B, N_dce)
    s0_dce_ref,       # (B, 1)
    # outputs
    x_fa_out_ref,     # (B, F)       modelled FA signal
    c_dce_ref,        # (B, N_dce)   DCE concentration
    t10_s0_ref,       # (B, 2)       [T10 | S0_fa] packed
    *, tr_dce, cos_fa_dce, r1_relax,
):
    B = fa_vals_ref.shape[0]
    L = w_hh_ref.shape[0]
    H = w_hh_ref.shape[1]
    T = x_flat_ref.shape[0] // B

    def sigmoid(v):
        return 1.0 / (1.0 + jnp.exp(-v))

    # ---- multi-layer GRU (batch_first, gate order r,z,n) ---------------------
    # Layer-0 input size is 1: the hoisted input-to-hidden product is a pure
    # VPU broadcast (no matmul, no zero-padded weight).
    gi_all = x_flat_ref[...] * w_ih0_ref[...] + b_ih_ref[0]        # (T*B, 3H)

    hs = []            # per-step hidden states of the current layer (SSA values)
    seq2d = None       # (T*B, H) output of the current layer
    for l in range(L):                         # static unroll over layers
        if l > 0:
            # hoisted input-to-hidden matmul: one (T*B,H)@(H,3H) per layer
            gi_all = (jnp.dot(seq2d, w_ih_ref[l - 1],
                              preferred_element_type=jnp.float32)
                      + b_ih_ref[l])
        gi_rz_all = gi_all[:, :2 * H]          # (T*B, 2H)
        gi_n_all = gi_all[:, 2 * H:]           # (T*B, H)
        w_hh = w_hh_ref[l]                     # (H, 3H)
        b_hh = jnp.broadcast_to(b_hh_ref[l], (B, 3 * H))   # hoisted broadcast
        h = jnp.zeros((B, H), jnp.float32)
        hs = []
        for t in range(T):                     # static unroll over time
            gh = jnp.dot(h, w_hh, preferred_element_type=jnp.float32) + b_hh
            rz = sigmoid(gi_rz_all[t * B:(t + 1) * B] + gh[:, :2 * H])  # fused r,z
            n = jnp.tanh(gi_n_all[t * B:(t + 1) * B]
                         + rz[:, :H] * gh[:, 2 * H:])
            z = rz[:, H:]
            h = (1.0 - z) * n + z * h
            hs.append(h)
        seq2d = jnp.concatenate(hs, axis=0)    # (T*B, H), feeds next layer / attn

    # ---- merged attention heads (softmax over the sequence axis) -------------
    # One (T*B,H)@(H,2) matmul gives both logit sets; softmax + weighted sum are
    # accumulated per step (no (T,B,.) reshape/relayout).
    logits = (jnp.dot(seq2d, w_score_ref[...],
                      preferred_element_type=jnp.float32)
              + b_score_ref[...])                                # (T*B, 2)
    logit_t = [logits[t * B:(t + 1) * B] for t in range(T)]      # (B, 2) each
    m = logit_t[0]
    for t in range(1, T):
        m = jnp.maximum(m, logit_t[t])
    denom = jnp.zeros((B, 2), jnp.float32)
    acc_t10 = jnp.zeros((B, H), jnp.float32)
    acc_s0 = jnp.zeros((B, H), jnp.float32)
    for t in range(T):
        e_t = jnp.exp(logit_t[t] - m)                            # (B, 2)
        denom = denom + e_t
        acc_t10 = acc_t10 + hs[t] * e_t[:, 0:1]
        acc_s0 = acc_s0 + hs[t] * e_t[:, 1:2]
    inv = pl.reciprocal(denom, approx=True)                      # (B, 2)
    hidden_t10 = acc_t10 * inv[:, 0:1]                           # (B, H)
    hidden_s0 = acc_s0 * inv[:, 1:2]                             # (B, H)

    # ---- fused encoders: Linear -> ELU -> Linear on cat(hidden, fa_vals) -----
    fa_vals = fa_vals_ref[...]
    e1 = (jnp.dot(hidden_t10, w1h_t10_ref[...], preferred_element_type=jnp.float32)
          + jnp.dot(hidden_s0, w1h_s0_ref[...], preferred_element_type=jnp.float32)
          + jnp.dot(fa_vals, w1f_ref[...], preferred_element_type=jnp.float32)
          + b1_ref[...])                                         # (B, 2*D1)
    # ELU(alpha=1); clamp the exp argument so the unselected lane stays finite.
    e1 = jnp.where(e1 > 0.0, e1, jnp.exp(jnp.minimum(e1, 0.0)) - 1.0)
    raw = (jnp.dot(e1, w2_ref[...], preferred_element_type=jnp.float32)
           + b2_ref[...])                                        # (B, 2)

    t10_s0 = bounds_lo_ref[...] + sigmoid(raw) * bounds_diff_ref[...]   # (B, 2)
    t10_s0_ref[...] = t10_s0
    t10 = t10_s0[:, 0:1]
    s0_fa = t10_s0[:, 1:2]

    # ---- SPGR flip-angle signal model (sin/cos precomputed in the wrapper) ---
    r1_map = 1.0 / t10                                           # (B, 1)
    e_fa = jnp.exp(-tr_vals_ref[...] * r1_map)                   # (B, 1)
    x_fa_out_ref[...] = ((1.0 - e_fa) * sin_fa_ref[...]
                         / (1.0 - cos_fa_ref[...] * e_fa)) * s0_fa

    # ---- DCE concentration ----------------------------------------------------
    a = x_dce_ref[...] / s0_dce_ref[...]                         # (B, N_dce)
    e0 = jnp.exp(-r1_map * tr_dce)                               # (B, 1)
    e_dce = ((1.0 - a + a * e0 - e0 * cos_fa_dce)
             / (1.0 - a * cos_fa_dce + a * e0 * cos_fa_dce - e0 * cos_fa_dce))
    r1_eff = (-1.0 / tr_dce) * jnp.log(e_dce)
    c = (r1_eff - r1_map) / r1_relax
    # Match PyTorch semantics: only NaNs are zeroed (log(0) -> -inf passes).
    c_dce_ref[...] = jnp.where(jnp.isnan(c), 0.0, c)


# -----------------------------------------------------------------------------
# Parameter initialization (deterministic; matches the module's shapes, with
# weights pre-transposed / pre-fused for the kernel layout)
# -----------------------------------------------------------------------------
def init_params(key, H, L, F):
    D1 = (H + F) // 2
    keys = iter(jax.random.split(key, 64))

    def u(shape, fan_in):
        scale = 1.0 / (fan_in ** 0.5)
        return jax.random.uniform(next(keys), shape, jnp.float32, -scale, scale)

    # GRU(1, H, L) — PyTorch gate order (r, z, n); transposed to (in, 3H).
    w_ih0 = u((3 * H, 1), H).T                                    # (1, 3H)
    w_ih = jnp.stack([u((3 * H, H), H).T for _ in range(L - 1)])  # (L-1, H, 3H)
    w_hh = jnp.stack([u((3 * H, H), H).T for _ in range(L)])      # (L, H, 3H)
    b_ih = jnp.stack([u((1, 3 * H), H) for _ in range(L)])        # (L, 1, 3H)
    b_hh = jnp.stack([u((1, 3 * H), H) for _ in range(L)])        # (L, 1, 3H)

    # attention scoring heads, merged into one (H, 2) matrix
    w_score = jnp.concatenate([u((H, 1), H), u((H, 1), H)], axis=1)
    b_score = jnp.concatenate([u((1, 1), H), u((1, 1), H)], axis=1)

    # encoders Linear(H+F, D1) -> ELU -> Linear(D1, 1), fused block-column form
    w1_t10 = u((H + F, D1), H + F); b1_t10 = u((1, D1), H + F)
    w2_t10 = u((D1, 1), D1);        b2_t10 = u((1, 1), D1)
    w1_s0 = u((H + F, D1), H + F);  b1_s0 = u((1, D1), H + F)
    w2_s0 = u((D1, 1), D1);         b2_s0 = u((1, 1), D1)

    zero_h = jnp.zeros((H, D1), jnp.float32)
    w1h_t10 = jnp.concatenate([w1_t10[:H], zero_h], axis=1)       # (H, 2*D1)
    w1h_s0 = jnp.concatenate([zero_h, w1_s0[:H]], axis=1)         # (H, 2*D1)
    w1f = jnp.concatenate([w1_t10[H:], w1_s0[H:]], axis=1)        # (F, 2*D1)
    b1 = jnp.concatenate([b1_t10, b1_s0], axis=1)                 # (1, 2*D1)
    w2 = jnp.zeros((2 * D1, 2), jnp.float32)
    w2 = w2.at[:D1, 0:1].set(w2_t10).at[D1:, 1:2].set(w2_s0)      # (2*D1, 2)
    b2 = jnp.concatenate([b2_t10, b2_s0], axis=1)                 # (1, 2)

    return dict(w_ih0=w_ih0, w_ih=w_ih, w_hh=w_hh, b_ih=b_ih, b_hh=b_hh,
                w_score=w_score, b_score=b_score,
                w1h_t10=w1h_t10, w1h_s0=w1h_s0, w1f=w1f, b1=b1, w2=w2, b2=b2)


# -----------------------------------------------------------------------------
# Wrapper
# -----------------------------------------------------------------------------
def t10_net_forward(params, X_fa, fa_vals, TR_vals, S0_dce, X_dce, hp):
    B, T = X_fa.shape
    F = fa_vals.shape[1]
    N_dce = X_dce.shape[1]

    # time-major flattened GRU input: x_flat[t*B + b] = X_fa[b, t]
    x_flat = X_fa.T.reshape(T * B, 1).astype(jnp.float32)

    t10_lo, s0_lo = float(hp["T10bounds"][0][0]), float(hp["T10bounds"][0][1])
    t10_hi, s0_hi = float(hp["T10bounds"][1][0]), float(hp["T10bounds"][1][1])
    bounds_lo = jnp.array([[t10_lo, s0_lo]], jnp.float32)
    bounds_diff = jnp.array([[t10_hi - t10_lo, s0_hi - s0_lo]], jnp.float32)

    kernel = functools.partial(
        t10_net_kernel,
        tr_dce=float(hp["TR_dce"]),
        cos_fa_dce=math.cos(float(hp["FA_dce"])),
        r1_relax=float(hp["r1"]),
    )

    fa_vals = fa_vals.astype(jnp.float32)
    inputs = (
        x_flat,
        params["w_ih0"], params["w_ih"], params["w_hh"],
        params["b_ih"], params["b_hh"],
        params["w_score"], params["b_score"],
        params["w1h_t10"], params["w1h_s0"], params["w1f"], params["b1"],
        params["w2"], params["b2"],
        bounds_lo, bounds_diff,
        fa_vals, jnp.sin(fa_vals), jnp.cos(fa_vals),   # transcendentals hoisted
        TR_vals.reshape(B, 1).astype(jnp.float32),
        X_dce.astype(jnp.float32),
        S0_dce.reshape(B, 1).astype(jnp.float32),
    )

    vmem = pl.BlockSpec(memory_space=pltpu.MemorySpace.VMEM)
    out_shapes = (
        jax.ShapeDtypeStruct((B, F), jnp.float32),       # X_fa (modelled signal)
        jax.ShapeDtypeStruct((B, N_dce), jnp.float32),   # C_dce
        jax.ShapeDtypeStruct((B, 2), jnp.float32),       # [T10 | S0_fa] packed
    )
    # NOTE: B=8 fits one TensorCore; for larger production batches add a batch
    # grid with dimension_semantics=("parallel",) so v7x's second TC is used.
    x_fa_out, c_dce, t10_s0 = pl.pallas_call(
        kernel,
        out_shape=out_shapes,
        in_specs=[vmem] * len(inputs),
        out_specs=(vmem, vmem, vmem),
    )(*inputs)

    return x_fa_out, c_dce, t10_s0[:, 0:1], t10_s0[:, 1:2]


# -----------------------------------------------------------------------------
# Main
# -----------------------------------------------------------------------------
if __name__ == "__main__":
    B, T, H, L, F, N_DCE = 8, 10, 32, 4, 10, 16
    PI = math.pi

    hp = {
        "T10bounds": [[0.2, 100.0], [5.0, 10000.0]],  # [[T10_lo, S0_lo], [T10_hi, S0_hi]]
        "TR_dce": 0.005,
        "FA_dce": 20.0 * PI / 180.0,
        "r1": 4.5,
    }

    key = jax.random.PRNGKey(0)
    k_par, k_xfa, k_dce, k_s0 = jax.random.split(key, 4)

    params = init_params(k_par, H, L, F)

    X_fa = jax.random.uniform(k_xfa, (B, T), jnp.float32, 0.1, 1.0)
    fa_vals = jnp.tile((jnp.linspace(2.0, 20.0, F) * PI / 180.0)[None, :],
                       (B, 1)).astype(jnp.float32)
    TR_vals = jnp.full((B, 1), 0.005, jnp.float32)
    X_dce = jax.random.uniform(k_dce, (B, N_DCE), jnp.float32, 0.5, 2.0)
    S0_dce = jax.random.uniform(k_s0, (B,), jnp.float32, 0.8, 1.2)
    # fa_len / T10_true / first / epoch are unused by forward() under the
    # chosen hp.xFA = (True, (F, None)) configuration, so they are omitted.

    X_fa_out, C_dce, T10, S0_fa = t10_net_forward(
        params, X_fa, fa_vals, TR_vals, S0_dce, X_dce, hp)
    jax.block_until_ready((X_fa_out, C_dce, T10, S0_fa))

    assert X_fa_out.shape == (B, F)
    assert C_dce.shape == (B, N_DCE)
    assert T10.shape == (B, 1)
    assert S0_fa.shape == (B, 1)
    print("KERNEL_OK")
</pallas_src>

<mosaic_0001>
module attributes {stable_mosaic.version = 11 : i64} {
  func.func @t10_net_kernel(%arg0: memref<80x1xf32, #tpu.memory_space<vmem>>, %arg1: memref<1x96xf32, #tpu.memory_space<vmem>>, %arg2: memref<3x32x96xf32, #tpu.memory_space<vmem>>, %arg3: memref<4x32x96xf32, #tpu.memory_space<vmem>>, %arg4: memref<4x1x96xf32, #tpu.memory_space<vmem>>, %arg5: memref<4x1x96xf32, #tpu.memory_space<vmem>>, %arg6: memref<32x2xf32, #tpu.memory_space<vmem>>, %arg7: memref<1x2xf32, #tpu.memory_space<vmem>>, %arg8: memref<32x42xf32, #tpu.memory_space<vmem>>, %arg9: memref<32x42xf32, #tpu.memory_space<vmem>>, %arg10: memref<10x42xf32, #tpu.memory_space<vmem>>, %arg11: memref<1x42xf32, #tpu.memory_space<vmem>>, %arg12: memref<42x2xf32, #tpu.memory_space<vmem>>, %arg13: memref<1x2xf32, #tpu.memory_space<vmem>>, %arg14: memref<1x2xf32, #tpu.memory_space<vmem>>, %arg15: memref<1x2xf32, #tpu.memory_space<vmem>>, %arg16: memref<8x10xf32, #tpu.memory_space<vmem>>, %arg17: memref<8x10xf32, #tpu.memory_space<vmem>>, %arg18: memref<8x10xf32, #tpu.memory_space<vmem>>, %arg19: memref<8x1xf32, #tpu.memory_space<vmem>>, %arg20: memref<8x16xf32, #tpu.memory_space<vmem>>, %arg21: memref<8x1xf32, #tpu.memory_space<vmem>>, %arg22: memref<8x10xf32, #tpu.memory_space<vmem>>, %arg23: memref<8x16xf32, #tpu.memory_space<vmem>>, %arg24: memref<8x2xf32, #tpu.memory_space<vmem>>) attributes {dimension_semantics = [], scalar_prefetch = 0 : i64, scratch_operands = 0 : i64, tpu.core_type = #tpu.core_type<tc>} {
    %c0 = arith.constant 0 : index
    %c0_0 = arith.constant 0 : index
    %0 = vector.load %arg0[%c0, %c0_0] : memref<80x1xf32, #tpu.memory_space<vmem>>, vector<80x1xf32>
    %c0_1 = arith.constant 0 : index
    %c0_2 = arith.constant 0 : index
    %1 = vector.load %arg1[%c0_1, %c0_2] : memref<1x96xf32, #tpu.memory_space<vmem>>, vector<1x96xf32>
    %2 = vector.broadcast %0 : vector<80x1xf32> to vector<80x96xf32>
    %3 = vector.broadcast %1 : vector<1x96xf32> to vector<80x96xf32>
    %4 = arith.mulf %2, %3 : vector<80x96xf32>
    %c0_3 = arith.constant 0 : index
    %c0_4 = arith.constant 0 : index
    %c0_5 = arith.constant 0 : index
    %5 = vector.load %arg4[%c0_3, %c0_4, %c0_5] : memref<4x1x96xf32, #tpu.memory_space<vmem>>, vector<1x1x96xf32>
    %6 = vector.shape_cast %5 : vector<1x1x96xf32> to vector<1x96xf32>
    %7 = vector.broadcast %6 : vector<1x96xf32> to vector<80x96xf32>
    %8 = arith.addf %4, %7 : vector<80x96xf32>
    %9 = vector.extract_strided_slice %8 {offsets = [0, 0], sizes = [80, 64], strides = [1, 1]} : vector<80x96xf32> to vector<80x64xf32>
    %10 = vector.extract_strided_slice %8 {offsets = [0, 64], sizes = [80, 32], strides = [1, 1]} : vector<80x96xf32> to vector<80x32xf32>
    %c0_6 = arith.constant 0 : index
    %c0_7 = arith.constant 0 : index
    %c0_8 = arith.constant 0 : index
    %11 = vector.load %arg3[%c0_6, %c0_7, %c0_8] : memref<4x32x96xf32, #tpu.memory_space<vmem>>, vector<1x32x96xf32>
    %12 = vector.shape_cast %11 : vector<1x32x96xf32> to vector<32x96xf32>
    %c0_9 = arith.constant 0 : index
    %c0_10 = arith.constant 0 : index
    %c0_11 = arith.constant 0 : index
    %13 = vector.load %arg5[%c0_9, %c0_10, %c0_11] : memref<4x1x96xf32, #tpu.memory_space<vmem>>, vector<1x1x96xf32>
    %14 = vector.shape_cast %13 : vector<1x1x96xf32> to vector<1x96xf32>
    %15 = vector.shape_cast %14 : vector<1x96xf32> to vector<1x96xf32>
    %16 = vector.broadcast %15 : vector<1x96xf32> to vector<8x96xf32>
    %cst = arith.constant 0.000000e+00 : f32
    %17 = vector.broadcast %cst : f32 to vector<8x32xf32>
    %cst_12 = arith.constant dense<0.000000e+00> : vector<8x96xf32>
    %18 = tpu.matmul %17, %12, %cst_12 {dimension_numbers = #tpu.dot_dimension_numbers<[1], [0], [0], [1], [0, 0, 1, 1], [], []>} : vector<8x32xf32>, vector<32x96xf32>, vector<8x96xf32> -> vector<8x96xf32>
    %19 = arith.addf %18, %16 : vector<8x96xf32>
    %20 = vector.extract_strided_slice %9 {offsets = [0, 0], sizes = [8, 64], strides = [1, 1]} : vector<80x64xf32> to vector<8x64xf32>
    %21 = vector.extract_strided_slice %19 {offsets = [0, 0], sizes = [8, 64], strides = [1, 1]} : vector<8x96xf32> to vector<8x64xf32>
    %22 = arith.addf %20, %21 : vector<8x64xf32>
    %cst_13 = arith.constant 0.000000e+00 : f32
    %23 = vector.broadcast %cst_13 : f32 to vector<8x64xf32>
    %24 = arith.subf %23, %22 : vector<8x64xf32>
    %25 = math.exp %24 : vector<8x64xf32>
    %cst_14 = arith.constant 1.000000e+00 : f32
    %26 = vector.broadcast %cst_14 : f32 to vector<8x64xf32>
    %27 = arith.addf %26, %25 : vector<8x64xf32>
    %cst_15 = arith.constant 1.000000e+00 : f32
    %28 = vector.broadcast %cst_15 : f32 to vector<8x64xf32>
    %29 = arith.divf %28, %27 : vector<8x64xf32>
    %30 = vector.extract_strided_slice %10 {offsets = [0, 0], sizes = [8, 32], strides = [1, 1]} : vector<80x32xf32> to vector<8x32xf32>
    %31 = vector.extract_strided_slice %29 {offsets = [0, 0], sizes = [8, 32], strides = [1, 1]} : vector<8x64xf32> to vector<8x32xf32>
    %32 = vector.extract_strided_slice %19 {offsets = [0, 64], sizes = [8, 32], strides = [1, 1]} : vector<8x96xf32> to vector<8x32xf32>
    %33 = arith.mulf %31, %32 : vector<8x32xf32>
    %34 = arith.addf %30, %33 : vector<8x32xf32>
    %35 = math.tanh %34 : vector<8x32xf32>
    %36 = vector.extract_strided_slice %29 {offsets = [0, 32], sizes = [8, 32], strides = [1, 1]} : vector<8x64xf32> to vector<8x32xf32>
    %cst_16 = arith.constant 1.000000e+00 : f32
    %37 = vector.broadcast %cst_16 : f32 to vector<8x32xf32>
    %38 = arith.subf %37, %36 : vector<8x32xf32>
    %39 = arith.mulf %38, %35 : vector<8x32xf32>
    %40 = arith.mulf %36, %17 : vector<8x32xf32>
    %41 = arith.addf %39, %40 : vector<8x32xf32>
    %cst_17 = arith.constant dense<0.000000e+00> : vector<8x96xf32>
    %42 = tpu.matmul %41, %12, %cst_17 {dimension_numbers = #tpu.dot_dimension_numbers<[1], [0], [0], [1], [0, 0, 1, 1], [], []>} : vector<8x32xf32>, vector<32x96xf32>, vector<8x96xf32> -> vector<8x96xf32>
    %43 = arith.addf %42, %16 : vector<8x96xf32>
    %44 = vector.extract_strided_slice %9 {offsets = [8, 0], sizes = [8, 64], strides = [1, 1]} : vector<80x64xf32> to vector<8x64xf32>
    %45 = vector.extract_strided_slice %43 {offsets = [0, 0], sizes = [8, 64], strides = [1, 1]} : vector<8x96xf32> to vector<8x64xf32>
    %46 = arith.addf %44, %45 : vector<8x64xf32>
    %cst_18 = arith.constant 0.000000e+00 : f32
    %47 = vector.broadcast %cst_18 : f32 to vector<8x64xf32>
    %48 = arith.subf %47, %46 : vector<8x64xf32>
    %49 = math.exp %48 : vector<8x64xf32>
    %cst_19 = arith.constant 1.000000e+00 : f32
    %50 = vector.broadcast %cst_19 : f32 to vector<8x64xf32>
    %51 = arith.addf %50, %49 : vector<8x64xf32>
    %cst_20 = arith.constant 1.000000e+00 : f32
    %52 = vector.broadcast %cst_20 : f32 to vector<8x64xf32>
    %53 = arith.divf %52, %51 : vector<8x64xf32>
    %54 = vector.extract_strided_slice %10 {offsets = [8, 0], sizes = [8, 32], strides = [1, 1]} : vector<80x32xf32> to vector<8x32xf32>
    %55 = vector.extract_strided_slice %53 {offsets = [0, 0], sizes = [8, 32], strides = [1, 1]} : vector<8x64xf32> to vector<8x32xf32>
    %56 = vector.extract_strided_slice %43 {offsets = [0, 64], sizes = [8, 32], strides = [1, 1]} : vector<8x96xf32> to vector<8x32xf32>
    %57 = arith.mulf %55, %56 : vector<8x32xf32>
    %58 = arith.addf %54, %57 : vector<8x32xf32>
    %59 = math.tanh %58 : vector<8x32xf32>
    %60 = vector.extract_strided_slice %53 {offsets = [0, 32], sizes = [8, 32], strides = [1, 1]} : vector<8x64xf32> to vector<8x32xf32>
    %cst_21 = arith.constant 1.000000e+00 : f32
    %61 = vector.broadcast %cst_21 : f32 to vector<8x32xf32>
    %62 = arith.subf %61, %60 : vector<8x32xf32>
    %63 = arith.mulf %62, %59 : vector<8x32xf32>
    %64 = arith.mulf %60, %41 : vector<8x32xf32>
    %65 = arith.addf %63, %64 : vector<8x32xf32>
    %cst_22 = arith.constant dense<0.000000e+00> : vector<8x96xf32>
    %66 = tpu.matmul %65, %12, %cst_22 {dimension_numbers = #tpu.dot_dimension_numbers<[1], [0], [0], [1], [0, 0, 1, 1], [], []>} : vector<8x32xf32>, vector<32x96xf32>, vector<8x96xf32> -> vector<8x96xf32>
    %67 = arith.addf %66, %16 : vector<8x96xf32>
    %68 = vector.extract_strided_slice %9 {offsets = [16, 0], sizes = [8, 64], strides = [1, 1]} : vector<80x64xf32> to vector<8x64xf32>
    %69 = vector.extract_strided_slice %67 {offsets = [0, 0], sizes = [8, 64], strides = [1, 1]} : vector<8x96xf32> to vector<8x64xf32>
    %70 = arith.addf %68, %69 : vector<8x64xf32>
    %cst_23 = arith.constant 0.000000e+00 : f32
    %71 = vector.broadcast %cst_23 : f32 to vector<8x64xf32>
    %72 = arith.subf %71, %70 : vector<8x64xf32>
    %73 = math.exp %72 : vector<8x64xf32>
    %cst_24 = arith.constant 1.000000e+00 : f32
    %74 = vector.broadcast %cst_24 : f32 to vector<8x64xf32>
    %75 = arith.addf %74, %73 : vector<8x64xf32>
    %cst_25 = arith.constant 1.000000e+00 : f32
    %76 = vector.broadcast %cst_25 : f32 to vector<8x64xf32>
    %77 = arith.divf %76, %75 : vector<8x64xf32>
    %78 = vector.extract_strided_slice %10 {offsets = [16, 0], sizes = [8, 32], strides = [1, 1]} : vector<80x32xf32> to vector<8x32xf32>
    %79 = vector.extract_strided_slice %77 {offsets = [0, 0], sizes = [8, 32], strides = [1, 1]} : vector<8x64xf32> to vector<8x32xf32>
    %80 = vector.extract_strided_slice %67 {offsets = [0, 64], sizes = [8, 32], strides = [1, 1]} : vector<8x96xf32> to vector<8x32xf32>
    %81 = arith.mulf %79, %80 : vector<8x32xf32>
    %82 = arith.addf %78, %81 : vector<8x32xf32>
    %83 = math.tanh %82 : vector<8x32xf32>
    %84 = vector.extract_strided_slice %77 {offsets = [0, 32], sizes = [8, 32], strides = [1, 1]} : vector<8x64xf32> to vector<8x32xf32>
    %cst_26 = arith.constant 1.000000e+00 : f32
    %85 = vector.broadcast %cst_26 : f32 to vector<8x32xf32>
    %86 = arith.subf %85, %84 : vector<8x32xf32>
    %87 = arith.mulf %86, %83 : vector<8x32xf32>
    %88 = arith.mulf %84, %65 : vector<8x32xf32>
    %89 = arith.addf %87, %88 : vector<8x32xf32>
    %cst_27 = arith.constant dense<0.000000e+00> : vector<8x96xf32>
    %90 = tpu.matmul %89, %12, %cst_27 {dimension_numbers = #tpu.dot_dimension_numbers<[1], [0], [0], [1], [0, 0, 1, 1], [], []>} : vector<8x32xf32>, vector<32x96xf32>, vector<8x96xf32> -> vector<8x96xf32>
    %91 = arith.addf %90, %16 : vector<8x96xf32>
    %92 = vector.extract_strided_slice %9 {offsets = [24, 0], sizes = [8, 64], strides = [1, 1]} : vector<80x64xf32> to vector<8x64xf32>
    %93 = vector.extract_strided_slice %91 {offsets = [0, 0], sizes = [8, 64], strides = [1, 1]} : vector<8x96xf32> to vector<8x64xf32>
    %94 = arith.addf %92, %93 : vector<8x64xf32>
    %cst_28 = arith.constant 0.000000e+00 : f32
    %95 = vector.broadcast %cst_28 : f32 to vector<8x64xf32>
    %96 = arith.subf %95, %94 : vector<8x64xf32>
    %97 = math.exp %96 : vector<8x64xf32>
    %cst_29 = arith.constant 1.000000e+00 : f32
    %98 = vector.broadcast %cst_29 : f32 to vector<8x64xf32>
    %99 = arith.addf %98, %97 : vector<8x64xf32>
    %cst_30 = arith.constant 1.000000e+00 : f32
    %100 = vector.broadcast %cst_30 : f32 to vector<8x64xf32>
    %101 = arith.divf %100, %99 : vector<8x64xf32>
    %102 = vector.extract_strided_slice %10 {offsets = [24, 0], sizes = [8, 32], strides = [1, 1]} : vector<80x32xf32> to vector<8x32xf32>
    %103 = vector.extract_strided_slice %101 {offsets = [0, 0], sizes = [8, 32], strides = [1, 1]} : vector<8x64xf32> to vector<8x32xf32>
    %104 = vector.extract_strided_slice %91 {offsets = [0, 64], sizes = [8, 32], strides = [1, 1]} : vector<8x96xf32> to vector<8x32xf32>
    %105 = arith.mulf %103, %104 : vector<8x32xf32>
    %106 = arith.addf %102, %105 : vector<8x32xf32>
    %107 = math.tanh %106 : vector<8x32xf32>
    %108 = vector.extract_strided_slice %101 {offsets = [0, 32], sizes = [8, 32], strides = [1, 1]} : vector<8x64xf32> to vector<8x32xf32>
    %cst_31 = arith.constant 1.000000e+00 : f32
    %109 = vector.broadcast %cst_31 : f32 to vector<8x32xf32>
    %110 = arith.subf %109, %108 : vector<8x32xf32>
    %111 = arith.mulf %110, %107 : vector<8x32xf32>
    %112 = arith.mulf %108, %89 : vector<8x32xf32>
    %113 = arith.addf %111, %112 : vector<8x32xf32>
    %cst_32 = arith.constant dense<0.000000e+00> : vector<8x96xf32>
    %114 = tpu.matmul %113, %12, %cst_32 {dimension_numbers = #tpu.dot_dimension_numbers<[1], [0], [0], [1], [0, 0, 1, 1], [], []>} : vector<8x32xf32>, vector<32x96xf32>, vector<8x96xf32> -> vector<8x96xf32>
    %115 = arith.addf %114, %16 : vector<8x96xf32>
    %116 = vector.extract_strided_slice %9 {offsets = [32, 0], sizes = [8, 64], strides = [1, 1]} : vector<80x64xf32> to vector<8x64xf32>
    %117 = vector.extract_strided_slice %115 {offsets = [0, 0], sizes = [8, 64], strides = [1, 1]} : vector<8x96xf32> to vector<8x64xf32>
    %118 = arith.addf %116, %117 : vector<8x64xf32>
    %cst_33 = arith.constant 0.000000e+00 : f32
    %119 = vector.broadcast %cst_33 : f32 to vector<8x64xf32>
    %120 = arith.subf %119, %118 : vector<8x64xf32>
    %121 = math.exp %120 : vector<8x64xf32>
    %cst_34 = arith.constant 1.000000e+00 : f32
    %122 = vector.broadcast %cst_34 : f32 to vector<8x64xf32>
    %123 = arith.addf %122, %121 : vector<8x64xf32>
    %cst_35 = arith.constant 1.000000e+00 : f32
    %124 = vector.broadcast %cst_35 : f32 to vector<8x64xf32>
    %125 = arith.divf %124, %123 : vector<8x64xf32>
    %126 = vector.extract_strided_slice %10 {offsets = [32, 0], sizes = [8, 32], strides = [1, 1]} : vector<80x32xf32> to vector<8x32xf32>
    %127 = vector.extract_strided_slice %125 {offsets = [0, 0], sizes = [8, 32], strides = [1, 1]} : vector<8x64xf32> to vector<8x32xf32>
    %128 = vector.extract_strided_slice %115 {offsets = [0, 64], sizes = [8, 32], strides = [1, 1]} : vector<8x96xf32> to vector<8x32xf32>
    %129 = arith.mulf %127, %128 : vector<8x32xf32>
    %130 = arith.addf %126, %129 : vector<8x32xf32>
    %131 = math.tanh %130 : vector<8x32xf32>
    %132 = vector.extract_strided_slice %125 {offsets = [0, 32], sizes = [8, 32], strides = [1, 1]} : vector<8x64xf32> to vector<8x32xf32>
    %cst_36 = arith.constant 1.000000e+00 : f32
    %133 = vector.broadcast %cst_36 : f32 to vector<8x32xf32>
    %134 = arith.subf %133, %132 : vector<8x32xf32>
    %135 = arith.mulf %134, %131 : vector<8x32xf32>
    %136 = arith.mulf %132, %113 : vector<8x32xf32>
    %137 = arith.addf %135, %136 : vector<8x32xf32>
    %cst_37 = arith.constant dense<0.000000e+00> : vector<8x96xf32>
    %138 = tpu.matmul %137, %12, %cst_37 {dimension_numbers = #tpu.dot_dimension_numbers<[1], [0], [0], [1], [0, 0, 1, 1], [], []>} : vector<8x32xf32>, vector<32x96xf32>, vector<8x96xf32> -> vector<8x96xf32>
    %139 = arith.addf %138, %16 : vector<8x96xf32>
    %140 = vector.extract_strided_slice %9 {offsets = [40, 0], sizes = [8, 64], strides = [1, 1]} : vector<80x64xf32> to vector<8x64xf32>
    %141 = vector.extract_strided_slice %139 {offsets = [0, 0], sizes = [8, 64], strides = [1, 1]} : vector<8x96xf32> to vector<8x64xf32>
    %142 = arith.addf %140, %141 : vector<8x64xf32>
    %cst_38 = arith.constant 0.000000e+00 : f32
    %143 = vector.broadcast %cst_38 : f32 to vector<8x64xf32>
    %144 = arith.subf %143, %142 : vector<8x64xf32>
    %145 = math.exp %144 : vector<8x64xf32>
    %cst_39 = arith.constant 1.000000e+00 : f32
    %146 = vector.broadcast %cst_39 : f32 to vector<8x64xf32>
    %147 = arith.addf %146, %145 : vector<8x64xf32>
    %cst_40 = arith.constant 1.000000e+00 : f32
    %148 = vector.broadcast %cst_40 : f32 to vector<8x64xf32>
    %149 = arith.divf %148, %147 : vector<8x64xf32>
    %150 = vector.extract_strided_slice %10 {offsets = [40, 0], sizes = [8, 32], strides = [1, 1]} : vector<80x32xf32> to vector<8x32xf32>
    %151 = vector.extract_strided_slice %149 {offsets = [0, 0], sizes = [8, 32], strides = [1, 1]} : vector<8x64xf32> to vector<8x32xf32>
    %152 = vector.extract_strided_slice %139 {offsets = [0, 64], sizes = [8, 32], strides = [1, 1]} : vector<8x96xf32> to vector<8x32xf32>
    %153 = arith.mulf %151, %152 : vector<8x32xf32>
    %154 = arith.addf %150, %153 : vector<8x32xf32>
    %155 = math.tanh %154 : vector<8x32xf32>
    %156 = vector.extract_strided_slice %149 {offsets = [0, 32], sizes = [8, 32], strides = [1, 1]} : vector<8x64xf32> to vector<8x32xf32>
    %cst_41 = arith.constant 1.000000e+00 : f32
    %157 = vector.broadcast %cst_41 : f32 to vector<8x32xf32>
    %158 = arith.subf %157, %156 : vector<8x32xf32>
    %159 = arith.mulf %158, %155 : vector<8x32xf32>
    %160 = arith.mulf %156, %137 : vector<8x32xf32>
    %161 = arith.addf %159, %160 : vector<8x32xf32>
    %cst_42 = arith.constant dense<0.000000e+00> : vector<8x96xf32>
    %162 = tpu.matmul %161, %12, %cst_42 {dimension_numbers = #tpu.dot_dimension_numbers<[1], [0], [0], [1], [0, 0, 1, 1], [], []>} : vector<8x32xf32>, vector<32x96xf32>, vector<8x96xf32> -> vector<8x96xf32>
    %163 = arith.addf %162, %16 : vector<8x96xf32>
    %164 = vector.extract_strided_slice %9 {offsets = [48, 0], sizes = [8, 64], strides = [1, 1]} : vector<80x64xf32> to vector<8x64xf32>
    %165 = vector.extract_strided_slice %163 {offsets = [0, 0], sizes = [8, 64], strides = [1, 1]} : vector<8x96xf32> to vector<8x64xf32>
    %166 = arith.addf %164, %165 : vector<8x64xf32>
    %cst_43 = arith.constant 0.000000e+00 : f32
    %167 = vector.broadcast %cst_43 : f32 to vector<8x64xf32>
    %168 = arith.subf %167, %166 : vector<8x64xf32>
    %169 = math.exp %168 : vector<8x64xf32>
    %cst_44 = arith.constant 1.000000e+00 : f32
    %170 = vector.broadcast %cst_44 : f32 to vector<8x64xf32>
    %171 = arith.addf %170, %169 : vector<8x64xf32>
    %cst_45 = arith.constant 1.000000e+00 : f32
    %172 = vector.broadcast %cst_45 : f32 to vector<8x64xf32>
    %173 = arith.divf %172, %171 : vector<8x64xf32>
    %174 = vector.extract_strided_slice %10 {offsets = [48, 0], sizes = [8, 32], strides = [1, 1]} : vector<80x32xf32> to vector<8x32xf32>
    %175 = vector.extract_strided_slice %173 {offsets = [0, 0], sizes = [8, 32], strides = [1, 1]} : vector<8x64xf32> to vector<8x32xf32>
    %176 = vector.extract_strided_slice %163 {offsets = [0, 64], sizes = [8, 32], strides = [1, 1]} : vector<8x96xf32> to vector<8x32xf32>
    %177 = arith.mulf %175, %176 : vector<8x32xf32>
    %178 = arith.addf %174, %177 : vector<8x32xf32>
    %179 = math.tanh %178 : vector<8x32xf32>
    %180 = vector.extract_strided_slice %173 {offsets = [0, 32], sizes = [8, 32], strides = [1, 1]} : vector<8x64xf32> to vector<8x32xf32>
    %cst_46 = arith.constant 1.000000e+00 : f32
    %181 = vector.broadcast %cst_46 : f32 to vector<8x32xf32>
    %182 = arith.subf %181, %180 : vector<8x32xf32>
    %183 = arith.mulf %182, %179 : vector<8x32xf32>
    %184 = arith.mulf %180, %161 : vector<8x32xf32>
    %185 = arith.addf %183, %184 : vector<8x32xf32>
    %cst_47 = arith.constant dense<0.000000e+00> : vector<8x96xf32>
    %186 = tpu.matmul %185, %12, %cst_47 {dimension_numbers = #tpu.dot_dimension_numbers<[1], [0], [0], [1], [0, 0, 1, 1], [], []>} : vector<8x32xf32>, vector<32x96xf32>, vector<8x96xf32> -> vector<8x96xf32>
    %187 = arith.addf %186, %16 : vector<8x96xf32>
    %188 = vector.extract_strided_slice %9 {offsets = [56, 0], sizes = [8, 64], strides = [1, 1]} : vector<80x64xf32> to vector<8x64xf32>
    %189 = vector.extract_strided_slice %187 {offsets = [0, 0], sizes = [8, 64], strides = [1, 1]} : vector<8x96xf32> to vector<8x64xf32>
    %190 = arith.addf %188, %189 : vector<8x64xf32>
    %cst_48 = arith.constant 0.000000e+00 : f32
    %191 = vector.broadcast %cst_48 : f32 to vector<8x64xf32>
    %192 = arith.subf %191, %190 : vector<8x64xf32>
    %193 = math.exp %192 : vector<8x64xf32>
    %cst_49 = arith.constant 1.000000e+00 : f32
    %194 = vector.broadcast %cst_49 : f32 to vector<8x64xf32>
    %195 = arith.addf %194, %193 : vector<8x64xf32>
    %cst_50 = arith.constant 1.000000e+00 : f32
    %196 = vector.broadcast %cst_50 : f32 to vector<8x64xf32>
    %197 = arith.divf %196, %195 : vector<8x64xf32>
    %198 = vector.extract_strided_slice %10 {offsets = [56, 0], sizes = [8, 32], strides = [1, 1]} : vector<80x32xf32> to vector<8x32xf32>
    %199 = vector.extract_strided_slice %197 {offsets = [0, 0], sizes = [8, 32], strides = [1, 1]} : vector<8x64xf32> to vector<8x32xf32>
    %200 = vector.extract_strided_slice %187 {offsets = [0, 64], sizes = [8, 32], strides = [1, 1]} : vector<8x96xf32> to vector<8x32xf32>
    %201 = arith.mulf %199, %200 : vector<8x32xf32>
    %202 = arith.addf %198, %201 : vector<8x32xf32>
    %203 = math.tanh %202 : vector<8x32xf32>
    %204 = vector.extract_strided_slice %197 {offsets = [0, 32], sizes = [8, 32], strides = [1, 1]} : vector<8x64xf32> to vector<8x32xf32>
    %cst_51 = arith.constant 1.000000e+00 : f32
    %205 = vector.broadcast %cst_51 : f32 to vector<8x32xf32>
    %206 = arith.subf %205, %204 : vector<8x32xf32>
    %207 = arith.mulf %206, %203 : vector<8x32xf32>
    %208 = arith.mulf %204, %185 : vector<8x32xf32>
    %209 = arith.addf %207, %208 : vector<8x32xf32>
    %cst_52 = arith.constant dense<0.000000e+00> : vector<8x96xf32>
    %210 = tpu.matmul %209, %12, %cst_52 {dimension_numbers = #tpu.dot_dimension_numbers<[1], [0], [0], [1], [0, 0, 1, 1], [], []>} : vector<8x32xf32>, vector<32x96xf32>, vector<8x96xf32> -> vector<8x96xf32>
    %211 = arith.addf %210, %16 : vector<8x96xf32>
    %212 = vector.extract_strided_slice %9 {offsets = [64, 0], sizes = [8, 64], strides = [1, 1]} : vector<80x64xf32> to vector<8x64xf32>
    %213 = vector.extract_strided_slice %211 {offsets = [0, 0], sizes = [8, 64], strides = [1, 1]} : vector<8x96xf32> to vector<8x64xf32>
    %214 = arith.addf %212, %213 : vector<8x64xf32>
    %cst_53 = arith.constant 0.000000e+00 : f32
    %215 = vector.broadcast %cst_53 : f32 to vector<8x64xf32>
    %216 = arith.subf %215, %214 : vector<8x64xf32>
    %217 = math.exp %216 : vector<8x64xf32>
    %cst_54 = arith.constant 1.000000e+00 : f32
    %218 = vector.broadcast %cst_54 : f32 to vector<8x64xf32>
    %219 = arith.addf %218, %217 : vector<8x64xf32>
    %cst_55 = arith.constant 1.000000e+00 : f32
    %220 = vector.broadcast %cst_55 : f32 to vector<8x64xf32>
    %221 = arith.divf %220, %219 : vector<8x64xf32>
    %222 = vector.extract_strided_slice %10 {offsets = [64, 0], sizes = [8, 32], strides = [1, 1]} : vector<80x32xf32> to vector<8x32xf32>
    %223 = vector.extract_strided_slice %221 {offsets = [0, 0], sizes = [8, 32], strides = [1, 1]} : vector<8x64xf32> to vector<8x32xf32>
    %224 = vector.extract_strided_slice %211 {offsets = [0, 64], sizes = [8, 32], strides = [1, 1]} : vector<8x96xf32> to vector<8x32xf32>
    %225 = arith.mulf %223, %224 : vector<8x32xf32>
    %226 = arith.addf %222, %225 : vector<8x32xf32>
    %227 = math.tanh %226 : vector<8x32xf32>
    %228 = vector.extract_strided_slice %221 {offsets = [0, 32], sizes = [8, 32], strides = [1, 1]} : vector<8x64xf32> to vector<8x32xf32>
    %cst_56 = arith.constant 1.000000e+00 : f32
    %229 = vector.broadcast %cst_56 : f32 to vector<8x32xf32>
    %230 = arith.subf %229, %228 : vector<8x32xf32>
    %231 = arith.mulf %230, %227 : vector<8x32xf32>
    %232 = arith.mulf %228, %209 : vector<8x32xf32>
    %233 = arith.addf %231, %232 : vector<8x32xf32>
    %cst_57 = arith.constant dense<0.000000e+00> : vector<8x96xf32>
    %234 = tpu.matmul %233, %12, %cst_57 {dimension_numbers = #tpu.dot_dimension_numbers<[1], [0], [0], [1], [0, 0, 1, 1], [], []>} : vector<8x32xf32>, vector<32x96xf32>, vector<8x96xf32> -> vector<8x96xf32>
    %235 = arith.addf %234, %16 : vector<8x96xf32>
    %236 = vector.extract_strided_slice %9 {offsets = [72, 0], sizes = [8, 64], strides = [1, 1]} : vector<80x64xf32> to vector<8x64xf32>
    %237 = vector.extract_strided_slice %235 {offsets = [0, 0], sizes = [8, 64], strides = [1, 1]} : vector<8x96xf32> to vector<8x64xf32>
    %238 = arith.addf %236, %237 : vector<8x64xf32>
    %cst_58 = arith.constant 0.000000e+00 : f32
    %239 = vector.broadcast %cst_58 : f32 to vector<8x64xf32>
    %240 = arith.subf %239, %238 : vector<8x64xf32>
    %241 = math.exp %240 : vector<8x64xf32>
    %cst_59 = arith.constant 1.000000e+00 : f32
    %242 = vector.broadcast %cst_59 : f32 to vector<8x64xf32>
    %243 = arith.addf %242, %241 : vector<8x64xf32>
    %cst_60 = arith.constant 1.000000e+00 : f32
    %244 = vector.broadcast %cst_60 : f32 to vector<8x64xf32>
    %245 = arith.divf %244, %243 : vector<8x64xf32>
    %246 = vector.extract_strided_slice %10 {offsets = [72, 0], sizes = [8, 32], strides = [1, 1]} : vector<80x32xf32> to vector<8x32xf32>
    %247 = vector.extract_strided_slice %245 {offsets = [0, 0], sizes = [8, 32], strides = [1, 1]} : vector<8x64xf32> to vector<8x32xf32>
    %248 = vector.extract_strided_slice %235 {offsets = [0, 64], sizes = [8, 32], strides = [1, 1]} : vector<8x96xf32> to vector<8x32xf32>
    %249 = arith.mulf %247, %248 : vector<8x32xf32>
    %250 = arith.addf %246, %249 : vector<8x32xf32>
    %251 = math.tanh %250 : vector<8x32xf32>
    %252 = vector.extract_strided_slice %245 {offsets = [0, 32], sizes = [8, 32], strides = [1, 1]} : vector<8x64xf32> to vector<8x32xf32>
    %cst_61 = arith.constant 1.000000e+00 : f32
    %253 = vector.broadcast %cst_61 : f32 to vector<8x32xf32>
    %254 = arith.subf %253, %252 : vector<8x32xf32>
    %255 = arith.mulf %254, %251 : vector<8x32xf32>
    %256 = arith.mulf %252, %233 : vector<8x32xf32>
    %257 = arith.addf %255, %256 : vector<8x32xf32>
    %258 = tpu.concatenate %41, %65, %89, %113, %137, %161, %185, %209, %233, %257 in 0 : vector<8x32xf32>, vector<8x32xf32>, vector<8x32xf32>, vector<8x32xf32>, vector<8x32xf32>, vector<8x32xf32>, vector<8x32xf32>, vector<8x32xf32>, vector<8x32xf32>, vector<8x32xf32> -> vector<80x32xf32>
    %c0_62 = arith.constant 0 : index
    %c0_63 = arith.constant 0 : index
    %c0_64 = arith.constant 0 : index
    %259 = vector.load %arg2[%c0_62, %c0_63, %c0_64] : memref<3x32x96xf32, #tpu.memory_space<vmem>>, vector<1x32x96xf32>
    %260 = vector.shape_cast %259 : vector<1x32x96xf32> to vector<32x96xf32>
    %cst_65 = arith.constant dense<0.000000e+00> : vector<80x96xf32>
    %261 = tpu.matmul %258, %260, %cst_65 {dimension_numbers = #tpu.dot_dimension_numbers<[1], [0], [0], [1], [0, 0, 1, 1], [], []>} : vector<80x32xf32>, vector<32x96xf32>, vector<80x96xf32> -> vector<80x96xf32>
    %c1 = arith.constant 1 : index
    %c0_66 = arith.constant 0 : index
    %c0_67 = arith.constant 0 : index
    %262 = vector.load %arg4[%c1, %c0_66, %c0_67] : memref<4x1x96xf32, #tpu.memory_space<vmem>>, vector<1x1x96xf32>
    %263 = vector.shape_cast %262 : vector<1x1x96xf32> to vector<1x96xf32>
    %264 = vector.broadcast %263 : vector<1x96xf32> to vector<80x96xf32>
    %265 = arith.addf %261, %264 : vector<80x96xf32>
    %266 = vector.extract_strided_slice %265 {offsets = [0, 0], sizes = [80, 64], strides = [1, 1]} : vector<80x96xf32> to vector<80x64xf32>
    %267 = vector.extract_strided_slice %265 {offsets = [0, 64], sizes = [80, 32], strides = [1, 1]} : vector<80x96xf32> to vector<80x32xf32>
    %c1_68 = arith.constant 1 : index
    %c0_69 = arith.constant 0 : index
    %c0_70 = arith.constant 0 : index
    %268 = vector.load %arg3[%c1_68, %c0_69, %c0_70] : memref<4x32x96xf32, #tpu.memory_space<vmem>>, vector<1x32x96xf32>
    %269 = vector.shape_cast %268 : vector<1x32x96xf32> to vector<32x96xf32>
    %c1_71 = arith.constant 1 : index
    %c0_72 = arith.constant 0 : index
    %c0_73 = arith.constant 0 : index
    %270 = vector.load %arg5[%c1_71, %c0_72, %c0_73] : memref<4x1x96xf32, #tpu.memory_space<vmem>>, vector<1x1x96xf32>
    %271 = vector.shape_cast %270 : vector<1x1x96xf32> to vector<1x96xf32>
    %272 = vector.shape_cast %271 : vector<1x96xf32> to vector<1x96xf32>
    %273 = vector.broadcast %272 : vector<1x96xf32> to vector<8x96xf32>
    %cst_74 = arith.constant 0.000000e+00 : f32
    %274 = vector.broadcast %cst_74 : f32 to vector<8x32xf32>
    %cst_75 = arith.constant dense<0.000000e+00> : vector<8x96xf32>
    %275 = tpu.matmul %274, %269, %cst_75 {dimension_numbers = #tpu.dot_dimension_numbers<[1], [0], [0], [1], [0, 0, 1, 1], [], []>} : vector<8x32xf32>, vector<32x96xf32>, vector<8x96xf32> -> vector<8x96xf32>
    %276 = arith.addf %275, %273 : vector<8x96xf32>
    %277 = vector.extract_strided_slice %266 {offsets = [0, 0], sizes = [8, 64], strides = [1, 1]} : vector<80x64xf32> to vector<8x64xf32>
    %278 = vector.extract_strided_slice %276 {offsets = [0, 0], sizes = [8, 64], strides = [1, 1]} : vector<8x96xf32> to vector<8x64xf32>
    %279 = arith.addf %277, %278 : vector<8x64xf32>
    %cst_76 = arith.constant 0.000000e+00 : f32
    %280 = vector.broadcast %cst_76 : f32 to vector<8x64xf32>
    %281 = arith.subf %280, %279 : vector<8x64xf32>
    %282 = math.exp %281 : vector<8x64xf32>
    %cst_77 = arith.constant 1.000000e+00 : f32
    %283 = vector.broadcast %cst_77 : f32 to vector<8x64xf32>
    %284 = arith.addf %283, %282 : vector<8x64xf32>
    %cst_78 = arith.constant 1.000000e+00 : f32
    %285 = vector.broadcast %cst_78 : f32 to vector<8x64xf32>
    %286 = arith.divf %285, %284 : vector<8x64xf32>
    %287 = vector.extract_strided_slice %267 {offsets = [0, 0], sizes = [8, 32], strides = [1, 1]} : vector<80x32xf32> to vector<8x32xf32>
    %288 = vector.extract_strided_slice %286 {offsets = [0, 0], sizes = [8, 32], strides = [1, 1]} : vector<8x64xf32> to vector<8x32xf32>
    %289 = vector.extract_strided_slice %276 {offsets = [0, 64], sizes = [8, 32], strides = [1, 1]} : vector<8x96xf32> to vector<8x32xf32>
    %290 = arith.mulf %288, %289 : vector<8x32xf32>
    %291 = arith.addf %287, %290 : vector<8x32xf32>
    %292 = math.tanh %291 : vector<8x32xf32>
    %293 = vector.extract_strided_slice %286 {offsets = [0, 32], sizes = [8, 32], strides = [1, 1]} : vector<8x64xf32> to vector<8x32xf32>
    %cst_79 = arith.constant 1.000000e+00 : f32
    %294 = vector.broadcast %cst_79 : f32 to vector<8x32xf32>
    %295 = arith.subf %294, %293 : vector<8x32xf32>
    %296 = arith.mulf %295, %292 : vector<8x32xf32>
    %297 = arith.mulf %293, %274 : vector<8x32xf32>
    %298 = arith.addf %296, %297 : vector<8x32xf32>
    %cst_80 = arith.constant dense<0.000000e+00> : vector<8x96xf32>
    %299 = tpu.matmul %298, %269, %cst_80 {dimension_numbers = #tpu.dot_dimension_numbers<[1], [0], [0], [1], [0, 0, 1, 1], [], []>} : vector<8x32xf32>, vector<32x96xf32>, vector<8x96xf32> -> vector<8x96xf32>
    %300 = arith.addf %299, %273 : vector<8x96xf32>
    %301 = vector.extract_strided_slice %266 {offsets = [8, 0], sizes = [8, 64], strides = [1, 1]} : vector<80x64xf32> to vector<8x64xf32>
    %302 = vector.extract_strided_slice %300 {offsets = [0, 0], sizes = [8, 64], strides = [1, 1]} : vector<8x96xf32> to vector<8x64xf32>
    %303 = arith.addf %301, %302 : vector<8x64xf32>
    %cst_81 = arith.constant 0.000000e+00 : f32
    %304 = vector.broadcast %cst_81 : f32 to vector<8x64xf32>
    %305 = arith.subf %304, %303 : vector<8x64xf32>
    %306 = math.exp %305 : vector<8x64xf32>
    %cst_82 = arith.constant 1.000000e+00 : f32
    %307 = vector.broadcast %cst_82 : f32 to vector<8x64xf32>
    %308 = arith.addf %307, %306 : vector<8x64xf32>
    %cst_83 = arith.constant 1.000000e+00 : f32
    %309 = vector.broadcast %cst_83 : f32 to vector<8x64xf32>
    %310 = arith.divf %309, %308 : vector<8x64xf32>
    %311 = vector.extract_strided_slice %267 {offsets = [8, 0], sizes = [8, 32], strides = [1, 1]} : vector<80x32xf32> to vector<8x32xf32>
    %312 = vector.extract_strided_slice %310 {offsets = [0, 0], sizes = [8, 32], strides = [1, 1]} : vector<8x64xf32> to vector<8x32xf32>
    %313 = vector.extract_strided_slice %300 {offsets = [0, 64], sizes = [8, 32], strides = [1, 1]} : vector<8x96xf32> to vector<8x32xf32>
    %314 = arith.mulf %312, %313 : vector<8x32xf32>
    %315 = arith.addf %311, %314 : vector<8x32xf32>
    %316 = math.tanh %315 : vector<8x32xf32>
    %317 = vector.extract_strided_slice %310 {offsets = [0, 32], sizes = [8, 32], strides = [1, 1]} : vector<8x64xf32> to vector<8x32xf32>
    %cst_84 = arith.constant 1.000000e+00 : f32
    %318 = vector.broadcast %cst_84 : f32 to vector<8x32xf32>
    %319 = arith.subf %318, %317 : vector<8x32xf32>
    %320 = arith.mulf %319, %316 : vector<8x32xf32>
    %321 = arith.mulf %317, %298 : vector<8x32xf32>
    %322 = arith.addf %320, %321 : vector<8x32xf32>
    %cst_85 = arith.constant dense<0.000000e+00> : vector<8x96xf32>
    %323 = tpu.matmul %322, %269, %cst_85 {dimension_numbers = #tpu.dot_dimension_numbers<[1], [0], [0], [1], [0, 0, 1, 1], [], []>} : vector<8x32xf32>, vector<32x96xf32>, vector<8x96xf32> -> vector<8x96xf32>
    %324 = arith.addf %323, %273 : vector<8x96xf32>
    %325 = vector.extract_strided_slice %266 {offsets = [16, 0], sizes = [8, 64], strides = [1, 1]} : vector<80x64xf32> to vector<8x64xf32>
    %326 = vector.extract_strided_slice %324 {offsets = [0, 0], sizes = [8, 64], strides = [1, 1]} : vector<8x96xf32> to vector<8x64xf32>
    %327 = arith.addf %325, %326 : vector<8x64xf32>
    %cst_86 = arith.constant 0.000000e+00 : f32
    %328 = vector.broadcast %cst_86 : f32 to vector<8x64xf32>
    %329 = arith.subf %328, %327 : vector<8x64xf32>
    %330 = math.exp %329 : vector<8x64xf32>
    %cst_87 = arith.constant 1.000000e+00 : f32
    %331 = vector.broadcast %cst_87 : f32 to vector<8x64xf32>
    %332 = arith.addf %331, %330 : vector<8x64xf32>
    %cst_88 = arith.constant 1.000000e+00 : f32
    %333 = vector.broadcast %cst_88 : f32 to vector<8x64xf32>
    %334 = arith.divf %333, %332 : vector<8x64xf32>
    %335 = vector.extract_strided_slice %267 {offsets = [16, 0], sizes = [8, 32], strides = [1, 1]} : vector<80x32xf32> to vector<8x32xf32>
    %336 = vector.extract_strided_slice %334 {offsets = [0, 0], sizes = [8, 32], strides = [1, 1]} : vector<8x64xf32> to vector<8x32xf32>
    %337 = vector.extract_strided_slice %324 {offsets = [0, 64], sizes = [8, 32], strides = [1, 1]} : vector<8x96xf32> to vector<8x32xf32>
    %338 = arith.mulf %336, %337 : vector<8x32xf32>
    %339 = arith.addf %335, %338 : vector<8x32xf32>
    %340 = math.tanh %339 : vector<8x32xf32>
    %341 = vector.extract_strided_slice %334 {offsets = [0, 32], sizes = [8, 32], strides = [1, 1]} : vector<8x64xf32> to vector<8x32xf32>
    %cst_89 = arith.constant 1.000000e+00 : f32
    %342 = vector.broadcast %cst_89 : f32 to vector<8x32xf32>
    %343 = arith.subf %342, %341 : vector<8x32xf32>
    %344 = arith.mulf %343, %340 : vector<8x32xf32>
    %345 = arith.mulf %341, %322 : vector<8x32xf32>
    %346 = arith.addf %344, %345 : vector<8x32xf32>
    %cst_90 = arith.constant dense<0.000000e+00> : vector<8x96xf32>
    %347 = tpu.matmul %346, %269, %cst_90 {dimension_numbers = #tpu.dot_dimension_numbers<[1], [0], [0], [1], [0, 0, 1, 1], [], []>} : vector<8x32xf32>, vector<32x96xf32>, vector<8x96xf32> -> vector<8x96xf32>
    %348 = arith.addf %347, %273 : vector<8x96xf32>
    %349 = vector.extract_strided_slice %266 {offsets = [24, 0], sizes = [8, 64], strides = [1, 1]} : vector<80x64xf32> to vector<8x64xf32>
    %350 = vector.extract_strided_slice %348 {offsets = [0, 0], sizes = [8, 64], strides = [1, 1]} : vector<8x96xf32> to vector<8x64xf32>
    %351 = arith.addf %349, %350 : vector<8x64xf32>
    %cst_91 = arith.constant 0.000000e+00 : f32
    %352 = vector.broadcast %cst_91 : f32 to vector<8x64xf32>
    %353 = arith.subf %352, %351 : vector<8x64xf32>
    %354 = math.exp %353 : vector<8x64xf32>
    %cst_92 = arith.constant 1.000000e+00 : f32
    %355 = vector.broadcast %cst_92 : f32 to vector<8x64xf32>
    %356 = arith.addf %355, %354 : vector<8x64xf32>
    %cst_93 = arith.constant 1.000000e+00 : f32
    %357 = vector.broadcast %cst_93 : f32 to vector<8x64xf32>
    %358 = arith.divf %357, %356 : vector<8x64xf32>
    %359 = vector.extract_strided_slice %267 {offsets = [24, 0], sizes = [8, 32], strides = [1, 1]} : vector<80x32xf32> to vector<8x32xf32>
    %360 = vector.extract_strided_slice %358 {offsets = [0, 0], sizes = [8, 32], strides = [1, 1]} : vector<8x64xf32> to vector<8x32xf32>
    %361 = vector.extract_strided_slice %348 {offsets = [0, 64], sizes = [8, 32], strides = [1, 1]} : vector<8x96xf32> to vector<8x32xf32>
    %362 = arith.mulf %360, %361 : vector<8x32xf32>
    %363 = arith.addf %359, %362 : vector<8x32xf32>
    %364 = math.tanh %363 : vector<8x32xf32>
    %365 = vector.extract_strided_slice %358 {offsets = [0, 32], sizes = [8, 32], strides = [1, 1]} : vector<8x64xf32> to vector<8x32xf32>
    %cst_94 = arith.constant 1.000000e+00 : f32
    %366 = vector.broadcast %cst_94 : f32 to vector<8x32xf32>
    %367 = arith.subf %366, %365 : vector<8x32xf32>
    %368 = arith.mulf %367, %364 : vector<8x32xf32>
    %369 = arith.mulf %365, %346 : vector<8x32xf32>
    %370 = arith.addf %368, %369 : vector<8x32xf32>
    %cst_95 = arith.constant dense<0.000000e+00> : vector<8x96xf32>
    %371 = tpu.matmul %370, %269, %cst_95 {dimension_numbers = #tpu.dot_dimension_numbers<[1], [0], [0], [1], [0, 0, 1, 1], [], []>} : vector<8x32xf32>, vector<32x96xf32>, vector<8x96xf32> -> vector<8x96xf32>
    %372 = arith.addf %371, %273 : vector<8x96xf32>
    %373 = vector.extract_strided_slice %266 {offsets = [32, 0], sizes = [8, 64], strides = [1, 1]} : vector<80x64xf32> to vector<8x64xf32>
    %374 = vector.extract_strided_slice %372 {offsets = [0, 0], sizes = [8, 64], strides = [1, 1]} : vector<8x96xf32> to vector<8x64xf32>
    %375 = arith.addf %373, %374 : vector<8x64xf32>
    %cst_96 = arith.constant 0.000000e+00 : f32
    %376 = vector.broadcast %cst_96 : f32 to vector<8x64xf32>
    %377 = arith.subf %376, %375 : vector<8x64xf32>
    %378 = math.exp %377 : vector<8x64xf32>
    %cst_97 = arith.constant 1.000000e+00 : f32
    %379 = vector.broadcast %cst_97 : f32 to vector<8x64xf32>
    %380 = arith.addf %379, %378 : vector<8x64xf32>
    %cst_98 = arith.constant 1.000000e+00 : f32
    %381 = vector.broadcast %cst_98 : f32 to vector<8x64xf32>
    %382 = arith.divf %381, %380 : vector<8x64xf32>
    %383 = vector.extract_strided_slice %267 {offsets = [32, 0], sizes = [8, 32], strides = [1, 1]} : vector<80x32xf32> to vector<8x32xf32>
    %384 = vector.extract_strided_slice %382 {offsets = [0, 0], sizes = [8, 32], strides = [1, 1]} : vector<8x64xf32> to vector<8x32xf32>
    %385 = vector.extract_strided_slice %372 {offsets = [0, 64], sizes = [8, 32], strides = [1, 1]} : vector<8x96xf32> to vector<8x32xf32>
    %386 = arith.mulf %384, %385 : vector<8x32xf32>
    %387 = arith.addf %383, %386 : vector<8x32xf32>
    %388 = math.tanh %387 : vector<8x32xf32>
    %389 = vector.extract_strided_slice %382 {offsets = [0, 32], sizes = [8, 32], strides = [1, 1]} : vector<8x64xf32> to vector<8x32xf32>
    %cst_99 = arith.constant 1.000000e+00 : f32
    %390 = vector.broadcast %cst_99 : f32 to vector<8x32xf32>
    %391 = arith.subf %390, %389 : vector<8x32xf32>
    %392 = arith.mulf %391, %388 : vector<8x32xf32>
    %393 = arith.mulf %389, %370 : vector<8x32xf32>
    %394 = arith.addf %392, %393 : vector<8x32xf32>
    %cst_100 = arith.constant dense<0.000000e+00> : vector<8x96xf32>
    %395 = tpu.matmul %394, %269, %cst_100 {dimension_numbers = #tpu.dot_dimension_numbers<[1], [0], [0], [1], [0, 0, 1, 1], [], []>} : vector<8x32xf32>, vector<32x96xf32>, vector<8x96xf32> -> vector<8x96xf32>
    %396 = arith.addf %395, %273 : vector<8x96xf32>
    %397 = vector.extract_strided_slice %266 {offsets = [40, 0], sizes = [8, 64], strides = [1, 1]} : vector<80x64xf32> to vector<8x64xf32>
    %398 = vector.extract_strided_slice %396 {offsets = [0, 0], sizes = [8, 64], strides = [1, 1]} : vector<8x96xf32> to vector<8x64xf32>
    %399 = arith.addf %397, %398 : vector<8x64xf32>
    %cst_101 = arith.constant 0.000000e+00 : f32
    %400 = vector.broadcast %cst_101 : f32 to vector<8x64xf32>
    %401 = arith.subf %400, %399 : vector<8x64xf32>
    %402 = math.exp %401 : vector<8x64xf32>
    %cst_102 = arith.constant 1.000000e+00 : f32
    %403 = vector.broadcast %cst_102 : f32 to vector<8x64xf32>
    %404 = arith.addf %403, %402 : vector<8x64xf32>
    %cst_103 = arith.constant 1.000000e+00 : f32
    %405 = vector.broadcast %cst_103 : f32 to vector<8x64xf32>
    %406 = arith.divf %405, %404 : vector<8x64xf32>
    %407 = vector.extract_strided_slice %267 {offsets = [40, 0], sizes = [8, 32], strides = [1, 1]} : vector<80x32xf32> to vector<8x32xf32>
    %408 = vector.extract_strided_slice %406 {offsets = [0, 0], sizes = [8, 32], strides = [1, 1]} : vector<8x64xf32> to vector<8x32xf32>
    %409 = vector.extract_strided_slice %396 {offsets = [0, 64], sizes = [8, 32], strides = [1, 1]} : vector<8x96xf32> to vector<8x32xf32>
    %410 = arith.mulf %408, %409 : vector<8x32xf32>
    %411 = arith.addf %407, %410 : vector<8x32xf32>
    %412 = math.tanh %411 : vector<8x32xf32>
    %413 = vector.extract_strided_slice %406 {offsets = [0, 32], sizes = [8, 32], strides = [1, 1]} : vector<8x64xf32> to vector<8x32xf32>
    %cst_104 = arith.constant 1.000000e+00 : f32
    %414 = vector.broadcast %cst_104 : f32 to vector<8x32xf32>
    %415 = arith.subf %414, %413 : vector<8x32xf32>
    %416 = arith.mulf %415, %412 : vector<8x32xf32>
    %417 = arith.mulf %413, %394 : vector<8x32xf32>
    %418 = arith.addf %416, %417 : vector<8x32xf32>
    %cst_105 = arith.constant dense<0.000000e+00> : vector<8x96xf32>
    %419 = tpu.matmul %418, %269, %cst_105 {dimension_numbers = #tpu.dot_dimension_numbers<[1], [0], [0], [1], [0, 0, 1, 1], [], []>} : vector<8x32xf32>, vector<32x96xf32>, vector<8x96xf32> -> vector<8x96xf32>
    %420 = arith.addf %419, %273 : vector<8x96xf32>
    %421 = vector.extract_strided_slice %266 {offsets = [48, 0], sizes = [8, 64], strides = [1, 1]} : vector<80x64xf32> to vector<8x64xf32>
    %422 = vector.extract_strided_slice %420 {offsets = [0, 0], sizes = [8, 64], strides = [1, 1]} : vector<8x96xf32> to vector<8x64xf32>
    %423 = arith.addf %421, %422 : vector<8x64xf32>
    %cst_106 = arith.constant 0.000000e+00 : f32
    %424 = vector.broadcast %cst_106 : f32 to vector<8x64xf32>
    %425 = arith.subf %424, %423 : vector<8x64xf32>
    %426 = math.exp %425 : vector<8x64xf32>
    %cst_107 = arith.constant 1.000000e+00 : f32
    %427 = vector.broadcast %cst_107 : f32 to vector<8x64xf32>
    %428 = arith.addf %427, %426 : vector<8x64xf32>
    %cst_108 = arith.constant 1.000000e+00 : f32
    %429 = vector.broadcast %cst_108 : f32 to vector<8x64xf32>
    %430 = arith.divf %429, %428 : vector<8x64xf32>
    %431 = vector.extract_strided_slice %267 {offsets = [48, 0], sizes = [8, 32], strides = [1, 1]} : vector<80x32xf32> to vector<8x32xf32>
    %432 = vector.extract_strided_slice %430 {offsets = [0, 0], sizes = [8, 32], strides = [1, 1]} : vector<8x64xf32> to vector<8x32xf32>
    %433 = vector.extract_strided_slice %420 {offsets = [0, 64], sizes = [8, 32], strides = [1, 1]} : vector<8x96xf32> to vector<8x32xf32>
    %434 = arith.mulf %432, %433 : vector<8x32xf32>
    %435 = arith.addf %431, %434 : vector<8x32xf32>
    %436 = math.tanh %435 : vector<8x32xf32>
    %437 = vector.extract_strided_slice %430 {offsets = [0, 32], sizes = [8, 32], strides = [1, 1]} : vector<8x64xf32> to vector<8x32xf32>
    %cst_109 = arith.constant 1.000000e+00 : f32
    %438 = vector.broadcast %cst_109 : f32 to vector<8x32xf32>
    %439 = arith.subf %438, %437 : vector<8x32xf32>
    %440 = arith.mulf %439, %436 : vector<8x32xf32>
    %441 = arith.mulf %437, %418 : vector<8x32xf32>
    %442 = arith.addf %440, %441 : vector<8x32xf32>
    %cst_110 = arith.constant dense<0.000000e+00> : vector<8x96xf32>
    %443 = tpu.matmul %442, %269, %cst_110 {dimension_numbers = #tpu.dot_dimension_numbers<[1], [0], [0], [1], [0, 0, 1, 1], [], []>} : vector<8x32xf32>, vector<32x96xf32>, vector<8x96xf32> -> vector<8x96xf32>
    %444 = arith.addf %443, %273 : vector<8x96xf32>
    %445 = vector.extract_strided_slice %266 {offsets = [56, 0], sizes = [8, 64], strides = [1, 1]} : vector<80x64xf32> to vector<8x64xf32>
    %446 = vector.extract_strided_slice %444 {offsets = [0, 0], sizes = [8, 64], strides = [1, 1]} : vector<8x96xf32> to vector<8x64xf32>
    %447 = arith.addf %445, %446 : vector<8x64xf32>
    %cst_111 = arith.constant 0.000000e+00 : f32
    %448 = vector.broadcast %cst_111 : f32 to vector<8x64xf32>
    %449 = arith.subf %448, %447 : vector<8x64xf32>
    %450 = math.exp %449 : vector<8x64xf32>
    %cst_112 = arith.constant 1.000000e+00 : f32
    %451 = vector.broadcast %cst_112 : f32 to vector<8x64xf32>
    %452 = arith.addf %451, %450 : vector<8x64xf32>
    %cst_113 = arith.constant 1.000000e+00 : f32
    %453 = vector.broadcast %cst_113 : f32 to vector<8x64xf32>
    %454 = arith.divf %453, %452 : vector<8x64xf32>
    %455 = vector.extract_strided_slice %267 {offsets = [56, 0], sizes = [8, 32], strides = [1, 1]} : vector<80x32xf32> to vector<8x32xf32>
    %456 = vector.extract_strided_slice %454 {offsets = [0, 0], sizes = [8, 32], strides = [1, 1]} : vector<8x64xf32> to vector<8x32xf32>
    %457 = vector.extract_strided_slice %444 {offsets = [0, 64], sizes = [8, 32], strides = [1, 1]} : vector<8x96xf32> to vector<8x32xf32>
    %458 = arith.mulf %456, %457 : vector<8x32xf32>
    %459 = arith.addf %455, %458 : vector<8x32xf32>
    %460 = math.tanh %459 : vector<8x32xf32>
    %461 = vector.extract_strided_slice %454 {offsets = [0, 32], sizes = [8, 32], strides = [1, 1]} : vector<8x64xf32> to vector<8x32xf32>
    %cst_114 = arith.constant 1.000000e+00 : f32
    %462 = vector.broadcast %cst_114 : f32 to vector<8x32xf32>
    %463 = arith.subf %462, %461 : vector<8x32xf32>
    %464 = arith.mulf %463, %460 : vector<8x32xf32>
    %465 = arith.mulf %461, %442 : vector<8x32xf32>
    %466 = arith.addf %464, %465 : vector<8x32xf32>
    %cst_115 = arith.constant dense<0.000000e+00> : vector<8x96xf32>
    %467 = tpu.matmul %466, %269, %cst_115 {dimension_numbers = #tpu.dot_dimension_numbers<[1], [0], [0], [1], [0, 0, 1, 1], [], []>} : vector<8x32xf32>, vector<32x96xf32>, vector<8x96xf32> -> vector<8x96xf32>
    %468 = arith.addf %467, %273 : vector<8x96xf32>
    %469 = vector.extract_strided_slice %266 {offsets = [64, 0], sizes = [8, 64], strides = [1, 1]} : vector<80x64xf32> to vector<8x64xf32>
    %470 = vector.extract_strided_slice %468 {offsets = [0, 0], sizes = [8, 64], strides = [1, 1]} : vector<8x96xf32> to vector<8x64xf32>
    %471 = arith.addf %469, %470 : vector<8x64xf32>
    %cst_116 = arith.constant 0.000000e+00 : f32
    %472 = vector.broadcast %cst_116 : f32 to vector<8x64xf32>
    %473 = arith.subf %472, %471 : vector<8x64xf32>
    %474 = math.exp %473 : vector<8x64xf32>
    %cst_117 = arith.constant 1.000000e+00 : f32
    %475 = vector.broadcast %cst_117 : f32 to vector<8x64xf32>
    %476 = arith.addf %475, %474 : vector<8x64xf32>
    %cst_118 = arith.constant 1.000000e+00 : f32
    %477 = vector.broadcast %cst_118 : f32 to vector<8x64xf32>
    %478 = arith.divf %477, %476 : vector<8x64xf32>
    %479 = vector.extract_strided_slice %267 {offsets = [64, 0], sizes = [8, 32], strides = [1, 1]} : vector<80x32xf32> to vector<8x32xf32>
    %480 = vector.extract_strided_slice %478 {offsets = [0, 0], sizes = [8, 32], strides = [1, 1]} : vector<8x64xf32> to vector<8x32xf32>
    %481 = vector.extract_strided_slice %468 {offsets = [0, 64], sizes = [8, 32], strides = [1, 1]} : vector<8x96xf32> to vector<8x32xf32>
    %482 = arith.mulf %480, %481 : vector<8x32xf32>
    %483 = arith.addf %479, %482 : vector<8x32xf32>
    %484 = math.tanh %483 : vector<8x32xf32>
    %485 = vector.extract_strided_slice %478 {offsets = [0, 32], sizes = [8, 32], strides = [1, 1]} : vector<8x64xf32> to vector<8x32xf32>
    %cst_119 = arith.constant 1.000000e+00 : f32
    %486 = vector.broadcast %cst_119 : f32 to vector<8x32xf32>
    %487 = arith.subf %486, %485 : vector<8x32xf32>
    %488 = arith.mulf %487, %484 : vector<8x32xf32>
    %489 = arith.mulf %485, %466 : vector<8x32xf32>
    %490 = arith.addf %488, %489 : vector<8x32xf32>
    %cst_120 = arith.constant dense<0.000000e+00> : vector<8x96xf32>
    %491 = tpu.matmul %490, %269, %cst_120 {dimension_numbers = #tpu.dot_dimension_numbers<[1], [0], [0], [1], [0, 0, 1, 1], [], []>} : vector<8x32xf32>, vector<32x96xf32>, vector<8x96xf32> -> vector<8x96xf32>
    %492 = arith.addf %491, %273 : vector<8x96xf32>
    %493 = vector.extract_strided_slice %266 {offsets = [72, 0], sizes = [8, 64], strides = [1, 1]} : vector<80x64xf32> to vector<8x64xf32>
    %494 = vector.extract_strided_slice %492 {offsets = [0, 0], sizes = [8, 64], strides = [1, 1]} : vector<8x96xf32> to vector<8x64xf32>
    %495 = arith.addf %493, %494 : vector<8x64xf32>
    %cst_121 = arith.constant 0.000000e+00 : f32
    %496 = vector.broadcast %cst_121 : f32 to vector<8x64xf32>
    %497 = arith.subf %496, %495 : vector<8x64xf32>
    %498 = math.exp %497 : vector<8x64xf32>
    %cst_122 = arith.constant 1.000000e+00 : f32
    %499 = vector.broadcast %cst_122 : f32 to vector<8x64xf32>
    %500 = arith.addf %499, %498 : vector<8x64xf32>
    %cst_123 = arith.constant 1.000000e+00 : f32
    %501 = vector.broadcast %cst_123 : f32 to vector<8x64xf32>
    %502 = arith.divf %501, %500 : vector<8x64xf32>
    %503 = vector.extract_strided_slice %267 {offsets = [72, 0], sizes = [8, 32], strides = [1, 1]} : vector<80x32xf32> to vector<8x32xf32>
    %504 = vector.extract_strided_slice %502 {offsets = [0, 0], sizes = [8, 32], strides = [1, 1]} : vector<8x64xf32> to vector<8x32xf32>
    %505 = vector.extract_strided_slice %492 {offsets = [0, 64], sizes = [8, 32], strides = [1, 1]} : vector<8x96xf32> to vector<8x32xf32>
    %506 = arith.mulf %504, %505 : vector<8x32xf32>
    %507 = arith.addf %503, %506 : vector<8x32xf32>
    %508 = math.tanh %507 : vector<8x32xf32>
    %509 = vector.extract_strided_slice %502 {offsets = [0, 32], sizes = [8, 32], strides = [1, 1]} : vector<8x64xf32> to vector<8x32xf32>
    %cst_124 = arith.constant 1.000000e+00 : f32
    %510 = vector.broadcast %cst_124 : f32 to vector<8x32xf32>
    %511 = arith.subf %510, %509 : vector<8x32xf32>
    %512 = arith.mulf %511, %508 : vector<8x32xf32>
    %513 = arith.mulf %509, %490 : vector<8x32xf32>
    %514 = arith.addf %512, %513 : vector<8x32xf32>
    %515 = tpu.concatenate %298, %322, %346, %370, %394, %418, %442, %466, %490, %514 in 0 : vector<8x32xf32>, vector<8x32xf32>, vector<8x32xf32>, vector<8x32xf32>, vector<8x32xf32>, vector<8x32xf32>, vector<8x32xf32>, vector<8x32xf32>, vector<8x32xf32>, vector<8x32xf32> -> vector<80x32xf32>
    %c1_125 = arith.constant 1 : index
    %c0_126 = arith.constant 0 : index
    %c0_127 = arith.constant 0 : index
    %516 = vector.load %arg2[%c1_125, %c0_126, %c0_127] : memref<3x32x96xf32, #tpu.memory_space<vmem>>, vector<1x32x96xf32>
    %517 = vector.shape_cast %516 : vector<1x32x96xf32> to vector<32x96xf32>
    %cst_128 = arith.constant dense<0.000000e+00> : vector<80x96xf32>
    %518 = tpu.matmul %515, %517, %cst_128 {dimension_numbers = #tpu.dot_dimension_numbers<[1], [0], [0], [1], [0, 0, 1, 1], [], []>} : vector<80x32xf32>, vector<32x96xf32>, vector<80x96xf32> -> vector<80x96xf32>
    %c2 = arith.constant 2 : index
    %c0_129 = arith.constant 0 : index
    %c0_130 = arith.constant 0 : index
    %519 = vector.load %arg4[%c2, %c0_129, %c0_130] : memref<4x1x96xf32, #tpu.memory_space<vmem>>, vector<1x1x96xf32>
    %520 = vector.shape_cast %519 : vector<1x1x96xf32> to vector<1x96xf32>
    %521 = vector.broadcast %520 : vector<1x96xf32> to vector<80x96xf32>
    %522 = arith.addf %518, %521 : vector<80x96xf32>
    %523 = vector.extract_strided_slice %522 {offsets = [0, 0], sizes = [80, 64], strides = [1, 1]} : vector<80x96xf32> to vector<80x64xf32>
    %524 = vector.extract_strided_slice %522 {offsets = [0, 64], sizes = [80, 32], strides = [1, 1]} : vector<80x96xf32> to vector<80x32xf32>
    %c2_131 = arith.constant 2 : index
    %c0_132 = arith.constant 0 : index
    %c0_133 = arith.constant 0 : index
    %525 = vector.load %arg3[%c2_131, %c0_132, %c0_133] : memref<4x32x96xf32, #tpu.memory_space<vmem>>, vector<1x32x96xf32>
    %526 = vector.shape_cast %525 : vector<1x32x96xf32> to vector<32x96xf32>
    %c2_134 = arith.constant 2 : index
    %c0_135 = arith.constant 0 : index
    %c0_136 = arith.constant 0 : index
    %527 = vector.load %arg5[%c2_134, %c0_135, %c0_136] : memref<4x1x96xf32, #tpu.memory_space<vmem>>, vector<1x1x96xf32>
    %528 = vector.shape_cast %527 : vector<1x1x96xf32> to vector<1x96xf32>
    %529 = vector.shape_cast %528 : vector<1x96xf32> to vector<1x96xf32>
    %530 = vector.broadcast %529 : vector<1x96xf32> to vector<8x96xf32>
    %cst_137 = arith.constant 0.000000e+00 : f32
    %531 = vector.broadcast %cst_137 : f32 to vector<8x32xf32>
    %cst_138 = arith.constant dense<0.000000e+00> : vector<8x96xf32>
    %532 = tpu.matmul %531, %526, %cst_138 {dimension_numbers = #tpu.dot_dimension_numbers<[1], [0], [0], [1], [0, 0, 1, 1], [], []>} : vector<8x32xf32>, vector<32x96xf32>, vector<8x96xf32> -> vector<8x96xf32>
    %533 = arith.addf %532, %530 : vector<8x96xf32>
    %534 = vector.extract_strided_slice %523 {offsets = [0, 0], sizes = [8, 64], strides = [1, 1]} : vector<80x64xf32> to vector<8x64xf32>
    %535 = vector.extract_strided_slice %533 {offsets = [0, 0], sizes = [8, 64], strides = [1, 1]} : vector<8x96xf32> to vector<8x64xf32>
    %536 = arith.addf %534, %535 : vector<8x64xf32>
    %cst_139 = arith.constant 0.000000e+00 : f32
    %537 = vector.broadcast %cst_139 : f32 to vector<8x64xf32>
    %538 = arith.subf %537, %536 : vector<8x64xf32>
    %539 = math.exp %538 : vector<8x64xf32>
    %cst_140 = arith.constant 1.000000e+00 : f32
    %540 = vector.broadcast %cst_140 : f32 to vector<8x64xf32>
    %541 = arith.addf %540, %539 : vector<8x64xf32>
    %cst_141 = arith.constant 1.000000e+00 : f32
    %542 = vector.broadcast %cst_141 : f32 to vector<8x64xf32>
    %543 = arith.divf %542, %541 : vector<8x64xf32>
    %544 = vector.extract_strided_slice %524 {offsets = [0, 0], sizes = [8, 32], strides = [1, 1]} : vector<80x32xf32> to vector<8x32xf32>
    %545 = vector.extract_strided_slice %543 {offsets = [0, 0], sizes = [8, 32], strides = [1, 1]} : vector<8x64xf32> to vector<8x32xf32>
    %546 = vector.extract_strided_slice %533 {offsets = [0, 64], sizes = [8, 32], strides = [1, 1]} : vector<8x96xf32> to vector<8x32xf32>
    %547 = arith.mulf %545, %546 : vector<8x32xf32>
    %548 = arith.addf %544, %547 : vector<8x32xf32>
    %549 = math.tanh %548 : vector<8x32xf32>
    %550 = vector.extract_strided_slice %543 {offsets = [0, 32], sizes = [8, 32], strides = [1, 1]} : vector<8x64xf32> to vector<8x32xf32>
    %cst_142 = arith.constant 1.000000e+00 : f32
    %551 = vector.broadcast %cst_142 : f32 to vector<8x32xf32>
    %552 = arith.subf %551, %550 : vector<8x32xf32>
    %553 = arith.mulf %552, %549 : vector<8x32xf32>
    %554 = arith.mulf %550, %531 : vector<8x32xf32>
    %555 = arith.addf %553, %554 : vector<8x32xf32>
    %cst_143 = arith.constant dense<0.000000e+00> : vector<8x96xf32>
    %556 = tpu.matmul %555, %526, %cst_143 {dimension_numbers = #tpu.dot_dimension_numbers<[1], [0], [0], [1], [0, 0, 1, 1], [], []>} : vector<8x32xf32>, vector<32x96xf32>, vector<8x96xf32> -> vector<8x96xf32>
    %557 = arith.addf %556, %530 : vector<8x96xf32>
    %558 = vector.extract_strided_slice %523 {offsets = [8, 0], sizes = [8, 64], strides = [1, 1]} : vector<80x64xf32> to vector<8x64xf32>
    %559 = vector.extract_strided_slice %557 {offsets = [0, 0], sizes = [8, 64], strides = [1, 1]} : vector<8x96xf32> to vector<8x64xf32>
    %560 = arith.addf %558, %559 : vector<8x64xf32>
    %cst_144 = arith.constant 0.000000e+00 : f32
    %561 = vector.broadcast %cst_144 : f32 to vector<8x64xf32>
    %562 = arith.subf %561, %560 : vector<8x64xf32>
    %563 = math.exp %562 : vector<8x64xf32>
    %cst_145 = arith.constant 1.000000e+00 : f32
    %564 = vector.broadcast %cst_145 : f32 to vector<8x64xf32>
    %565 = arith.addf %564, %563 : vector<8x64xf32>
    %cst_146 = arith.constant 1.000000e+00 : f32
    %566 = vector.broadcast %cst_146 : f32 to vector<8x64xf32>
    %567 = arith.divf %566, %565 : vector<8x64xf32>
    %568 = vector.extract_strided_slice %524 {offsets = [8, 0], sizes = [8, 32], strides = [1, 1]} : vector<80x32xf32> to vector<8x32xf32>
    %569 = vector.extract_strided_slice %567 {offsets = [0, 0], sizes = [8, 32], strides = [1, 1]} : vector<8x64xf32> to vector<8x32xf32>
    %570 = vector.extract_strided_slice %557 {offsets = [0, 64], sizes = [8, 32], strides = [1, 1]} : vector<8x96xf32> to vector<8x32xf32>
    %571 = arith.mulf %569, %570 : vector<8x32xf32>
    %572 = arith.addf %568, %571 : vector<8x32xf32>
    %573 = math.tanh %572 : vector<8x32xf32>
    %574 = vector.extract_strided_slice %567 {offsets = [0, 32], sizes = [8, 32], strides = [1, 1]} : vector<8x64xf32> to vector<8x32xf32>
    %cst_147 = arith.constant 1.000000e+00 : f32
    %575 = vector.broadcast %cst_147 : f32 to vector<8x32xf32>
    %576 = arith.subf %575, %574 : vector<8x32xf32>
    %577 = arith.mulf %576, %573 : vector<8x32xf32>
    %578 = arith.mulf %574, %555 : vector<8x32xf32>
    %579 = arith.addf %577, %578 : vector<8x32xf32>
    %cst_148 = arith.constant dense<0.000000e+00> : vector<8x96xf32>
    %580 = tpu.matmul %579, %526, %cst_148 {dimension_numbers = #tpu.dot_dimension_numbers<[1], [0], [0], [1], [0, 0, 1, 1], [], []>} : vector<8x32xf32>, vector<32x96xf32>, vector<8x96xf32> -> vector<8x96xf32>
    %581 = arith.addf %580, %530 : vector<8x96xf32>
    %582 = vector.extract_strided_slice %523 {offsets = [16, 0], sizes = [8, 64], strides = [1, 1]} : vector<80x64xf32> to vector<8x64xf32>
    %583 = vector.extract_strided_slice %581 {offsets = [0, 0], sizes = [8, 64], strides = [1, 1]} : vector<8x96xf32> to vector<8x64xf32>
    %584 = arith.addf %582, %583 : vector<8x64xf32>
    %cst_149 = arith.constant 0.000000e+00 : f32
    %585 = vector.broadcast %cst_149 : f32 to vector<8x64xf32>
    %586 = arith.subf %585, %584 : vector<8x64xf32>
    %587 = math.exp %586 : vector<8x64xf32>
    %cst_150 = arith.constant 1.000000e+00 : f32
    %588 = vector.broadcast %cst_150 : f32 to vector<8x64xf32>
    %589 = arith.addf %588, %587 : vector<8x64xf32>
    %cst_151 = arith.constant 1.000000e+00 : f32
    %590 = vector.broadcast %cst_151 : f32 to vector<8x64xf32>
    %591 = arith.divf %590, %589 : vector<8x64xf32>
    %592 = vector.extract_strided_slice %524 {offsets = [16, 0], sizes = [8, 32], strides = [1, 1]} : vector<80x32xf32> to vector<8x32xf32>
    %593 = vector.extract_strided_slice %591 {offsets = [0, 0], sizes = [8, 32], strides = [1, 1]} : vector<8x64xf32> to vector<8x32xf32>
    %594 = vector.extract_strided_slice %581 {offsets = [0, 64], sizes = [8, 32], strides = [1, 1]} : vector<8x96xf32> to vector<8x32xf32>
    %595 = arith.mulf %593, %594 : vector<8x32xf32>
    %596 = arith.addf %592, %595 : vector<8x32xf32>
    %597 = math.tanh %596 : vector<8x32xf32>
    %598 = vector.extract_strided_slice %591 {offsets = [0, 32], sizes = [8, 32], strides = [1, 1]} : vector<8x64xf32> to vector<8x32xf32>
    %cst_152 = arith.constant 1.000000e+00 : f32
    %599 = vector.broadcast %cst_152 : f32 to vector<8x32xf32>
    %600 = arith.subf %599, %598 : vector<8x32xf32>
    %601 = arith.mulf %600, %597 : vector<8x32xf32>
    %602 = arith.mulf %598, %579 : vector<8x32xf32>
    %603 = arith.addf %601, %602 : vector<8x32xf32>
    %cst_153 = arith.constant dense<0.000000e+00> : vector<8x96xf32>
    %604 = tpu.matmul %603, %526, %cst_153 {dimension_numbers = #tpu.dot_dimension_numbers<[1], [0], [0], [1], [0, 0, 1, 1], [], []>} : vector<8x32xf32>, vector<32x96xf32>, vector<8x96xf32> -> vector<8x96xf32>
    %605 = arith.addf %604, %530 : vector<8x96xf32>
    %606 = vector.extract_strided_slice %523 {offsets = [24, 0], sizes = [8, 64], strides = [1, 1]} : vector<80x64xf32> to vector<8x64xf32>
    %607 = vector.extract_strided_slice %605 {offsets = [0, 0], sizes = [8, 64], strides = [1, 1]} : vector<8x96xf32> to vector<8x64xf32>
    %608 = arith.addf %606, %607 : vector<8x64xf32>
    %cst_154 = arith.constant 0.000000e+00 : f32
    %609 = vector.broadcast %cst_154 : f32 to vector<8x64xf32>
    %610 = arith.subf %609, %608 : vector<8x64xf32>
    %611 = math.exp %610 : vector<8x64xf32>
    %cst_155 = arith.constant 1.000000e+00 : f32
    %612 = vector.broadcast %cst_155 : f32 to vector<8x64xf32>
    %613 = arith.addf %612, %611 : vector<8x64xf32>
    %cst_156 = arith.constant 1.000000e+00 : f32
    %614 = vector.broadcast %cst_156 : f32 to vector<8x64xf32>
    %615 = arith.divf %614, %613 : vector<8x64xf32>
    %616 = vector.extract_strided_slice %524 {offsets = [24, 0], sizes = [8, 32], strides = [1, 1]} : vector<80x32xf32> to vector<8x32xf32>
    %617 = vector.extract_strided_slice %615 {offsets = [0, 0], sizes = [8, 32], strides = [1, 1]} : vector<8x64xf32> to vector<8x32xf32>
    %618 = vector.extract_strided_slice %605 {offsets = [0, 64], sizes = [8, 32], strides = [1, 1]} : vector<8x96xf32> to vector<8x32xf32>
    %619 = arith.mulf %617, %618 : vector<8x32xf32>
    %620 = arith.addf %616, %619 : vector<8x32xf32>
    %621 = math.tanh %620 : vector<8x32xf32>
    %622 = vector.extract_strided_slice %615 {offsets = [0, 32], sizes = [8, 32], strides = [1, 1]} : vector<8x64xf32> to vector<8x32xf32>
    %cst_157 = arith.constant 1.000000e+00 : f32
    %623 = vector.broadcast %cst_157 : f32 to vector<8x32xf32>
    %624 = arith.subf %623, %622 : vector<8x32xf32>
    %625 = arith.mulf %624, %621 : vector<8x32xf32>
    %626 = arith.mulf %622, %603 : vector<8x32xf32>
    %627 = arith.addf %625, %626 : vector<8x32xf32>
    %cst_158 = arith.constant dense<0.000000e+00> : vector<8x96xf32>
    %628 = tpu.matmul %627, %526, %cst_158 {dimension_numbers = #tpu.dot_dimension_numbers<[1], [0], [0], [1], [0, 0, 1, 1], [], []>} : vector<8x32xf32>, vector<32x96xf32>, vector<8x96xf32> -> vector<8x96xf32>
    %629 = arith.addf %628, %530 : vector<8x96xf32>
    %630 = vector.extract_strided_slice %523 {offsets = [32, 0], sizes = [8, 64], strides = [1, 1]} : vector<80x64xf32> to vector<8x64xf32>
    %631 = vector.extract_strided_slice %629 {offsets = [0, 0], sizes = [8, 64], strides = [1, 1]} : vector<8x96xf32> to vector<8x64xf32>
    %632 = arith.addf %630, %631 : vector<8x64xf32>
    %cst_159 = arith.constant 0.000000e+00 : f32
    %633 = vector.broadcast %cst_159 : f32 to vector<8x64xf32>
    %634 = arith.subf %633, %632 : vector<8x64xf32>
    %635 = math.exp %634 : vector<8x64xf32>
    %cst_160 = arith.constant 1.000000e+00 : f32
    %636 = vector.broadcast %cst_160 : f32 to vector<8x64xf32>
    %637 = arith.addf %636, %635 : vector<8x64xf32>
    %cst_161 = arith.constant 1.000000e+00 : f32
    %638 = vector.broadcast %cst_161 : f32 to vector<8x64xf32>
    %639 = arith.divf %638, %637 : vector<8x64xf32>
    %640 = vector.extract_strided_slice %524 {offsets = [32, 0], sizes = [8, 32], strides = [1, 1]} : vector<80x32xf32> to vector<8x32xf32>
    %641 = vector.extract_strided_slice %639 {offsets = [0, 0], sizes = [8, 32], strides = [1, 1]} : vector<8x64xf32> to vector<8x32xf32>
    %642 = vector.extract_strided_slice %629 {offsets = [0, 64], sizes = [8, 32], strides = [1, 1]} : vector<8x96xf32> to vector<8x32xf32>
    %643 = arith.mulf %641, %642 : vector<8x32xf32>
    %644 = arith.addf %640, %643 : vector<8x32xf32>
    %645 = math.tanh %644 : vector<8x32xf32>
    %646 = vector.extract_strided_slice %639 {offsets = [0, 32], sizes = [8, 32], strides = [1, 1]} : vector<8x64xf32> to vector<8x32xf32>
    %cst_162 = arith.constant 1.000000e+00 : f32
    %647 = vector.broadcast %cst_162 : f32 to vector<8x32xf32>
    %648 = arith.subf %647, %646 : vector<8x32xf32>
    %649 = arith.mulf %648, %645 : vector<8x32xf32>
    %650 = arith.mulf %646, %627 : vector<8x32xf32>
    %651 = arith.addf %649, %650 : vector<8x32xf32>
    %cst_163 = arith.constant dense<0.000000e+00> : vector<8x96xf32>
    %652 = tpu.matmul %651, %526, %cst_163 {dimension_numbers = #tpu.dot_dimension_numbers<[1], [0], [0], [1], [0, 0, 1, 1], [], []>} : vector<8x32xf32>, vector<32x96xf32>, vector<8x96xf32> -> vector<8x96xf32>
    %653 = arith.addf %652, %530 : vector<8x96xf32>
    %654 = vector.extract_strided_slice %523 {offsets = [40, 0], sizes = [8, 64], strides = [1, 1]} : vector<80x64xf32> to vector<8x64xf32>
    %655 = vector.extract_strided_slice %653 {offsets = [0, 0], sizes = [8, 64], strides = [1, 1]} : vector<8x96xf32> to vector<8x64xf32>
    %656 = arith.addf %654, %655 : vector<8x64xf32>
    %cst_164 = arith.constant 0.000000e+00 : f32
    %657 = vector.broadcast %cst_164 : f32 to vector<8x64xf32>
    %658 = arith.subf %657, %656 : vector<8x64xf32>
    %659 = math.exp %658 : vector<8x64xf32>
    %cst_165 = arith.constant 1.000000e+00 : f32
    %660 = vector.broadcast %cst_165 : f32 to vector<8x64xf32>
    %661 = arith.addf %660, %659 : vector<8x64xf32>
    %cst_166 = arith.constant 1.000000e+00 : f32
    %662 = vector.broadcast %cst_166 : f32 to vector<8x64xf32>
    %663 = arith.divf %662, %661 : vector<8x64xf32>
    %664 = vector.extract_strided_slice %524 {offsets = [40, 0], sizes = [8, 32], strides = [1, 1]} : vector<80x32xf32> to vector<8x32xf32>
    %665 = vector.extract_strided_slice %663 {offsets = [0, 0], sizes = [8, 32], strides = [1, 1]} : vector<8x64xf32> to vector<8x32xf32>
    %666 = vector.extract_strided_slice %653 {offsets = [0, 64], sizes = [8, 32], strides = [1, 1]} : vector<8x96xf32> to vector<8x32xf32>
    %667 = arith.mulf %665, %666 : vector<8x32xf32>
    %668 = arith.addf %664, %667 : vector<8x32xf32>
    %669 = math.tanh %668 : vector<8x32xf32>
    %670 = vector.extract_strided_slice %663 {offsets = [0, 32], sizes = [8, 32], strides = [1, 1]} : vector<8x64xf32> to vector<8x32xf32>
    %cst_167 = arith.constant 1.000000e+00 : f32
    %671 = vector.broadcast %cst_167 : f32 to vector<8x32xf32>
    %672 = arith.subf %671, %670 : vector<8x32xf32>
    %673 = arith.mulf %672, %669 : vector<8x32xf32>
    %674 = arith.mulf %670, %651 : vector<8x32xf32>
    %675 = arith.addf %673, %674 : vector<8x32xf32>
    %cst_168 = arith.constant dense<0.000000e+00> : vector<8x96xf32>
    %676 = tpu.matmul %675, %526, %cst_168 {dimension_numbers = #tpu.dot_dimension_numbers<[1], [0], [0], [1], [0, 0, 1, 1], [], []>} : vector<8x32xf32>, vector<32x96xf32>, vector<8x96xf32> -> vector<8x96xf32>
    %677 = arith.addf %676, %530 : vector<8x96xf32>
    %678 = vector.extract_strided_slice %523 {offsets = [48, 0], sizes = [8, 64], strides = [1, 1]} : vector<80x64xf32> to vector<8x64xf32>
    %679 = vector.extract_strided_slice %677 {offsets = [0, 0], sizes = [8, 64], strides = [1, 1]} : vector<8x96xf32> to vector<8x64xf32>
    %680 = arith.addf %678, %679 : vector<8x64xf32>
    %cst_169 = arith.constant 0.000000e+00 : f32
    %681 = vector.broadcast %cst_169 : f32 to vector<8x64xf32>
    %682 = arith.subf %681, %680 : vector<8x64xf32>
    %683 = math.exp %682 : vector<8x64xf32>
    %cst_170 = arith.constant 1.000000e+00 : f32
    %684 = vector.broadcast %cst_170 : f32 to vector<8x64xf32>
    %685 = arith.addf %684, %683 : vector<8x64xf32>
    %cst_171 = arith.constant 1.000000e+00 : f32
    %686 = vector.broadcast %cst_171 : f32 to vector<8x64xf32>
    %687 = arith.divf %686, %685 : vector<8x64xf32>
    %688 = vector.extract_strided_slice %524 {offsets = [48, 0], sizes = [8, 32], strides = [1, 1]} : vector<80x32xf32> to vector<8x32xf32>
    %689 = vector.extract_strided_slice %687 {offsets = [0, 0], sizes = [8, 32], strides = [1, 1]} : vector<8x64xf32> to vector<8x32xf32>
    %690 = vector.extract_strided_slice %677 {offsets = [0, 64], sizes = [8, 32], strides = [1, 1]} : vector<8x96xf32> to vector<8x32xf32>
    %691 = arith.mulf %689, %690 : vector<8x32xf32>
    %692 = arith.addf %688, %691 : vector<8x32xf32>
    %693 = math.tanh %692 : vector<8x32xf32>
    %694 = vector.extract_strided_slice %687 {offsets = [0, 32], sizes = [8, 32], strides = [1, 1]} : vector<8x64xf32> to vector<8x32xf32>
    %cst_172 = arith.constant 1.000000e+00 : f32
    %695 = vector.broadcast %cst_172 : f32 to vector<8x32xf32>
    %696 = arith.subf %695, %694 : vector<8x32xf32>
    %697 = arith.mulf %696, %693 : vector<8x32xf32>
    %698 = arith.mulf %694, %675 : vector<8x32xf32>
    %699 = arith.addf %697, %698 : vector<8x32xf32>
    %cst_173 = arith.constant dense<0.000000e+00> : vector<8x96xf32>
    %700 = tpu.matmul %699, %526, %cst_173 {dimension_numbers = #tpu.dot_dimension_numbers<[1], [0], [0], [1], [0, 0, 1, 1], [], []>} : vector<8x32xf32>, vector<32x96xf32>, vector<8x96xf32> -> vector<8x96xf32>
    %701 = arith.addf %700, %530 : vector<8x96xf32>
    %702 = vector.extract_strided_slice %523 {offsets = [56, 0], sizes = [8, 64], strides = [1, 1]} : vector<80x64xf32> to vector<8x64xf32>
    %703 = vector.extract_strided_slice %701 {offsets = [0, 0], sizes = [8, 64], strides = [1, 1]} : vector<8x96xf32> to vector<8x64xf32>
    %704 = arith.addf %702, %703 : vector<8x64xf32>
    %cst_174 = arith.constant 0.000000e+00 : f32
    %705 = vector.broadcast %cst_174 : f32 to vector<8x64xf32>
    %706 = arith.subf %705, %704 : vector<8x64xf32>
    %707 = math.exp %706 : vector<8x64xf32>
    %cst_175 = arith.constant 1.000000e+00 : f32
    %708 = vector.broadcast %cst_175 : f32 to vector<8x64xf32>
    %709 = arith.addf %708, %707 : vector<8x64xf32>
    %cst_176 = arith.constant 1.000000e+00 : f32
    %710 = vector.broadcast %cst_176 : f32 to vector<8x64xf32>
    %711 = arith.divf %710, %709 : vector<8x64xf32>
    %712 = vector.extract_strided_slice %524 {offsets = [56, 0], sizes = [8, 32], strides = [1, 1]} : vector<80x32xf32> to vector<8x32xf32>
    %713 = vector.extract_strided_slice %711 {offsets = [0, 0], sizes = [8, 32], strides = [1, 1]} : vector<8x64xf32> to vector<8x32xf32>
    %714 = vector.extract_strided_slice %701 {offsets = [0, 64], sizes = [8, 32], strides = [1, 1]} : vector<8x96xf32> to vector<8x32xf32>
    %715 = arith.mulf %713, %714 : vector<8x32xf32>
    %716 = arith.addf %712, %715 : vector<8x32xf32>
    %717 = math.tanh %716 : vector<8x32xf32>
    %718 = vector.extract_strided_slice %711 {offsets = [0, 32], sizes = [8, 32], strides = [1, 1]} : vector<8x64xf32> to vector<8x32xf32>
    %cst_177 = arith.constant 1.000000e+00 : f32
    %719 = vector.broadcast %cst_177 : f32 to vector<8x32xf32>
    %720 = arith.subf %719, %718 : vector<8x32xf32>
    %721 = arith.mulf %720, %717 : vector<8x32xf32>
    %722 = arith.mulf %718, %699 : vector<8x32xf32>
    %723 = arith.addf %721, %722 : vector<8x32xf32>
    %cst_178 = arith.constant dense<0.000000e+00> : vector<8x96xf32>
    %724 = tpu.matmul %723, %526, %cst_178 {dimension_numbers = #tpu.dot_dimension_numbers<[1], [0], [0], [1], [0, 0, 1, 1], [], []>} : vector<8x32xf32>, vector<32x96xf32>, vector<8x96xf32> -> vector<8x96xf32>
    %725 = arith.addf %724, %530 : vector<8x96xf32>
    %726 = vector.extract_strided_slice %523 {offsets = [64, 0], sizes = [8, 64], strides = [1, 1]} : vector<80x64xf32> to vector<8x64xf32>
    %727 = vector.extract_strided_slice %725 {offsets = [0, 0], sizes = [8, 64], strides = [1, 1]} : vector<8x96xf32> to vector<8x64xf32>
    %728 = arith.addf %726, %727 : vector<8x64xf32>
    %cst_179 = arith.constant 0.000000e+00 : f32
    %729 = vector.broadcast %cst_179 : f32 to vector<8x64xf32>
    %730 = arith.subf %729, %728 : vector<8x64xf32>
    %731 = math.exp %730 : vector<8x64xf32>
    %cst_180 = arith.constant 1.000000e+00 : f32
    %732 = vector.broadcast %cst_180 : f32 to vector<8x64xf32>
    %733 = arith.addf %732, %731 : vector<8x64xf32>
    %cst_181 = arith.constant 1.000000e+00 : f32
    %734 = vector.broadcast %cst_181 : f32 to vector<8x64xf32>
    %735 = arith.divf %734, %733 : vector<8x64xf32>
    %736 = vector.extract_strided_slice %524 {offsets = [64, 0], sizes = [8, 32], strides = [1, 1]} : vector<80x32xf32> to vector<8x32xf32>
    %737 = vector.extract_strided_slice %735 {offsets = [0, 0], sizes = [8, 32], strides = [1, 1]} : vector<8x64xf32> to vector<8x32xf32>
    %738 = vector.extract_strided_slice %725 {offsets = [0, 64], sizes = [8, 32], strides = [1, 1]} : vector<8x96xf32> to vector<8x32xf32>
    %739 = arith.mulf %737, %738 : vector<8x32xf32>
    %740 = arith.addf %736, %739 : vector<8x32xf32>
    %741 = math.tanh %740 : vector<8x32xf32>
    %742 = vector.extract_strided_slice %735 {offsets = [0, 32], sizes = [8, 32], strides = [1, 1]} : vector<8x64xf32> to vector<8x32xf32>
    %cst_182 = arith.constant 1.000000e+00 : f32
    %743 = vector.broadcast %cst_182 : f32 to vector<8x32xf32>
    %744 = arith.subf %743, %742 : vector<8x32xf32>
    %745 = arith.mulf %744, %741 : vector<8x32xf32>
    %746 = arith.mulf %742, %723 : vector<8x32xf32>
    %747 = arith.addf %745, %746 : vector<8x32xf32>
    %cst_183 = arith.constant dense<0.000000e+00> : vector<8x96xf32>
    %748 = tpu.matmul %747, %526, %cst_183 {dimension_numbers = #tpu.dot_dimension_numbers<[1], [0], [0], [1], [0, 0, 1, 1], [], []>} : vector<8x32xf32>, vector<32x96xf32>, vector<8x96xf32> -> vector<8x96xf32>
    %749 = arith.addf %748, %530 : vector<8x96xf32>
    %750 = vector.extract_strided_slice %523 {offsets = [72, 0], sizes = [8, 64], strides = [1, 1]} : vector<80x64xf32> to vector<8x64xf32>
    %751 = vector.extract_strided_slice %749 {offsets = [0, 0], sizes = [8, 64], strides = [1, 1]} : vector<8x96xf32> to vector<8x64xf32>
    %752 = arith.addf %750, %751 : vector<8x64xf32>
    %cst_184 = arith.constant 0.000000e+00 : f32
    %753 = vector.broadcast %cst_184 : f32 to vector<8x64xf32>
    %754 = arith.subf %753, %752 : vector<8x64xf32>
    %755 = math.exp %754 : vector<8x64xf32>
    %cst_185 = arith.constant 1.000000e+00 : f32
    %756 = vector.broadcast %cst_185 : f32 to vector<8x64xf32>
    %757 = arith.addf %756, %755 : vector<8x64xf32>
    %cst_186 = arith.constant 1.000000e+00 : f32
    %758 = vector.broadcast %cst_186 : f32 to vector<8x64xf32>
    %759 = arith.divf %758, %757 : vector<8x64xf32>
    %760 = vector.extract_strided_slice %524 {offsets = [72, 0], sizes = [8, 32], strides = [1, 1]} : vector<80x32xf32> to vector<8x32xf32>
    %761 = vector.extract_strided_slice %759 {offsets = [0, 0], sizes = [8, 32], strides = [1, 1]} : vector<8x64xf32> to vector<8x32xf32>
    %762 = vector.extract_strided_slice %749 {offsets = [0, 64], sizes = [8, 32], strides = [1, 1]} : vector<8x96xf32> to vector<8x32xf32>
    %763 = arith.mulf %761, %762 : vector<8x32xf32>
    %764 = arith.addf %760, %763 : vector<8x32xf32>
    %765 = math.tanh %764 : vector<8x32xf32>
    %766 = vector.extract_strided_slice %759 {offsets = [0, 32], sizes = [8, 32], strides = [1, 1]} : vector<8x64xf32> to vector<8x32xf32>
    %cst_187 = arith.constant 1.000000e+00 : f32
    %767 = vector.broadcast %cst_187 : f32 to vector<8x32xf32>
    %768 = arith.subf %767, %766 : vector<8x32xf32>
    %769 = arith.mulf %768, %765 : vector<8x32xf32>
    %770 = arith.mulf %766, %747 : vector<8x32xf32>
    %771 = arith.addf %769, %770 : vector<8x32xf32>
    %772 = tpu.concatenate %555, %579, %603, %627, %651, %675, %699, %723, %747, %771 in 0 : vector<8x32xf32>, vector<8x32xf32>, vector<8x32xf32>, vector<8x32xf32>, vector<8x32xf32>, vector<8x32xf32>, vector<8x32xf32>, vector<8x32xf32>, vector<8x32xf32>, vector<8x32xf32> -> vector<80x32xf32>
    %c2_188 = arith.constant 2 : index
    %c0_189 = arith.constant 0 : index
    %c0_190 = arith.constant 0 : index
    %773 = vector.load %arg2[%c2_188, %c0_189, %c0_190] : memref<3x32x96xf32, #tpu.memory_space<vmem>>, vector<1x32x96xf32>
    %774 = vector.shape_cast %773 : vector<1x32x96xf32> to vector<32x96xf32>
    %cst_191 = arith.constant dense<0.000000e+00> : vector<80x96xf32>
    %775 = tpu.matmul %772, %774, %cst_191 {dimension_numbers = #tpu.dot_dimension_numbers<[1], [0], [0], [1], [0, 0, 1, 1], [], []>} : vector<80x32xf32>, vector<32x96xf32>, vector<80x96xf32> -> vector<80x96xf32>
    %c3 = arith.constant 3 : index
    %c0_192 = arith.constant 0 : index
    %c0_193 = arith.constant 0 : index
    %776 = vector.load %arg4[%c3, %c0_192, %c0_193] : memref<4x1x96xf32, #tpu.memory_space<vmem>>, vector<1x1x96xf32>
    %777 = vector.shape_cast %776 : vector<1x1x96xf32> to vector<1x96xf32>
    %778 = vector.broadcast %777 : vector<1x96xf32> to vector<80x96xf32>
    %779 = arith.addf %775, %778 : vector<80x96xf32>
    %780 = vector.extract_strided_slice %779 {offsets = [0, 0], sizes = [80, 64], strides = [1, 1]} : vector<80x96xf32> to vector<80x64xf32>
    %781 = vector.extract_strided_slice %779 {offsets = [0, 64], sizes = [80, 32], strides = [1, 1]} : vector<80x96xf32> to vector<80x32xf32>
    %c3_194 = arith.constant 3 : index
    %c0_195 = arith.constant 0 : index
    %c0_196 = arith.constant 0 : index
    %782 = vector.load %arg3[%c3_194, %c0_195, %c0_196] : memref<4x32x96xf32, #tpu.memory_space<vmem>>, vector<1x32x96xf32>
    %783 = vector.shape_cast %782 : vector<1x32x96xf32> to vector<32x96xf32>
    %c3_197 = arith.constant 3 : index
    %c0_198 = arith.constant 0 : index
    %c0_199 = arith.constant 0 : index
    %784 = vector.load %arg5[%c3_197, %c0_198, %c0_199] : memref<4x1x96xf32, #tpu.memory_space<vmem>>, vector<1x1x96xf32>
    %785 = vector.shape_cast %784 : vector<1x1x96xf32> to vector<1x96xf32>
    %786 = vector.shape_cast %785 : vector<1x96xf32> to vector<1x96xf32>
    %787 = vector.broadcast %786 : vector<1x96xf32> to vector<8x96xf32>
    %cst_200 = arith.constant 0.000000e+00 : f32
    %788 = vector.broadcast %cst_200 : f32 to vector<8x32xf32>
    %cst_201 = arith.constant dense<0.000000e+00> : vector<8x96xf32>
    %789 = tpu.matmul %788, %783, %cst_201 {dimension_numbers = #tpu.dot_dimension_numbers<[1], [0], [0], [1], [0, 0, 1, 1], [], []>} : vector<8x32xf32>, vector<32x96xf32>, vector<8x96xf32> -> vector<8x96xf32>
    %790 = arith.addf %789, %787 : vector<8x96xf32>
    %791 = vector.extract_strided_slice %780 {offsets = [0, 0], sizes = [8, 64], strides = [1, 1]} : vector<80x64xf32> to vector<8x64xf32>
    %792 = vector.extract_strided_slice %790 {offsets = [0, 0], sizes = [8, 64], strides = [1, 1]} : vector<8x96xf32> to vector<8x64xf32>
    %793 = arith.addf %791, %792 : vector<8x64xf32>
    %cst_202 = arith.constant 0.000000e+00 : f32
    %794 = vector.broadcast %cst_202 : f32 to vector<8x64xf32>
    %795 = arith.subf %794, %793 : vector<8x64xf32>
    %796 = math.exp %795 : vector<8x64xf32>
    %cst_203 = arith.constant 1.000000e+00 : f32
    %797 = vector.broadcast %cst_203 : f32 to vector<8x64xf32>
    %798 = arith.addf %797, %796 : vector<8x64xf32>
    %cst_204 = arith.constant 1.000000e+00 : f32
    %799 = vector.broadcast %cst_204 : f32 to vector<8x64xf32>
    %800 = arith.divf %799, %798 : vector<8x64xf32>
    %801 = vector.extract_strided_slice %781 {offsets = [0, 0], sizes = [8, 32], strides = [1, 1]} : vector<80x32xf32> to vector<8x32xf32>
    %802 = vector.extract_strided_slice %800 {offsets = [0, 0], sizes = [8, 32], strides = [1, 1]} : vector<8x64xf32> to vector<8x32xf32>
    %803 = vector.extract_strided_slice %790 {offsets = [0, 64], sizes = [8, 32], strides = [1, 1]} : vector<8x96xf32> to vector<8x32xf32>
    %804 = arith.mulf %802, %803 : vector<8x32xf32>
    %805 = arith.addf %801, %804 : vector<8x32xf32>
    %806 = math.tanh %805 : vector<8x32xf32>
    %807 = vector.extract_strided_slice %800 {offsets = [0, 32], sizes = [8, 32], strides = [1, 1]} : vector<8x64xf32> to vector<8x32xf32>
    %cst_205 = arith.constant 1.000000e+00 : f32
    %808 = vector.broadcast %cst_205 : f32 to vector<8x32xf32>
    %809 = arith.subf %808, %807 : vector<8x32xf32>
    %810 = arith.mulf %809, %806 : vector<8x32xf32>
    %811 = arith.mulf %807, %788 : vector<8x32xf32>
    %812 = arith.addf %810, %811 : vector<8x32xf32>
    %cst_206 = arith.constant dense<0.000000e+00> : vector<8x96xf32>
    %813 = tpu.matmul %812, %783, %cst_206 {dimension_numbers = #tpu.dot_dimension_numbers<[1], [0], [0], [1], [0, 0, 1, 1], [], []>} : vector<8x32xf32>, vector<32x96xf32>, vector<8x96xf32> -> vector<8x96xf32>
    %814 = arith.addf %813, %787 : vector<8x96xf32>
    %815 = vector.extract_strided_slice %780 {offsets = [8, 0], sizes = [8, 64], strides = [1, 1]} : vector<80x64xf32> to vector<8x64xf32>
    %816 = vector.extract_strided_slice %814 {offsets = [0, 0], sizes = [8, 64], strides = [1, 1]} : vector<8x96xf32> to vector<8x64xf32>
    %817 = arith.addf %815, %816 : vector<8x64xf32>
    %cst_207 = arith.constant 0.000000e+00 : f32
    %818 = vector.broadcast %cst_207 : f32 to vector<8x64xf32>
    %819 = arith.subf %818, %817 : vector<8x64xf32>
    %820 = math.exp %819 : vector<8x64xf32>
    %cst_208 = arith.constant 1.000000e+00 : f32
    %821 = vector.broadcast %cst_208 : f32 to vector<8x64xf32>
    %822 = arith.addf %821, %820 : vector<8x64xf32>
    %cst_209 = arith.constant 1.000000e+00 : f32
    %823 = vector.broadcast %cst_209 : f32 to vector<8x64xf32>
    %824 = arith.divf %823, %822 : vector<8x64xf32>
    %825 = vector.extract_strided_slice %781 {offsets = [8, 0], sizes = [8, 32], strides = [1, 1]} : vector<80x32xf32> to vector<8x32xf32>
    %826 = vector.extract_strided_slice %824 {offsets = [0, 0], sizes = [8, 32], strides = [1, 1]} : vector<8x64xf32> to vector<8x32xf32>
    %827 = vector.extract_strided_slice %814 {offsets = [0, 64], sizes = [8, 32], strides = [1, 1]} : vector<8x96xf32> to vector<8x32xf32>
    %828 = arith.mulf %826, %827 : vector<8x32xf32>
    %829 = arith.addf %825, %828 : vector<8x32xf32>
    %830 = math.tanh %829 : vector<8x32xf32>
    %831 = vector.extract_strided_slice %824 {offsets = [0, 32], sizes = [8, 32], strides = [1, 1]} : vector<8x64xf32> to vector<8x32xf32>
    %cst_210 = arith.constant 1.000000e+00 : f32
    %832 = vector.broadcast %cst_210 : f32 to vector<8x32xf32>
    %833 = arith.subf %832, %831 : vector<8x32xf32>
    %834 = arith.mulf %833, %830 : vector<8x32xf32>
    %835 = arith.mulf %831, %812 : vector<8x32xf32>
    %836 = arith.addf %834, %835 : vector<8x32xf32>
    %cst_211 = arith.constant dense<0.000000e+00> : vector<8x96xf32>
    %837 = tpu.matmul %836, %783, %cst_211 {dimension_numbers = #tpu.dot_dimension_numbers<[1], [0], [0], [1], [0, 0, 1, 1], [], []>} : vector<8x32xf32>, vector<32x96xf32>, vector<8x96xf32> -> vector<8x96xf32>
    %838 = arith.addf %837, %787 : vector<8x96xf32>
    %839 = vector.extract_strided_slice %780 {offsets = [16, 0], sizes = [8, 64], strides = [1, 1]} : vector<80x64xf32> to vector<8x64xf32>
    %840 = vector.extract_strided_slice %838 {offsets = [0, 0], sizes = [8, 64], strides = [1, 1]} : vector<8x96xf32> to vector<8x64xf32>
    %841 = arith.addf %839, %840 : vector<8x64xf32>
    %cst_212 = arith.constant 0.000000e+00 : f32
    %842 = vector.broadcast %cst_212 : f32 to vector<8x64xf32>
    %843 = arith.subf %842, %841 : vector<8x64xf32>
    %844 = math.exp %843 : vector<8x64xf32>
    %cst_213 = arith.constant 1.000000e+00 : f32
    %845 = vector.broadcast %cst_213 : f32 to vector<8x64xf32>
    %846 = arith.addf %845, %844 : vector<8x64xf32>
    %cst_214 = arith.constant 1.000000e+00 : f32
    %847 = vector.broadcast %cst_214 : f32 to vector<8x64xf32>
    %848 = arith.divf %847, %846 : vector<8x64xf32>
    %849 = vector.extract_strided_slice %781 {offsets = [16, 0], sizes = [8, 32], strides = [1, 1]} : vector<80x32xf32> to vector<8x32xf32>
    %850 = vector.extract_strided_slice %848 {offsets = [0, 0], sizes = [8, 32], strides = [1, 1]} : vector<8x64xf32> to vector<8x32xf32>
    %851 = vector.extract_strided_slice %838 {offsets = [0, 64], sizes = [8, 32], strides = [1, 1]} : vector<8x96xf32> to vector<8x32xf32>
    %852 = arith.mulf %850, %851 : vector<8x32xf32>
    %853 = arith.addf %849, %852 : vector<8x32xf32>
    %854 = math.tanh %853 : vector<8x32xf32>
    %855 = vector.extract_strided_slice %848 {offsets = [0, 32], sizes = [8, 32], strides = [1, 1]} : vector<8x64xf32> to vector<8x32xf32>
    %cst_215 = arith.constant 1.000000e+00 : f32
    %856 = vector.broadcast %cst_215 : f32 to vector<8x32xf32>
    %857 = arith.subf %856, %855 : vector<8x32xf32>
    %858 = arith.mulf %857, %854 : vector<8x32xf32>
    %859 = arith.mulf %855, %836 : vector<8x32xf32>
    %860 = arith.addf %858, %859 : vector<8x32xf32>
    %cst_216 = arith.constant dense<0.000000e+00> : vector<8x96xf32>
    %861 = tpu.matmul %860, %783, %cst_216 {dimension_numbers = #tpu.dot_dimension_numbers<[1], [0], [0], [1], [0, 0, 1, 1], [], []>} : vector<8x32xf32>, vector<32x96xf32>, vector<8x96xf32> -> vector<8x96xf32>
    %862 = arith.addf %861, %787 : vector<8x96xf32>
    %863 = vector.extract_strided_slice %780 {offsets = [24, 0], sizes = [8, 64], strides = [1, 1]} : vector<80x64xf32> to vector<8x64xf32>
    %864 = vector.extract_strided_slice %862 {offsets = [0, 0], sizes = [8, 64], strides = [1, 1]} : vector<8x96xf32> to vector<8x64xf32>
    %865 = arith.addf %863, %864 : vector<8x64xf32>
    %cst_217 = arith.constant 0.000000e+00 : f32
    %866 = vector.broadcast %cst_217 : f32 to vector<8x64xf32>
    %867 = arith.subf %866, %865 : vector<8x64xf32>
    %868 = math.exp %867 : vector<8x64xf32>
    %cst_218 = arith.constant 1.000000e+00 : f32
    %869 = vector.broadcast %cst_218 : f32 to vector<8x64xf32>
    %870 = arith.addf %869, %868 : vector<8x64xf32>
    %cst_219 = arith.constant 1.000000e+00 : f32
    %871 = vector.broadcast %cst_219 : f32 to vector<8x64xf32>
    %872 = arith.divf %871, %870 : vector<8x64xf32>
    %873 = vector.extract_strided_slice %781 {offsets = [24, 0], sizes = [8, 32], strides = [1, 1]} : vector<80x32xf32> to vector<8x32xf32>
    %874 = vector.extract_strided_slice %872 {offsets = [0, 0], sizes = [8, 32], strides = [1, 1]} : vector<8x64xf32> to vector<8x32xf32>
    %875 = vector.extract_strided_slice %862 {offsets = [0, 64], sizes = [8, 32], strides = [1, 1]} : vector<8x96xf32> to vector<8x32xf32>
    %876 = arith.mulf %874, %875 : vector<8x32xf32>
    %877 = arith.addf %873, %876 : vector<8x32xf32>
    %878 = math.tanh %877 : vector<8x32xf32>
    %879 = vector.extract_strided_slice %872 {offsets = [0, 32], sizes = [8, 32], strides = [1, 1]} : vector<8x64xf32> to vector<8x32xf32>
    %cst_220 = arith.constant 1.000000e+00 : f32
    %880 = vector.broadcast %cst_220 : f32 to vector<8x32xf32>
    %881 = arith.subf %880, %879 : vector<8x32xf32>
    %882 = arith.mulf %881, %878 : vector<8x32xf32>
    %883 = arith.mulf %879, %860 : vector<8x32xf32>
    %884 = arith.addf %882, %883 : vector<8x32xf32>
    %cst_221 = arith.constant dense<0.000000e+00> : vector<8x96xf32>
    %885 = tpu.matmul %884, %783, %cst_221 {dimension_numbers = #tpu.dot_dimension_numbers<[1], [0], [0], [1], [0, 0, 1, 1], [], []>} : vector<8x32xf32>, vector<32x96xf32>, vector<8x96xf32> -> vector<8x96xf32>
    %886 = arith.addf %885, %787 : vector<8x96xf32>
    %887 = vector.extract_strided_slice %780 {offsets = [32, 0], sizes = [8, 64], strides = [1, 1]} : vector<80x64xf32> to vector<8x64xf32>
    %888 = vector.extract_strided_slice %886 {offsets = [0, 0], sizes = [8, 64], strides = [1, 1]} : vector<8x96xf32> to vector<8x64xf32>
    %889 = arith.addf %887, %888 : vector<8x64xf32>
    %cst_222 = arith.constant 0.000000e+00 : f32
    %890 = vector.broadcast %cst_222 : f32 to vector<8x64xf32>
    %891 = arith.subf %890, %889 : vector<8x64xf32>
    %892 = math.exp %891 : vector<8x64xf32>
    %cst_223 = arith.constant 1.000000e+00 : f32
    %893 = vector.broadcast %cst_223 : f32 to vector<8x64xf32>
    %894 = arith.addf %893, %892 : vector<8x64xf32>
    %cst_224 = arith.constant 1.000000e+00 : f32
    %895 = vector.broadcast %cst_224 : f32 to vector<8x64xf32>
    %896 = arith.divf %895, %894 : vector<8x64xf32>
    %897 = vector.extract_strided_slice %781 {offsets = [32, 0], sizes = [8, 32], strides = [1, 1]} : vector<80x32xf32> to vector<8x32xf32>
    %898 = vector.extract_strided_slice %896 {offsets = [0, 0], sizes = [8, 32], strides = [1, 1]} : vector<8x64xf32> to vector<8x32xf32>
    %899 = vector.extract_strided_slice %886 {offsets = [0, 64], sizes = [8, 32], strides = [1, 1]} : vector<8x96xf32> to vector<8x32xf32>
    %900 = arith.mulf %898, %899 : vector<8x32xf32>
    %901 = arith.addf %897, %900 : vector<8x32xf32>
    %902 = math.tanh %901 : vector<8x32xf32>
    %903 = vector.extract_strided_slice %896 {offsets = [0, 32], sizes = [8, 32], strides = [1, 1]} : vector<8x64xf32> to vector<8x32xf32>
    %cst_225 = arith.constant 1.000000e+00 : f32
    %904 = vector.broadcast %cst_225 : f32 to vector<8x32xf32>
    %905 = arith.subf %904, %903 : vector<8x32xf32>
    %906 = arith.mulf %905, %902 : vector<8x32xf32>
    %907 = arith.mulf %903, %884 : vector<8x32xf32>
    %908 = arith.addf %906, %907 : vector<8x32xf32>
    %cst_226 = arith.constant dense<0.000000e+00> : vector<8x96xf32>
    %909 = tpu.matmul %908, %783, %cst_226 {dimension_numbers = #tpu.dot_dimension_numbers<[1], [0], [0], [1], [0, 0, 1, 1], [], []>} : vector<8x32xf32>, vector<32x96xf32>, vector<8x96xf32> -> vector<8x96xf32>
    %910 = arith.addf %909, %787 : vector<8x96xf32>
    %911 = vector.extract_strided_slice %780 {offsets = [40, 0], sizes = [8, 64], strides = [1, 1]} : vector<80x64xf32> to vector<8x64xf32>
    %912 = vector.extract_strided_slice %910 {offsets = [0, 0], sizes = [8, 64], strides = [1, 1]} : vector<8x96xf32> to vector<8x64xf32>
    %913 = arith.addf %911, %912 : vector<8x64xf32>
    %cst_227 = arith.constant 0.000000e+00 : f32
    %914 = vector.broadcast %cst_227 : f32 to vector<8x64xf32>
    %915 = arith.subf %914, %913 : vector<8x64xf32>
    %916 = math.exp %915 : vector<8x64xf32>
    %cst_228 = arith.constant 1.000000e+00 : f32
    %917 = vector.broadcast %cst_228 : f32 to vector<8x64xf32>
    %918 = arith.addf %917, %916 : vector<8x64xf32>
    %cst_229 = arith.constant 1.000000e+00 : f32
    %919 = vector.broadcast %cst_229 : f32 to vector<8x64xf32>
    %920 = arith.divf %919, %918 : vector<8x64xf32>
    %921 = vector.extract_strided_slice %781 {offsets = [40, 0], sizes = [8, 32], strides = [1, 1]} : vector<80x32xf32> to vector<8x32xf32>
    %922 = vector.extract_strided_slice %920 {offsets = [0, 0], sizes = [8, 32], strides = [1, 1]} : vector<8x64xf32> to vector<8x32xf32>
    %923 = vector.extract_strided_slice %910 {offsets = [0, 64], sizes = [8, 32], strides = [1, 1]} : vector<8x96xf32> to vector<8x32xf32>
    %924 = arith.mulf %922, %923 : vector<8x32xf32>
    %925 = arith.addf %921, %924 : vector<8x32xf32>
    %926 = math.tanh %925 : vector<8x32xf32>
    %927 = vector.extract_strided_slice %920 {offsets = [0, 32], sizes = [8, 32], strides = [1, 1]} : vector<8x64xf32> to vector<8x32xf32>
    %cst_230 = arith.constant 1.000000e+00 : f32
    %928 = vector.broadcast %cst_230 : f32 to vector<8x32xf32>
    %929 = arith.subf %928, %927 : vector<8x32xf32>
    %930 = arith.mulf %929, %926 : vector<8x32xf32>
    %931 = arith.mulf %927, %908 : vector<8x32xf32>
    %932 = arith.addf %930, %931 : vector<8x32xf32>
    %cst_231 = arith.constant dense<0.000000e+00> : vector<8x96xf32>
    %933 = tpu.matmul %932, %783, %cst_231 {dimension_numbers = #tpu.dot_dimension_numbers<[1], [0], [0], [1], [0, 0, 1, 1], [], []>} : vector<8x32xf32>, vector<32x96xf32>, vector<8x96xf32> -> vector<8x96xf32>
    %934 = arith.addf %933, %787 : vector<8x96xf32>
    %935 = vector.extract_strided_slice %780 {offsets = [48, 0], sizes = [8, 64], strides = [1, 1]} : vector<80x64xf32> to vector<8x64xf32>
    %936 = vector.extract_strided_slice %934 {offsets = [0, 0], sizes = [8, 64], strides = [1, 1]} : vector<8x96xf32> to vector<8x64xf32>
    %937 = arith.addf %935, %936 : vector<8x64xf32>
    %cst_232 = arith.constant 0.000000e+00 : f32
    %938 = vector.broadcast %cst_232 : f32 to vector<8x64xf32>
    %939 = arith.subf %938, %937 : vector<8x64xf32>
    %940 = math.exp %939 : vector<8x64xf32>
    %cst_233 = arith.constant 1.000000e+00 : f32
    %941 = vector.broadcast %cst_233 : f32 to vector<8x64xf32>
    %942 = arith.addf %941, %940 : vector<8x64xf32>
    %cst_234 = arith.constant 1.000000e+00 : f32
    %943 = vector.broadcast %cst_234 : f32 to vector<8x64xf32>
    %944 = arith.divf %943, %942 : vector<8x64xf32>
    %945 = vector.extract_strided_slice %781 {offsets = [48, 0], sizes = [8, 32], strides = [1, 1]} : vector<80x32xf32> to vector<8x32xf32>
    %946 = vector.extract_strided_slice %944 {offsets = [0, 0], sizes = [8, 32], strides = [1, 1]} : vector<8x64xf32> to vector<8x32xf32>
    %947 = vector.extract_strided_slice %934 {offsets = [0, 64], sizes = [8, 32], strides = [1, 1]} : vector<8x96xf32> to vector<8x32xf32>
    %948 = arith.mulf %946, %947 : vector<8x32xf32>
    %949 = arith.addf %945, %948 : vector<8x32xf32>
    %950 = math.tanh %949 : vector<8x32xf32>
    %951 = vector.extract_strided_slice %944 {offsets = [0, 32], sizes = [8, 32], strides = [1, 1]} : vector<8x64xf32> to vector<8x32xf32>
    %cst_235 = arith.constant 1.000000e+00 : f32
    %952 = vector.broadcast %cst_235 : f32 to vector<8x32xf32>
    %953 = arith.subf %952, %951 : vector<8x32xf32>
    %954 = arith.mulf %953, %950 : vector<8x32xf32>
    %955 = arith.mulf %951, %932 : vector<8x32xf32>
    %956 = arith.addf %954, %955 : vector<8x32xf32>
    %cst_236 = arith.constant dense<0.000000e+00> : vector<8x96xf32>
    %957 = tpu.matmul %956, %783, %cst_236 {dimension_numbers = #tpu.dot_dimension_numbers<[1], [0], [0], [1], [0, 0, 1, 1], [], []>} : vector<8x32xf32>, vector<32x96xf32>, vector<8x96xf32> -> vector<8x96xf32>
    %958 = arith.addf %957, %787 : vector<8x96xf32>
    %959 = vector.extract_strided_slice %780 {offsets = [56, 0], sizes = [8, 64], strides = [1, 1]} : vector<80x64xf32> to vector<8x64xf32>
    %960 = vector.extract_strided_slice %958 {offsets = [0, 0], sizes = [8, 64], strides = [1, 1]} : vector<8x96xf32> to vector<8x64xf32>
    %961 = arith.addf %959, %960 : vector<8x64xf32>
    %cst_237 = arith.constant 0.000000e+00 : f32
    %962 = vector.broadcast %cst_237 : f32 to vector<8x64xf32>
    %963 = arith.subf %962, %961 : vector<8x64xf32>
    %964 = math.exp %963 : vector<8x64xf32>
    %cst_238 = arith.constant 1.000000e+00 : f32
    %965 = vector.broadcast %cst_238 : f32 to vector<8x64xf32>
    %966 = arith.addf %965, %964 : vector<8x64xf32>
    %cst_239 = arith.constant 1.000000e+00 : f32
    %967 = vector.broadcast %cst_239 : f32 to vector<8x64xf32>
    %968 = arith.divf %967, %966 : vector<8x64xf32>
    %969 = vector.extract_strided_slice %781 {offsets = [56, 0], sizes = [8, 32], strides = [1, 1]} : vector<80x32xf32> to vector<8x32xf32>
    %970 = vector.extract_strided_slice %968 {offsets = [0, 0], sizes = [8, 32], strides = [1, 1]} : vector<8x64xf32> to vector<8x32xf32>
    %971 = vector.extract_strided_slice %958 {offsets = [0, 64], sizes = [8, 32], strides = [1, 1]} : vector<8x96xf32> to vector<8x32xf32>
    %972 = arith.mulf %970, %971 : vector<8x32xf32>
    %973 = arith.addf %969, %972 : vector<8x32xf32>
    %974 = math.tanh %973 : vector<8x32xf32>
    %975 = vector.extract_strided_slice %968 {offsets = [0, 32], sizes = [8, 32], strides = [1, 1]} : vector<8x64xf32> to vector<8x32xf32>
    %cst_240 = arith.constant 1.000000e+00 : f32
    %976 = vector.broadcast %cst_240 : f32 to vector<8x32xf32>
    %977 = arith.subf %976, %975 : vector<8x32xf32>
    %978 = arith.mulf %977, %974 : vector<8x32xf32>
    %979 = arith.mulf %975, %956 : vector<8x32xf32>
    %980 = arith.addf %978, %979 : vector<8x32xf32>
    %cst_241 = arith.constant dense<0.000000e+00> : vector<8x96xf32>
    %981 = tpu.matmul %980, %783, %cst_241 {dimension_numbers = #tpu.dot_dimension_numbers<[1], [0], [0], [1], [0, 0, 1, 1], [], []>} : vector<8x32xf32>, vector<32x96xf32>, vector<8x96xf32> -> vector<8x96xf32>
    %982 = arith.addf %981, %787 : vector<8x96xf32>
    %983 = vector.extract_strided_slice %780 {offsets = [64, 0], sizes = [8, 64], strides = [1, 1]} : vector<80x64xf32> to vector<8x64xf32>
    %984 = vector.extract_strided_slice %982 {offsets = [0, 0], sizes = [8, 64], strides = [1, 1]} : vector<8x96xf32> to vector<8x64xf32>
    %985 = arith.addf %983, %984 : vector<8x64xf32>
    %cst_242 = arith.constant 0.000000e+00 : f32
    %986 = vector.broadcast %cst_242 : f32 to vector<8x64xf32>
    %987 = arith.subf %986, %985 : vector<8x64xf32>
    %988 = math.exp %987 : vector<8x64xf32>
    %cst_243 = arith.constant 1.000000e+00 : f32
    %989 = vector.broadcast %cst_243 : f32 to vector<8x64xf32>
    %990 = arith.addf %989, %988 : vector<8x64xf32>
    %cst_244 = arith.constant 1.000000e+00 : f32
    %991 = vector.broadcast %cst_244 : f32 to vector<8x64xf32>
    %992 = arith.divf %991, %990 : vector<8x64xf32>
    %993 = vector.extract_strided_slice %781 {offsets = [64, 0], sizes = [8, 32], strides = [1, 1]} : vector<80x32xf32> to vector<8x32xf32>
    %994 = vector.extract_strided_slice %992 {offsets = [0, 0], sizes = [8, 32], strides = [1, 1]} : vector<8x64xf32> to vector<8x32xf32>
    %995 = vector.extract_strided_slice %982 {offsets = [0, 64], sizes = [8, 32], strides = [1, 1]} : vector<8x96xf32> to vector<8x32xf32>
    %996 = arith.mulf %994, %995 : vector<8x32xf32>
    %997 = arith.addf %993, %996 : vector<8x32xf32>
    %998 = math.tanh %997 : vector<8x32xf32>
    %999 = vector.extract_strided_slice %992 {offsets = [0, 32], sizes = [8, 32], strides = [1, 1]} : vector<8x64xf32> to vector<8x32xf32>
    %cst_245 = arith.constant 1.000000e+00 : f32
    %1000 = vector.broadcast %cst_245 : f32 to vector<8x32xf32>
    %1001 = arith.subf %1000, %999 : vector<8x32xf32>
    %1002 = arith.mulf %1001, %998 : vector<8x32xf32>
    %1003 = arith.mulf %999, %980 : vector<8x32xf32>
    %1004 = arith.addf %1002, %1003 : vector<8x32xf32>
    %cst_246 = arith.constant dense<0.000000e+00> : vector<8x96xf32>
    %1005 = tpu.matmul %1004, %783, %cst_246 {dimension_numbers = #tpu.dot_dimension_numbers<[1], [0], [0], [1], [0, 0, 1, 1], [], []>} : vector<8x32xf32>, vector<32x96xf32>, vector<8x96xf32> -> vector<8x96xf32>
    %1006 = arith.addf %1005, %787 : vector<8x96xf32>
    %1007 = vector.extract_strided_slice %780 {offsets = [72, 0], sizes = [8, 64], strides = [1, 1]} : vector<80x64xf32> to vector<8x64xf32>
    %1008 = vector.extract_strided_slice %1006 {offsets = [0, 0], sizes = [8, 64], strides = [1, 1]} : vector<8x96xf32> to vector<8x64xf32>
    %1009 = arith.addf %1007, %1008 : vector<8x64xf32>
    %cst_247 = arith.constant 0.000000e+00 : f32
    %1010 = vector.broadcast %cst_247 : f32 to vector<8x64xf32>
    %1011 = arith.subf %1010, %1009 : vector<8x64xf32>
    %1012 = math.exp %1011 : vector<8x64xf32>
    %cst_248 = arith.constant 1.000000e+00 : f32
    %1013 = vector.broadcast %cst_248 : f32 to vector<8x64xf32>
    %1014 = arith.addf %1013, %1012 : vector<8x64xf32>
    %cst_249 = arith.constant 1.000000e+00 : f32
    %1015 = vector.broadcast %cst_249 : f32 to vector<8x64xf32>
    %1016 = arith.divf %1015, %1014 : vector<8x64xf32>
    %1017 = vector.extract_strided_slice %781 {offsets = [72, 0], sizes = [8, 32], strides = [1, 1]} : vector<80x32xf32> to vector<8x32xf32>
    %1018 = vector.extract_strided_slice %1016 {offsets = [0, 0], sizes = [8, 32], strides = [1, 1]} : vector<8x64xf32> to vector<8x32xf32>
    %1019 = vector.extract_strided_slice %1006 {offsets = [0, 64], sizes = [8, 32], strides = [1, 1]} : vector<8x96xf32> to vector<8x32xf32>
    %1020 = arith.mulf %1018, %1019 : vector<8x32xf32>
    %1021 = arith.addf %1017, %1020 : vector<8x32xf32>
    %1022 = math.tanh %1021 : vector<8x32xf32>
    %1023 = vector.extract_strided_slice %1016 {offsets = [0, 32], sizes = [8, 32], strides = [1, 1]} : vector<8x64xf32> to vector<8x32xf32>
    %cst_250 = arith.constant 1.000000e+00 : f32
    %1024 = vector.broadcast %cst_250 : f32 to vector<8x32xf32>
    %1025 = arith.subf %1024, %1023 : vector<8x32xf32>
    %1026 = arith.mulf %1025, %1022 : vector<8x32xf32>
    %1027 = arith.mulf %1023, %1004 : vector<8x32xf32>
    %1028 = arith.addf %1026, %1027 : vector<8x32xf32>
    %1029 = tpu.concatenate %812, %836, %860, %884, %908, %932, %956, %980, %1004, %1028 in 0 : vector<8x32xf32>, vector<8x32xf32>, vector<8x32xf32>, vector<8x32xf32>, vector<8x32xf32>, vector<8x32xf32>, vector<8x32xf32>, vector<8x32xf32>, vector<8x32xf32>, vector<8x32xf32> -> vector<80x32xf32>
    %c0_251 = arith.constant 0 : index
    %c0_252 = arith.constant 0 : index
    %1030 = vector.load %arg6[%c0_251, %c0_252] : memref<32x2xf32, #tpu.memory_space<vmem>>, vector<32x2xf32>
    %cst_253 = arith.constant dense<0.000000e+00> : vector<80x2xf32>
    %1031 = tpu.matmul %1029, %1030, %cst_253 {dimension_numbers = #tpu.dot_dimension_numbers<[1], [0], [0], [1], [0, 0, 1, 1], [], []>} : vector<80x32xf32>, vector<32x2xf32>, vector<80x2xf32> -> vector<80x2xf32>
    %c0_254 = arith.constant 0 : index
    %c0_255 = arith.constant 0 : index
    %1032 = vector.load %arg7[%c0_254, %c0_255] : memref<1x2xf32, #tpu.memory_space<vmem>>, vector<1x2xf32>
    %1033 = vector.broadcast %1032 : vector<1x2xf32> to vector<80x2xf32>
    %1034 = arith.addf %1031, %1033 : vector<80x2xf32>
    %1035 = vector.extract_strided_slice %1034 {offsets = [0, 0], sizes = [8, 2], strides = [1, 1]} : vector<80x2xf32> to vector<8x2xf32>
    %1036 = vector.extract_strided_slice %1034 {offsets = [8, 0], sizes = [8, 2], strides = [1, 1]} : vector<80x2xf32> to vector<8x2xf32>
    %1037 = vector.extract_strided_slice %1034 {offsets = [16, 0], sizes = [8, 2], strides = [1, 1]} : vector<80x2xf32> to vector<8x2xf32>
    %1038 = vector.extract_strided_slice %1034 {offsets = [24, 0], sizes = [8, 2], strides = [1, 1]} : vector<80x2xf32> to vector<8x2xf32>
    %1039 = vector.extract_strided_slice %1034 {offsets = [32, 0], sizes = [8, 2], strides = [1, 1]} : vector<80x2xf32> to vector<8x2xf32>
    %1040 = vector.extract_strided_slice %1034 {offsets = [40, 0], sizes = [8, 2], strides = [1, 1]} : vector<80x2xf32> to vector<8x2xf32>
    %1041 = vector.extract_strided_slice %1034 {offsets = [48, 0], sizes = [8, 2], strides = [1, 1]} : vector<80x2xf32> to vector<8x2xf32>
    %1042 = vector.extract_strided_slice %1034 {offsets = [56, 0], sizes = [8, 2], strides = [1, 1]} : vector<80x2xf32> to vector<8x2xf32>
    %1043 = vector.extract_strided_slice %1034 {offsets = [64, 0], sizes = [8, 2], strides = [1, 1]} : vector<80x2xf32> to vector<8x2xf32>
    %1044 = vector.extract_strided_slice %1034 {offsets = [72, 0], sizes = [8, 2], strides = [1, 1]} : vector<80x2xf32> to vector<8x2xf32>
    %1045 = arith.maximumf %1035, %1036 : vector<8x2xf32>
    %1046 = arith.maximumf %1045, %1037 : vector<8x2xf32>
    %1047 = arith.maximumf %1046, %1038 : vector<8x2xf32>
    %1048 = arith.maximumf %1047, %1039 : vector<8x2xf32>
    %1049 = arith.maximumf %1048, %1040 : vector<8x2xf32>
    %1050 = arith.maximumf %1049, %1041 : vector<8x2xf32>
    %1051 = arith.maximumf %1050, %1042 : vector<8x2xf32>
    %1052 = arith.maximumf %1051, %1043 : vector<8x2xf32>
    %1053 = arith.maximumf %1052, %1044 : vector<8x2xf32>
    %cst_256 = arith.constant 0.000000e+00 : f32
    %1054 = vector.broadcast %cst_256 : f32 to vector<8x2xf32>
    %cst_257 = arith.constant 0.000000e+00 : f32
    %1055 = vector.broadcast %cst_257 : f32 to vector<8x32xf32>
    %cst_258 = arith.constant 0.000000e+00 : f32
    %1056 = vector.broadcast %cst_258 : f32 to vector<8x32xf32>
    %1057 = arith.subf %1035, %1053 : vector<8x2xf32>
    %1058 = math.exp %1057 : vector<8x2xf32>
    %1059 = arith.addf %1054, %1058 : vector<8x2xf32>
    %1060 = vector.extract_strided_slice %1058 {offsets = [0, 0], sizes = [8, 1], strides = [1, 1]} : vector<8x2xf32> to vector<8x1xf32>
    %1061 = vector.broadcast %1060 : vector<8x1xf32> to vector<8x32xf32>
    %1062 = arith.mulf %812, %1061 : vector<8x32xf32>
    %1063 = arith.addf %1055, %1062 : vector<8x32xf32>
    %1064 = vector.extract_strided_slice %1058 {offsets = [0, 1], sizes = [8, 1], strides = [1, 1]} : vector<8x2xf32> to vector<8x1xf32>
    %1065 = vector.broadcast %1064 : vector<8x1xf32> to vector<8x32xf32>
    %1066 = arith.mulf %812, %1065 : vector<8x32xf32>
    %1067 = arith.addf %1056, %1066 : vector<8x32xf32>
    %1068 = arith.subf %1036, %1053 : vector<8x2xf32>
    %1069 = math.exp %1068 : vector<8x2xf32>
    %1070 = arith.addf %1059, %1069 : vector<8x2xf32>
    %1071 = vector.extract_strided_slice %1069 {offsets = [0, 0], sizes = [8, 1], strides = [1, 1]} : vector<8x2xf32> to vector<8x1xf32>
    %1072 = vector.broadcast %1071 : vector<8x1xf32> to vector<8x32xf32>
    %1073 = arith.mulf %836, %1072 : vector<8x32xf32>
    %1074 = arith.addf %1063, %1073 : vector<8x32xf32>
    %1075 = vector.extract_strided_slice %1069 {offsets = [0, 1], sizes = [8, 1], strides = [1, 1]} : vector<8x2xf32> to vector<8x1xf32>
    %1076 = vector.broadcast %1075 : vector<8x1xf32> to vector<8x32xf32>
    %1077 = arith.mulf %836, %1076 : vector<8x32xf32>
    %1078 = arith.addf %1067, %1077 : vector<8x32xf32>
    %1079 = arith.subf %1037, %1053 : vector<8x2xf32>
    %1080 = math.exp %1079 : vector<8x2xf32>
    %1081 = arith.addf %1070, %1080 : vector<8x2xf32>
    %1082 = vector.extract_strided_slice %1080 {offsets = [0, 0], sizes = [8, 1], strides = [1, 1]} : vector<8x2xf32> to vector<8x1xf32>
    %1083 = vector.broadcast %1082 : vector<8x1xf32> to vector<8x32xf32>
    %1084 = arith.mulf %860, %1083 : vector<8x32xf32>
    %1085 = arith.addf %1074, %1084 : vector<8x32xf32>
    %1086 = vector.extract_strided_slice %1080 {offsets = [0, 1], sizes = [8, 1], strides = [1, 1]} : vector<8x2xf32> to vector<8x1xf32>
    %1087 = vector.broadcast %1086 : vector<8x1xf32> to vector<8x32xf32>
    %1088 = arith.mulf %860, %1087 : vector<8x32xf32>
    %1089 = arith.addf %1078, %1088 : vector<8x32xf32>
    %1090 = arith.subf %1038, %1053 : vector<8x2xf32>
    %1091 = math.exp %1090 : vector<8x2xf32>
    %1092 = arith.addf %1081, %1091 : vector<8x2xf32>
    %1093 = vector.extract_strided_slice %1091 {offsets = [0, 0], sizes = [8, 1], strides = [1, 1]} : vector<8x2xf32> to vector<8x1xf32>
    %1094 = vector.broadcast %1093 : vector<8x1xf32> to vector<8x32xf32>
    %1095 = arith.mulf %884, %1094 : vector<8x32xf32>
    %1096 = arith.addf %1085, %1095 : vector<8x32xf32>
    %1097 = vector.extract_strided_slice %1091 {offsets = [0, 1], sizes = [8, 1], strides = [1, 1]} : vector<8x2xf32> to vector<8x1xf32>
    %1098 = vector.broadcast %1097 : vector<8x1xf32> to vector<8x32xf32>
    %1099 = arith.mulf %884, %1098 : vector<8x32xf32>
    %1100 = arith.addf %1089, %1099 : vector<8x32xf32>
    %1101 = arith.subf %1039, %1053 : vector<8x2xf32>
    %1102 = math.exp %1101 : vector<8x2xf32>
    %1103 = arith.addf %1092, %1102 : vector<8x2xf32>
    %1104 = vector.extract_strided_slice %1102 {offsets = [0, 0], sizes = [8, 1], strides = [1, 1]} : vector<8x2xf32> to vector<8x1xf32>
    %1105 = vector.broadcast %1104 : vector<8x1xf32> to vector<8x32xf32>
    %1106 = arith.mulf %908, %1105 : vector<8x32xf32>
    %1107 = arith.addf %1096, %1106 : vector<8x32xf32>
    %1108 = vector.extract_strided_slice %1102 {offsets = [0, 1], sizes = [8, 1], strides = [1, 1]} : vector<8x2xf32> to vector<8x1xf32>
    %1109 = vector.broadcast %1108 : vector<8x1xf32> to vector<8x32xf32>
    %1110 = arith.mulf %908, %1109 : vector<8x32xf32>
    %1111 = arith.addf %1100, %1110 : vector<8x32xf32>
    %1112 = arith.subf %1040, %1053 : vector<8x2xf32>
    %1113 = math.exp %1112 : vector<8x2xf32>
    %1114 = arith.addf %1103, %1113 : vector<8x2xf32>
    %1115 = vector.extract_strided_slice %1113 {offsets = [0, 0], sizes = [8, 1], strides = [1, 1]} : vector<8x2xf32> to vector<8x1xf32>
    %1116 = vector.broadcast %1115 : vector<8x1xf32> to vector<8x32xf32>
    %1117 = arith.mulf %932, %1116 : vector<8x32xf32>
    %1118 = arith.addf %1107, %1117 : vector<8x32xf32>
    %1119 = vector.extract_strided_slice %1113 {offsets = [0, 1], sizes = [8, 1], strides = [1, 1]} : vector<8x2xf32> to vector<8x1xf32>
    %1120 = vector.broadcast %1119 : vector<8x1xf32> to vector<8x32xf32>
    %1121 = arith.mulf %932, %1120 : vector<8x32xf32>
    %1122 = arith.addf %1111, %1121 : vector<8x32xf32>
    %1123 = arith.subf %1041, %1053 : vector<8x2xf32>
    %1124 = math.exp %1123 : vector<8x2xf32>
    %1125 = arith.addf %1114, %1124 : vector<8x2xf32>
    %1126 = vector.extract_strided_slice %1124 {offsets = [0, 0], sizes = [8, 1], strides = [1, 1]} : vector<8x2xf32> to vector<8x1xf32>
    %1127 = vector.broadcast %1126 : vector<8x1xf32> to vector<8x32xf32>
    %1128 = arith.mulf %956, %1127 : vector<8x32xf32>
    %1129 = arith.addf %1118, %1128 : vector<8x32xf32>
    %1130 = vector.extract_strided_slice %1124 {offsets = [0, 1], sizes = [8, 1], strides = [1, 1]} : vector<8x2xf32> to vector<8x1xf32>
    %1131 = vector.broadcast %1130 : vector<8x1xf32> to vector<8x32xf32>
    %1132 = arith.mulf %956, %1131 : vector<8x32xf32>
    %1133 = arith.addf %1122, %1132 : vector<8x32xf32>
    %1134 = arith.subf %1042, %1053 : vector<8x2xf32>
    %1135 = math.exp %1134 : vector<8x2xf32>
    %1136 = arith.addf %1125, %1135 : vector<8x2xf32>
    %1137 = vector.extract_strided_slice %1135 {offsets = [0, 0], sizes = [8, 1], strides = [1, 1]} : vector<8x2xf32> to vector<8x1xf32>
    %1138 = vector.broadcast %1137 : vector<8x1xf32> to vector<8x32xf32>
    %1139 = arith.mulf %980, %1138 : vector<8x32xf32>
    %1140 = arith.addf %1129, %1139 : vector<8x32xf32>
    %1141 = vector.extract_strided_slice %1135 {offsets = [0, 1], sizes = [8, 1], strides = [1, 1]} : vector<8x2xf32> to vector<8x1xf32>
    %1142 = vector.broadcast %1141 : vector<8x1xf32> to vector<8x32xf32>
    %1143 = arith.mulf %980, %1142 : vector<8x32xf32>
    %1144 = arith.addf %1133, %1143 : vector<8x32xf32>
    %1145 = arith.subf %1043, %1053 : vector<8x2xf32>
    %1146 = math.exp %1145 : vector<8x2xf32>
    %1147 = arith.addf %1136, %1146 : vector<8x2xf32>
    %1148 = vector.extract_strided_slice %1146 {offsets = [0, 0], sizes = [8, 1], strides = [1, 1]} : vector<8x2xf32> to vector<8x1xf32>
    %1149 = vector.broadcast %1148 : vector<8x1xf32> to vector<8x32xf32>
    %1150 = arith.mulf %1004, %1149 : vector<8x32xf32>
    %1151 = arith.addf %1140, %1150 : vector<8x32xf32>
    %1152 = vector.extract_strided_slice %1146 {offsets = [0, 1], sizes = [8, 1], strides = [1, 1]} : vector<8x2xf32> to vector<8x1xf32>
    %1153 = vector.broadcast %1152 : vector<8x1xf32> to vector<8x32xf32>
    %1154 = arith.mulf %1004, %1153 : vector<8x32xf32>
    %1155 = arith.addf %1144, %1154 : vector<8x32xf32>
    %1156 = arith.subf %1044, %1053 : vector<8x2xf32>
    %1157 = math.exp %1156 : vector<8x2xf32>
    %1158 = arith.addf %1147, %1157 : vector<8x2xf32>
    %1159 = vector.extract_strided_slice %1157 {offsets = [0, 0], sizes = [8, 1], strides = [1, 1]} : vector<8x2xf32> to vector<8x1xf32>
    %1160 = vector.broadcast %1159 : vector<8x1xf32> to vector<8x32xf32>
    %1161 = arith.mulf %1028, %1160 : vector<8x32xf32>
    %1162 = arith.addf %1151, %1161 : vector<8x32xf32>
    %1163 = vector.extract_strided_slice %1157 {offsets = [0, 1], sizes = [8, 1], strides = [1, 1]} : vector<8x2xf32> to vector<8x1xf32>
    %1164 = vector.broadcast %1163 : vector<8x1xf32> to vector<8x32xf32>
    %1165 = arith.mulf %1028, %1164 : vector<8x32xf32>
    %1166 = arith.addf %1155, %1165 : vector<8x32xf32>
    %1167 = tpu.reciprocal %1158 {approx = true} : vector<8x2xf32> -> vector<8x2xf32>
    %1168 = vector.extract_strided_slice %1167 {offsets = [0, 0], sizes = [8, 1], strides = [1, 1]} : vector<8x2xf32> to vector<8x1xf32>
    %1169 = vector.broadcast %1168 : vector<8x1xf32> to vector<8x32xf32>
    %1170 = arith.mulf %1162, %1169 : vector<8x32xf32>
    %1171 = vector.extract_strided_slice %1167 {offsets = [0, 1], sizes = [8, 1], strides = [1, 1]} : vector<8x2xf32> to vector<8x1xf32>
    %1172 = vector.broadcast %1171 : vector<8x1xf32> to vector<8x32xf32>
    %1173 = arith.mulf %1166, %1172 : vector<8x32xf32>
    %c0_259 = arith.constant 0 : index
    %c0_260 = arith.constant 0 : index
    %1174 = vector.load %arg16[%c0_259, %c0_260] : memref<8x10xf32, #tpu.memory_space<vmem>>, vector<8x10xf32>
    %c0_261 = arith.constant 0 : index
    %c0_262 = arith.constant 0 : index
    %1175 = vector.load %arg8[%c0_261, %c0_262] : memref<32x42xf32, #tpu.memory_space<vmem>>, vector<32x42xf32>
    %cst_263 = arith.constant dense<0.000000e+00> : vector<8x42xf32>
    %1176 = tpu.matmul %1170, %1175, %cst_263 {dimension_numbers = #tpu.dot_dimension_numbers<[1], [0], [0], [1], [0, 0, 1, 1], [], []>} : vector<8x32xf32>, vector<32x42xf32>, vector<8x42xf32> -> vector<8x42xf32>
    %c0_264 = arith.constant 0 : index
    %c0_265 = arith.constant 0 : index
    %1177 = vector.load %arg9[%c0_264, %c0_265] : memref<32x42xf32, #tpu.memory_space<vmem>>, vector<32x42xf32>
    %cst_266 = arith.constant dense<0.000000e+00> : vector<8x42xf32>
    %1178 = tpu.matmul %1173, %1177, %cst_266 {dimension_numbers = #tpu.dot_dimension_numbers<[1], [0], [0], [1], [0, 0, 1, 1], [], []>} : vector<8x32xf32>, vector<32x42xf32>, vector<8x42xf32> -> vector<8x42xf32>
    %1179 = arith.addf %1176, %1178 : vector<8x42xf32>
    %c0_267 = arith.constant 0 : index
    %c0_268 = arith.constant 0 : index
    %1180 = vector.load %arg10[%c0_267, %c0_268] : memref<10x42xf32, #tpu.memory_space<vmem>>, vector<10x42xf32>
    %cst_269 = arith.constant dense<0.000000e+00> : vector<8x42xf32>
    %1181 = tpu.matmul %1174, %1180, %cst_269 {dimension_numbers = #tpu.dot_dimension_numbers<[1], [0], [0], [1], [0, 0, 1, 1], [], []>} : vector<8x10xf32>, vector<10x42xf32>, vector<8x42xf32> -> vector<8x42xf32>
    %1182 = arith.addf %1179, %1181 : vector<8x42xf32>
    %c0_270 = arith.constant 0 : index
    %c0_271 = arith.constant 0 : index
    %1183 = vector.load %arg11[%c0_270, %c0_271] : memref<1x42xf32, #tpu.memory_space<vmem>>, vector<1x42xf32>
    %1184 = vector.broadcast %1183 : vector<1x42xf32> to vector<8x42xf32>
    %1185 = arith.addf %1182, %1184 : vector<8x42xf32>
    %cst_272 = arith.constant 0.000000e+00 : f32
    %1186 = vector.broadcast %cst_272 : f32 to vector<8x42xf32>
    %1187 = arith.cmpf ogt, %1185, %1186 : vector<8x42xf32>
    %cst_273 = arith.constant 0.000000e+00 : f32
    %1188 = vector.broadcast %cst_273 : f32 to vector<8x42xf32>
    %1189 = arith.minimumf %1185, %1188 : vector<8x42xf32>
    %1190 = math.exp %1189 : vector<8x42xf32>
    %cst_274 = arith.constant 1.000000e+00 : f32
    %1191 = vector.broadcast %cst_274 : f32 to vector<8x42xf32>
    %1192 = arith.subf %1190, %1191 : vector<8x42xf32>
    %1193 = arith.select %1187, %1185, %1192 : vector<8x42xi1>, vector<8x42xf32>
    %c0_275 = arith.constant 0 : index
    %c0_276 = arith.constant 0 : index
    %1194 = vector.load %arg12[%c0_275, %c0_276] : memref<42x2xf32, #tpu.memory_space<vmem>>, vector<42x2xf32>
    %cst_277 = arith.constant dense<0.000000e+00> : vector<8x2xf32>
    %1195 = tpu.matmul %1193, %1194, %cst_277 {dimension_numbers = #tpu.dot_dimension_numbers<[1], [0], [0], [1], [0, 0, 1, 1], [], []>} : vector<8x42xf32>, vector<42x2xf32>, vector<8x2xf32> -> vector<8x2xf32>
    %c0_278 = arith.constant 0 : index
    %c0_279 = arith.constant 0 : index
    %1196 = vector.load %arg13[%c0_278, %c0_279] : memref<1x2xf32, #tpu.memory_space<vmem>>, vector<1x2xf32>
    %1197 = vector.broadcast %1196 : vector<1x2xf32> to vector<8x2xf32>
    %1198 = arith.addf %1195, %1197 : vector<8x2xf32>
    %c0_280 = arith.constant 0 : index
    %c0_281 = arith.constant 0 : index
    %1199 = vector.load %arg14[%c0_280, %c0_281] : memref<1x2xf32, #tpu.memory_space<vmem>>, vector<1x2xf32>
    %cst_282 = arith.constant 0.000000e+00 : f32
    %1200 = vector.broadcast %cst_282 : f32 to vector<8x2xf32>
    %1201 = arith.subf %1200, %1198 : vector<8x2xf32>
    %1202 = math.exp %1201 : vector<8x2xf32>
    %cst_283 = arith.constant 1.000000e+00 : f32
    %1203 = vector.broadcast %cst_283 : f32 to vector<8x2xf32>
    %1204 = arith.addf %1203, %1202 : vector<8x2xf32>
    %cst_284 = arith.constant 1.000000e+00 : f32
    %1205 = vector.broadcast %cst_284 : f32 to vector<8x2xf32>
    %1206 = arith.divf %1205, %1204 : vector<8x2xf32>
    %c0_285 = arith.constant 0 : index
    %c0_286 = arith.constant 0 : index
    %1207 = vector.load %arg15[%c0_285, %c0_286] : memref<1x2xf32, #tpu.memory_space<vmem>>, vector<1x2xf32>
    %1208 = vector.broadcast %1207 : vector<1x2xf32> to vector<8x2xf32>
    %1209 = arith.mulf %1206, %1208 : vector<8x2xf32>
    %1210 = vector.broadcast %1199 : vector<1x2xf32> to vector<8x2xf32>
    %1211 = arith.addf %1210, %1209 : vector<8x2xf32>
    %c0_287 = arith.constant 0 : index
    %c0_288 = arith.constant 0 : index
    %1212 = vector.load %arg24[%c0_287, %c0_288] : memref<8x2xf32, #tpu.memory_space<vmem>>, vector<8x2xf32>
    tpu.vector_store %arg24[%c0_287, %c0_288], %1211 {strides = array<i32>} : memref<8x2xf32, #tpu.memory_space<vmem>>, vector<8x2xf32>,
    %1213 = vector.extract_strided_slice %1211 {offsets = [0, 0], sizes = [8, 1], strides = [1, 1]} : vector<8x2xf32> to vector<8x1xf32>
    %1214 = vector.extract_strided_slice %1211 {offsets = [0, 1], sizes = [8, 1], strides = [1, 1]} : vector<8x2xf32> to vector<8x1xf32>
    %cst_289 = arith.constant 1.000000e+00 : f32
    %1215 = vector.broadcast %cst_289 : f32 to vector<8x1xf32>
    %1216 = arith.divf %1215, %1213 : vector<8x1xf32>
    %c0_290 = arith.constant 0 : index
    %c0_291 = arith.constant 0 : index
    %1217 = vector.load %arg19[%c0_290, %c0_291] : memref<8x1xf32, #tpu.memory_space<vmem>>, vector<8x1xf32>
    %cst_292 = arith.constant 0.000000e+00 : f32
    %1218 = vector.broadcast %cst_292 : f32 to vector<8x1xf32>
    %1219 = arith.subf %1218, %1217 : vector<8x1xf32>
    %1220 = arith.mulf %1219, %1216 : vector<8x1xf32>
    %1221 = math.exp %1220 : vector<8x1xf32>
    %cst_293 = arith.constant 1.000000e+00 : f32
    %1222 = vector.broadcast %cst_293 : f32 to vector<8x1xf32>
    %1223 = arith.subf %1222, %1221 : vector<8x1xf32>
    %c0_294 = arith.constant 0 : index
    %c0_295 = arith.constant 0 : index
    %1224 = vector.load %arg17[%c0_294, %c0_295] : memref<8x10xf32, #tpu.memory_space<vmem>>, vector<8x10xf32>
    %1225 = vector.broadcast %1223 : vector<8x1xf32> to vector<8x10xf32>
    %1226 = arith.mulf %1225, %1224 : vector<8x10xf32>
    %c0_296 = arith.constant 0 : index
    %c0_297 = arith.constant 0 : index
    %1227 = vector.load %arg18[%c0_296, %c0_297] : memref<8x10xf32, #tpu.memory_space<vmem>>, vector<8x10xf32>
    %1228 = vector.broadcast %1221 : vector<8x1xf32> to vector<8x10xf32>
    %1229 = arith.mulf %1227, %1228 : vector<8x10xf32>
    %cst_298 = arith.constant 1.000000e+00 : f32
    %1230 = vector.broadcast %cst_298 : f32 to vector<8x10xf32>
    %1231 = arith.subf %1230, %1229 : vector<8x10xf32>
    %1232 = arith.divf %1226, %1231 : vector<8x10xf32>
    %1233 = vector.broadcast %1214 : vector<8x1xf32> to vector<8x10xf32>
    %1234 = arith.mulf %1232, %1233 : vector<8x10xf32>
    %c0_299 = arith.constant 0 : index
    %c0_300 = arith.constant 0 : index
    %1235 = vector.load %arg22[%c0_299, %c0_300] : memref<8x10xf32, #tpu.memory_space<vmem>>, vector<8x10xf32>
    tpu.vector_store %arg22[%c0_299, %c0_300], %1234 {strides = array<i32>} : memref<8x10xf32, #tpu.memory_space<vmem>>, vector<8x10xf32>,
    %c0_301 = arith.constant 0 : index
    %c0_302 = arith.constant 0 : index
    %1236 = vector.load %arg20[%c0_301, %c0_302] : memref<8x16xf32, #tpu.memory_space<vmem>>, vector<8x16xf32>
    %c0_303 = arith.constant 0 : index
    %c0_304 = arith.constant 0 : index
    %1237 = vector.load %arg21[%c0_303, %c0_304] : memref<8x1xf32, #tpu.memory_space<vmem>>, vector<8x1xf32>
    %1238 = vector.broadcast %1237 : vector<8x1xf32> to vector<8x16xf32>
    %1239 = arith.divf %1236, %1238 : vector<8x16xf32>
    %cst_305 = arith.constant 0.000000e+00 : f32
    %1240 = vector.broadcast %cst_305 : f32 to vector<8x1xf32>
    %1241 = arith.subf %1240, %1216 : vector<8x1xf32>
    %cst_306 = arith.constant 5.000000e-03 : f32
    %1242 = vector.broadcast %cst_306 : f32 to vector<8x1xf32>
    %1243 = arith.mulf %1241, %1242 : vector<8x1xf32>
    %1244 = math.exp %1243 : vector<8x1xf32>
    %cst_307 = arith.constant 1.000000e+00 : f32
    %1245 = vector.broadcast %cst_307 : f32 to vector<8x16xf32>
    %1246 = arith.subf %1245, %1239 : vector<8x16xf32>
    %1247 = vector.broadcast %1244 : vector<8x1xf32> to vector<8x16xf32>
    %1248 = arith.mulf %1239, %1247 : vector<8x16xf32>
    %1249 = arith.addf %1246, %1248 : vector<8x16xf32>
    %cst_308 = arith.constant 0.939692616 : f32
    %1250 = vector.broadcast %cst_308 : f32 to vector<8x1xf32>
    %1251 = arith.mulf %1244, %1250 : vector<8x1xf32>
    %1252 = vector.broadcast %1251 : vector<8x1xf32> to vector<8x16xf32>
    %1253 = arith.subf %1249, %1252 : vector<8x16xf32>
    %cst_309 = arith.constant 0.939692616 : f32
    %1254 = vector.broadcast %cst_309 : f32 to vector<8x16xf32>
    %1255 = arith.mulf %1239, %1254 : vector<8x16xf32>
    %cst_310 = arith.constant 1.000000e+00 : f32
    %1256 = vector.broadcast %cst_310 : f32 to vector<8x16xf32>
    %1257 = arith.subf %1256, %1255 : vector<8x16xf32>
    %1258 = vector.broadcast %1244 : vector<8x1xf32> to vector<8x16xf32>
    %1259 = arith.mulf %1239, %1258 : vector<8x16xf32>
    %cst_311 = arith.constant 0.939692616 : f32
    %1260 = vector.broadcast %cst_311 : f32 to vector<8x16xf32>
    %1261 = arith.mulf %1259, %1260 : vector<8x16xf32>
    %1262 = arith.addf %1257, %1261 : vector<8x16xf32>
    %cst_312 = arith.constant 0.939692616 : f32
    %1263 = vector.broadcast %cst_312 : f32 to vector<8x1xf32>
    %1264 = arith.mulf %1244, %1263 : vector<8x1xf32>
    %1265 = vector.broadcast %1264 : vector<8x1xf32> to vector<8x16xf32>
    %1266 = arith.subf %1262, %1265 : vector<8x16xf32>
    %1267 = arith.divf %1253, %1266 : vector<8x16xf32>
    %1268 = math.log %1267 : vector<8x16xf32>
    %cst_313 = arith.constant -2.000000e+02 : f32
    %1269 = vector.broadcast %cst_313 : f32 to vector<8x16xf32>
    %1270 = arith.mulf %1269, %1268 : vector<8x16xf32>
    %1271 = vector.broadcast %1216 : vector<8x1xf32> to vector<8x16xf32>
    %1272 = arith.subf %1270, %1271 : vector<8x16xf32>
    %cst_314 = arith.constant 4.500000e+00 : f32
    %1273 = vector.broadcast %cst_314 : f32 to vector<8x16xf32>
    %1274 = arith.divf %1272, %1273 : vector<8x16xf32>
    %1275 = arith.cmpf one, %1274, %1274 : vector<8x16xf32>
    %cst_315 = arith.constant 0.000000e+00 : f32
    %1276 = vector.broadcast %cst_315 : f32 to vector<8x16xf32>
    %1277 = arith.select %1275, %1276, %1274 : vector<8x16xi1>, vector<8x16xf32>
    %c0_316 = arith.constant 0 : index
    %c0_317 = arith.constant 0 : index
    %1278 = vector.load %arg23[%c0_316, %c0_317] : memref<8x16xf32, #tpu.memory_space<vmem>>, vector<8x16xf32>
    tpu.vector_store %arg23[%c0_316, %c0_317], %1277 {strides = array<i32>} : memref<8x16xf32, #tpu.memory_space<vmem>>, vector<8x16xf32>,
    return
  }
}

</mosaic_0001>

<llo_original>
// kernel: tpu_custom_call.1
$region0: #{tpu_custom_call.1}
  #allocation0 [shape = 'u32[]', space=smem, size = 0x4, offset = 0x4, fixed_abs, tag = 'smem constant byte address 0x4 - core index']
  #allocation1 [shape = 'u32[144,128]{1,0:T(1,128)}', space=vmem, size = 0x12000, scoped, tag = 'internal scratch']
  %s0 = inlined_call_operand.vmem [shape: f32[80,1], index: 0, kind: input, shape index: {}]
  %s1 = inlined_call_operand.hbm [shape: f32[1,96], index: 1, kind: input, shape index: {}]
  %s2 = inlined_call_operand.hbm [shape: f32[3,32,96], index: 2, kind: input, shape index: {}]
  %s3 = inlined_call_operand.vmem [shape: f32[4,32,96], index: 3, kind: input, shape index: {}]
  %s4 = inlined_call_operand.hbm [shape: f32[4,1,96], index: 4, kind: input, shape index: {}]
  %s5 = inlined_call_operand.hbm [shape: f32[4,1,96], index: 5, kind: input, shape index: {}]
  %s6 = inlined_call_operand.vmem [shape: f32[32,2], index: 6, kind: input, shape index: {}]
  %s7 = inlined_call_operand.hbm [shape: f32[1,2], index: 7, kind: input, shape index: {}]
  %s8 = inlined_call_operand.vmem [shape: f32[32,42], index: 8, kind: input, shape index: {}]
  %s9 = inlined_call_operand.vmem [shape: f32[32,42], index: 9, kind: input, shape index: {}]
  %s10 = inlined_call_operand.vmem [shape: f32[10,42], index: 10, kind: input, shape index: {}]
  %s11 = inlined_call_operand.hbm [shape: f32[1,42], index: 11, kind: input, shape index: {}]
  %s12 = inlined_call_operand.vmem [shape: f32[42,2], index: 12, kind: input, shape index: {}]
  %s13 = inlined_call_operand.hbm [shape: f32[1,2], index: 13, kind: input, shape index: {}]
  %s14 = inlined_call_operand.vmem [shape: f32[1,2], index: 14, kind: input, shape index: {}]
  %s15 = inlined_call_operand.vmem [shape: f32[1,2], index: 15, kind: input, shape index: {}]
  %s16 = inlined_call_operand.vmem [shape: f32[8,10], index: 16, kind: input, shape index: {}]
  %s17 = inlined_call_operand.vmem [shape: f32[8,10], index: 17, kind: input, shape index: {}]
  %s18 = inlined_call_operand.vmem [shape: f32[8,10], index: 18, kind: input, shape index: {}]
  %s19 = inlined_call_operand.vmem [shape: f32[8,1], index: 19, kind: input, shape index: {}]
  %s20 = inlined_call_operand.vmem [shape: f32[8,16], index: 20, kind: input, shape index: {}]
  %s21 = inlined_call_operand.vmem [shape: f32[8,1], index: 21, kind: input, shape index: {}]
  %s22 = inlined_call_operand.hbm [shape: f32[8,10], index: 22, kind: output, shape index: {0}]
  %s23 = inlined_call_operand.hbm [shape: f32[8,16], index: 23, kind: output, shape index: {1}]
  %s24 = inlined_call_operand.vmem [shape: f32[8,2], index: 24, kind: output, shape index: {2}]
  %25 = xla_tuple %s22, %s23, %s24
  %s26 = sld [smem:[#allocation0]]
  $region142: #{tpu_custom_call.1} parent=0
    _
  %s28 = ssub.s32 1, %s26
  %s29 = scalar_select 0, %s28, %s26
  $region1: #{tpu_custom_call.1} parent=0
    #allocation2 [shape = 'u8[512]{0}', space=vmem, size = 0x400, scoped, tag = 'input window, operand 1, single buffered']
    #allocation3 [shape = 's32[1]{0}', space=sflag, size = 0x4, scoped, tag = 'scoped memory for tpu_custom_call.1']
    #allocation4 [shape = 's32[1]{0}', space=sflag, size = 0x4, scoped, tag = 'scoped memory for tpu_custom_call.1']
    #allocation5 [shape = 'u8[49152]{0}', space=vmem, size = 0xc000, scoped, tag = 'input window, operand 2, single buffered']
    #allocation6 [shape = 's32[1]{0}', space=sflag, size = 0x4, scoped, tag = 'scoped memory for tpu_custom_call.1']
    #allocation7 [shape = 'u8[2048]{0}', space=vmem, size = 0x800, scoped, tag = 'input window, operand 4, single buffered']
    #allocation8 [shape = 'u8[2048]{0}', space=vmem, size = 0x800, scoped, tag = 'input window, operand 5, single buffered']
    #allocation9 [shape = 's32[1]{0}', space=sflag, size = 0x4, scoped, tag = 'scoped memory for tpu_custom_call.1']
    #allocation10 [shape = 'u8[512]{0}', space=vmem, size = 0x400, scoped, tag = 'input window, operand 7, single buffered']
    #allocation11 [shape = 'u8[512]{0}', space=vmem, size = 0x400, scoped, tag = 'input window, operand 11, single buffered']
    #allocation12 [shape = 's32[1]{0}', space=sflag, size = 0x4, scoped, tag = 'scoped memory for tpu_custom_call.1']
    #allocation13 [shape = 'u8[512]{0}', space=vmem, size = 0x400, scoped, tag = 'input window, operand 13, single buffered']
    #allocation14 [shape = 'u8[4096]{0}', space=vmem, size = 0x1000, scoped, tag = 'output window, operand 0, single buffered']
    #allocation15 [shape = 'u8[4096]{0}', space=vmem, size = 0x1000, scoped, tag = 'output window, operand 1, single buffered']
    #allocation16 [shape = 's32[1]{0}', space=sflag, size = 0x4, scoped, tag = 'scoped memory for tpu_custom_call.1']
    %30 = vsyncpa [#allocation3], 0
    %31 = vsyncpa [#allocation6], 0
    %32 = vsyncpa [#allocation9], 0
    %33 = vsyncpa [#allocation12], 0
    %34 = vsyncpa [#allocation4], 0
    %35 = vsyncpa [#allocation16], 0
    // Predicated region
    $region2: #{tpu_custom_call.1} parent=1 // pred_check
      _
    $region3: #{tpu_custom_call.1} parent=1 // pred_check_branch
      %37 = sbr.rel (0) target = $region5
    $region4: #{tpu_custom_call.1} parent=1 // pred_region
      _
    $region5: #{tpu_custom_call.1} parent=1 // pred_fallthru
      _
    // Predicated region
    $region6: #{tpu_custom_call.1} parent=1 // pred_check
      _
    $region7: #{tpu_custom_call.1} parent=1 // pred_check_branch
      %39 = sbr.rel (0) target = $region9
    $region8: #{tpu_custom_call.1} parent=1 // pred_region
      %s41 = ssub.s32 16, 16
      %42 = vsyncadd [#allocation3], %s41
      %s44 = sshll.u32 [#allocation2], 4
      %s45 = int_to_ptr.vmem [resolvable:$true] %s44
      %47 = dma.hbm_to_vmem [thread:$0]  %s1, 16, %s45, [#allocation3]
    $region9: #{tpu_custom_call.1} parent=1 // pred_fallthru
      _
    // Predicated region
    $region10: #{tpu_custom_call.1} parent=1 // pred_check
      _
    $region11: #{tpu_custom_call.1} parent=1 // pred_check_branch
      %49 = sbr.rel (0) target = $region13
    $region12: #{tpu_custom_call.1} parent=1 // pred_region
      %s51 = ssub.s32 1536, 1536
      %52 = vsyncadd [#allocation6], %s51
      %s53 = sshll.u32 [#allocation5], 4
      %s54 = int_to_ptr.vmem [resolvable:$true] %s53
      %59 = dma.hbm_to_vmem [thread:$0]  %s2, 1536, %s54, [#allocation6], 128, 128, 8
    $region13: #{tpu_custom_call.1} parent=1 // pred_fallthru
      _
    // Predicated region
    $region14: #{tpu_custom_call.1} parent=1 // pred_check
      _
    $region15: #{tpu_custom_call.1} parent=1 // pred_check_branch
      %61 = sbr.rel (0) target = $region17
    $region16: #{tpu_custom_call.1} parent=1 // pred_region
      _
    $region17: #{tpu_custom_call.1} parent=1 // pred_fallthru
      _
    // Predicated region
    $region18: #{tpu_custom_call.1} parent=1 // pred_check
      _
    $region19: #{tpu_custom_call.1} parent=1 // pred_check_branch
      %63 = sbr.rel (0) target = $region21
    $region20: #{tpu_custom_call.1} parent=1 // pred_region
      %s65 = ssub.s32 64, 64
      %66 = vsyncadd [#allocation6], %s65
      %s67 = sshll.u32 [#allocation7], 4
      %s68 = int_to_ptr.vmem [resolvable:$true] %s67
      %73 = dma.hbm_to_vmem [thread:$0]  %s4, 64, %s68, [#allocation6], 16, 16, 1
    $region21: #{tpu_custom_call.1} parent=1 // pred_fallthru
      _
    // Predicated region
    $region22: #{tpu_custom_call.1} parent=1 // pred_check
      _
    $region23: #{tpu_custom_call.1} parent=1 // pred_check_branch
      %75 = sbr.rel (0) target = $region25
    $region24: #{tpu_custom_call.1} parent=1 // pred_region
      %s77 = ssub.s32 64, 64
      %78 = vsyncadd [#allocation9], %s77
      %s79 = sshll.u32 [#allocation8], 4
      %s80 = int_to_ptr.vmem [resolvable:$true] %s79
      %85 = dma.hbm_to_vmem [thread:$0]  %s5, 64, %s80, [#allocation9], 16, 16, 1
    $region25: #{tpu_custom_call.1} parent=1 // pred_fallthru
      _
    // Predicated region
    $region26: #{tpu_custom_call.1} parent=1 // pred_check
      _
    $region27: #{tpu_custom_call.1} parent=1 // pred_check_branch
      %87 = sbr.rel (0) target = $region29
    $region28: #{tpu_custom_call.1} parent=1 // pred_region
      _
    $region29: #{tpu_custom_call.1} parent=1 // pred_fallthru
      _
    // Predicated region
    $region30: #{tpu_custom_call.1} parent=1 // pred_check
      _
    $region31: #{tpu_custom_call.1} parent=1 // pred_check_branch
      %89 = sbr.rel (0) target = $region33
    $region32: #{tpu_custom_call.1} parent=1 // pred_region
      %s91 = ssub.s32 16, 16
      %92 = vsyncadd [#allocation9], %s91
      %s94 = sshll.u32 [#allocation10], 4
      %s95 = int_to_ptr.vmem [resolvable:$true] %s94
      %97 = dma.hbm_to_vmem [thread:$0]  %s7, 16, %s95, [#allocation9]
    $region33: #{tpu_custom_call.1} parent=1 // pred_fallthru
      _
    // Predicated region
    $region34: #{tpu_custom_call.1} parent=1 // pred_check
      _
    $region35: #{tpu_custom_call.1} parent=1 // pred_check_branch
      %99 = sbr.rel (0) target = $region37
    $region36: #{tpu_custom_call.1} parent=1 // pred_region
      _
    $region37: #{tpu_custom_call.1} parent=1 // pred_fallthru
      _
    // Predicated region
    $region38: #{tpu_custom_call.1} parent=1 // pred_check
      _
    $region39: #{tpu_custom_call.1} parent=1 // pred_check_branch
      %101 = sbr.rel (0) target = $region41
    $region40: #{tpu_custom_call.1} parent=1 // pred_region
      _
    $region41: #{tpu_custom_call.1} parent=1 // pred_fallthru
      _
    // Predicated region
    $region42: #{tpu_custom_call.1} parent=1 // pred_check
      _
    $region43: #{tpu_custom_call.1} parent=1 // pred_check_branch
      %103 = sbr.rel (0) target = $region45
    $region44: #{tpu_custom_call.1} parent=1 // pred_region
      _
    $region45: #{tpu_custom_call.1} parent=1 // pred_fallthru
      _
    // Predicated region
    $region46: #{tpu_custom_call.1} parent=1 // pred_check
      _
    $region47: #{tpu_custom_call.1} parent=1 // pred_check_branch
      %105 = sbr.rel (0) target = $region49
    $region48: #{tpu_custom_call.1} parent=1 // pred_region
      %s107 = ssub.s32 16, 16
      %108 = vsyncadd [#allocation12], %s107
      %s110 = sshll.u32 [#allocation11], 4
      %s111 = int_to_ptr.vmem [resolvable:$true] %s110
      %113 = dma.hbm_to_vmem [thread:$0]  %s11, 16, %s111, [#allocation12]
    $region49: #{tpu_custom_call.1} parent=1 // pred_fallthru
      _
    // Predicated region
    $region50: #{tpu_custom_call.1} parent=1 // pred_check
      _
    $region51: #{tpu_custom_call.1} parent=1 // pred_check_branch
      %115 = sbr.rel (0) target = $region53
    $region52: #{tpu_custom_call.1} parent=1 // pred_region
      _
    $region53: #{tpu_custom_call.1} parent=1 // pred_fallthru
      _
    // Predicated region
    $region54: #{tpu_custom_call.1} parent=1 // pred_check
      _
    $region55: #{tpu_custom_call.1} parent=1 // pred_check_branch
      %117 = sbr.rel (0) target = $region57
    $region56: #{tpu_custom_call.1} parent=1 // pred_region
      %s119 = ssub.s32 16, 16
      %120 = vsyncadd [#allocation12], %s119
      %s122 = sshll.u32 [#allocation13], 4
      %s123 = int_to_ptr.vmem [resolvable:$true] %s122
      %125 = dma.hbm_to_vmem [thread:$0]  %s13, 16, %s123, [#allocation12]
    $region57: #{tpu_custom_call.1} parent=1 // pred_fallthru
      _
    // Predicated region
    $region58: #{tpu_custom_call.1} parent=1 // pred_check
      _
    $region59: #{tpu_custom_call.1} parent=1 // pred_check_branch
      %127 = sbr.rel (0) target = $region61
    $region60: #{tpu_custom_call.1} parent=1 // pred_region
      _
    $region61: #{tpu_custom_call.1} parent=1 // pred_fallthru
      _
    // Predicated region
    $region62: #{tpu_custom_call.1} parent=1 // pred_check
      _
    $region63: #{tpu_custom_call.1} parent=1 // pred_check_branch
      %129 = sbr.rel (0) target = $region65
    $region64: #{tpu_custom_call.1} parent=1 // pred_region
      _
    $region65: #{tpu_custom_call.1} parent=1 // pred_fallthru
      _
    // Predicated region
    $region66: #{tpu_custom_call.1} parent=1 // pred_check
      _
    $region67: #{tpu_custom_call.1} parent=1 // pred_check_branch
      %131 = sbr.rel (0) target = $region69
    $region68: #{tpu_custom_call.1} parent=1 // pred_region
      _
    $region69: #{tpu_custom_call.1} parent=1 // pred_fallthru
      _
    // Predicated region
    $region70: #{tpu_custom_call.1} parent=1 // pred_check
      _
    $region71: #{tpu_custom_call.1} parent=1 // pred_check_branch
      %133 = sbr.rel (0) target = $region73
    $region72: #{tpu_custom_call.1} parent=1 // pred_region
      _
    $region73: #{tpu_custom_call.1} parent=1 // pred_fallthru
      _
    // Predicated region
    $region74: #{tpu_custom_call.1} parent=1 // pred_check
      _
    $region75: #{tpu_custom_call.1} parent=1 // pred_check_branch
      %135 = sbr.rel (0) target = $region77
    $region76: #{tpu_custom_call.1} parent=1 // pred_region
      _
    $region77: #{tpu_custom_call.1} parent=1 // pred_fallthru
      _
    // Predicated region
    $region78: #{tpu_custom_call.1} parent=1 // pred_check
      _
    $region79: #{tpu_custom_call.1} parent=1 // pred_check_branch
      %137 = sbr.rel (0) target = $region81
    $region80: #{tpu_custom_call.1} parent=1 // pred_region
      _
    $region81: #{tpu_custom_call.1} parent=1 // pred_fallthru
      _
    // Predicated region
    $region82: #{tpu_custom_call.1} parent=1 // pred_check
      _
    $region83: #{tpu_custom_call.1} parent=1 // pred_check_branch
      %139 = sbr.rel (0) target = $region85
    $region84: #{tpu_custom_call.1} parent=1 // pred_region
      _
    $region85: #{tpu_custom_call.1} parent=1 // pred_fallthru
      _
    // Predicated region
    $region86: #{tpu_custom_call.1} parent=1 // pred_check
      _
    $region87: #{tpu_custom_call.1} parent=1 // pred_check_branch
      %141 = sbr.rel (0) target = $region89
    $region88: #{tpu_custom_call.1} parent=1 // pred_region
      _
    $region89: #{tpu_custom_call.1} parent=1 // pred_fallthru
      _
    // Predicated region
    $region90: #{tpu_custom_call.1} parent=1 // pred_check
      _
    $region91: #{tpu_custom_call.1} parent=1 // pred_check_branch
      %143 = sbr.rel (0) target = $region93
    $region92: #{tpu_custom_call.1} parent=1 // pred_region
      %144 = dma.done [#allocation3], 16
    $region93: #{tpu_custom_call.1} parent=1 // pred_fallthru
      _
    // Predicated region
    $region94: #{tpu_custom_call.1} parent=1 // pred_check
      _
    $region95: #{tpu_custom_call.1} parent=1 // pred_check_branch
      %146 = sbr.rel (0) target = $region97
    $region96: #{tpu_custom_call.1} parent=1 // pred_region
      %147 = dma.done [#allocation6], 1536
    $region97: #{tpu_custom_call.1} parent=1 // pred_fallthru
      _
    // Predicated region
    $region98: #{tpu_custom_call.1} parent=1 // pred_check
      _
    $region99: #{tpu_custom_call.1} parent=1 // pred_check_branch
      %149 = sbr.rel (0) target = $region101
    $region100: #{tpu_custom_call.1} parent=1 // pred_region
      %150 = dma.done [#allocation6], 64
    $region101: #{tpu_custom_call.1} parent=1 // pred_fallthru
      _
    // Predicated region
    $region102: #{tpu_custom_call.1} parent=1 // pred_check
      _
    $region103: #{tpu_custom_call.1} parent=1 // pred_check_branch
      %152 = sbr.rel (0) target = $region105
    $region104: #{tpu_custom_call.1} parent=1 // pred_region
      %153 = dma.done [#allocation9], 64
    $region105: #{tpu_custom_call.1} parent=1 // pred_fallthru
      _
    // Predicated region
    $region106: #{tpu_custom_call.1} parent=1 // pred_check
      _
    $region107: #{tpu_custom_call.1} parent=1 // pred_check_branch
      %155 = sbr.rel (0) target = $region109
    $region108: #{tpu_custom_call.1} parent=1 // pred_region
      %156 = dma.done [#allocation9], 16
    $region109: #{tpu_custom_call.1} parent=1 // pred_fallthru
      _
    // Predicated region
    $region110: #{tpu_custom_call.1} parent=1 // pred_check
      _
    $region111: #{tpu_custom_call.1} parent=1 // pred_check_branch
      %158 = sbr.rel (0) target = $region113
    $region112: #{tpu_custom_call.1} parent=1 // pred_region
      %159 = dma.done [#allocation12], 16
    $region113: #{tpu_custom_call.1} parent=1 // pred_fallthru
      _
    // Predicated region
    $region114: #{tpu_custom_call.1} parent=1 // pred_check
      _
    $region115: #{tpu_custom_call.1} parent=1 // pred_check_branch
      %161 = sbr.rel (0) target = $region117
    $region116: #{tpu_custom_call.1} parent=1 // pred_region
      %162 = dma.done [#allocation12], 16
    $region117: #{tpu_custom_call.1} parent=1 // pred_fallthru
      _
    %v163 = vld [vmem:[%s0] sm:$0xff]
    %v164 = vld [vmem:[%s0 + $0x8] sm:$0xff]
    %v165 = vld [vmem:[%s0 + $0x10] sm:$0xff]
    %v166 = vld [vmem:[%s0 + $0x18] sm:$0xff]
    %v167 = vld [vmem:[%s0 + $0x20] sm:$0xff]
    %v168 = vld [vmem:[%s0 + $0x28] sm:$0xff]
    %v169 = vld [vmem:[%s0 + $0x30] sm:$0xff]
    %v170 = vld [vmem:[%s0 + $0x38] sm:$0xff]
    %v171 = vld [vmem:[%s0 + $0x40] sm:$0xff]
    %v172 = vld [vmem:[%s0 + $0x48] sm:$0xff]
    %v173 = vld [vmem:[#allocation2] sm:$0x1]
    %175 = vset.pattern.permute.xlu0 0
    %176 = vperm.xlu0 %175, %v163
    %v177 = vpop.permute.xlu0 %176
    %180 = vset.pattern.permute.xlu0 0
    %181 = vperm.xlu0 %180, %v164
    %v182 = vpop.permute.xlu0 %181
    %185 = vset.pattern.permute.xlu0 0
    %186 = vperm.xlu0 %185, %v165
    %v187 = vpop.permute.xlu0 %186
    %190 = vset.pattern.permute.xlu0 0
    %191 = vperm.xlu0 %190, %v166
    %v192 = vpop.permute.xlu0 %191
    %195 = vset.pattern.permute.xlu0 0
    %196 = vperm.xlu0 %195, %v167
    %v197 = vpop.permute.xlu0 %196
    %200 = vset.pattern.permute.xlu0 0
    %201 = vperm.xlu0 %200, %v168
    %v202 = vpop.permute.xlu0 %201
    %205 = vset.pattern.permute.xlu0 0
    %206 = vperm.xlu0 %205, %v169
    %v207 = vpop.permute.xlu0 %206
    %210 = vset.pattern.permute.xlu0 0
    %211 = vperm.xlu0 %210, %v170
    %v212 = vpop.permute.xlu0 %211
    %215 = vset.pattern.permute.xlu0 0
    %216 = vperm.xlu0 %215, %v171
    %v217 = vpop.permute.xlu0 %216
    %220 = vset.pattern.permute.xlu0 0
    %221 = vperm.xlu0 %220, %v172
    %v222 = vpop.permute.xlu0 %221
    %v225 = vlaneseq
    %v226 = vshrl.u32 %v225, 7
    %v227 = vsub.s32 0, %v226
    %v228 = vrot.slane %v173, %v227
    %v230 = vmul.f32 %v177, %v228
    %v231 = vmul.f32 %v182, %v228
    %v232 = vmul.f32 %v187, %v228
    %v233 = vmul.f32 %v192, %v228
    %v234 = vmul.f32 %v197, %v228
    %v235 = vmul.f32 %v202, %v228
    %v236 = vmul.f32 %v207, %v228
    %v237 = vmul.f32 %v212, %v228
    %v238 = vmul.f32 %v217, %v228
    %v239 = vmul.f32 %v222, %v228
    %v240 = vld [vmem:[#allocation7] sm:$0x1]
    %v242 = vlaneseq
    %v243 = vshrl.u32 %v242, 7
    %v244 = vsub.s32 0, %v243
    %v245 = vrot.slane %v240, %v244
    %v247 = vadd.f32 %v230, %v245
    %v248 = vadd.f32 %v231, %v245
    %v249 = vadd.f32 %v232, %v245
    %v250 = vadd.f32 %v233, %v245
    %v251 = vadd.f32 %v234, %v245
    %v252 = vadd.f32 %v235, %v245
    %v253 = vadd.f32 %v236, %v245
    %v254 = vadd.f32 %v237, %v245
    %v255 = vadd.f32 %v238, %v245
    %v256 = vadd.f32 %v239, %v245
    %v257 = vld [vmem:[%s3] sm:$0xff]
    %v258 = vld [vmem:[%s3 + $0x8] sm:$0xff]
    %v259 = vld [vmem:[%s3 + $0x10] sm:$0xff]
    %v260 = vld [vmem:[%s3 + $0x18] sm:$0xff]
    %v261 = vld [vmem:[#allocation8] sm:$0x1]
    %v263 = vlaneseq
    %v264 = vshrl.u32 %v263, 7
    %v265 = vsub.s32 0, %v264
    %v266 = vrot.slane %v261, %v265
    %vm268 = vcmask 261120
    %v270 = vsel %vm268, 0.0, 0
    %272 = vmatprep.subr.mxu0 0.0
    %273 = vmatpush1.msra.mxu0 %v257
    %274 = vmatprep.subr.mxu0 0.0
    %275 = vmatpush1.msra.mxu0 %v258
    %276 = vmatprep.subr.mxu0 0.0
    %277 = vmatpush1.msra.mxu0 %v259
    %278 = vmatprep.subr.mxu0 0.0
    %279 = vmatpush1.msra.mxu0 %v260
    %280 = vmatprep.subr.mxu0 0.0
    %281 = vmatpush1.msra.mxu0 0.0
    %282 = vmatprep.subr.mxu0 0.0
    %283 = vmatpush1.msra.mxu0 0.0
    %284 = vmatprep.subr.mxu0 0.0
    %285 = vmatpush1.msra.mxu0 0.0
    %286 = vmatprep.subr.mxu0 0.0
    %287 = vmatpush1.msra.mxu0 0.0
    %288 = vmatprep.subr.mxu0 0.0
    %289 = vmatpush1.msra.mxu0 0.0
    %290 = vmatprep.subr.mxu0 0.0
    %291 = vmatpush1.msra.mxu0 0.0
    %292 = vmatprep.subr.mxu0 0.0
    %293 = vmatpush1.msra.mxu0 0.0
    %294 = vmatprep.subr.mxu0 0.0
    %295 = vmatpush1.msra.mxu0 0.0
    %296 = vmatprep.subr.mxu0 0.0
    %297 = vmatpush1.msra.mxu0 0.0
    %298 = vmatprep.subr.mxu0 0.0
    %299 = vmatpush1.msra.mxu0 0.0
    %300 = vmatprep.subr.mxu0 0.0
    %301 = vmatpush1.msra.mxu0 0.0
    %302 = vmatprep.subr.mxu0 0.0
    %303 = vmatpush1.msra.mxu0 0.0
    %304 = vmatprep.subr.mxu0 0.0
    %305 = vmatpush1.msra.mxu0 0.0
    %306 = vmatprep.subr.mxu0 0.0
    %307 = vmatpush1.msra.mxu0 0.0
    %308 = vmatprep.subr.mxu0 0.0
    %309 = vmatpush1.msra.mxu0 0.0
    %310 = vmatprep.subr.mxu0 0.0
    %311 = vmatpush1.msra.mxu0 0.0
    %312 = vmatprep.subr.mxu0 0.0
    %313 = vmatpush1.msra.mxu0 0.0
    %314 = vmatprep.subr.mxu0 0.0
    %315 = vmatpush1.msra.mxu0 0.0
    %316 = vmatprep.subr.mxu0 0.0
    %317 = vmatpush1.msra.mxu0 0.0
    %318 = vmatprep.subr.mxu0 0.0
    %319 = vmatpush1.msra.mxu0 0.0
    %320 = vmatprep.subr.mxu0 0.0
    %321 = vmatpush1.msra.mxu0 0.0
    %322 = vmatprep.subr.mxu0 0.0
    %323 = vmatpush1.msra.mxu0 0.0
    %324 = vmatprep.subr.mxu0 0.0
    %325 = vmatpush1.msra.mxu0 0.0
    %326 = vmatprep.subr.mxu0 0.0
    %327 = vmatpush1.msra.mxu0 0.0
    %328 = vmatprep.subr.mxu0 0.0
    %329 = vmatpush1.msra.mxu0 0.0
    %330 = vmatprep.subr.mxu0 0.0
    %331 = vmatpush1.msra.mxu0 0.0
    %332 = vmatprep.subr.mxu0 0.0
    %333 = vmatpush1.msra.mxu0 0.0
    %334 = vmatprep.subr.mxu0 0.0
    %335 = vmatpush1.msra.mxu0 0.0
    %336 = vmatprep.mubr.f32.mxu0 0.0
    %337 = vmatmul.mubr.f32.gmra.mrb[0].mxu0 %v270
    %v338 = vpop.f32.mrb[0].mxu0
    %v339 = vadd.f32 %v266, %v338
    %v340 = vpop.f32.mrb[0].mxu0
    %341 = vdwg.mxu0
    %v342 = vadd.f32 %v247, %v339
    %v343 = vsub.f32 0.0, %v342
    %v344 = vmul.f32 %v343, 1.442695
    %v345 = vpow.pop %v344
    %v346 = vadd.f32 %v345, 1.0
    %v347 = vrcp.pop %v346
    %v348 = vmul.f32 1.0, %v347
    %350 = vrot.lane.b32.xlu0 %v339, 64
    %v351 = vpop.permute.xlu0 %350
    %v353 = vmul.f32 %v348, %v351
    %355 = vrot.lane.b32.xlu0 %v353, 64
    %v356 = vpop.permute.xlu0 %355
    %v358 = vadd.f32 %v247, %v356
    %v359 = vtanh.pop %v358
    %v360 = vsub.f32 1.0, %v348
    %362 = vrot.lane.b32.xlu0 %v359, 96
    %v363 = vpop.permute.xlu0 %362
    %v365 = vmul.f32 %v360, %v363
    %v366 = vmul.f32 %v348, 0.0
    %v367 = vadd.f32 %v365, %v366
    %369 = vrot.lane.b32.xlu0 %v367, 96
    %v370 = vpop.permute.xlu0 %369
    %v371 = vsel %vm268, %v370, 0
    %373 = vmatprep.subr.mxu0 0.0
    %374 = vmatpush1.msra.mxu0 %v257
    %375 = vmatprep.subr.mxu0 0.0
    %376 = vmatpush1.msra.mxu0 %v258
    %377 = vmatprep.subr.mxu0 0.0
    %378 = vmatpush1.msra.mxu0 %v259
    %379 = vmatprep.subr.mxu0 0.0
    %380 = vmatpush1.msra.mxu0 %v260
    %381 = vmatprep.subr.mxu0 0.0
    %382 = vmatpush1.msra.mxu0 0.0
    %383 = vmatprep.subr.mxu0 0.0
    %384 = vmatpush1.msra.mxu0 0.0
    %385 = vmatprep.subr.mxu0 0.0
    %386 = vmatpush1.msra.mxu0 0.0
    %387 = vmatprep.subr.mxu0 0.0
    %388 = vmatpush1.msra.mxu0 0.0
    %389 = vmatprep.subr.mxu0 0.0
    %390 = vmatpush1.msra.mxu0 0.0
    %391 = vmatprep.subr.mxu0 0.0
    %392 = vmatpush1.msra.mxu0 0.0
    %393 = vmatprep.subr.mxu0 0.0
    %394 = vmatpush1.msra.mxu0 0.0
    %395 = vmatprep.subr.mxu0 0.0
    %396 = vmatpush1.msra.mxu0 0.0
    %397 = vmatprep.subr.mxu0 0.0
    %398 = vmatpush1.msra.mxu0 0.0
    %399 = vmatprep.subr.mxu0 0.0
    %400 = vmatpush1.msra.mxu0 0.0
    %401 = vmatprep.subr.mxu0 0.0
    %402 = vmatpush1.msra.mxu0 0.0
    %403 = vmatprep.subr.mxu0 0.0
    %404 = vmatpush1.msra.mxu0 0.0
    %405 = vmatprep.subr.mxu0 0.0
    %406 = vmatpush1.msra.mxu0 0.0
    %407 = vmatprep.subr.mxu0 0.0
    %408 = vmatpush1.msra.mxu0 0.0
    %409 = vmatprep.subr.mxu0 0.0
    %410 = vmatpush1.msra.mxu0 0.0
    %411 = vmatprep.subr.mxu0 0.0
    %412 = vmatpush1.msra.mxu0 0.0
    %413 = vmatprep.subr.mxu0 0.0
    %414 = vmatpush1.msra.mxu0 0.0
    %415 = vmatprep.subr.mxu0 0.0
    %416 = vmatpush1.msra.mxu0 0.0
    %417 = vmatprep.subr.mxu0 0.0
    %418 = vmatpush1.msra.mxu0 0.0
    %419 = vmatprep.subr.mxu0 0.0
    %420 = vmatpush1.msra.mxu0 0.0
    %421 = vmatprep.subr.mxu0 0.0
    %422 = vmatpush1.msra.mxu0 0.0
    %423 = vmatprep.subr.mxu0 0.0
    %424 = vmatpush1.msra.mxu0 0.0
    %425 = vmatprep.subr.mxu0 0.0
    %426 = vmatpush1.msra.mxu0 0.0
    %427 = vmatprep.subr.mxu0 0.0
    %428 = vmatpush1.msra.mxu0 0.0
    %429 = vmatprep.subr.mxu0 0.0
    %430 = vmatpush1.msra.mxu0 0.0
    %431 = vmatprep.subr.mxu0 0.0
    %432 = vmatpush1.msra.mxu0 0.0
    %433 = vmatprep.subr.mxu0 0.0
    %434 = vmatpush1.msra.mxu0 0.0
    %435 = vmatprep.subr.mxu0 0.0
    %436 = vmatpush1.msra.mxu0 0.0
    %437 = vmatprep.mubr.f32.mxu0 0.0
    %438 = vmatmul.mubr.f32.gmra.mrb[0].mxu0 %v371
    %v439 = vpop.f32.mrb[0].mxu0
    %v440 = vadd.f32 %v266, %v439
    %v441 = vpop.f32.mrb[0].mxu0
    %442 = vdwg.mxu0
    %v443 = vadd.f32 %v248, %v440
    %v444 = vsub.f32 0.0, %v443
    %v445 = vmul.f32 %v444, 1.442695
    %v446 = vpow.pop %v445
    %v447 = vadd.f32 %v446, 1.0
    %v448 = vrcp.pop %v447
    %v449 = vmul.f32 1.0, %v448
    %451 = vrot.lane.b32.xlu0 %v440, 64
    %v452 = vpop.permute.xlu0 %451
    %v454 = vmul.f32 %v449, %v452
    %456 = vrot.lane.b32.xlu0 %v454, 64
    %v457 = vpop.permute.xlu0 %456
    %v459 = vadd.f32 %v248, %v457
    %v460 = vtanh.pop %v459
    %v461 = vsub.f32 1.0, %v449
    %463 = vrot.lane.b32.xlu0 %v460, 96
    %v464 = vpop.permute.xlu0 %463
    %v466 = vmul.f32 %v461, %v464
    %v467 = vmul.f32 %v449, %v367
    %v468 = vadd.f32 %v466, %v467
    %470 = vrot.lane.b32.xlu0 %v468, 96
    %v471 = vpop.permute.xlu0 %470
    %v472 = vsel %vm268, %v471, 0
    %474 = vmatprep.subr.mxu0 0.0
    %475 = vmatpush1.msra.mxu0 %v257
    %476 = vmatprep.subr.mxu0 0.0
    %477 = vmatpush1.msra.mxu0 %v258
    %478 = vmatprep.subr.mxu0 0.0
    %479 = vmatpush1.msra.mxu0 %v259
    %480 = vmatprep.subr.mxu0 0.0
    %481 = vmatpush1.msra.mxu0 %v260
    %482 = vmatprep.subr.mxu0 0.0
    %483 = vmatpush1.msra.mxu0 0.0
    %484 = vmatprep.subr.mxu0 0.0
    %485 = vmatpush1.msra.mxu0 0.0
    %486 = vmatprep.subr.mxu0 0.0
    %487 = vmatpush1.msra.mxu0 0.0
    %488 = vmatprep.subr.mxu0 0.0
    %489 = vmatpush1.msra.mxu0 0.0
    %490 = vmatprep.subr.mxu0 0.0
    %491 = vmatpush1.msra.mxu0 0.0
    %492 = vmatprep.subr.mxu0 0.0
    %493 = vmatpush1.msra.mxu0 0.0
    %494 = vmatprep.subr.mxu0 0.0
    %495 = vmatpush1.msra.mxu0 0.0
    %496 = vmatprep.subr.mxu0 0.0
    %497 = vmatpush1.msra.mxu0 0.0
    %498 = vmatprep.subr.mxu0 0.0
    %499 = vmatpush1.msra.mxu0 0.0
    %500 = vmatprep.subr.mxu0 0.0
    %501 = vmatpush1.msra.mxu0 0.0
    %502 = vmatprep.subr.mxu0 0.0
    %503 = vmatpush1.msra.mxu0 0.0
    %504 = vmatprep.subr.mxu0 0.0
    %505 = vmatpush1.msra.mxu0 0.0
    %506 = vmatprep.subr.mxu0 0.0
    %507 = vmatpush1.msra.mxu0 0.0
    %508 = vmatprep.subr.mxu0 0.0
    %509 = vmatpush1.msra.mxu0 0.0
    %510 = vmatprep.subr.mxu0 0.0
    %511 = vmatpush1.msra.mxu0 0.0
    %512 = vmatprep.subr.mxu0 0.0
    %513 = vmatpush1.msra.mxu0 0.0
    %514 = vmatprep.subr.mxu0 0.0
    %515 = vmatpush1.msra.mxu0 0.0
    %516 = vmatprep.subr.mxu0 0.0
    %517 = vmatpush1.msra.mxu0 0.0
    %518 = vmatprep.subr.mxu0 0.0
    %519 = vmatpush1.msra.mxu0 0.0
    %520 = vmatprep.subr.mxu0 0.0
    %521 = vmatpush1.msra.mxu0 0.0
    %522 = vmatprep.subr.mxu0 0.0
    %523 = vmatpush1.msra.mxu0 0.0
    %524 = vmatprep.subr.mxu0 0.0
    %525 = vmatpush1.msra.mxu0 0.0
    %526 = vmatprep.subr.mxu0 0.0
    %527 = vmatpush1.msra.mxu0 0.0
    %528 = vmatprep.subr.mxu0 0.0
    %529 = vmatpush1.msra.mxu0 0.0
    %530 = vmatprep.subr.mxu0 0.0
    %531 = vmatpush1.msra.mxu0 0.0
    %532 = vmatprep.subr.mxu0 0.0
    %533 = vmatpush1.msra.mxu0 0.0
    %534 = vmatprep.subr.mxu0 0.0
    %535 = vmatpush1.msra.mxu0 0.0
    %536 = vmatprep.subr.mxu0 0.0
    %537 = vmatpush1.msra.mxu0 0.0
    %538 = vmatprep.mubr.f32.mxu0 0.0
    %539 = vmatmul.mubr.f32.gmra.mrb[0].mxu0 %v472
    %v540 = vpop.f32.mrb[0].mxu0
    %v541 = vadd.f32 %v266, %v540
    %v542 = vpop.f32.mrb[0].mxu0
    %543 = vdwg.mxu0
    %v544 = vadd.f32 %v249, %v541
    %v545 = vsub.f32 0.0, %v544
    %v546 = vmul.f32 %v545, 1.442695
    %v547 = vpow.pop %v546
    %v548 = vadd.f32 %v547, 1.0
    %v549 = vrcp.pop %v548
    %v550 = vmul.f32 1.0, %v549
    %552 = vrot.lane.b32.xlu0 %v541, 64
    %v553 = vpop.permute.xlu0 %552
    %v555 = vmul.f32 %v550, %v553
    %557 = vrot.lane.b32.xlu0 %v555, 64
    %v558 = vpop.permute.xlu0 %557
    %v560 = vadd.f32 %v249, %v558
    %v561 = vtanh.pop %v560
    %v562 = vsub.f32 1.0, %v550
    %564 = vrot.lane.b32.xlu0 %v561, 96
    %v565 = vpop.permute.xlu0 %564
    %v567 = vmul.f32 %v562, %v565
    %v568 = vmul.f32 %v550, %v468
    %v569 = vadd.f32 %v567, %v568
    %571 = vrot.lane.b32.xlu0 %v569, 96
    %v572 = vpop.permute.xlu0 %571
    %v573 = vsel %vm268, %v572, 0
    %575 = vmatprep.subr.mxu0 0.0
    %576 = vmatpush1.msra.mxu0 %v257
    %577 = vmatprep.subr.mxu0 0.0
    %578 = vmatpush1.msra.mxu0 %v258
    %579 = vmatprep.subr.mxu0 0.0
    %580 = vmatpush1.msra.mxu0 %v259
    %581 = vmatprep.subr.mxu0 0.0
    %582 = vmatpush1.msra.mxu0 %v260
    %583 = vmatprep.subr.mxu0 0.0
    %584 = vmatpush1.msra.mxu0 0.0
    %585 = vmatprep.subr.mxu0 0.0
    %586 = vmatpush1.msra.mxu0 0.0
    %587 = vmatprep.subr.mxu0 0.0
    %588 = vmatpush1.msra.mxu0 0.0
    %589 = vmatprep.subr.mxu0 0.0
    %590 = vmatpush1.msra.mxu0 0.0
    %591 = vmatprep.subr.mxu0 0.0
    %592 = vmatpush1.msra.mxu0 0.0
    %593 = vmatprep.subr.mxu0 0.0
    %594 = vmatpush1.msra.mxu0 0.0
    %595 = vmatprep.subr.mxu0 0.0
    %596 = vmatpush1.msra.mxu0 0.0
    %597 = vmatprep.subr.mxu0 0.0
    %598 = vmatpush1.msra.mxu0 0.0
    %599 = vmatprep.subr.mxu0 0.0
    %600 = vmatpush1.msra.mxu0 0.0
    %601 = vmatprep.subr.mxu0 0.0
    %602 = vmatpush1.msra.mxu0 0.0
    %603 = vmatprep.subr.mxu0 0.0
    %604 = vmatpush1.msra.mxu0 0.0
    %605 = vmatprep.subr.mxu0 0.0
    %606 = vmatpush1.msra.mxu0 0.0
    %607 = vmatprep.subr.mxu0 0.0
    %608 = vmatpush1.msra.mxu0 0.0
    %609 = vmatprep.subr.mxu0 0.0
    %610 = vmatpush1.msra.mxu0 0.0
    %611 = vmatprep.subr.mxu0 0.0
    %612 = vmatpush1.msra.mxu0 0.0
    %613 = vmatprep.subr.mxu0 0.0
    %614 = vmatpush1.msra.mxu0 0.0
    %615 = vmatprep.subr.mxu0 0.0
    %616 = vmatpush1.msra.mxu0 0.0
    %617 = vmatprep.subr.mxu0 0.0
    %618 = vmatpush1.msra.mxu0 0.0
    %619 = vmatprep.subr.mxu0 0.0
    %620 = vmatpush1.msra.mxu0 0.0
    %621 = vmatprep.subr.mxu0 0.0
    %622 = vmatpush1.msra.mxu0 0.0
    %623 = vmatprep.subr.mxu0 0.0
    %624 = vmatpush1.msra.mxu0 0.0
    %625 = vmatprep.subr.mxu0 0.0
    %626 = vmatpush1.msra.mxu0 0.0
    %627 = vmatprep.subr.mxu0 0.0
    %628 = vmatpush1.msra.mxu0 0.0
    %629 = vmatprep.subr.mxu0 0.0
    %630 = vmatpush1.msra.mxu0 0.0
    %631 = vmatprep.subr.mxu0 0.0
    %632 = vmatpush1.msra.mxu0 0.0
    %633 = vmatprep.subr.mxu0 0.0
    %634 = vmatpush1.msra.mxu0 0.0
    %635 = vmatprep.subr.mxu0 0.0
    %636 = vmatpush1.msra.mxu0 0.0
    %637 = vmatprep.subr.mxu0 0.0
    %638 = vmatpush1.msra.mxu0 0.0
    %639 = vmatprep.mubr.f32.mxu0 0.0
    %640 = vmatmul.mubr.f32.gmra.mrb[0].mxu0 %v573
    %v641 = vpop.f32.mrb[0].mxu0
    %v642 = vadd.f32 %v266, %v641
    %v643 = vpop.f32.mrb[0].mxu0
    %644 = vdwg.mxu0
    %v645 = vadd.f32 %v250, %v642
    %v646 = vsub.f32 0.0, %v645
    %v647 = vmul.f32 %v646, 1.442695
    %v648 = vpow.pop %v647
    %v649 = vadd.f32 %v648, 1.0
    %v650 = vrcp.pop %v649
    %v651 = vmul.f32 1.0, %v650
    %653 = vrot.lane.b32.xlu0 %v642, 64
    %v654 = vpop.permute.xlu0 %653
    %v656 = vmul.f32 %v651, %v654
    %658 = vrot.lane.b32.xlu0 %v656, 64
    %v659 = vpop.permute.xlu0 %658
    %v661 = vadd.f32 %v250, %v659
    %v662 = vtanh.pop %v661
    %v663 = vsub.f32 1.0, %v651
    %665 = vrot.lane.b32.xlu0 %v662, 96
    %v666 = vpop.permute.xlu0 %665
    %v668 = vmul.f32 %v663, %v666
    %v669 = vmul.f32 %v651, %v569
    %v670 = vadd.f32 %v668, %v669
    %672 = vrot.lane.b32.xlu0 %v670, 96
    %v673 = vpop.permute.xlu0 %672
    %v674 = vsel %vm268, %v673, 0
    %676 = vmatprep.subr.mxu0 0.0
    %677 = vmatpush1.msra.mxu0 %v257
    %678 = vmatprep.subr.mxu0 0.0
    %679 = vmatpush1.msra.mxu0 %v258
    %680 = vmatprep.subr.mxu0 0.0
    %681 = vmatpush1.msra.mxu0 %v259
    %682 = vmatprep.subr.mxu0 0.0
    %683 = vmatpush1.msra.mxu0 %v260
    %684 = vmatprep.subr.mxu0 0.0
    %685 = vmatpush1.msra.mxu0 0.0
    %686 = vmatprep.subr.mxu0 0.0
    %687 = vmatpush1.msra.mxu0 0.0
    %688 = vmatprep.subr.mxu0 0.0
    %689 = vmatpush1.msra.mxu0 0.0
    %690 = vmatprep.subr.mxu0 0.0
    %691 = vmatpush1.msra.mxu0 0.0
    %692 = vmatprep.subr.mxu0 0.0
    %693 = vmatpush1.msra.mxu0 0.0
    %694 = vmatprep.subr.mxu0 0.0
    %695 = vmatpush1.msra.mxu0 0.0
    %696 = vmatprep.subr.mxu0 0.0
    %697 = vmatpush1.msra.mxu0 0.0
    %698 = vmatprep.subr.mxu0 0.0
    %699 = vmatpush1.msra.mxu0 0.0
    %700 = vmatprep.subr.mxu0 0.0
    %701 = vmatpush1.msra.mxu0 0.0
    %702 = vmatprep.subr.mxu0 0.0
    %703 = vmatpush1.msra.mxu0 0.0
    %704 = vmatprep.subr.mxu0 0.0
    %705 = vmatpush1.msra.mxu0 0.0
    %706 = vmatprep.subr.mxu0 0.0
    %707 = vmatpush1.msra.mxu0 0.0
    %708 = vmatprep.subr.mxu0 0.0
    %709 = vmatpush1.msra.mxu0 0.0
    %710 = vmatprep.subr.mxu0 0.0
    %711 = vmatpush1.msra.mxu0 0.0
    %712 = vmatprep.subr.mxu0 0.0
    %713 = vmatpush1.msra.mxu0 0.0
    %714 = vmatprep.subr.mxu0 0.0
    %715 = vmatpush1.msra.mxu0 0.0
    %716 = vmatprep.subr.mxu0 0.0
    %717 = vmatpush1.msra.mxu0 0.0
    %718 = vmatprep.subr.mxu0 0.0
    %719 = vmatpush1.msra.mxu0 0.0
    %720 = vmatprep.subr.mxu0 0.0
    %721 = vmatpush1.msra.mxu0 0.0
    %722 = vmatprep.subr.mxu0 0.0
    %723 = vmatpush1.msra.mxu0 0.0
    %724 = vmatprep.subr.mxu0 0.0
    %725 = vmatpush1.msra.mxu0 0.0
    %726 = vmatprep.subr.mxu0 0.0
    %727 = vmatpush1.msra.mxu0 0.0
    %728 = vmatprep.subr.mxu0 0.0
    %729 = vmatpush1.msra.mxu0 0.0
    %730 = vmatprep.subr.mxu0 0.0
    %731 = vmatpush1.msra.mxu0 0.0
    %732 = vmatprep.subr.mxu0 0.0
    %733 = vmatpush1.msra.mxu0 0.0
    %734 = vmatprep.subr.mxu0 0.0
    %735 = vmatpush1.msra.mxu0 0.0
    %736 = vmatprep.subr.mxu0 0.0
    %737 = vmatpush1.msra.mxu0 0.0
    %738 = vmatprep.subr.mxu0 0.0
    %739 = vmatpush1.msra.mxu0 0.0
    %740 = vmatprep.mubr.f32.mxu0 0.0
    %741 = vmatmul.mubr.f32.gmra.mrb[0].mxu0 %v674
    %v742 = vpop.f32.mrb[0].mxu0
    %v743 = vadd.f32 %v266, %v742
    %v744 = vpop.f32.mrb[0].mxu0
    %745 = vdwg.mxu0
    %v746 = vadd.f32 %v251, %v743
    %v747 = vsub.f32 0.0, %v746
    %v748 = vmul.f32 %v747, 1.442695
    %v749 = vpow.pop %v748
    %v750 = vadd.f32 %v749, 1.0
    %v751 = vrcp.pop %v750
    %v752 = vmul.f32 1.0, %v751
    %754 = vrot.lane.b32.xlu0 %v743, 64
    %v755 = vpop.permute.xlu0 %754
    %v757 = vmul.f32 %v752, %v755
    %759 = vrot.lane.b32.xlu0 %v757, 64
    %v760 = vpop.permute.xlu0 %759
    %v762 = vadd.f32 %v251, %v760
    %v763 = vtanh.pop %v762
    %v764 = vsub.f32 1.0, %v752
    %766 = vrot.lane.b32.xlu0 %v763, 96
    %v767 = vpop.permute.xlu0 %766
    %v769 = vmul.f32 %v764, %v767
    %v770 = vmul.f32 %v752, %v670
    %v771 = vadd.f32 %v769, %v770
    %773 = vrot.lane.b32.xlu0 %v771, 96
    %v774 = vpop.permute.xlu0 %773
    %v775 = vsel %vm268, %v774, 0
    %777 = vmatprep.subr.mxu0 0.0
    %778 = vmatpush1.msra.mxu0 %v257
    %779 = vmatprep.subr.mxu0 0.0
    %780 = vmatpush1.msra.mxu0 %v258
    %781 = vmatprep.subr.mxu0 0.0
    %782 = vmatpush1.msra.mxu0 %v259
    %783 = vmatprep.subr.mxu0 0.0
    %784 = vmatpush1.msra.mxu0 %v260
    %785 = vmatprep.subr.mxu0 0.0
    %786 = vmatpush1.msra.mxu0 0.0
    %787 = vmatprep.subr.mxu0 0.0
    %788 = vmatpush1.msra.mxu0 0.0
    %789 = vmatprep.subr.mxu0 0.0
    %790 = vmatpush1.msra.mxu0 0.0
    %791 = vmatprep.subr.mxu0 0.0
    %792 = vmatpush1.msra.mxu0 0.0
    %793 = vmatprep.subr.mxu0 0.0
    %794 = vmatpush1.msra.mxu0 0.0
    %795 = vmatprep.subr.mxu0 0.0
    %796 = vmatpush1.msra.mxu0 0.0
    %797 = vmatprep.subr.mxu0 0.0
    %798 = vmatpush1.msra.mxu0 0.0
    %799 = vmatprep.subr.mxu0 0.0
    %800 = vmatpush1.msra.mxu0 0.0
    %801 = vmatprep.subr.mxu0 0.0
    %802 = vmatpush1.msra.mxu0 0.0
    %803 = vmatprep.subr.mxu0 0.0
    %804 = vmatpush1.msra.mxu0 0.0
    %805 = vmatprep.subr.mxu0 0.0
    %806 = vmatpush1.msra.mxu0 0.0
    %807 = vmatprep.subr.mxu0 0.0
    %808 = vmatpush1.msra.mxu0 0.0
    %809 = vmatprep.subr.mxu0 0.0
    %810 = vmatpush1.msra.mxu0 0.0
    %811 = vmatprep.subr.mxu0 0.0
    %812 = vmatpush1.msra.mxu0 0.0
    %813 = vmatprep.subr.mxu0 0.0
    %814 = vmatpush1.msra.mxu0 0.0
    %815 = vmatprep.subr.mxu0 0.0
    %816 = vmatpush1.msra.mxu0 0.0
    %817 = vmatprep.subr.mxu0 0.0
    %818 = vmatpush1.msra.mxu0 0.0
    %819 = vmatprep.subr.mxu0 0.0
    %820 = vmatpush1.msra.mxu0 0.0
    %821 = vmatprep.subr.mxu0 0.0
    %822 = vmatpush1.msra.mxu0 0.0
    %823 = vmatprep.subr.mxu0 0.0
    %824 = vmatpush1.msra.mxu0 0.0
    %825 = vmatprep.subr.mxu0 0.0
    %826 = vmatpush1.msra.mxu0 0.0
    %827 = vmatprep.subr.mxu0 0.0
    %828 = vmatpush1.msra.mxu0 0.0
    %829 = vmatprep.subr.mxu0 0.0
    %830 = vmatpush1.msra.mxu0 0.0
    %831 = vmatprep.subr.mxu0 0.0
    %832 = vmatpush1.msra.mxu0 0.0
    %833 = vmatprep.subr.mxu0 0.0
    %834 = vmatpush1.msra.mxu0 0.0
    %835 = vmatprep.subr.mxu0 0.0
    %836 = vmatpush1.msra.mxu0 0.0
    %837 = vmatprep.subr.mxu0 0.0
    %838 = vmatpush1.msra.mxu0 0.0
    %839 = vmatprep.subr.mxu0 0.0
    %840 = vmatpush1.msra.mxu0 0.0
    %841 = vmatprep.mubr.f32.mxu0 0.0
    %842 = vmatmul.mubr.f32.gmra.mrb[0].mxu0 %v775
    %v843 = vpop.f32.mrb[0].mxu0
    %v844 = vadd.f32 %v266, %v843
    %v845 = vpop.f32.mrb[0].mxu0
    %846 = vdwg.mxu0
    %v847 = vadd.f32 %v252, %v844
    %v848 = vsub.f32 0.0, %v847
    %v849 = vmul.f32 %v848, 1.442695
    %v850 = vpow.pop %v849
    %v851 = vadd.f32 %v850, 1.0
    %v852 = vrcp.pop %v851
    %v853 = vmul.f32 1.0, %v852
    %855 = vrot.lane.b32.xlu0 %v844, 64
    %v856 = vpop.permute.xlu0 %855
    %v858 = vmul.f32 %v853, %v856
    %860 = vrot.lane.b32.xlu0 %v858, 64
    %v861 = vpop.permute.xlu0 %860
    %v863 = vadd.f32 %v252, %v861
    %v864 = vtanh.pop %v863
    %v865 = vsub.f32 1.0, %v853
    %867 = vrot.lane.b32.xlu0 %v864, 96
    %v868 = vpop.permute.xlu0 %867
    %v870 = vmul.f32 %v865, %v868
    %v871 = vmul.f32 %v853, %v771
    %v872 = vadd.f32 %v870, %v871
    %874 = vrot.lane.b32.xlu0 %v872, 96
    %v875 = vpop.permute.xlu0 %874
    %v876 = vsel %vm268, %v875, 0
    %878 = vmatprep.subr.mxu0 0.0
    %879 = vmatpush1.msra.mxu0 %v257
    %880 = vmatprep.subr.mxu0 0.0
    %881 = vmatpush1.msra.mxu0 %v258
    %882 = vmatprep.subr.mxu0 0.0
    %883 = vmatpush1.msra.mxu0 %v259
    %884 = vmatprep.subr.mxu0 0.0
    %885 = vmatpush1.msra.mxu0 %v260
    %886 = vmatprep.subr.mxu0 0.0
    %887 = vmatpush1.msra.mxu0 0.0
    %888 = vmatprep.subr.mxu0 0.0
    %889 = vmatpush1.msra.mxu0 0.0
    %890 = vmatprep.subr.mxu0 0.0
    %891 = vmatpush1.msra.mxu0 0.0
    %892 = vmatprep.subr.mxu0 0.0
    %893 = vmatpush1.msra.mxu0 0.0
    %894 = vmatprep.subr.mxu0 0.0
    %895 = vmatpush1.msra.mxu0 0.0
    %896 = vmatprep.subr.mxu0 0.0
    %897 = vmatpush1.msra.mxu0 0.0
    %898 = vmatprep.subr.mxu0 0.0
    %899 = vmatpush1.msra.mxu0 0.0
    %900 = vmatprep.subr.mxu0 0.0
    %901 = vmatpush1.msra.mxu0 0.0
    %902 = vmatprep.subr.mxu0 0.0
    %903 = vmatpush1.msra.mxu0 0.0
    %904 = vmatprep.subr.mxu0 0.0
    %905 = vmatpush1.msra.mxu0 0.0
    %906 = vmatprep.subr.mxu0 0.0
    %907 = vmatpush1.msra.mxu0 0.0
    %908 = vmatprep.subr.mxu0 0.0
    %909 = vmatpush1.msra.mxu0 0.0
    %910 = vmatprep.subr.mxu0 0.0
    %911 = vmatpush1.msra.mxu0 0.0
    %912 = vmatprep.subr.mxu0 0.0
    %913 = vmatpush1.msra.mxu0 0.0
    %914 = vmatprep.subr.mxu0 0.0
    %915 = vmatpush1.msra.mxu0 0.0
    %916 = vmatprep.subr.mxu0 0.0
    %917 = vmatpush1.msra.mxu0 0.0
    %918 = vmatprep.subr.mxu0 0.0
    %919 = vmatpush1.msra.mxu0 0.0
    %920 = vmatprep.subr.mxu0 0.0
    %921 = vmatpush1.msra.mxu0 0.0
    %922 = vmatprep.subr.mxu0 0.0
    %923 = vmatpush1.msra.mxu0 0.0
    %924 = vmatprep.subr.mxu0 0.0
    %925 = vmatpush1.msra.mxu0 0.0
    %926 = vmatprep.subr.mxu0 0.0
    %927 = vmatpush1.msra.mxu0 0.0
    %928 = vmatprep.subr.mxu0 0.0
    %929 = vmatpush1.msra.mxu0 0.0
    %930 = vmatprep.subr.mxu0 0.0
    %931 = vmatpush1.msra.mxu0 0.0
    %932 = vmatprep.subr.mxu0 0.0
    %933 = vmatpush1.msra.mxu0 0.0
    %934 = vmatprep.subr.mxu0 0.0
    %935 = vmatpush1.msra.mxu0 0.0
    %936 = vmatprep.subr.mxu0 0.0
    %937 = vmatpush1.msra.mxu0 0.0
    %938 = vmatprep.subr.mxu0 0.0
    %939 = vmatpush1.msra.mxu0 0.0
    %940 = vmatprep.subr.mxu0 0.0
    %941 = vmatpush1.msra.mxu0 0.0
    %942 = vmatprep.mubr.f32.mxu0 0.0
    %943 = vmatmul.mubr.f32.gmra.mrb[0].mxu0 %v876
    %v944 = vpop.f32.mrb[0].mxu0
    %v945 = vadd.f32 %v266, %v944
    %v946 = vpop.f32.mrb[0].mxu0
    %947 = vdwg.mxu0
    %v948 = vadd.f32 %v253, %v945
    %v949 = vsub.f32 0.0, %v948
    %v950 = vmul.f32 %v949, 1.442695
    %v951 = vpow.pop %v950
    %v952 = vadd.f32 %v951, 1.0
    %v953 = vrcp.pop %v952
    %v954 = vmul.f32 1.0, %v953
    %956 = vrot.lane.b32.xlu0 %v945, 64
    %v957 = vpop.permute.xlu0 %956
    %v959 = vmul.f32 %v954, %v957
    %961 = vrot.lane.b32.xlu0 %v959, 64
    %v962 = vpop.permute.xlu0 %961
    %v964 = vadd.f32 %v253, %v962
    %v965 = vtanh.pop %v964
    %v966 = vsub.f32 1.0, %v954
    %968 = vrot.lane.b32.xlu0 %v965, 96
    %v969 = vpop.permute.xlu0 %968
    %v971 = vmul.f32 %v966, %v969
    %v972 = vmul.f32 %v954, %v872
    %v973 = vadd.f32 %v971, %v972
    %975 = vrot.lane.b32.xlu0 %v973, 96
    %v976 = vpop.permute.xlu0 %975
    %v977 = vsel %vm268, %v976, 0
    %979 = vmatprep.subr.mxu0 0.0
    %980 = vmatpush1.msra.mxu0 %v257
    %981 = vmatprep.subr.mxu0 0.0
    %982 = vmatpush1.msra.mxu0 %v258
    %983 = vmatprep.subr.mxu0 0.0
    %984 = vmatpush1.msra.mxu0 %v259
    %985 = vmatprep.subr.mxu0 0.0
    %986 = vmatpush1.msra.mxu0 %v260
    %987 = vmatprep.subr.mxu0 0.0
    %988 = vmatpush1.msra.mxu0 0.0
    %989 = vmatprep.subr.mxu0 0.0
    %990 = vmatpush1.msra.mxu0 0.0
    %991 = vmatprep.subr.mxu0 0.0
    %992 = vmatpush1.msra.mxu0 0.0
    %993 = vmatprep.subr.mxu0 0.0
    %994 = vmatpush1.msra.mxu0 0.0
    %995 = vmatprep.subr.mxu0 0.0
    %996 = vmatpush1.msra.mxu0 0.0
    %997 = vmatprep.subr.mxu0 0.0
    %998 = vmatpush1.msra.mxu0 0.0
    %999 = vmatprep.subr.mxu0 0.0
    %1000 = vmatpush1.msra.mxu0 0.0
    %1001 = vmatprep.subr.mxu0 0.0
    %1002 = vmatpush1.msra.mxu0 0.0
    %1003 = vmatprep.subr.mxu0 0.0
    %1004 = vmatpush1.msra.mxu0 0.0
    %1005 = vmatprep.subr.mxu0 0.0
    %1006 = vmatpush1.msra.mxu0 0.0
    %1007 = vmatprep.subr.mxu0 0.0
    %1008 = vmatpush1.msra.mxu0 0.0
    %1009 = vmatprep.subr.mxu0 0.0
    %1010 = vmatpush1.msra.mxu0 0.0
    %1011 = vmatprep.subr.mxu0 0.0
    %1012 = vmatpush1.msra.mxu0 0.0
    %1013 = vmatprep.subr.mxu0 0.0
    %1014 = vmatpush1.msra.mxu0 0.0
    %1015 = vmatprep.subr.mxu0 0.0
    %1016 = vmatpush1.msra.mxu0 0.0
    %1017 = vmatprep.subr.mxu0 0.0
    %1018 = vmatpush1.msra.mxu0 0.0
    %1019 = vmatprep.subr.mxu0 0.0
    %1020 = vmatpush1.msra.mxu0 0.0
    %1021 = vmatprep.subr.mxu0 0.0
    %1022 = vmatpush1.msra.mxu0 0.0
    %1023 = vmatprep.subr.mxu0 0.0
    %1024 = vmatpush1.msra.mxu0 0.0
    %1025 = vmatprep.subr.mxu0 0.0
    %1026 = vmatpush1.msra.mxu0 0.0
    %1027 = vmatprep.subr.mxu0 0.0
    %1028 = vmatpush1.msra.mxu0 0.0
    %1029 = vmatprep.subr.mxu0 0.0
    %1030 = vmatpush1.msra.mxu0 0.0
    %1031 = vmatprep.subr.mxu0 0.0
    %1032 = vmatpush1.msra.mxu0 0.0
    %1033 = vmatprep.subr.mxu0 0.0
    %1034 = vmatpush1.msra.mxu0 0.0
    %1035 = vmatprep.subr.mxu0 0.0
    %1036 = vmatpush1.msra.mxu0 0.0
    %1037 = vmatprep.subr.mxu0 0.0
    %1038 = vmatpush1.msra.mxu0 0.0
    %1039 = vmatprep.subr.mxu0 0.0
    %1040 = vmatpush1.msra.mxu0 0.0
    %1041 = vmatprep.subr.mxu0 0.0
    %1042 = vmatpush1.msra.mxu0 0.0
    %1043 = vmatprep.mubr.f32.mxu0 0.0
    %1044 = vmatmul.mubr.f32.gmra.mrb[0].mxu0 %v977
    %v1045 = vpop.f32.mrb[0].mxu0
    %v1046 = vadd.f32 %v266, %v1045
    %v1047 = vpop.f32.mrb[0].mxu0
    %1048 = vdwg.mxu0
    %v1049 = vadd.f32 %v254, %v1046
    %v1050 = vsub.f32 0.0, %v1049
    %v1051 = vmul.f32 %v1050, 1.442695
    %v1052 = vpow.pop %v1051
    %v1053 = vadd.f32 %v1052, 1.0
    %v1054 = vrcp.pop %v1053
    %v1055 = vmul.f32 1.0, %v1054
    %1057 = vrot.lane.b32.xlu0 %v1046, 64
    %v1058 = vpop.permute.xlu0 %1057
    %v1060 = vmul.f32 %v1055, %v1058
    %1062 = vrot.lane.b32.xlu0 %v1060, 64
    %v1063 = vpop.permute.xlu0 %1062
    %v1065 = vadd.f32 %v254, %v1063
    %v1066 = vtanh.pop %v1065
    %v1067 = vsub.f32 1.0, %v1055
    %1069 = vrot.lane.b32.xlu0 %v1066, 96
    %v1070 = vpop.permute.xlu0 %1069
    %v1072 = vmul.f32 %v1067, %v1070
    %v1073 = vmul.f32 %v1055, %v973
    %v1074 = vadd.f32 %v1072, %v1073
    %1076 = vrot.lane.b32.xlu0 %v1074, 96
    %v1077 = vpop.permute.xlu0 %1076
    %v1078 = vsel %vm268, %v1077, 0
    %1080 = vmatprep.subr.mxu0 0.0
    %1081 = vmatpush1.msra.mxu0 %v257
    %1082 = vmatprep.subr.mxu0 0.0
    %1083 = vmatpush1.msra.mxu0 %v258
    %1084 = vmatprep.subr.mxu0 0.0
    %1085 = vmatpush1.msra.mxu0 %v259
    %1086 = vmatprep.subr.mxu0 0.0
    %1087 = vmatpush1.msra.mxu0 %v260
    %1088 = vmatprep.subr.mxu0 0.0
    %1089 = vmatpush1.msra.mxu0 0.0
    %1090 = vmatprep.subr.mxu0 0.0
    %1091 = vmatpush1.msra.mxu0 0.0
    %1092 = vmatprep.subr.mxu0 0.0
    %1093 = vmatpush1.msra.mxu0 0.0
    %1094 = vmatprep.subr.mxu0 0.0
    %1095 = vmatpush1.msra.mxu0 0.0
    %1096 = vmatprep.subr.mxu0 0.0
    %1097 = vmatpush1.msra.mxu0 0.0
    %1098 = vmatprep.subr.mxu0 0.0
    %1099 = vmatpush1.msra.mxu0 0.0
    %1100 = vmatprep.subr.mxu0 0.0
    %1101 = vmatpush1.msra.mxu0 0.0
    %1102 = vmatprep.subr.mxu0 0.0
    %1103 = vmatpush1.msra.mxu0 0.0
    %1104 = vmatprep.subr.mxu0 0.0
    %1105 = vmatpush1.msra.mxu0 0.0
    %1106 = vmatprep.subr.mxu0 0.0
    %1107 = vmatpush1.msra.mxu0 0.0
    %1108 = vmatprep.subr.mxu0 0.0
    %1109 = vmatpush1.msra.mxu0 0.0
    %1110 = vmatprep.subr.mxu0 0.0
    %1111 = vmatpush1.msra.mxu0 0.0
    %1112 = vmatprep.subr.mxu0 0.0
    %1113 = vmatpush1.msra.mxu0 0.0
    %1114 = vmatprep.subr.mxu0 0.0
    %1115 = vmatpush1.msra.mxu0 0.0
    %1116 = vmatprep.subr.mxu0 0.0
    %1117 = vmatpush1.msra.mxu0 0.0
    %1118 = vmatprep.subr.mxu0 0.0
    %1119 = vmatpush1.msra.mxu0 0.0
    %1120 = vmatprep.subr.mxu0 0.0
    %1121 = vmatpush1.msra.mxu0 0.0
    %1122 = vmatprep.subr.mxu0 0.0
    %1123 = vmatpush1.msra.mxu0 0.0
    %1124 = vmatprep.subr.mxu0 0.0
    %1125 = vmatpush1.msra.mxu0 0.0
    %1126 = vmatprep.subr.mxu0 0.0
    %1127 = vmatpush1.msra.mxu0 0.0
    %1128 = vmatprep.subr.mxu0 0.0
    %1129 = vmatpush1.msra.mxu0 0.0
    %1130 = vmatprep.subr.mxu0 0.0
    %1131 = vmatpush1.msra.mxu0 0.0
    %1132 = vmatprep.subr.mxu0 0.0
    %1133 = vmatpush1.msra.mxu0 0.0
    %1134 = vmatprep.subr.mxu0 0.0
    %1135 = vmatpush1.msra.mxu0 0.0
    %1136 = vmatprep.subr.mxu0 0.0
    %1137 = vmatpush1.msra.mxu0 0.0
    %1138 = vmatprep.subr.mxu0 0.0
    %1139 = vmatpush1.msra.mxu0 0.0
    %1140 = vmatprep.subr.mxu0 0.0
    %1141 = vmatpush1.msra.mxu0 0.0
    %1142 = vmatprep.subr.mxu0 0.0
    %1143 = vmatpush1.msra.mxu0 0.0
    %1144 = vmatprep.mubr.f32.mxu0 0.0
    %1145 = vmatmul.mubr.f32.gmra.mrb[0].mxu0 %v1078
    %v1146 = vpop.f32.mrb[0].mxu0
    %v1147 = vadd.f32 %v266, %v1146
    %v1148 = vpop.f32.mrb[0].mxu0
    %1149 = vdwg.mxu0
    %v1150 = vadd.f32 %v255, %v1147
    %v1151 = vsub.f32 0.0, %v1150
    %v1152 = vmul.f32 %v1151, 1.442695
    %v1153 = vpow.pop %v1152
    %v1154 = vadd.f32 %v1153, 1.0
    %v1155 = vrcp.pop %v1154
    %v1156 = vmul.f32 1.0, %v1155
    %1158 = vrot.lane.b32.xlu0 %v1147, 64
    %v1159 = vpop.permute.xlu0 %1158
    %v1161 = vmul.f32 %v1156, %v1159
    %1163 = vrot.lane.b32.xlu0 %v1161, 64
    %v1164 = vpop.permute.xlu0 %1163
    %v1166 = vadd.f32 %v255, %v1164
    %v1167 = vtanh.pop %v1166
    %v1168 = vsub.f32 1.0, %v1156
    %1170 = vrot.lane.b32.xlu0 %v1167, 96
    %v1171 = vpop.permute.xlu0 %1170
    %v1173 = vmul.f32 %v1168, %v1171
    %v1174 = vmul.f32 %v1156, %v1074
    %v1175 = vadd.f32 %v1173, %v1174
    %1177 = vrot.lane.b32.xlu0 %v1175, 96
    %v1178 = vpop.permute.xlu0 %1177
    %v1179 = vsel %vm268, %v1178, 0
    %1181 = vmatprep.subr.mxu0 0.0
    %1182 = vmatpush1.msra.mxu0 %v257
    %1183 = vmatprep.subr.mxu0 0.0
    %1184 = vmatpush1.msra.mxu0 %v258
    %1185 = vmatprep.subr.mxu0 0.0
    %1186 = vmatpush1.msra.mxu0 %v259
    %1187 = vmatprep.subr.mxu0 0.0
    %1188 = vmatpush1.msra.mxu0 %v260
    %1189 = vmatprep.subr.mxu0 0.0
    %1190 = vmatpush1.msra.mxu0 0.0
    %1191 = vmatprep.subr.mxu0 0.0
    %1192 = vmatpush1.msra.mxu0 0.0
    %1193 = vmatprep.subr.mxu0 0.0
    %1194 = vmatpush1.msra.mxu0 0.0
    %1195 = vmatprep.subr.mxu0 0.0
    %1196 = vmatpush1.msra.mxu0 0.0
    %1197 = vmatprep.subr.mxu0 0.0
    %1198 = vmatpush1.msra.mxu0 0.0
    %1199 = vmatprep.subr.mxu0 0.0
    %1200 = vmatpush1.msra.mxu0 0.0
    %1201 = vmatprep.subr.mxu0 0.0
    %1202 = vmatpush1.msra.mxu0 0.0
    %1203 = vmatprep.subr.mxu0 0.0
    %1204 = vmatpush1.msra.mxu0 0.0
    %1205 = vmatprep.subr.mxu0 0.0
    %1206 = vmatpush1.msra.mxu0 0.0
    %1207 = vmatprep.subr.mxu0 0.0
    %1208 = vmatpush1.msra.mxu0 0.0
    %1209 = vmatprep.subr.mxu0 0.0
    %1210 = vmatpush1.msra.mxu0 0.0
    %1211 = vmatprep.subr.mxu0 0.0
    %1212 = vmatpush1.msra.mxu0 0.0
    %1213 = vmatprep.subr.mxu0 0.0
    %1214 = vmatpush1.msra.mxu0 0.0
    %1215 = vmatprep.subr.mxu0 0.0
    %1216 = vmatpush1.msra.mxu0 0.0
    %1217 = vmatprep.subr.mxu0 0.0
    %1218 = vmatpush1.msra.mxu0 0.0
    %1219 = vmatprep.subr.mxu0 0.0
    %1220 = vmatpush1.msra.mxu0 0.0
    %1221 = vmatprep.subr.mxu0 0.0
    %1222 = vmatpush1.msra.mxu0 0.0
    %1223 = vmatprep.subr.mxu0 0.0
    %1224 = vmatpush1.msra.mxu0 0.0
    %1225 = vmatprep.subr.mxu0 0.0
    %1226 = vmatpush1.msra.mxu0 0.0
    %1227 = vmatprep.subr.mxu0 0.0
    %1228 = vmatpush1.msra.mxu0 0.0
    %1229 = vmatprep.subr.mxu0 0.0
    %1230 = vmatpush1.msra.mxu0 0.0
    %1231 = vmatprep.subr.mxu0 0.0
    %1232 = vmatpush1.msra.mxu0 0.0
    %1233 = vmatprep.subr.mxu0 0.0
    %1234 = vmatpush1.msra.mxu0 0.0
    %1235 = vmatprep.subr.mxu0 0.0
    %1236 = vmatpush1.msra.mxu0 0.0
    %1237 = vmatprep.subr.mxu0 0.0
    %1238 = vmatpush1.msra.mxu0 0.0
    %1239 = vmatprep.subr.mxu0 0.0
    %1240 = vmatpush1.msra.mxu0 0.0
    %1241 = vmatprep.subr.mxu0 0.0
    %1242 = vmatpush1.msra.mxu0 0.0
    %1243 = vmatprep.subr.mxu0 0.0
    %1244 = vmatpush1.msra.mxu0 0.0
    %1245 = vmatprep.mubr.f32.mxu0 0.0
    %1246 = vmatmul.mubr.f32.gmra.mrb[0].mxu0 %v1179
    %v1247 = vpop.f32.mrb[0].mxu0
    %v1248 = vadd.f32 %v266, %v1247
    %v1249 = vpop.f32.mrb[0].mxu0
    %1250 = vdwg.mxu0
    %v1251 = vadd.f32 %v256, %v1248
    %v1252 = vsub.f32 0.0, %v1251
    %v1253 = vmul.f32 %v1252, 1.442695
    %v1254 = vpow.pop %v1253
    %v1255 = vadd.f32 %v1254, 1.0
    %v1256 = vrcp.pop %v1255
    %v1257 = vmul.f32 1.0, %v1256
    %1259 = vrot.lane.b32.xlu0 %v1248, 64
    %v1260 = vpop.permute.xlu0 %1259
    %v1262 = vmul.f32 %v1257, %v1260
    %1264 = vrot.lane.b32.xlu0 %v1262, 64
    %v1265 = vpop.permute.xlu0 %1264
    %v1267 = vadd.f32 %v256, %v1265
    %v1268 = vtanh.pop %v1267
    %v1269 = vsub.f32 1.0, %v1257
    %1271 = vrot.lane.b32.xlu0 %v1268, 96
    %v1272 = vpop.permute.xlu0 %1271
    %v1274 = vmul.f32 %v1269, %v1272
    %v1275 = vmul.f32 %v1257, %v1175
    %v1276 = vadd.f32 %v1274, %v1275
    %v1277 = vld [vmem:[#allocation5] sm:$0xff]
    %v1278 = vld [vmem:[#allocation5 + $0x8] sm:$0xff]
    %v1279 = vld [vmem:[#allocation5 + $0x10] sm:$0xff]
    %v1280 = vld [vmem:[#allocation5 + $0x18] sm:$0xff]
    %s1281 = scalar_lea.vmem [#allocation7], 1
    %v1282 = vld [vmem:[%s1281] sm:$0x1]
    %v1284 = vlaneseq
    %v1285 = vshrl.u32 %v1284, 7
    %v1286 = vsub.s32 0, %v1285
    %v1287 = vrot.slane %v1282, %v1286
    %1290 = vrot.lane.b32.xlu0 %v1276, 96
    %v1291 = vpop.permute.xlu0 %1290
    %v1292 = vsel %vm268, %v1291, 0
    %1294 = vmatprep.subr.mxu0 0.0
    %1295 = vmatpush1.msra.mxu0 %v1277
    %1296 = vmatprep.subr.mxu0 0.0
    %1297 = vmatpush1.msra.mxu0 %v1278
    %1298 = vmatprep.subr.mxu0 0.0
    %1299 = vmatpush1.msra.mxu0 %v1279
    %1300 = vmatprep.subr.mxu0 0.0
    %1301 = vmatpush1.msra.mxu0 %v1280
    %1302 = vmatprep.subr.mxu0 0.0
    %1303 = vmatpush1.msra.mxu0 0.0
    %1304 = vmatprep.subr.mxu0 0.0
    %1305 = vmatpush1.msra.mxu0 0.0
    %1306 = vmatprep.subr.mxu0 0.0
    %1307 = vmatpush1.msra.mxu0 0.0
    %1308 = vmatprep.subr.mxu0 0.0
    %1309 = vmatpush1.msra.mxu0 0.0
    %1310 = vmatprep.subr.mxu0 0.0
    %1311 = vmatpush1.msra.mxu0 0.0
    %1312 = vmatprep.subr.mxu0 0.0
    %1313 = vmatpush1.msra.mxu0 0.0
    %1314 = vmatprep.subr.mxu0 0.0
    %1315 = vmatpush1.msra.mxu0 0.0
    %1316 = vmatprep.subr.mxu0 0.0
    %1317 = vmatpush1.msra.mxu0 0.0
    %1318 = vmatprep.subr.mxu0 0.0
    %1319 = vmatpush1.msra.mxu0 0.0
    %1320 = vmatprep.subr.mxu0 0.0
    %1321 = vmatpush1.msra.mxu0 0.0
    %1322 = vmatprep.subr.mxu0 0.0
    %1323 = vmatpush1.msra.mxu0 0.0
    %1324 = vmatprep.subr.mxu0 0.0
    %1325 = vmatpush1.msra.mxu0 0.0
    %1326 = vmatprep.subr.mxu0 0.0
    %1327 = vmatpush1.msra.mxu0 0.0
    %1328 = vmatprep.subr.mxu0 0.0
    %1329 = vmatpush1.msra.mxu0 0.0
    %1330 = vmatprep.subr.mxu0 0.0
    %1331 = vmatpush1.msra.mxu0 0.0
    %1332 = vmatprep.subr.mxu0 0.0
    %1333 = vmatpush1.msra.mxu0 0.0
    %1334 = vmatprep.subr.mxu0 0.0
    %1335 = vmatpush1.msra.mxu0 0.0
    %1336 = vmatprep.subr.mxu0 0.0
    %1337 = vmatpush1.msra.mxu0 0.0
    %1338 = vmatprep.subr.mxu0 0.0
    %1339 = vmatpush1.msra.mxu0 0.0
    %1340 = vmatprep.subr.mxu0 0.0
    %1341 = vmatpush1.msra.mxu0 0.0
    %1342 = vmatprep.subr.mxu0 0.0
    %1343 = vmatpush1.msra.mxu0 0.0
    %1344 = vmatprep.subr.mxu0 0.0
    %1345 = vmatpush1.msra.mxu0 0.0
    %1346 = vmatprep.subr.mxu0 0.0
    %1347 = vmatpush1.msra.mxu0 0.0
    %1348 = vmatprep.subr.mxu0 0.0
    %1349 = vmatpush1.msra.mxu0 0.0
    %1350 = vmatprep.subr.mxu0 0.0
    %1351 = vmatpush1.msra.mxu0 0.0
    %1352 = vmatprep.subr.mxu0 0.0
    %1353 = vmatpush1.msra.mxu0 0.0
    %1354 = vmatprep.subr.mxu0 0.0
    %1355 = vmatpush1.msra.mxu0 0.0
    %1356 = vmatprep.subr.mxu0 0.0
    %1357 = vmatpush1.msra.mxu0 0.0
    %1358 = vmatprep.mubr.f32.mxu0 0.0
    %1359 = vmatmul.mubr.f32.gmra.mrb[0].mxu0 %v371
    %v1360 = vpop.f32.mrb[0].mxu0
    %v1361 = vadd.f32 %v1287, %v1360
    %v1362 = vpop.f32.mrb[0].mxu0
    %1363 = vmatprep.mubr.f32.mxu0 0.0
    %1364 = vmatmul.mubr.f32.gmra.mrb[0].mxu0 %v472
    %v1365 = vpop.f32.mrb[0].mxu0
    %v1366 = vadd.f32 %v1287, %v1365
    %v1367 = vpop.f32.mrb[0].mxu0
    %1368 = vmatprep.mubr.f32.mxu0 0.0
    %1369 = vmatmul.mubr.f32.gmra.mrb[0].mxu0 %v573
    %v1370 = vpop.f32.mrb[0].mxu0
    %v1371 = vadd.f32 %v1287, %v1370
    %v1372 = vpop.f32.mrb[0].mxu0
    %1373 = vmatprep.mubr.f32.mxu0 0.0
    %1374 = vmatmul.mubr.f32.gmra.mrb[0].mxu0 %v674
    %v1375 = vpop.f32.mrb[0].mxu0
    %v1376 = vadd.f32 %v1287, %v1375
    %v1377 = vpop.f32.mrb[0].mxu0
    %1378 = vmatprep.mubr.f32.mxu0 0.0
    %1379 = vmatmul.mubr.f32.gmra.mrb[0].mxu0 %v775
    %v1380 = vpop.f32.mrb[0].mxu0
    %v1381 = vadd.f32 %v1287, %v1380
    %v1382 = vpop.f32.mrb[0].mxu0
    %1383 = vmatprep.mubr.f32.mxu0 0.0
    %1384 = vmatmul.mubr.f32.gmra.mrb[0].mxu0 %v876
    %v1385 = vpop.f32.mrb[0].mxu0
    %v1386 = vadd.f32 %v1287, %v1385
    %v1387 = vpop.f32.mrb[0].mxu0
    %1388 = vmatprep.mubr.f32.mxu0 0.0
    %1389 = vmatmul.mubr.f32.gmra.mrb[0].mxu0 %v977
    %v1390 = vpop.f32.mrb[0].mxu0
    %v1391 = vadd.f32 %v1287, %v1390
    %v1392 = vpop.f32.mrb[0].mxu0
    %1393 = vmatprep.mubr.f32.mxu0 0.0
    %1394 = vmatmul.mubr.f32.gmra.mrb[0].mxu0 %v1078
    %v1395 = vpop.f32.mrb[0].mxu0
    %v1396 = vadd.f32 %v1287, %v1395
    %v1397 = vpop.f32.mrb[0].mxu0
    %1398 = vmatprep.mubr.f32.mxu0 0.0
    %1399 = vmatmul.mubr.f32.gmra.mrb[0].mxu0 %v1179
    %v1400 = vpop.f32.mrb[0].mxu0
    %v1401 = vadd.f32 %v1287, %v1400
    %v1402 = vpop.f32.mrb[0].mxu0
    %1403 = vmatprep.mubr.f32.mxu0 0.0
    %1404 = vmatmul.mubr.f32.gmra.mrb[0].mxu0 %v1292
    %v1405 = vpop.f32.mrb[0].mxu0
    %v1406 = vadd.f32 %v1287, %v1405
    %v1407 = vpop.f32.mrb[0].mxu0
    %1408 = vdwg.mxu0
    %s1409 = scalar_lea.vmem %s3, 32
    %v1410 = vld [vmem:[%s1409] sm:$0xff]
    %v1411 = vld [vmem:[%s1409 + $0x8] sm:$0xff]
    %v1412 = vld [vmem:[%s1409 + $0x10] sm:$0xff]
    %v1413 = vld [vmem:[%s1409 + $0x18] sm:$0xff]
    %s1414 = scalar_lea.vmem [#allocation8], 1
    %v1415 = vld [vmem:[%s1414] sm:$0x1]
    %v1417 = vlaneseq
    %v1418 = vshrl.u32 %v1417, 7
    %v1419 = vsub.s32 0, %v1418
    %v1420 = vrot.slane %v1415, %v1419
    %1422 = vmatprep.subr.mxu0 0.0
    %1423 = vmatpush1.msra.mxu0 %v1410
    %1424 = vmatprep.subr.mxu0 0.0
    %1425 = vmatpush1.msra.mxu0 %v1411
    %1426 = vmatprep.subr.mxu0 0.0
    %1427 = vmatpush1.msra.mxu0 %v1412
    %1428 = vmatprep.subr.mxu0 0.0
    %1429 = vmatpush1.msra.mxu0 %v1413
    %1430 = vmatprep.subr.mxu0 0.0
    %1431 = vmatpush1.msra.mxu0 0.0
    %1432 = vmatprep.subr.mxu0 0.0
    %1433 = vmatpush1.msra.mxu0 0.0
    %1434 = vmatprep.subr.mxu0 0.0
    %1435 = vmatpush1.msra.mxu0 0.0
    %1436 = vmatprep.subr.mxu0 0.0
    %1437 = vmatpush1.msra.mxu0 0.0
    %1438 = vmatprep.subr.mxu0 0.0
    %1439 = vmatpush1.msra.mxu0 0.0
    %1440 = vmatprep.subr.mxu0 0.0
    %1441 = vmatpush1.msra.mxu0 0.0
    %1442 = vmatprep.subr.mxu0 0.0
    %1443 = vmatpush1.msra.mxu0 0.0
    %1444 = vmatprep.subr.mxu0 0.0
    %1445 = vmatpush1.msra.mxu0 0.0
    %1446 = vmatprep.subr.mxu0 0.0
    %1447 = vmatpush1.msra.mxu0 0.0
    %1448 = vmatprep.subr.mxu0 0.0
    %1449 = vmatpush1.msra.mxu0 0.0
    %1450 = vmatprep.subr.mxu0 0.0
    %1451 = vmatpush1.msra.mxu0 0.0
    %1452 = vmatprep.subr.mxu0 0.0
    %1453 = vmatpush1.msra.mxu0 0.0
    %1454 = vmatprep.subr.mxu0 0.0
    %1455 = vmatpush1.msra.mxu0 0.0
    %1456 = vmatprep.subr.mxu0 0.0
    %1457 = vmatpush1.msra.mxu0 0.0
    %1458 = vmatprep.subr.mxu0 0.0
    %1459 = vmatpush1.msra.mxu0 0.0
    %1460 = vmatprep.subr.mxu0 0.0
    %1461 = vmatpush1.msra.mxu0 0.0
    %1462 = vmatprep.subr.mxu0 0.0
    %1463 = vmatpush1.msra.mxu0 0.0
    %1464 = vmatprep.subr.mxu0 0.0
    %1465 = vmatpush1.msra.mxu0 0.0
    %1466 = vmatprep.subr.mxu0 0.0
    %1467 = vmatpush1.msra.mxu0 0.0
    %1468 = vmatprep.subr.mxu0 0.0
    %1469 = vmatpush1.msra.mxu0 0.0
    %1470 = vmatprep.subr.mxu0 0.0
    %1471 = vmatpush1.msra.mxu0 0.0
    %1472 = vmatprep.subr.mxu0 0.0
    %1473 = vmatpush1.msra.mxu0 0.0
    %1474 = vmatprep.subr.mxu0 0.0
    %1475 = vmatpush1.msra.mxu0 0.0
    %1476 = vmatprep.subr.mxu0 0.0
    %1477 = vmatpush1.msra.mxu0 0.0
    %1478 = vmatprep.subr.mxu0 0.0
    %1479 = vmatpush1.msra.mxu0 0.0
    %1480 = vmatprep.subr.mxu0 0.0
    %1481 = vmatpush1.msra.mxu0 0.0
    %1482 = vmatprep.subr.mxu0 0.0
    %1483 = vmatpush1.msra.mxu0 0.0
    %1484 = vmatprep.subr.mxu0 0.0
    %1485 = vmatpush1.msra.mxu0 0.0
    %1486 = vmatprep.mubr.f32.mxu0 0.0
    %1487 = vmatmul.mubr.f32.gmra.mrb[0].mxu0 %v270
    %v1488 = vpop.f32.mrb[0].mxu0
    %v1489 = vadd.f32 %v1420, %v1488
    %v1490 = vpop.f32.mrb[0].mxu0
    %1491 = vdwg.mxu0
    %v1492 = vadd.f32 %v1361, %v1489
    %v1493 = vsub.f32 0.0, %v1492
    %v1494 = vmul.f32 %v1493, 1.442695
    %v1495 = vpow.pop %v1494
    %v1496 = vadd.f32 %v1495, 1.0
    %v1497 = vrcp.pop %v1496
    %v1498 = vmul.f32 1.0, %v1497
    %1500 = vrot.lane.b32.xlu0 %v1489, 64
    %v1501 = vpop.permute.xlu0 %1500
    %v1503 = vmul.f32 %v1498, %v1501
    %1505 = vrot.lane.b32.xlu0 %v1503, 64
    %v1506 = vpop.permute.xlu0 %1505
    %v1508 = vadd.f32 %v1361, %v1506
    %v1509 = vtanh.pop %v1508
    %v1510 = vsub.f32 1.0, %v1498
    %1512 = vrot.lane.b32.xlu0 %v1509, 96
    %v1513 = vpop.permute.xlu0 %1512
    %v1515 = vmul.f32 %v1510, %v1513
    %v1516 = vmul.f32 %v1498, 0.0
    %v1517 = vadd.f32 %v1515, %v1516
    %1519 = vrot.lane.b32.xlu0 %v1517, 96
    %v1520 = vpop.permute.xlu0 %1519
    %v1521 = vsel %vm268, %v1520, 0
    %1523 = vmatprep.subr.mxu0 0.0
    %1524 = vmatpush1.msra.mxu0 %v1410
    %1525 = vmatprep.subr.mxu0 0.0
    %1526 = vmatpush1.msra.mxu0 %v1411
    %1527 = vmatprep.subr.mxu0 0.0
    %1528 = vmatpush1.msra.mxu0 %v1412
    %1529 = vmatprep.subr.mxu0 0.0
    %1530 = vmatpush1.msra.mxu0 %v1413
    %1531 = vmatprep.subr.mxu0 0.0
    %1532 = vmatpush1.msra.mxu0 0.0
    %1533 = vmatprep.subr.mxu0 0.0
    %1534 = vmatpush1.msra.mxu0 0.0
    %1535 = vmatprep.subr.mxu0 0.0
    %1536 = vmatpush1.msra.mxu0 0.0
    %1537 = vmatprep.subr.mxu0 0.0
    %1538 = vmatpush1.msra.mxu0 0.0
    %1539 = vmatprep.subr.mxu0 0.0
    %1540 = vmatpush1.msra.mxu0 0.0
    %1541 = vmatprep.subr.mxu0 0.0
    %1542 = vmatpush1.msra.mxu0 0.0
    %1543 = vmatprep.subr.mxu0 0.0
    %1544 = vmatpush1.msra.mxu0 0.0
    %1545 = vmatprep.subr.mxu0 0.0
    %1546 = vmatpush1.msra.mxu0 0.0
    %1547 = vmatprep.subr.mxu0 0.0
    %1548 = vmatpush1.msra.mxu0 0.0
    %1549 = vmatprep.subr.mxu0 0.0
    %1550 = vmatpush1.msra.mxu0 0.0
    %1551 = vmatprep.subr.mxu0 0.0
    %1552 = vmatpush1.msra.mxu0 0.0
    %1553 = vmatprep.subr.mxu0 0.0
    %1554 = vmatpush1.msra.mxu0 0.0
    %1555 = vmatprep.subr.mxu0 0.0
    %1556 = vmatpush1.msra.mxu0 0.0
    %1557 = vmatprep.subr.mxu0 0.0
    %1558 = vmatpush1.msra.mxu0 0.0
    %1559 = vmatprep.subr.mxu0 0.0
    %1560 = vmatpush1.msra.mxu0 0.0
    %1561 = vmatprep.subr.mxu0 0.0
    %1562 = vmatpush1.msra.mxu0 0.0
    %1563 = vmatprep.subr.mxu0 0.0
    %1564 = vmatpush1.msra.mxu0 0.0
    %1565 = vmatprep.subr.mxu0 0.0
    %1566 = vmatpush1.msra.mxu0 0.0
    %1567 = vmatprep.subr.mxu0 0.0
    %1568 = vmatpush1.msra.mxu0 0.0
    %1569 = vmatprep.subr.mxu0 0.0
    %1570 = vmatpush1.msra.mxu0 0.0
    %1571 = vmatprep.subr.mxu0 0.0
    %1572 = vmatpush1.msra.mxu0 0.0
    %1573 = vmatprep.subr.mxu0 0.0
    %1574 = vmatpush1.msra.mxu0 0.0
    %1575 = vmatprep.subr.mxu0 0.0
    %1576 = vmatpush1.msra.mxu0 0.0
    %1577 = vmatprep.subr.mxu0 0.0
    %1578 = vmatpush1.msra.mxu0 0.0
    %1579 = vmatprep.subr.mxu0 0.0
    %1580 = vmatpush1.msra.mxu0 0.0
    %1581 = vmatprep.subr.mxu0 0.0
    %1582 = vmatpush1.msra.mxu0 0.0
    %1583 = vmatprep.subr.mxu0 0.0
    %1584 = vmatpush1.msra.mxu0 0.0
    %1585 = vmatprep.subr.mxu0 0.0
    %1586 = vmatpush1.msra.mxu0 0.0
    %1587 = vmatprep.mubr.f32.mxu0 0.0
    %1588 = vmatmul.mubr.f32.gmra.mrb[0].mxu0 %v1521
    %v1589 = vpop.f32.mrb[0].mxu0
    %v1590 = vadd.f32 %v1420, %v1589
    %v1591 = vpop.f32.mrb[0].mxu0
    %1592 = vdwg.mxu0
    %v1593 = vadd.f32 %v1366, %v1590
    %v1594 = vsub.f32 0.0, %v1593
    %v1595 = vmul.f32 %v1594, 1.442695
    %v1596 = vpow.pop %v1595
    %v1597 = vadd.f32 %v1596, 1.0
    %v1598 = vrcp.pop %v1597
    %v1599 = vmul.f32 1.0, %v1598
    %1601 = vrot.lane.b32.xlu0 %v1590, 64
    %v1602 = vpop.permute.xlu0 %1601
    %v1604 = vmul.f32 %v1599, %v1602
    %1606 = vrot.lane.b32.xlu0 %v1604, 64
    %v1607 = vpop.permute.xlu0 %1606
    %v1609 = vadd.f32 %v1366, %v1607
    %v1610 = vtanh.pop %v1609
    %v1611 = vsub.f32 1.0, %v1599
    %1613 = vrot.lane.b32.xlu0 %v1610, 96
    %v1614 = vpop.permute.xlu0 %1613
    %v1616 = vmul.f32 %v1611, %v1614
    %v1617 = vmul.f32 %v1599, %v1517
    %v1618 = vadd.f32 %v1616, %v1617
    %1620 = vrot.lane.b32.xlu0 %v1618, 96
    %v1621 = vpop.permute.xlu0 %1620
    %v1622 = vsel %vm268, %v1621, 0
    %1624 = vmatprep.subr.mxu0 0.0
    %1625 = vmatpush1.msra.mxu0 %v1410
    %1626 = vmatprep.subr.mxu0 0.0
    %1627 = vmatpush1.msra.mxu0 %v1411
    %1628 = vmatprep.subr.mxu0 0.0
    %1629 = vmatpush1.msra.mxu0 %v1412
    %1630 = vmatprep.subr.mxu0 0.0
    %1631 = vmatpush1.msra.mxu0 %v1413
    %1632 = vmatprep.subr.mxu0 0.0
    %1633 = vmatpush1.msra.mxu0 0.0
    %1634 = vmatprep.subr.mxu0 0.0
    %1635 = vmatpush1.msra.mxu0 0.0
    %1636 = vmatprep.subr.mxu0 0.0
    %1637 = vmatpush1.msra.mxu0 0.0
    %1638 = vmatprep.subr.mxu0 0.0
    %1639 = vmatpush1.msra.mxu0 0.0
    %1640 = vmatprep.subr.mxu0 0.0
    %1641 = vmatpush1.msra.mxu0 0.0
    %1642 = vmatprep.subr.mxu0 0.0
    %1643 = vmatpush1.msra.mxu0 0.0
    %1644 = vmatprep.subr.mxu0 0.0
    %1645 = vmatpush1.msra.mxu0 0.0
    %1646 = vmatprep.subr.mxu0 0.0
    %1647 = vmatpush1.msra.mxu0 0.0
    %1648 = vmatprep.subr.mxu0 0.0
    %1649 = vmatpush1.msra.mxu0 0.0
    %1650 = vmatprep.subr.mxu0 0.0
    %1651 = vmatpush1.msra.mxu0 0.0
    %1652 = vmatprep.subr.mxu0 0.0
    %1653 = vmatpush1.msra.mxu0 0.0
    %1654 = vmatprep.subr.mxu0 0.0
    %1655 = vmatpush1.msra.mxu0 0.0
    %1656 = vmatprep.subr.mxu0 0.0
    %1657 = vmatpush1.msra.mxu0 0.0
    %1658 = vmatprep.subr.mxu0 0.0
    %1659 = vmatpush1.msra.mxu0 0.0
    %1660 = vmatprep.subr.mxu0 0.0
    %1661 = vmatpush1.msra.mxu0 0.0
    %1662 = vmatprep.subr.mxu0 0.0
    %1663 = vmatpush1.msra.mxu0 0.0
    %1664 = vmatprep.subr.mxu0 0.0
    %1665 = vmatpush1.msra.mxu0 0.0
    %1666 = vmatprep.subr.mxu0 0.0
    %1667 = vmatpush1.msra.mxu0 0.0
    %1668 = vmatprep.subr.mxu0 0.0
    %1669 = vmatpush1.msra.mxu0 0.0
    %1670 = vmatprep.subr.mxu0 0.0
    %1671 = vmatpush1.msra.mxu0 0.0
    %1672 = vmatprep.subr.mxu0 0.0
    %1673 = vmatpush1.msra.mxu0 0.0
    %1674 = vmatprep.subr.mxu0 0.0
    %1675 = vmatpush1.msra.mxu0 0.0
    %1676 = vmatprep.subr.mxu0 0.0
    %1677 = vmatpush1.msra.mxu0 0.0
    %1678 = vmatprep.subr.mxu0 0.0
    %1679 = vmatpush1.msra.mxu0 0.0
    %1680 = vmatprep.subr.mxu0 0.0
    %1681 = vmatpush1.msra.mxu0 0.0
    %1682 = vmatprep.subr.mxu0 0.0
    %1683 = vmatpush1.msra.mxu0 0.0
    %1684 = vmatprep.subr.mxu0 0.0
    %1685 = vmatpush1.msra.mxu0 0.0
    %1686 = vmatprep.subr.mxu0 0.0
    %1687 = vmatpush1.msra.mxu0 0.0
    %1688 = vmatprep.mubr.f32.mxu0 0.0
    %1689 = vmatmul.mubr.f32.gmra.mrb[0].mxu0 %v1622
    %v1690 = vpop.f32.mrb[0].mxu0
    %v1691 = vadd.f32 %v1420, %v1690
    %v1692 = vpop.f32.mrb[0].mxu0
    %1693 = vdwg.mxu0
    %v1694 = vadd.f32 %v1371, %v1691
    %v1695 = vsub.f32 0.0, %v1694
    %v1696 = vmul.f32 %v1695, 1.442695
    %v1697 = vpow.pop %v1696
    %v1698 = vadd.f32 %v1697, 1.0
    %v1699 = vrcp.pop %v1698
    %v1700 = vmul.f32 1.0, %v1699
    %1702 = vrot.lane.b32.xlu0 %v1691, 64
    %v1703 = vpop.permute.xlu0 %1702
    %v1705 = vmul.f32 %v1700, %v1703
    %1707 = vrot.lane.b32.xlu0 %v1705, 64
    %v1708 = vpop.permute.xlu0 %1707
    %v1710 = vadd.f32 %v1371, %v1708
    %v1711 = vtanh.pop %v1710
    %v1712 = vsub.f32 1.0, %v1700
    %1714 = vrot.lane.b32.xlu0 %v1711, 96
    %v1715 = vpop.permute.xlu0 %1714
    %v1717 = vmul.f32 %v1712, %v1715
    %v1718 = vmul.f32 %v1700, %v1618
    %v1719 = vadd.f32 %v1717, %v1718
    %1721 = vrot.lane.b32.xlu0 %v1719, 96
    %v1722 = vpop.permute.xlu0 %1721
    %v1723 = vsel %vm268, %v1722, 0
    %1725 = vmatprep.subr.mxu0 0.0
    %1726 = vmatpush1.msra.mxu0 %v1410
    %1727 = vmatprep.subr.mxu0 0.0
    %1728 = vmatpush1.msra.mxu0 %v1411
    %1729 = vmatprep.subr.mxu0 0.0
    %1730 = vmatpush1.msra.mxu0 %v1412
    %1731 = vmatprep.subr.mxu0 0.0
    %1732 = vmatpush1.msra.mxu0 %v1413
    %1733 = vmatprep.subr.mxu0 0.0
    %1734 = vmatpush1.msra.mxu0 0.0
    %1735 = vmatprep.subr.mxu0 0.0
    %1736 = vmatpush1.msra.mxu0 0.0
    %1737 = vmatprep.subr.mxu0 0.0
    %1738 = vmatpush1.msra.mxu0 0.0
    %1739 = vmatprep.subr.mxu0 0.0
    %1740 = vmatpush1.msra.mxu0 0.0
    %1741 = vmatprep.subr.mxu0 0.0
    %1742 = vmatpush1.msra.mxu0 0.0
    %1743 = vmatprep.subr.mxu0 0.0
    %1744 = vmatpush1.msra.mxu0 0.0
    %1745 = vmatprep.subr.mxu0 0.0
    %1746 = vmatpush1.msra.mxu0 0.0
    %1747 = vmatprep.subr.mxu0 0.0
    %1748 = vmatpush1.msra.mxu0 0.0
    %1749 = vmatprep.subr.mxu0 0.0
    %1750 = vmatpush1.msra.mxu0 0.0
    %1751 = vmatprep.subr.mxu0 0.0
    %1752 = vmatpush1.msra.mxu0 0.0
    %1753 = vmatprep.subr.mxu0 0.0
    %1754 = vmatpush1.msra.mxu0 0.0
    %1755 = vmatprep.subr.mxu0 0.0
    %1756 = vmatpush1.msra.mxu0 0.0
    %1757 = vmatprep.subr.mxu0 0.0
    %1758 = vmatpush1.msra.mxu0 0.0
    %1759 = vmatprep.subr.mxu0 0.0
    %1760 = vmatpush1.msra.mxu0 0.0
    %1761 = vmatprep.subr.mxu0 0.0
    %1762 = vmatpush1.msra.mxu0 0.0
    %1763 = vmatprep.subr.mxu0 0.0
    %1764 = vmatpush1.msra.mxu0 0.0
    %1765 = vmatprep.subr.mxu0 0.0
    %1766 = vmatpush1.msra.mxu0 0.0
    %1767 = vmatprep.subr.mxu0 0.0
    %1768 = vmatpush1.msra.mxu0 0.0
    %1769 = vmatprep.subr.mxu0 0.0
    %1770 = vmatpush1.msra.mxu0 0.0
    %1771 = vmatprep.subr.mxu0 0.0
    %1772 = vmatpush1.msra.mxu0 0.0
    %1773 = vmatprep.subr.mxu0 0.0
    %1774 = vmatpush1.msra.mxu0 0.0
    %1775 = vmatprep.subr.mxu0 0.0
    %1776 = vmatpush1.msra.mxu0 0.0
    %1777 = vmatprep.subr.mxu0 0.0
    %1778 = vmatpush1.msra.mxu0 0.0
    %1779 = vmatprep.subr.mxu0 0.0
    %1780 = vmatpush1.msra.mxu0 0.0
    %1781 = vmatprep.subr.mxu0 0.0
    %1782 = vmatpush1.msra.mxu0 0.0
    %1783 = vmatprep.subr.mxu0 0.0
    %1784 = vmatpush1.msra.mxu0 0.0
    %1785 = vmatprep.subr.mxu0 0.0
    %1786 = vmatpush1.msra.mxu0 0.0
    %1787 = vmatprep.subr.mxu0 0.0
    %1788 = vmatpush1.msra.mxu0 0.0
    %1789 = vmatprep.mubr.f32.mxu0 0.0
    %1790 = vmatmul.mubr.f32.gmra.mrb[0].mxu0 %v1723
    %v1791 = vpop.f32.mrb[0].mxu0
    %v1792 = vadd.f32 %v1420, %v1791
    %v1793 = vpop.f32.mrb[0].mxu0
    %1794 = vdwg.mxu0
    %v1795 = vadd.f32 %v1376, %v1792
    %v1796 = vsub.f32 0.0, %v1795
    %v1797 = vmul.f32 %v1796, 1.442695
    %v1798 = vpow.pop %v1797
    %v1799 = vadd.f32 %v1798, 1.0
    %v1800 = vrcp.pop %v1799
    %v1801 = vmul.f32 1.0, %v1800
    %1803 = vrot.lane.b32.xlu0 %v1792, 64
    %v1804 = vpop.permute.xlu0 %1803
    %v1806 = vmul.f32 %v1801, %v1804
    %1808 = vrot.lane.b32.xlu0 %v1806, 64
    %v1809 = vpop.permute.xlu0 %1808
    %v1811 = vadd.f32 %v1376, %v1809
    %v1812 = vtanh.pop %v1811
    %v1813 = vsub.f32 1.0, %v1801
    %1815 = vrot.lane.b32.xlu0 %v1812, 96
    %v1816 = vpop.permute.xlu0 %1815
    %v1818 = vmul.f32 %v1813, %v1816
    %v1819 = vmul.f32 %v1801, %v1719
    %v1820 = vadd.f32 %v1818, %v1819
    %1822 = vrot.lane.b32.xlu0 %v1820, 96
    %v1823 = vpop.permute.xlu0 %1822
    %v1824 = vsel %vm268, %v1823, 0
    %1826 = vmatprep.subr.mxu0 0.0
    %1827 = vmatpush1.msra.mxu0 %v1410
    %1828 = vmatprep.subr.mxu0 0.0
    %1829 = vmatpush1.msra.mxu0 %v1411
    %1830 = vmatprep.subr.mxu0 0.0
    %1831 = vmatpush1.msra.mxu0 %v1412
    %1832 = vmatprep.subr.mxu0 0.0
    %1833 = vmatpush1.msra.mxu0 %v1413
    %1834 = vmatprep.subr.mxu0 0.0
    %1835 = vmatpush1.msra.mxu0 0.0
    %1836 = vmatprep.subr.mxu0 0.0
    %1837 = vmatpush1.msra.mxu0 0.0
    %1838 = vmatprep.subr.mxu0 0.0
    %1839 = vmatpush1.msra.mxu0 0.0
    %1840 = vmatprep.subr.mxu0 0.0
    %1841 = vmatpush1.msra.mxu0 0.0
    %1842 = vmatprep.subr.mxu0 0.0
    %1843 = vmatpush1.msra.mxu0 0.0
    %1844 = vmatprep.subr.mxu0 0.0
    %1845 = vmatpush1.msra.mxu0 0.0
    %1846 = vmatprep.subr.mxu0 0.0
    %1847 = vmatpush1.msra.mxu0 0.0
    %1848 = vmatprep.subr.mxu0 0.0
    %1849 = vmatpush1.msra.mxu0 0.0
    %1850 = vmatprep.subr.mxu0 0.0
    %1851 = vmatpush1.msra.mxu0 0.0
    %1852 = vmatprep.subr.mxu0 0.0
    %1853 = vmatpush1.msra.mxu0 0.0
    %1854 = vmatprep.subr.mxu0 0.0
    %1855 = vmatpush1.msra.mxu0 0.0
    %1856 = vmatprep.subr.mxu0 0.0
    %1857 = vmatpush1.msra.mxu0 0.0
    %1858 = vmatprep.subr.mxu0 0.0
    %1859 = vmatpush1.msra.mxu0 0.0
    %1860 = vmatprep.subr.mxu0 0.0
    %1861 = vmatpush1.msra.mxu0 0.0
    %1862 = vmatprep.subr.mxu0 0.0
    %1863 = vmatpush1.msra.mxu0 0.0
    %1864 = vmatprep.subr.mxu0 0.0
    %1865 = vmatpush1.msra.mxu0 0.0
    %1866 = vmatprep.subr.mxu0 0.0
    %1867 = vmatpush1.msra.mxu0 0.0
    %1868 = vmatprep.subr.mxu0 0.0
    %1869 = vmatpush1.msra.mxu0 0.0
    %1870 = vmatprep.subr.mxu0 0.0
    %1871 = vmatpush1.msra.mxu0 0.0
    %1872 = vmatprep.subr.mxu0 0.0
    %1873 = vmatpush1.msra.mxu0 0.0
    %1874 = vmatprep.subr.mxu0 0.0
    %1875 = vmatpush1.msra.mxu0 0.0
    %1876 = vmatprep.subr.mxu0 0.0
    %1877 = vmatpush1.msra.mxu0 0.0
    %1878 = vmatprep.subr.mxu0 0.0
    %1879 = vmatpush1.msra.mxu0 0.0
    %1880 = vmatprep.subr.mxu0 0.0
    %1881 = vmatpush1.msra.mxu0 0.0
    %1882 = vmatprep.subr.mxu0 0.0
    %1883 = vmatpush1.msra.mxu0 0.0
    %1884 = vmatprep.subr.mxu0 0.0
    %1885 = vmatpush1.msra.mxu0 0.0
    %1886 = vmatprep.subr.mxu0 0.0
    %1887 = vmatpush1.msra.mxu0 0.0
    %1888 = vmatprep.subr.mxu0 0.0
    %1889 = vmatpush1.msra.mxu0 0.0
    %1890 = vmatprep.mubr.f32.mxu0 0.0
    %1891 = vmatmul.mubr.f32.gmra.mrb[0].mxu0 %v1824
    %v1892 = vpop.f32.mrb[0].mxu0
    %v1893 = vadd.f32 %v1420, %v1892
    %v1894 = vpop.f32.mrb[0].mxu0
    %1895 = vdwg.mxu0
    %v1896 = vadd.f32 %v1381, %v1893
    %v1897 = vsub.f32 0.0, %v1896
    %v1898 = vmul.f32 %v1897, 1.442695
    %v1899 = vpow.pop %v1898
    %v1900 = vadd.f32 %v1899, 1.0
    %v1901 = vrcp.pop %v1900
    %v1902 = vmul.f32 1.0, %v1901
    %1904 = vrot.lane.b32.xlu0 %v1893, 64
    %v1905 = vpop.permute.xlu0 %1904
    %v1907 = vmul.f32 %v1902, %v1905
    %1909 = vrot.lane.b32.xlu0 %v1907, 64
    %v1910 = vpop.permute.xlu0 %1909
    %v1912 = vadd.f32 %v1381, %v1910
    %v1913 = vtanh.pop %v1912
    %v1914 = vsub.f32 1.0, %v1902
    %1916 = vrot.lane.b32.xlu0 %v1913, 96
    %v1917 = vpop.permute.xlu0 %1916
    %v1919 = vmul.f32 %v1914, %v1917
    %v1920 = vmul.f32 %v1902, %v1820
    %v1921 = vadd.f32 %v1919, %v1920
    %1923 = vrot.lane.b32.xlu0 %v1921, 96
    %v1924 = vpop.permute.xlu0 %1923
    %v1925 = vsel %vm268, %v1924, 0
    %1927 = vmatprep.subr.mxu0 0.0
    %1928 = vmatpush1.msra.mxu0 %v1410
    %1929 = vmatprep.subr.mxu0 0.0
    %1930 = vmatpush1.msra.mxu0 %v1411
    %1931 = vmatprep.subr.mxu0 0.0
    %1932 = vmatpush1.msra.mxu0 %v1412
    %1933 = vmatprep.subr.mxu0 0.0
    %1934 = vmatpush1.msra.mxu0 %v1413
    %1935 = vmatprep.subr.mxu0 0.0
    %1936 = vmatpush1.msra.mxu0 0.0
    %1937 = vmatprep.subr.mxu0 0.0
    %1938 = vmatpush1.msra.mxu0 0.0
    %1939 = vmatprep.subr.mxu0 0.0
    %1940 = vmatpush1.msra.mxu0 0.0
    %1941 = vmatprep.subr.mxu0 0.0
    %1942 = vmatpush1.msra.mxu0 0.0
    %1943 = vmatprep.subr.mxu0 0.0
    %1944 = vmatpush1.msra.mxu0 0.0
    %1945 = vmatprep.subr.mxu0 0.0
    %1946 = vmatpush1.msra.mxu0 0.0
    %1947 = vmatprep.subr.mxu0 0.0
    %1948 = vmatpush1.msra.mxu0 0.0
    %1949 = vmatprep.subr.mxu0 0.0
    %1950 = vmatpush1.msra.mxu0 0.0
    %1951 = vmatprep.subr.mxu0 0.0
    %1952 = vmatpush1.msra.mxu0 0.0
    %1953 = vmatprep.subr.mxu0 0.0
    %1954 = vmatpush1.msra.mxu0 0.0
    %1955 = vmatprep.subr.mxu0 0.0
    %1956 = vmatpush1.msra.mxu0 0.0
    %1957 = vmatprep.subr.mxu0 0.0
    %1958 = vmatpush1.msra.mxu0 0.0
    %1959 = vmatprep.subr.mxu0 0.0
    %1960 = vmatpush1.msra.mxu0 0.0
    %1961 = vmatprep.subr.mxu0 0.0
    %1962 = vmatpush1.msra.mxu0 0.0
    %1963 = vmatprep.subr.mxu0 0.0
    %1964 = vmatpush1.msra.mxu0 0.0
    %1965 = vmatprep.subr.mxu0 0.0
    %1966 = vmatpush1.msra.mxu0 0.0
    %1967 = vmatprep.subr.mxu0 0.0
    %1968 = vmatpush1.msra.mxu0 0.0
    %1969 = vmatprep.subr.mxu0 0.0
    %1970 = vmatpush1.msra.mxu0 0.0
    %1971 = vmatprep.subr.mxu0 0.0
    %1972 = vmatpush1.msra.mxu0 0.0
    %1973 = vmatprep.subr.mxu0 0.0
    %1974 = vmatpush1.msra.mxu0 0.0
    %1975 = vmatprep.subr.mxu0 0.0
    %1976 = vmatpush1.msra.mxu0 0.0
    %1977 = vmatprep.subr.mxu0 0.0
    %1978 = vmatpush1.msra.mxu0 0.0
    %1979 = vmatprep.subr.mxu0 0.0
    %1980 = vmatpush1.msra.mxu0 0.0
    %1981 = vmatprep.subr.mxu0 0.0
    %1982 = vmatpush1.msra.mxu0 0.0
    %1983 = vmatprep.subr.mxu0 0.0
    %1984 = vmatpush1.msra.mxu0 0.0
    %1985 = vmatprep.subr.mxu0 0.0
    %1986 = vmatpush1.msra.mxu0 0.0
    %1987 = vmatprep.subr.mxu0 0.0
    %1988 = vmatpush1.msra.mxu0 0.0
    %1989 = vmatprep.subr.mxu0 0.0
    %1990 = vmatpush1.msra.mxu0 0.0
    %1991 = vmatprep.mubr.f32.mxu0 0.0
    %1992 = vmatmul.mubr.f32.gmra.mrb[0].mxu0 %v1925
    %v1993 = vpop.f32.mrb[0].mxu0
    %v1994 = vadd.f32 %v1420, %v1993
    %v1995 = vpop.f32.mrb[0].mxu0
    %1996 = vdwg.mxu0
    %v1997 = vadd.f32 %v1386, %v1994
    %v1998 = vsub.f32 0.0, %v1997
    %v1999 = vmul.f32 %v1998, 1.442695
    %v2000 = vpow.pop %v1999
    %v2001 = vadd.f32 %v2000, 1.0
    %v2002 = vrcp.pop %v2001
    %v2003 = vmul.f32 1.0, %v2002
    %2005 = vrot.lane.b32.xlu0 %v1994, 64
    %v2006 = vpop.permute.xlu0 %2005
    %v2008 = vmul.f32 %v2003, %v2006
    %2010 = vrot.lane.b32.xlu0 %v2008, 64
    %v2011 = vpop.permute.xlu0 %2010
    %v2013 = vadd.f32 %v1386, %v2011
    %v2014 = vtanh.pop %v2013
    %v2015 = vsub.f32 1.0, %v2003
    %2017 = vrot.lane.b32.xlu0 %v2014, 96
    %v2018 = vpop.permute.xlu0 %2017
    %v2020 = vmul.f32 %v2015, %v2018
    %v2021 = vmul.f32 %v2003, %v1921
    %v2022 = vadd.f32 %v2020, %v2021
    %2024 = vrot.lane.b32.xlu0 %v2022, 96
    %v2025 = vpop.permute.xlu0 %2024
    %v2026 = vsel %vm268, %v2025, 0
    %2028 = vmatprep.subr.mxu0 0.0
    %2029 = vmatpush1.msra.mxu0 %v1410
    %2030 = vmatprep.subr.mxu0 0.0
    %2031 = vmatpush1.msra.mxu0 %v1411
    %2032 = vmatprep.subr.mxu0 0.0
    %2033 = vmatpush1.msra.mxu0 %v1412
    %2034 = vmatprep.subr.mxu0 0.0
    %2035 = vmatpush1.msra.mxu0 %v1413
    %2036 = vmatprep.subr.mxu0 0.0
    %2037 = vmatpush1.msra.mxu0 0.0
    %2038 = vmatprep.subr.mxu0 0.0
    %2039 = vmatpush1.msra.mxu0 0.0
    %2040 = vmatprep.subr.mxu0 0.0
    %2041 = vmatpush1.msra.mxu0 0.0
    %2042 = vmatprep.subr.mxu0 0.0
    %2043 = vmatpush1.msra.mxu0 0.0
    %2044 = vmatprep.subr.mxu0 0.0
    %2045 = vmatpush1.msra.mxu0 0.0
    %2046 = vmatprep.subr.mxu0 0.0
    %2047 = vmatpush1.msra.mxu0 0.0
    %2048 = vmatprep.subr.mxu0 0.0
    %2049 = vmatpush1.msra.mxu0 0.0
    %2050 = vmatprep.subr.mxu0 0.0
    %2051 = vmatpush1.msra.mxu0 0.0
    %2052 = vmatprep.subr.mxu0 0.0
    %2053 = vmatpush1.msra.mxu0 0.0
    %2054 = vmatprep.subr.mxu0 0.0
    %2055 = vmatpush1.msra.mxu0 0.0
    %2056 = vmatprep.subr.mxu0 0.0
    %2057 = vmatpush1.msra.mxu0 0.0
    %2058 = vmatprep.subr.mxu0 0.0
    %2059 = vmatpush1.msra.mxu0 0.0
    %2060 = vmatprep.subr.mxu0 0.0
    %2061 = vmatpush1.msra.mxu0 0.0
    %2062 = vmatprep.subr.mxu0 0.0
    %2063 = vmatpush1.msra.mxu0 0.0
    %2064 = vmatprep.subr.mxu0 0.0
    %2065 = vmatpush1.msra.mxu0 0.0
    %2066 = vmatprep.subr.mxu0 0.0
    %2067 = vmatpush1.msra.mxu0 0.0
    %2068 = vmatprep.subr.mxu0 0.0
    %2069 = vmatpush1.msra.mxu0 0.0
    %2070 = vmatprep.subr.mxu0 0.0
    %2071 = vmatpush1.msra.mxu0 0.0
    %2072 = vmatprep.subr.mxu0 0.0
    %2073 = vmatpush1.msra.mxu0 0.0
    %2074 = vmatprep.subr.mxu0 0.0
    %2075 = vmatpush1.msra.mxu0 0.0
    %2076 = vmatprep.subr.mxu0 0.0
    %2077 = vmatpush1.msra.mxu0 0.0
    %2078 = vmatprep.subr.mxu0 0.0
    %2079 = vmatpush1.msra.mxu0 0.0
    %2080 = vmatprep.subr.mxu0 0.0
    %2081 = vmatpush1.msra.mxu0 0.0
    %2082 = vmatprep.subr.mxu0 0.0
    %2083 = vmatpush1.msra.mxu0 0.0
    %2084 = vmatprep.subr.mxu0 0.0
    %2085 = vmatpush1.msra.mxu0 0.0
    %2086 = vmatprep.subr.mxu0 0.0
    %2087 = vmatpush1.msra.mxu0 0.0
    %2088 = vmatprep.subr.mxu0 0.0
    %2089 = vmatpush1.msra.mxu0 0.0
    %2090 = vmatprep.subr.mxu0 0.0
    %2091 = vmatpush1.msra.mxu0 0.0
    %2092 = vmatprep.mubr.f32.mxu0 0.0
    %2093 = vmatmul.mubr.f32.gmra.mrb[0].mxu0 %v2026
    %v2094 = vpop.f32.mrb[0].mxu0
    %v2095 = vadd.f32 %v1420, %v2094
    %v2096 = vpop.f32.mrb[0].mxu0
    %2097 = vdwg.mxu0
    %v2098 = vadd.f32 %v1391, %v2095
    %v2099 = vsub.f32 0.0, %v2098
    %v2100 = vmul.f32 %v2099, 1.442695
    %v2101 = vpow.pop %v2100
    %v2102 = vadd.f32 %v2101, 1.0
    %v2103 = vrcp.pop %v2102
    %v2104 = vmul.f32 1.0, %v2103
    %2106 = vrot.lane.b32.xlu0 %v2095, 64
    %v2107 = vpop.permute.xlu0 %2106
    %v2109 = vmul.f32 %v2104, %v2107
    %2111 = vrot.lane.b32.xlu0 %v2109, 64
    %v2112 = vpop.permute.xlu0 %2111
    %v2114 = vadd.f32 %v1391, %v2112
    %v2115 = vtanh.pop %v2114
    %v2116 = vsub.f32 1.0, %v2104
    %2118 = vrot.lane.b32.xlu0 %v2115, 96
    %v2119 = vpop.permute.xlu0 %2118
    %v2121 = vmul.f32 %v2116, %v2119
    %v2122 = vmul.f32 %v2104, %v2022
    %v2123 = vadd.f32 %v2121, %v2122
    %2125 = vrot.lane.b32.xlu0 %v2123, 96
    %v2126 = vpop.permute.xlu0 %2125
    %v2127 = vsel %vm268, %v2126, 0
    %2129 = vmatprep.subr.mxu0 0.0
    %2130 = vmatpush1.msra.mxu0 %v1410
    %2131 = vmatprep.subr.mxu0 0.0
    %2132 = vmatpush1.msra.mxu0 %v1411
    %2133 = vmatprep.subr.mxu0 0.0
    %2134 = vmatpush1.msra.mxu0 %v1412
    %2135 = vmatprep.subr.mxu0 0.0
    %2136 = vmatpush1.msra.mxu0 %v1413
    %2137 = vmatprep.subr.mxu0 0.0
    %2138 = vmatpush1.msra.mxu0 0.0
    %2139 = vmatprep.subr.mxu0 0.0
    %2140 = vmatpush1.msra.mxu0 0.0
    %2141 = vmatprep.subr.mxu0 0.0
    %2142 = vmatpush1.msra.mxu0 0.0
    %2143 = vmatprep.subr.mxu0 0.0
    %2144 = vmatpush1.msra.mxu0 0.0
    %2145 = vmatprep.subr.mxu0 0.0
    %2146 = vmatpush1.msra.mxu0 0.0
    %2147 = vmatprep.subr.mxu0 0.0
    %2148 = vmatpush1.msra.mxu0 0.0
    %2149 = vmatprep.subr.mxu0 0.0
    %2150 = vmatpush1.msra.mxu0 0.0
    %2151 = vmatprep.subr.mxu0 0.0
    %2152 = vmatpush1.msra.mxu0 0.0
    %2153 = vmatprep.subr.mxu0 0.0
    %2154 = vmatpush1.msra.mxu0 0.0
    %2155 = vmatprep.subr.mxu0 0.0
    %2156 = vmatpush1.msra.mxu0 0.0
    %2157 = vmatprep.subr.mxu0 0.0
    %2158 = vmatpush1.msra.mxu0 0.0
    %2159 = vmatprep.subr.mxu0 0.0
    %2160 = vmatpush1.msra.mxu0 0.0
    %2161 = vmatprep.subr.mxu0 0.0
    %2162 = vmatpush1.msra.mxu0 0.0
    %2163 = vmatprep.subr.mxu0 0.0
    %2164 = vmatpush1.msra.mxu0 0.0
    %2165 = vmatprep.subr.mxu0 0.0
    %2166 = vmatpush1.msra.mxu0 0.0
    %2167 = vmatprep.subr.mxu0 0.0
    %2168 = vmatpush1.msra.mxu0 0.0
    %2169 = vmatprep.subr.mxu0 0.0
    %2170 = vmatpush1.msra.mxu0 0.0
    %2171 = vmatprep.subr.mxu0 0.0
    %2172 = vmatpush1.msra.mxu0 0.0
    %2173 = vmatprep.subr.mxu0 0.0
    %2174 = vmatpush1.msra.mxu0 0.0
    %2175 = vmatprep.subr.mxu0 0.0
    %2176 = vmatpush1.msra.mxu0 0.0
    %2177 = vmatprep.subr.mxu0 0.0
    %2178 = vmatpush1.msra.mxu0 0.0
    %2179 = vmatprep.subr.mxu0 0.0
    %2180 = vmatpush1.msra.mxu0 0.0
    %2181 = vmatprep.subr.mxu0 0.0
    %2182 = vmatpush1.msra.mxu0 0.0
    %2183 = vmatprep.subr.mxu0 0.0
    %2184 = vmatpush1.msra.mxu0 0.0
    %2185 = vmatprep.subr.mxu0 0.0
    %2186 = vmatpush1.msra.mxu0 0.0
    %2187 = vmatprep.subr.mxu0 0.0
    %2188 = vmatpush1.msra.mxu0 0.0
    %2189 = vmatprep.subr.mxu0 0.0
    %2190 = vmatpush1.msra.mxu0 0.0
    %2191 = vmatprep.subr.mxu0 0.0
    %2192 = vmatpush1.msra.mxu0 0.0
    %2193 = vmatprep.mubr.f32.mxu0 0.0
    %2194 = vmatmul.mubr.f32.gmra.mrb[0].mxu0 %v2127
    %v2195 = vpop.f32.mrb[0].mxu0
    %v2196 = vadd.f32 %v1420, %v2195
    %v2197 = vpop.f32.mrb[0].mxu0
    %2198 = vdwg.mxu0
    %v2199 = vadd.f32 %v1396, %v2196
    %v2200 = vsub.f32 0.0, %v2199
    %v2201 = vmul.f32 %v2200, 1.442695
    %v2202 = vpow.pop %v2201
    %v2203 = vadd.f32 %v2202, 1.0
    %v2204 = vrcp.pop %v2203
    %v2205 = vmul.f32 1.0, %v2204
    %2207 = vrot.lane.b32.xlu0 %v2196, 64
    %v2208 = vpop.permute.xlu0 %2207
    %v2210 = vmul.f32 %v2205, %v2208
    %2212 = vrot.lane.b32.xlu0 %v2210, 64
    %v2213 = vpop.permute.xlu0 %2212
    %v2215 = vadd.f32 %v1396, %v2213
    %v2216 = vtanh.pop %v2215
    %v2217 = vsub.f32 1.0, %v2205
    %2219 = vrot.lane.b32.xlu0 %v2216, 96
    %v2220 = vpop.permute.xlu0 %2219
    %v2222 = vmul.f32 %v2217, %v2220
    %v2223 = vmul.f32 %v2205, %v2123
    %v2224 = vadd.f32 %v2222, %v2223
    %2226 = vrot.lane.b32.xlu0 %v2224, 96
    %v2227 = vpop.permute.xlu0 %2226
    %v2228 = vsel %vm268, %v2227, 0
    %2230 = vmatprep.subr.mxu0 0.0
    %2231 = vmatpush1.msra.mxu0 %v1410
    %2232 = vmatprep.subr.mxu0 0.0
    %2233 = vmatpush1.msra.mxu0 %v1411
    %2234 = vmatprep.subr.mxu0 0.0
    %2235 = vmatpush1.msra.mxu0 %v1412
    %2236 = vmatprep.subr.mxu0 0.0
    %2237 = vmatpush1.msra.mxu0 %v1413
    %2238 = vmatprep.subr.mxu0 0.0
    %2239 = vmatpush1.msra.mxu0 0.0
    %2240 = vmatprep.subr.mxu0 0.0
    %2241 = vmatpush1.msra.mxu0 0.0
    %2242 = vmatprep.subr.mxu0 0.0
    %2243 = vmatpush1.msra.mxu0 0.0
    %2244 = vmatprep.subr.mxu0 0.0
    %2245 = vmatpush1.msra.mxu0 0.0
    %2246 = vmatprep.subr.mxu0 0.0
    %2247 = vmatpush1.msra.mxu0 0.0
    %2248 = vmatprep.subr.mxu0 0.0
    %2249 = vmatpush1.msra.mxu0 0.0
    %2250 = vmatprep.subr.mxu0 0.0
    %2251 = vmatpush1.msra.mxu0 0.0
    %2252 = vmatprep.subr.mxu0 0.0
    %2253 = vmatpush1.msra.mxu0 0.0
    %2254 = vmatprep.subr.mxu0 0.0
    %2255 = vmatpush1.msra.mxu0 0.0
    %2256 = vmatprep.subr.mxu0 0.0
    %2257 = vmatpush1.msra.mxu0 0.0
    %2258 = vmatprep.subr.mxu0 0.0
    %2259 = vmatpush1.msra.mxu0 0.0
    %2260 = vmatprep.subr.mxu0 0.0
    %2261 = vmatpush1.msra.mxu0 0.0
    %2262 = vmatprep.subr.mxu0 0.0
    %2263 = vmatpush1.msra.mxu0 0.0
    %2264 = vmatprep.subr.mxu0 0.0
    %2265 = vmatpush1.msra.mxu0 0.0
    %2266 = vmatprep.subr.mxu0 0.0
    %2267 = vmatpush1.msra.mxu0 0.0
    %2268 = vmatprep.subr.mxu0 0.0
    %2269 = vmatpush1.msra.mxu0 0.0
    %2270 = vmatprep.subr.mxu0 0.0
    %2271 = vmatpush1.msra.mxu0 0.0
    %2272 = vmatprep.subr.mxu0 0.0
    %2273 = vmatpush1.msra.mxu0 0.0
    %2274 = vmatprep.subr.mxu0 0.0
    %2275 = vmatpush1.msra.mxu0 0.0
    %2276 = vmatprep.subr.mxu0 0.0
    %2277 = vmatpush1.msra.mxu0 0.0
    %2278 = vmatprep.subr.mxu0 0.0
    %2279 = vmatpush1.msra.mxu0 0.0
    %2280 = vmatprep.subr.mxu0 0.0
    %2281 = vmatpush1.msra.mxu0 0.0
    %2282 = vmatprep.subr.mxu0 0.0
    %2283 = vmatpush1.msra.mxu0 0.0
    %2284 = vmatprep.subr.mxu0 0.0
    %2285 = vmatpush1.msra.mxu0 0.0
    %2286 = vmatprep.subr.mxu0 0.0
    %2287 = vmatpush1.msra.mxu0 0.0
    %2288 = vmatprep.subr.mxu0 0.0
    %2289 = vmatpush1.msra.mxu0 0.0
    %2290 = vmatprep.subr.mxu0 0.0
    %2291 = vmatpush1.msra.mxu0 0.0
    %2292 = vmatprep.subr.mxu0 0.0
    %2293 = vmatpush1.msra.mxu0 0.0
    %2294 = vmatprep.mubr.f32.mxu0 0.0
    %2295 = vmatmul.mubr.f32.gmra.mrb[0].mxu0 %v2228
    %v2296 = vpop.f32.mrb[0].mxu0
    %v2297 = vadd.f32 %v1420, %v2296
    %v2298 = vpop.f32.mrb[0].mxu0
    %2299 = vdwg.mxu0
    %v2300 = vadd.f32 %v1401, %v2297
    %v2301 = vsub.f32 0.0, %v2300
    %v2302 = vmul.f32 %v2301, 1.442695
    %v2303 = vpow.pop %v2302
    %v2304 = vadd.f32 %v2303, 1.0
    %v2305 = vrcp.pop %v2304
    %v2306 = vmul.f32 1.0, %v2305
    %2308 = vrot.lane.b32.xlu0 %v2297, 64
    %v2309 = vpop.permute.xlu0 %2308
    %v2311 = vmul.f32 %v2306, %v2309
    %2313 = vrot.lane.b32.xlu0 %v2311, 64
    %v2314 = vpop.permute.xlu0 %2313
    %v2316 = vadd.f32 %v1401, %v2314
    %v2317 = vtanh.pop %v2316
    %v2318 = vsub.f32 1.0, %v2306
    %2320 = vrot.lane.b32.xlu0 %v2317, 96
    %v2321 = vpop.permute.xlu0 %2320
    %v2323 = vmul.f32 %v2318, %v2321
    %v2324 = vmul.f32 %v2306, %v2224
    %v2325 = vadd.f32 %v2323, %v2324
    %2327 = vrot.lane.b32.xlu0 %v2325, 96
    %v2328 = vpop.permute.xlu0 %2327
    %v2329 = vsel %vm268, %v2328, 0
    %2331 = vmatprep.subr.mxu0 0.0
    %2332 = vmatpush1.msra.mxu0 %v1410
    %2333 = vmatprep.subr.mxu0 0.0
    %2334 = vmatpush1.msra.mxu0 %v1411
    %2335 = vmatprep.subr.mxu0 0.0
    %2336 = vmatpush1.msra.mxu0 %v1412
    %2337 = vmatprep.subr.mxu0 0.0
    %2338 = vmatpush1.msra.mxu0 %v1413
    %2339 = vmatprep.subr.mxu0 0.0
    %2340 = vmatpush1.msra.mxu0 0.0
    %2341 = vmatprep.subr.mxu0 0.0
    %2342 = vmatpush1.msra.mxu0 0.0
    %2343 = vmatprep.subr.mxu0 0.0
    %2344 = vmatpush1.msra.mxu0 0.0
    %2345 = vmatprep.subr.mxu0 0.0
    %2346 = vmatpush1.msra.mxu0 0.0
    %2347 = vmatprep.subr.mxu0 0.0
    %2348 = vmatpush1.msra.mxu0 0.0
    %2349 = vmatprep.subr.mxu0 0.0
    %2350 = vmatpush1.msra.mxu0 0.0
    %2351 = vmatprep.subr.mxu0 0.0
    %2352 = vmatpush1.msra.mxu0 0.0
    %2353 = vmatprep.subr.mxu0 0.0
    %2354 = vmatpush1.msra.mxu0 0.0
    %2355 = vmatprep.subr.mxu0 0.0
    %2356 = vmatpush1.msra.mxu0 0.0
    %2357 = vmatprep.subr.mxu0 0.0
    %2358 = vmatpush1.msra.mxu0 0.0
    %2359 = vmatprep.subr.mxu0 0.0
    %2360 = vmatpush1.msra.mxu0 0.0
    %2361 = vmatprep.subr.mxu0 0.0
    %2362 = vmatpush1.msra.mxu0 0.0
    %2363 = vmatprep.subr.mxu0 0.0
    %2364 = vmatpush1.msra.mxu0 0.0
    %2365 = vmatprep.subr.mxu0 0.0
    %2366 = vmatpush1.msra.mxu0 0.0
    %2367 = vmatprep.subr.mxu0 0.0
    %2368 = vmatpush1.msra.mxu0 0.0
    %2369 = vmatprep.subr.mxu0 0.0
    %2370 = vmatpush1.msra.mxu0 0.0
    %2371 = vmatprep.subr.mxu0 0.0
    %2372 = vmatpush1.msra.mxu0 0.0
    %2373 = vmatprep.subr.mxu0 0.0
    %2374 = vmatpush1.msra.mxu0 0.0
    %2375 = vmatprep.subr.mxu0 0.0
    %2376 = vmatpush1.msra.mxu0 0.0
    %2377 = vmatprep.subr.mxu0 0.0
    %2378 = vmatpush1.msra.mxu0 0.0
    %2379 = vmatprep.subr.mxu0 0.0
    %2380 = vmatpush1.msra.mxu0 0.0
    %2381 = vmatprep.subr.mxu0 0.0
    %2382 = vmatpush1.msra.mxu0 0.0
    %2383 = vmatprep.subr.mxu0 0.0
    %2384 = vmatpush1.msra.mxu0 0.0
    %2385 = vmatprep.subr.mxu0 0.0
    %2386 = vmatpush1.msra.mxu0 0.0
    %2387 = vmatprep.subr.mxu0 0.0
    %2388 = vmatpush1.msra.mxu0 0.0
    %2389 = vmatprep.subr.mxu0 0.0
    %2390 = vmatpush1.msra.mxu0 0.0
    %2391 = vmatprep.subr.mxu0 0.0
    %2392 = vmatpush1.msra.mxu0 0.0
    %2393 = vmatprep.subr.mxu0 0.0
    %2394 = vmatpush1.msra.mxu0 0.0
    %2395 = vmatprep.mubr.f32.mxu0 0.0
    %2396 = vmatmul.mubr.f32.gmra.mrb[0].mxu0 %v2329
    %v2397 = vpop.f32.mrb[0].mxu0
    %v2398 = vadd.f32 %v1420, %v2397
    %v2399 = vpop.f32.mrb[0].mxu0
    %2400 = vdwg.mxu0
    %v2401 = vadd.f32 %v1406, %v2398
    %v2402 = vsub.f32 0.0, %v2401
    %v2403 = vmul.f32 %v2402, 1.442695
    %v2404 = vpow.pop %v2403
    %v2405 = vadd.f32 %v2404, 1.0
    %v2406 = vrcp.pop %v2405
    %v2407 = vmul.f32 1.0, %v2406
    %2409 = vrot.lane.b32.xlu0 %v2398, 64
    %v2410 = vpop.permute.xlu0 %2409
    %v2412 = vmul.f32 %v2407, %v2410
    %2414 = vrot.lane.b32.xlu0 %v2412, 64
    %v2415 = vpop.permute.xlu0 %2414
    %v2417 = vadd.f32 %v1406, %v2415
    %v2418 = vtanh.pop %v2417
    %v2419 = vsub.f32 1.0, %v2407
    %2421 = vrot.lane.b32.xlu0 %v2418, 96
    %v2422 = vpop.permute.xlu0 %2421
    %v2424 = vmul.f32 %v2419, %v2422
    %v2425 = vmul.f32 %v2407, %v2325
    %v2426 = vadd.f32 %v2424, %v2425
    %s2427 = scalar_lea.vmem [#allocation5], 32
    %v2428 = vld [vmem:[%s2427] sm:$0xff]
    %v2429 = vld [vmem:[%s2427 + $0x8] sm:$0xff]
    %v2430 = vld [vmem:[%s2427 + $0x10] sm:$0xff]
    %v2431 = vld [vmem:[%s2427 + $0x18] sm:$0xff]
    %s2432 = scalar_lea.vmem [#allocation7], 2
    %v2433 = vld [vmem:[%s2432] sm:$0x1]
    %v2435 = vlaneseq
    %v2436 = vshrl.u32 %v2435, 7
    %v2437 = vsub.s32 0, %v2436
    %v2438 = vrot.slane %v2433, %v2437
    %2441 = vrot.lane.b32.xlu0 %v2426, 96
    %v2442 = vpop.permute.xlu0 %2441
    %v2443 = vsel %vm268, %v2442, 0
    %2445 = vmatprep.subr.mxu0 0.0
    %2446 = vmatpush1.msra.mxu0 %v2428
    %2447 = vmatprep.subr.mxu0 0.0
    %2448 = vmatpush1.msra.mxu0 %v2429
    %2449 = vmatprep.subr.mxu0 0.0
    %2450 = vmatpush1.msra.mxu0 %v2430
    %2451 = vmatprep.subr.mxu0 0.0
    %2452 = vmatpush1.msra.mxu0 %v2431
    %2453 = vmatprep.subr.mxu0 0.0
    %2454 = vmatpush1.msra.mxu0 0.0
    %2455 = vmatprep.subr.mxu0 0.0
    %2456 = vmatpush1.msra.mxu0 0.0
    %2457 = vmatprep.subr.mxu0 0.0
    %2458 = vmatpush1.msra.mxu0 0.0
    %2459 = vmatprep.subr.mxu0 0.0
    %2460 = vmatpush1.msra.mxu0 0.0
    %2461 = vmatprep.subr.mxu0 0.0
    %2462 = vmatpush1.msra.mxu0 0.0
    %2463 = vmatprep.subr.mxu0 0.0
    %2464 = vmatpush1.msra.mxu0 0.0
    %2465 = vmatprep.subr.mxu0 0.0
    %2466 = vmatpush1.msra.mxu0 0.0
    %2467 = vmatprep.subr.mxu0 0.0
    %2468 = vmatpush1.msra.mxu0 0.0
    %2469 = vmatprep.subr.mxu0 0.0
    %2470 = vmatpush1.msra.mxu0 0.0
    %2471 = vmatprep.subr.mxu0 0.0
    %2472 = vmatpush1.msra.mxu0 0.0
    %2473 = vmatprep.subr.mxu0 0.0
    %2474 = vmatpush1.msra.mxu0 0.0
    %2475 = vmatprep.subr.mxu0 0.0
    %2476 = vmatpush1.msra.mxu0 0.0
    %2477 = vmatprep.subr.mxu0 0.0
    %2478 = vmatpush1.msra.mxu0 0.0
    %2479 = vmatprep.subr.mxu0 0.0
    %2480 = vmatpush1.msra.mxu0 0.0
    %2481 = vmatprep.subr.mxu0 0.0
    %2482 = vmatpush1.msra.mxu0 0.0
    %2483 = vmatprep.subr.mxu0 0.0
    %2484 = vmatpush1.msra.mxu0 0.0
    %2485 = vmatprep.subr.mxu0 0.0
    %2486 = vmatpush1.msra.mxu0 0.0
    %2487 = vmatprep.subr.mxu0 0.0
    %2488 = vmatpush1.msra.mxu0 0.0
    %2489 = vmatprep.subr.mxu0 0.0
    %2490 = vmatpush1.msra.mxu0 0.0
    %2491 = vmatprep.subr.mxu0 0.0
    %2492 = vmatpush1.msra.mxu0 0.0
    %2493 = vmatprep.subr.mxu0 0.0
    %2494 = vmatpush1.msra.mxu0 0.0
    %2495 = vmatprep.subr.mxu0 0.0
    %2496 = vmatpush1.msra.mxu0 0.0
    %2497 = vmatprep.subr.mxu0 0.0
    %2498 = vmatpush1.msra.mxu0 0.0
    %2499 = vmatprep.subr.mxu0 0.0
    %2500 = vmatpush1.msra.mxu0 0.0
    %2501 = vmatprep.subr.mxu0 0.0
    %2502 = vmatpush1.msra.mxu0 0.0
    %2503 = vmatprep.subr.mxu0 0.0
    %2504 = vmatpush1.msra.mxu0 0.0
    %2505 = vmatprep.subr.mxu0 0.0
    %2506 = vmatpush1.msra.mxu0 0.0
    %2507 = vmatprep.subr.mxu0 0.0
    %2508 = vmatpush1.msra.mxu0 0.0
    %2509 = vmatprep.mubr.f32.mxu0 0.0
    %2510 = vmatmul.mubr.f32.gmra.mrb[0].mxu0 %v1521
    %v2511 = vpop.f32.mrb[0].mxu0
    %v2512 = vadd.f32 %v2438, %v2511
    %v2513 = vpop.f32.mrb[0].mxu0
    %2514 = vmatprep.mubr.f32.mxu0 0.0
    %2515 = vmatmul.mubr.f32.gmra.mrb[0].mxu0 %v1622
    %v2516 = vpop.f32.mrb[0].mxu0
    %v2517 = vadd.f32 %v2438, %v2516
    %v2518 = vpop.f32.mrb[0].mxu0
    %2519 = vmatprep.mubr.f32.mxu0 0.0
    %2520 = vmatmul.mubr.f32.gmra.mrb[0].mxu0 %v1723
    %v2521 = vpop.f32.mrb[0].mxu0
    %v2522 = vadd.f32 %v2438, %v2521
    %v2523 = vpop.f32.mrb[0].mxu0
    %2524 = vmatprep.mubr.f32.mxu0 0.0
    %2525 = vmatmul.mubr.f32.gmra.mrb[0].mxu0 %v1824
    %v2526 = vpop.f32.mrb[0].mxu0
    %v2527 = vadd.f32 %v2438, %v2526
    %v2528 = vpop.f32.mrb[0].mxu0
    %2529 = vmatprep.mubr.f32.mxu0 0.0
    %2530 = vmatmul.mubr.f32.gmra.mrb[0].mxu0 %v1925
    %v2531 = vpop.f32.mrb[0].mxu0
    %v2532 = vadd.f32 %v2438, %v2531
    %v2533 = vpop.f32.mrb[0].mxu0
    %2534 = vmatprep.mubr.f32.mxu0 0.0
    %2535 = vmatmul.mubr.f32.gmra.mrb[0].mxu0 %v2026
    %v2536 = vpop.f32.mrb[0].mxu0
    %v2537 = vadd.f32 %v2438, %v2536
    %v2538 = vpop.f32.mrb[0].mxu0
    %2539 = vmatprep.mubr.f32.mxu0 0.0
    %2540 = vmatmul.mubr.f32.gmra.mrb[0].mxu0 %v2127
    %v2541 = vpop.f32.mrb[0].mxu0
    %v2542 = vadd.f32 %v2438, %v2541
    %v2543 = vpop.f32.mrb[0].mxu0
    %2544 = vmatprep.mubr.f32.mxu0 0.0
    %2545 = vmatmul.mubr.f32.gmra.mrb[0].mxu0 %v2228
    %v2546 = vpop.f32.mrb[0].mxu0
    %v2547 = vadd.f32 %v2438, %v2546
    %v2548 = vpop.f32.mrb[0].mxu0
    %2549 = vmatprep.mubr.f32.mxu0 0.0
    %2550 = vmatmul.mubr.f32.gmra.mrb[0].mxu0 %v2329
    %v2551 = vpop.f32.mrb[0].mxu0
    %v2552 = vadd.f32 %v2438, %v2551
    %v2553 = vpop.f32.mrb[0].mxu0
    %2554 = vmatprep.mubr.f32.mxu0 0.0
    %2555 = vmatmul.mubr.f32.gmra.mrb[0].mxu0 %v2443
    %v2556 = vpop.f32.mrb[0].mxu0
    %v2557 = vadd.f32 %v2438, %v2556
    %v2558 = vpop.f32.mrb[0].mxu0
    %2559 = vdwg.mxu0
    %s2560 = scalar_lea.vmem %s3, 64
    %v2561 = vld [vmem:[%s2560] sm:$0xff]
    %v2562 = vld [vmem:[%s2560 + $0x8] sm:$0xff]
    %v2563 = vld [vmem:[%s2560 + $0x10] sm:$0xff]
    %v2564 = vld [vmem:[%s2560 + $0x18] sm:$0xff]
    %s2565 = scalar_lea.vmem [#allocation8], 2
    %v2566 = vld [vmem:[%s2565] sm:$0x1]
    %v2568 = vlaneseq
    %v2569 = vshrl.u32 %v2568, 7
    %v2570 = vsub.s32 0, %v2569
    %v2571 = vrot.slane %v2566, %v2570
    %2573 = vmatprep.subr.mxu0 0.0
    %2574 = vmatpush1.msra.mxu0 %v2561
    %2575 = vmatprep.subr.mxu0 0.0
    %2576 = vmatpush1.msra.mxu0 %v2562
    %2577 = vmatprep.subr.mxu0 0.0
    %2578 = vmatpush1.msra.mxu0 %v2563
    %2579 = vmatprep.subr.mxu0 0.0
    %2580 = vmatpush1.msra.mxu0 %v2564
    %2581 = vmatprep.subr.mxu0 0.0
    %2582 = vmatpush1.msra.mxu0 0.0
    %2583 = vmatprep.subr.mxu0 0.0
    %2584 = vmatpush1.msra.mxu0 0.0
    %2585 = vmatprep.subr.mxu0 0.0
    %2586 = vmatpush1.msra.mxu0 0.0
    %2587 = vmatprep.subr.mxu0 0.0
    %2588 = vmatpush1.msra.mxu0 0.0
    %2589 = vmatprep.subr.mxu0 0.0
    %2590 = vmatpush1.msra.mxu0 0.0
    %2591 = vmatprep.subr.mxu0 0.0
    %2592 = vmatpush1.msra.mxu0 0.0
    %2593 = vmatprep.subr.mxu0 0.0
    %2594 = vmatpush1.msra.mxu0 0.0
    %2595 = vmatprep.subr.mxu0 0.0
    %2596 = vmatpush1.msra.mxu0 0.0
    %2597 = vmatprep.subr.mxu0 0.0
    %2598 = vmatpush1.msra.mxu0 0.0
    %2599 = vmatprep.subr.mxu0 0.0
    %2600 = vmatpush1.msra.mxu0 0.0
    %2601 = vmatprep.subr.mxu0 0.0
    %2602 = vmatpush1.msra.mxu0 0.0
    %2603 = vmatprep.subr.mxu0 0.0
    %2604 = vmatpush1.msra.mxu0 0.0
    %2605 = vmatprep.subr.mxu0 0.0
    %2606 = vmatpush1.msra.mxu0 0.0
    %2607 = vmatprep.subr.mxu0 0.0
    %2608 = vmatpush1.msra.mxu0 0.0
    %2609 = vmatprep.subr.mxu0 0.0
    %2610 = vmatpush1.msra.mxu0 0.0
    %2611 = vmatprep.subr.mxu0 0.0
    %2612 = vmatpush1.msra.mxu0 0.0
    %2613 = vmatprep.subr.mxu0 0.0
    %2614 = vmatpush1.msra.mxu0 0.0
    %2615 = vmatprep.subr.mxu0 0.0
    %2616 = vmatpush1.msra.mxu0 0.0
    %2617 = vmatprep.subr.mxu0 0.0
    %2618 = vmatpush1.msra.mxu0 0.0
    %2619 = vmatprep.subr.mxu0 0.0
    %2620 = vmatpush1.msra.mxu0 0.0
    %2621 = vmatprep.subr.mxu0 0.0
    %2622 = vmatpush1.msra.mxu0 0.0
    %2623 = vmatprep.subr.mxu0 0.0
    %2624 = vmatpush1.msra.mxu0 0.0
    %2625 = vmatprep.subr.mxu0 0.0
    %2626 = vmatpush1.msra.mxu0 0.0
    %2627 = vmatprep.subr.mxu0 0.0
    %2628 = vmatpush1.msra.mxu0 0.0
    %2629 = vmatprep.subr.mxu0 0.0
    %2630 = vmatpush1.msra.mxu0 0.0
    %2631 = vmatprep.subr.mxu0 0.0
    %2632 = vmatpush1.msra.mxu0 0.0
    %2633 = vmatprep.subr.mxu0 0.0
    %2634 = vmatpush1.msra.mxu0 0.0
    %2635 = vmatprep.subr.mxu0 0.0
    %2636 = vmatpush1.msra.mxu0 0.0
    %2637 = vmatprep.mubr.f32.mxu0 0.0
    %2638 = vmatmul.mubr.f32.gmra.mrb[0].mxu0 %v270
    %v2639 = vpop.f32.mrb[0].mxu0
    %v2640 = vadd.f32 %v2571, %v2639
    %v2641 = vpop.f32.mrb[0].mxu0
    %2642 = vdwg.mxu0
    %v2643 = vadd.f32 %v2512, %v2640
    %v2644 = vsub.f32 0.0, %v2643
    %v2645 = vmul.f32 %v2644, 1.442695
    %v2646 = vpow.pop %v2645
    %v2647 = vadd.f32 %v2646, 1.0
    %v2648 = vrcp.pop %v2647
    %v2649 = vmul.f32 1.0, %v2648
    %2651 = vrot.lane.b32.xlu0 %v2640, 64
    %v2652 = vpop.permute.xlu0 %2651
    %v2654 = vmul.f32 %v2649, %v2652
    %2656 = vrot.lane.b32.xlu0 %v2654, 64
    %v2657 = vpop.permute.xlu0 %2656
    %v2659 = vadd.f32 %v2512, %v2657
    %v2660 = vtanh.pop %v2659
    %v2661 = vsub.f32 1.0, %v2649
    %2663 = vrot.lane.b32.xlu0 %v2660, 96
    %v2664 = vpop.permute.xlu0 %2663
    %v2666 = vmul.f32 %v2661, %v2664
    %v2667 = vmul.f32 %v2649, 0.0
    %v2668 = vadd.f32 %v2666, %v2667
    %2670 = vrot.lane.b32.xlu0 %v2668, 96
    %v2671 = vpop.permute.xlu0 %2670
    %v2672 = vsel %vm268, %v2671, 0
    %2674 = vmatprep.subr.mxu0 0.0
    %2675 = vmatpush1.msra.mxu0 %v2561
    %2676 = vmatprep.subr.mxu0 0.0
    %2677 = vmatpush1.msra.mxu0 %v2562
    %2678 = vmatprep.subr.mxu0 0.0
    %2679 = vmatpush1.msra.mxu0 %v2563
    %2680 = vmatprep.subr.mxu0 0.0
    %2681 = vmatpush1.msra.mxu0 %v2564
    %2682 = vmatprep.subr.mxu0 0.0
    %2683 = vmatpush1.msra.mxu0 0.0
    %2684 = vmatprep.subr.mxu0 0.0
    %2685 = vmatpush1.msra.mxu0 0.0
    %2686 = vmatprep.subr.mxu0 0.0
    %2687 = vmatpush1.msra.mxu0 0.0
    %2688 = vmatprep.subr.mxu0 0.0
    %2689 = vmatpush1.msra.mxu0 0.0
    %2690 = vmatprep.subr.mxu0 0.0
    %2691 = vmatpush1.msra.mxu0 0.0
    %2692 = vmatprep.subr.mxu0 0.0
    %2693 = vmatpush1.msra.mxu0 0.0
    %2694 = vmatprep.subr.mxu0 0.0
    %2695 = vmatpush1.msra.mxu0 0.0
    %2696 = vmatprep.subr.mxu0 0.0
    %2697 = vmatpush1.msra.mxu0 0.0
    %2698 = vmatprep.subr.mxu0 0.0
    %2699 = vmatpush1.msra.mxu0 0.0
    %2700 = vmatprep.subr.mxu0 0.0
    %2701 = vmatpush1.msra.mxu0 0.0
    %2702 = vmatprep.subr.mxu0 0.0
    %2703 = vmatpush1.msra.mxu0 0.0
    %2704 = vmatprep.subr.mxu0 0.0
    %2705 = vmatpush1.msra.mxu0 0.0
    %2706 = vmatprep.subr.mxu0 0.0
    %2707 = vmatpush1.msra.mxu0 0.0
    %2708 = vmatprep.subr.mxu0 0.0
    %2709 = vmatpush1.msra.mxu0 0.0
    %2710 = vmatprep.subr.mxu0 0.0
    %2711 = vmatpush1.msra.mxu0 0.0
    %2712 = vmatprep.subr.mxu0 0.0
    %2713 = vmatpush1.msra.mxu0 0.0
    %2714 = vmatprep.subr.mxu0 0.0
    %2715 = vmatpush1.msra.mxu0 0.0
    %2716 = vmatprep.subr.mxu0 0.0
    %2717 = vmatpush1.msra.mxu0 0.0
    %2718 = vmatprep.subr.mxu0 0.0
    %2719 = vmatpush1.msra.mxu0 0.0
    %2720 = vmatprep.subr.mxu0 0.0
    %2721 = vmatpush1.msra.mxu0 0.0
    %2722 = vmatprep.subr.mxu0 0.0
    %2723 = vmatpush1.msra.mxu0 0.0
    %2724 = vmatprep.subr.mxu0 0.0
    %2725 = vmatpush1.msra.mxu0 0.0
    %2726 = vmatprep.subr.mxu0 0.0
    %2727 = vmatpush1.msra.mxu0 0.0
    %2728 = vmatprep.subr.mxu0 0.0
    %2729 = vmatpush1.msra.mxu0 0.0
    %2730 = vmatprep.subr.mxu0 0.0
    %2731 = vmatpush1.msra.mxu0 0.0
    %2732 = vmatprep.subr.mxu0 0.0
    %2733 = vmatpush1.msra.mxu0 0.0
    %2734 = vmatprep.subr.mxu0 0.0
    %2735 = vmatpush1.msra.mxu0 0.0
    %2736 = vmatprep.subr.mxu0 0.0
    %2737 = vmatpush1.msra.mxu0 0.0
    %2738 = vmatprep.mubr.f32.mxu0 0.0
    %2739 = vmatmul.mubr.f32.gmra.mrb[0].mxu0 %v2672
    %v2740 = vpop.f32.mrb[0].mxu0
    %v2741 = vadd.f32 %v2571, %v2740
    %v2742 = vpop.f32.mrb[0].mxu0
    %2743 = vdwg.mxu0
    %v2744 = vadd.f32 %v2517, %v2741
    %v2745 = vsub.f32 0.0, %v2744
    %v2746 = vmul.f32 %v2745, 1.442695
    %v2747 = vpow.pop %v2746
    %v2748 = vadd.f32 %v2747, 1.0
    %v2749 = vrcp.pop %v2748
    %v2750 = vmul.f32 1.0, %v2749
    %2752 = vrot.lane.b32.xlu0 %v2741, 64
    %v2753 = vpop.permute.xlu0 %2752
    %v2755 = vmul.f32 %v2750, %v2753
    %2757 = vrot.lane.b32.xlu0 %v2755, 64
    %v2758 = vpop.permute.xlu0 %2757
    %v2760 = vadd.f32 %v2517, %v2758
    %v2761 = vtanh.pop %v2760
    %v2762 = vsub.f32 1.0, %v2750
    %2764 = vrot.lane.b32.xlu0 %v2761, 96
    %v2765 = vpop.permute.xlu0 %2764
    %v2767 = vmul.f32 %v2762, %v2765
    %v2768 = vmul.f32 %v2750, %v2668
    %v2769 = vadd.f32 %v2767, %v2768
    %2771 = vrot.lane.b32.xlu0 %v2769, 96
    %v2772 = vpop.permute.xlu0 %2771
    %v2773 = vsel %vm268, %v2772, 0
    %2775 = vmatprep.subr.mxu0 0.0
    %2776 = vmatpush1.msra.mxu0 %v2561
    %2777 = vmatprep.subr.mxu0 0.0
    %2778 = vmatpush1.msra.mxu0 %v2562
    %2779 = vmatprep.subr.mxu0 0.0
    %2780 = vmatpush1.msra.mxu0 %v2563
    %2781 = vmatprep.subr.mxu0 0.0
    %2782 = vmatpush1.msra.mxu0 %v2564
    %2783 = vmatprep.subr.mxu0 0.0
    %2784 = vmatpush1.msra.mxu0 0.0
    %2785 = vmatprep.subr.mxu0 0.0
    %2786 = vmatpush1.msra.mxu0 0.0
    %2787 = vmatprep.subr.mxu0 0.0
    %2788 = vmatpush1.msra.mxu0 0.0
    %2789 = vmatprep.subr.mxu0 0.0
    %2790 = vmatpush1.msra.mxu0 0.0
    %2791 = vmatprep.subr.mxu0 0.0
    %2792 = vmatpush1.msra.mxu0 0.0
    %2793 = vmatprep.subr.mxu0 0.0
    %2794 = vmatpush1.msra.mxu0 0.0
    %2795 = vmatprep.subr.mxu0 0.0
    %2796 = vmatpush1.msra.mxu0 0.0
    %2797 = vmatprep.subr.mxu0 0.0
    %2798 = vmatpush1.msra.mxu0 0.0
    %2799 = vmatprep.subr.mxu0 0.0
    %2800 = vmatpush1.msra.mxu0 0.0
    %2801 = vmatprep.subr.mxu0 0.0
    %2802 = vmatpush1.msra.mxu0 0.0
    %2803 = vmatprep.subr.mxu0 0.0
    %2804 = vmatpush1.msra.mxu0 0.0
    %2805 = vmatprep.subr.mxu0 0.0
    %2806 = vmatpush1.msra.mxu0 0.0
    %2807 = vmatprep.subr.mxu0 0.0
    %2808 = vmatpush1.msra.mxu0 0.0
    %2809 = vmatprep.subr.mxu0 0.0
    %2810 = vmatpush1.msra.mxu0 0.0
    %2811 = vmatprep.subr.mxu0 0.0
    %2812 = vmatpush1.msra.mxu0 0.0
    %2813 = vmatprep.subr.mxu0 0.0
    %2814 = vmatpush1.msra.mxu0 0.0
    %2815 = vmatprep.subr.mxu0 0.0
    %2816 = vmatpush1.msra.mxu0 0.0
    %2817 = vmatprep.subr.mxu0 0.0
    %2818 = vmatpush1.msra.mxu0 0.0
    %2819 = vmatprep.subr.mxu0 0.0
    %2820 = vmatpush1.msra.mxu0 0.0
    %2821 = vmatprep.subr.mxu0 0.0
    %2822 = vmatpush1.msra.mxu0 0.0
    %2823 = vmatprep.subr.mxu0 0.0
    %2824 = vmatpush1.msra.mxu0 0.0
    %2825 = vmatprep.subr.mxu0 0.0
    %2826 = vmatpush1.msra.mxu0 0.0
    %2827 = vmatprep.subr.mxu0 0.0
    %2828 = vmatpush1.msra.mxu0 0.0
    %2829 = vmatprep.subr.mxu0 0.0
    %2830 = vmatpush1.msra.mxu0 0.0
    %2831 = vmatprep.subr.mxu0 0.0
    %2832 = vmatpush1.msra.mxu0 0.0
    %2833 = vmatprep.subr.mxu0 0.0
    %2834 = vmatpush1.msra.mxu0 0.0
    %2835 = vmatprep.subr.mxu0 0.0
    %2836 = vmatpush1.msra.mxu0 0.0
    %2837 = vmatprep.subr.mxu0 0.0
    %2838 = vmatpush1.msra.mxu0 0.0
    %2839 = vmatprep.mubr.f32.mxu0 0.0
    %2840 = vmatmul.mubr.f32.gmra.mrb[0].mxu0 %v2773
    %v2841 = vpop.f32.mrb[0].mxu0
    %v2842 = vadd.f32 %v2571, %v2841
    %v2843 = vpop.f32.mrb[0].mxu0
    %2844 = vdwg.mxu0
    %v2845 = vadd.f32 %v2522, %v2842
    %v2846 = vsub.f32 0.0, %v2845
    %v2847 = vmul.f32 %v2846, 1.442695
    %v2848 = vpow.pop %v2847
    %v2849 = vadd.f32 %v2848, 1.0
    %v2850 = vrcp.pop %v2849
    %v2851 = vmul.f32 1.0, %v2850
    %2853 = vrot.lane.b32.xlu0 %v2842, 64
    %v2854 = vpop.permute.xlu0 %2853
    %v2856 = vmul.f32 %v2851, %v2854
    %2858 = vrot.lane.b32.xlu0 %v2856, 64
    %v2859 = vpop.permute.xlu0 %2858
    %v2861 = vadd.f32 %v2522, %v2859
    %v2862 = vtanh.pop %v2861
    %v2863 = vsub.f32 1.0, %v2851
    %2865 = vrot.lane.b32.xlu0 %v2862, 96
    %v2866 = vpop.permute.xlu0 %2865
    %v2868 = vmul.f32 %v2863, %v2866
    %v2869 = vmul.f32 %v2851, %v2769
    %v2870 = vadd.f32 %v2868, %v2869
    %2872 = vrot.lane.b32.xlu0 %v2870, 96
    %v2873 = vpop.permute.xlu0 %2872
    %v2874 = vsel %vm268, %v2873, 0
    %2876 = vmatprep.subr.mxu0 0.0
    %2877 = vmatpush1.msra.mxu0 %v2561
    %2878 = vmatprep.subr.mxu0 0.0
    %2879 = vmatpush1.msra.mxu0 %v2562
    %2880 = vmatprep.subr.mxu0 0.0
    %2881 = vmatpush1.msra.mxu0 %v2563
    %2882 = vmatprep.subr.mxu0 0.0
    %2883 = vmatpush1.msra.mxu0 %v2564
    %2884 = vmatprep.subr.mxu0 0.0
    %2885 = vmatpush1.msra.mxu0 0.0
    %2886 = vmatprep.subr.mxu0 0.0
    %2887 = vmatpush1.msra.mxu0 0.0
    %2888 = vmatprep.subr.mxu0 0.0
    %2889 = vmatpush1.msra.mxu0 0.0
    %2890 = vmatprep.subr.mxu0 0.0
    %2891 = vmatpush1.msra.mxu0 0.0
    %2892 = vmatprep.subr.mxu0 0.0
    %2893 = vmatpush1.msra.mxu0 0.0
    %2894 = vmatprep.subr.mxu0 0.0
    %2895 = vmatpush1.msra.mxu0 0.0
    %2896 = vmatprep.subr.mxu0 0.0
    %2897 = vmatpush1.msra.mxu0 0.0
    %2898 = vmatprep.subr.mxu0 0.0
    %2899 = vmatpush1.msra.mxu0 0.0
    %2900 = vmatprep.subr.mxu0 0.0
    %2901 = vmatpush1.msra.mxu0 0.0
    %2902 = vmatprep.subr.mxu0 0.0
    %2903 = vmatpush1.msra.mxu0 0.0
    %2904 = vmatprep.subr.mxu0 0.0
    %2905 = vmatpush1.msra.mxu0 0.0
    %2906 = vmatprep.subr.mxu0 0.0
    %2907 = vmatpush1.msra.mxu0 0.0
    %2908 = vmatprep.subr.mxu0 0.0
    %2909 = vmatpush1.msra.mxu0 0.0
    %2910 = vmatprep.subr.mxu0 0.0
    %2911 = vmatpush1.msra.mxu0 0.0
    %2912 = vmatprep.subr.mxu0 0.0
    %2913 = vmatpush1.msra.mxu0 0.0
    %2914 = vmatprep.subr.mxu0 0.0
    %2915 = vmatpush1.msra.mxu0 0.0
    %2916 = vmatprep.subr.mxu0 0.0
    %2917 = vmatpush1.msra.mxu0 0.0
    %2918 = vmatprep.subr.mxu0 0.0
    %2919 = vmatpush1.msra.mxu0 0.0
    %2920 = vmatprep.subr.mxu0 0.0
    %2921 = vmatpush1.msra.mxu0 0.0
    %2922 = vmatprep.subr.mxu0 0.0
    %2923 = vmatpush1.msra.mxu0 0.0
    %2924 = vmatprep.subr.mxu0 0.0
    %2925 = vmatpush1.msra.mxu0 0.0
    %2926 = vmatprep.subr.mxu0 0.0
    %2927 = vmatpush1.msra.mxu0 0.0
    %2928 = vmatprep.subr.mxu0 0.0
    %2929 = vmatpush1.msra.mxu0 0.0
    %2930 = vmatprep.subr.mxu0 0.0
    %2931 = vmatpush1.msra.mxu0 0.0
    %2932 = vmatprep.subr.mxu0 0.0
    %2933 = vmatpush1.msra.mxu0 0.0
    %2934 = vmatprep.subr.mxu0 0.0
    %2935 = vmatpush1.msra.mxu0 0.0
    %2936 = vmatprep.subr.mxu0 0.0
    %2937 = vmatpush1.msra.mxu0 0.0
    %2938 = vmatprep.subr.mxu0 0.0
    %2939 = vmatpush1.msra.mxu0 0.0
    %2940 = vmatprep.mubr.f32.mxu0 0.0
    %2941 = vmatmul.mubr.f32.gmra.mrb[0].mxu0 %v2874
    %v2942 = vpop.f32.mrb[0].mxu0
    %v2943 = vadd.f32 %v2571, %v2942
    %v2944 = vpop.f32.mrb[0].mxu0
    %2945 = vdwg.mxu0
    %v2946 = vadd.f32 %v2527, %v2943
    %v2947 = vsub.f32 0.0, %v2946
    %v2948 = vmul.f32 %v2947, 1.442695
    %v2949 = vpow.pop %v2948
    %v2950 = vadd.f32 %v2949, 1.0
    %v2951 = vrcp.pop %v2950
    %v2952 = vmul.f32 1.0, %v2951
    %2954 = vrot.lane.b32.xlu0 %v2943, 64
    %v2955 = vpop.permute.xlu0 %2954
    %v2957 = vmul.f32 %v2952, %v2955
    %2959 = vrot.lane.b32.xlu0 %v2957, 64
    %v2960 = vpop.permute.xlu0 %2959
    %v2962 = vadd.f32 %v2527, %v2960
    %v2963 = vtanh.pop %v2962
    %v2964 = vsub.f32 1.0, %v2952
    %2966 = vrot.lane.b32.xlu0 %v2963, 96
    %v2967 = vpop.permute.xlu0 %2966
    %v2969 = vmul.f32 %v2964, %v2967
    %v2970 = vmul.f32 %v2952, %v2870
    %v2971 = vadd.f32 %v2969, %v2970
    %2973 = vrot.lane.b32.xlu0 %v2971, 96
    %v2974 = vpop.permute.xlu0 %2973
    %v2975 = vsel %vm268, %v2974, 0
    %2977 = vmatprep.subr.mxu0 0.0
    %2978 = vmatpush1.msra.mxu0 %v2561
    %2979 = vmatprep.subr.mxu0 0.0
    %2980 = vmatpush1.msra.mxu0 %v2562
    %2981 = vmatprep.subr.mxu0 0.0
    %2982 = vmatpush1.msra.mxu0 %v2563
    %2983 = vmatprep.subr.mxu0 0.0
    %2984 = vmatpush1.msra.mxu0 %v2564
    %2985 = vmatprep.subr.mxu0 0.0
    %2986 = vmatpush1.msra.mxu0 0.0
    %2987 = vmatprep.subr.mxu0 0.0
    %2988 = vmatpush1.msra.mxu0 0.0
    %2989 = vmatprep.subr.mxu0 0.0
    %2990 = vmatpush1.msra.mxu0 0.0
    %2991 = vmatprep.subr.mxu0 0.0
    %2992 = vmatpush1.msra.mxu0 0.0
    %2993 = vmatprep.subr.mxu0 0.0
    %2994 = vmatpush1.msra.mxu0 0.0
    %2995 = vmatprep.subr.mxu0 0.0
    %2996 = vmatpush1.msra.mxu0 0.0
    %2997 = vmatprep.subr.mxu0 0.0
    %2998 = vmatpush1.msra.mxu0 0.0
    %2999 = vmatprep.subr.mxu0 0.0
    %3000 = vmatpush1.msra.mxu0 0.0
    %3001 = vmatprep.subr.mxu0 0.0
    %3002 = vmatpush1.msra.mxu0 0.0
    %3003 = vmatprep.subr.mxu0 0.0
    %3004 = vmatpush1.msra.mxu0 0.0
    %3005 = vmatprep.subr.mxu0 0.0
    %3006 = vmatpush1.msra.mxu0 0.0
    %3007 = vmatprep.subr.mxu0 0.0
    %3008 = vmatpush1.msra.mxu0 0.0
    %3009 = vmatprep.subr.mxu0 0.0
    %3010 = vmatpush1.msra.mxu0 0.0
    %3011 = vmatprep.subr.mxu0 0.0
    %3012 = vmatpush1.msra.mxu0 0.0
    %3013 = vmatprep.subr.mxu0 0.0
    %3014 = vmatpush1.msra.mxu0 0.0
    %3015 = vmatprep.subr.mxu0 0.0
    %3016 = vmatpush1.msra.mxu0 0.0
    %3017 = vmatprep.subr.mxu0 0.0
    %3018 = vmatpush1.msra.mxu0 0.0
    %3019 = vmatprep.subr.mxu0 0.0
    %3020 = vmatpush1.msra.mxu0 0.0
    %3021 = vmatprep.subr.mxu0 0.0
    %3022 = vmatpush1.msra.mxu0 0.0
    %3023 = vmatprep.subr.mxu0 0.0
    %3024 = vmatpush1.msra.mxu0 0.0
    %3025 = vmatprep.subr.mxu0 0.0
    %3026 = vmatpush1.msra.mxu0 0.0
    %3027 = vmatprep.subr.mxu0 0.0
    %3028 = vmatpush1.msra.mxu0 0.0
    %3029 = vmatprep.subr.mxu0 0.0
    %3030 = vmatpush1.msra.mxu0 0.0
    %3031 = vmatprep.subr.mxu0 0.0
    %3032 = vmatpush1.msra.mxu0 0.0
    %3033 = vmatprep.subr.mxu0 0.0
    %3034 = vmatpush1.msra.mxu0 0.0
    %3035 = vmatprep.subr.mxu0 0.0
    %3036 = vmatpush1.msra.mxu0 0.0
    %3037 = vmatprep.subr.mxu0 0.0
    %3038 = vmatpush1.msra.mxu0 0.0
    %3039 = vmatprep.subr.mxu0 0.0
    %3040 = vmatpush1.msra.mxu0 0.0
    %3041 = vmatprep.mubr.f32.mxu0 0.0
    %3042 = vmatmul.mubr.f32.gmra.mrb[0].mxu0 %v2975
    %v3043 = vpop.f32.mrb[0].mxu0
    %v3044 = vadd.f32 %v2571, %v3043
    %v3045 = vpop.f32.mrb[0].mxu0
    %3046 = vdwg.mxu0
    %v3047 = vadd.f32 %v2532, %v3044
    %v3048 = vsub.f32 0.0, %v3047
    %v3049 = vmul.f32 %v3048, 1.442695
    %v3050 = vpow.pop %v3049
    %v3051 = vadd.f32 %v3050, 1.0
    %v3052 = vrcp.pop %v3051
    %v3053 = vmul.f32 1.0, %v3052
    %3055 = vrot.lane.b32.xlu0 %v3044, 64
    %v3056 = vpop.permute.xlu0 %3055
    %v3058 = vmul.f32 %v3053, %v3056
    %3060 = vrot.lane.b32.xlu0 %v3058, 64
    %v3061 = vpop.permute.xlu0 %3060
    %v3063 = vadd.f32 %v2532, %v3061
    %v3064 = vtanh.pop %v3063
    %v3065 = vsub.f32 1.0, %v3053
    %3067 = vrot.lane.b32.xlu0 %v3064, 96
    %v3068 = vpop.permute.xlu0 %3067
    %v3070 = vmul.f32 %v3065, %v3068
    %v3071 = vmul.f32 %v3053, %v2971
    %v3072 = vadd.f32 %v3070, %v3071
    %3074 = vrot.lane.b32.xlu0 %v3072, 96
    %v3075 = vpop.permute.xlu0 %3074
    %v3076 = vsel %vm268, %v3075, 0
    %3078 = vmatprep.subr.mxu0 0.0
    %3079 = vmatpush1.msra.mxu0 %v2561
    %3080 = vmatprep.subr.mxu0 0.0
    %3081 = vmatpush1.msra.mxu0 %v2562
    %3082 = vmatprep.subr.mxu0 0.0
    %3083 = vmatpush1.msra.mxu0 %v2563
    %3084 = vmatprep.subr.mxu0 0.0
    %3085 = vmatpush1.msra.mxu0 %v2564
    %3086 = vmatprep.subr.mxu0 0.0
    %3087 = vmatpush1.msra.mxu0 0.0
    %3088 = vmatprep.subr.mxu0 0.0
    %3089 = vmatpush1.msra.mxu0 0.0
    %3090 = vmatprep.subr.mxu0 0.0
    %3091 = vmatpush1.msra.mxu0 0.0
    %3092 = vmatprep.subr.mxu0 0.0
    %3093 = vmatpush1.msra.mxu0 0.0
    %3094 = vmatprep.subr.mxu0 0.0
    %3095 = vmatpush1.msra.mxu0 0.0
    %3096 = vmatprep.subr.mxu0 0.0
    %3097 = vmatpush1.msra.mxu0 0.0
    %3098 = vmatprep.subr.mxu0 0.0
    %3099 = vmatpush1.msra.mxu0 0.0
    %3100 = vmatprep.subr.mxu0 0.0
    %3101 = vmatpush1.msra.mxu0 0.0
    %3102 = vmatprep.subr.mxu0 0.0
    %3103 = vmatpush1.msra.mxu0 0.0
    %3104 = vmatprep.subr.mxu0 0.0
    %3105 = vmatpush1.msra.mxu0 0.0
    %3106 = vmatprep.subr.mxu0 0.0
    %3107 = vmatpush1.msra.mxu0 0.0
    %3108 = vmatprep.subr.mxu0 0.0
    %3109 = vmatpush1.msra.mxu0 0.0
    %3110 = vmatprep.subr.mxu0 0.0
    %3111 = vmatpush1.msra.mxu0 0.0
    %3112 = vmatprep.subr.mxu0 0.0
    %3113 = vmatpush1.msra.mxu0 0.0
    %3114 = vmatprep.subr.mxu0 0.0
    %3115 = vmatpush1.msra.mxu0 0.0
    %3116 = vmatprep.subr.mxu0 0.0
    %3117 = vmatpush1.msra.mxu0 0.0
    %3118 = vmatprep.subr.mxu0 0.0
    %3119 = vmatpush1.msra.mxu0 0.0
    %3120 = vmatprep.subr.mxu0 0.0
    %3121 = vmatpush1.msra.mxu0 0.0
    %3122 = vmatprep.subr.mxu0 0.0
    %3123 = vmatpush1.msra.mxu0 0.0
    %3124 = vmatprep.subr.mxu0 0.0
    %3125 = vmatpush1.msra.mxu0 0.0
    %3126 = vmatprep.subr.mxu0 0.0
    %3127 = vmatpush1.msra.mxu0 0.0
    %3128 = vmatprep.subr.mxu0 0.0
    %3129 = vmatpush1.msra.mxu0 0.0
    %3130 = vmatprep.subr.mxu0 0.0
    %3131 = vmatpush1.msra.mxu0 0.0
    %3132 = vmatprep.subr.mxu0 0.0
    %3133 = vmatpush1.msra.mxu0 0.0
    %3134 = vmatprep.subr.mxu0 0.0
    %3135 = vmatpush1.msra.mxu0 0.0
    %3136 = vmatprep.subr.mxu0 0.0
    %3137 = vmatpush1.msra.mxu0 0.0
    %3138 = vmatprep.subr.mxu0 0.0
    %3139 = vmatpush1.msra.mxu0 0.0
    %3140 = vmatprep.subr.mxu0 0.0
    %3141 = vmatpush1.msra.mxu0 0.0
    %3142 = vmatprep.mubr.f32.mxu0 0.0
    %3143 = vmatmul.mubr.f32.gmra.mrb[0].mxu0 %v3076
    %v3144 = vpop.f32.mrb[0].mxu0
    %v3145 = vadd.f32 %v2571, %v3144
    %v3146 = vpop.f32.mrb[0].mxu0
    %3147 = vdwg.mxu0
    %v3148 = vadd.f32 %v2537, %v3145
    %v3149 = vsub.f32 0.0, %v3148
    %v3150 = vmul.f32 %v3149, 1.442695
    %v3151 = vpow.pop %v3150
    %v3152 = vadd.f32 %v3151, 1.0
    %v3153 = vrcp.pop %v3152
    %v3154 = vmul.f32 1.0, %v3153
    %3156 = vrot.lane.b32.xlu0 %v3145, 64
    %v3157 = vpop.permute.xlu0 %3156
    %v3159 = vmul.f32 %v3154, %v3157
    %3161 = vrot.lane.b32.xlu0 %v3159, 64
    %v3162 = vpop.permute.xlu0 %3161
    %v3164 = vadd.f32 %v2537, %v3162
    %v3165 = vtanh.pop %v3164
    %v3166 = vsub.f32 1.0, %v3154
    %3168 = vrot.lane.b32.xlu0 %v3165, 96
    %v3169 = vpop.permute.xlu0 %3168
    %v3171 = vmul.f32 %v3166, %v3169
    %v3172 = vmul.f32 %v3154, %v3072
    %v3173 = vadd.f32 %v3171, %v3172
    %3175 = vrot.lane.b32.xlu0 %v3173, 96
    %v3176 = vpop.permute.xlu0 %3175
    %v3177 = vsel %vm268, %v3176, 0
    %3179 = vmatprep.subr.mxu0 0.0
    %3180 = vmatpush1.msra.mxu0 %v2561
    %3181 = vmatprep.subr.mxu0 0.0
    %3182 = vmatpush1.msra.mxu0 %v2562
    %3183 = vmatprep.subr.mxu0 0.0
    %3184 = vmatpush1.msra.mxu0 %v2563
    %3185 = vmatprep.subr.mxu0 0.0
    %3186 = vmatpush1.msra.mxu0 %v2564
    %3187 = vmatprep.subr.mxu0 0.0
    %3188 = vmatpush1.msra.mxu0 0.0
    %3189 = vmatprep.subr.mxu0 0.0
    %3190 = vmatpush1.msra.mxu0 0.0
    %3191 = vmatprep.subr.mxu0 0.0
    %3192 = vmatpush1.msra.mxu0 0.0
    %3193 = vmatprep.subr.mxu0 0.0
    %3194 = vmatpush1.msra.mxu0 0.0
    %3195 = vmatprep.subr.mxu0 0.0
    %3196 = vmatpush1.msra.mxu0 0.0
    %3197 = vmatprep.subr.mxu0 0.0
    %3198 = vmatpush1.msra.mxu0 0.0
    %3199 = vmatprep.subr.mxu0 0.0
    %3200 = vmatpush1.msra.mxu0 0.0
    %3201 = vmatprep.subr.mxu0 0.0
    %3202 = vmatpush1.msra.mxu0 0.0
    %3203 = vmatprep.subr.mxu0 0.0
    %3204 = vmatpush1.msra.mxu0 0.0
    %3205 = vmatprep.subr.mxu0 0.0
    %3206 = vmatpush1.msra.mxu0 0.0
    %3207 = vmatprep.subr.mxu0 0.0
    %3208 = vmatpush1.msra.mxu0 0.0
    %3209 = vmatprep.subr.mxu0 0.0
    %3210 = vmatpush1.msra.mxu0 0.0
    %3211 = vmatprep.subr.mxu0 0.0
    %3212 = vmatpush1.msra.mxu0 0.0
    %3213 = vmatprep.subr.mxu0 0.0
    %3214 = vmatpush1.msra.mxu0 0.0
    %3215 = vmatprep.subr.mxu0 0.0
    %3216 = vmatpush1.msra.mxu0 0.0
    %3217 = vmatprep.subr.mxu0 0.0
    %3218 = vmatpush1.msra.mxu0 0.0
    %3219 = vmatprep.subr.mxu0 0.0
    %3220 = vmatpush1.msra.mxu0 0.0
    %3221 = vmatprep.subr.mxu0 0.0
    %3222 = vmatpush1.msra.mxu0 0.0
    %3223 = vmatprep.subr.mxu0 0.0
    %3224 = vmatpush1.msra.mxu0 0.0
    %3225 = vmatprep.subr.mxu0 0.0
    %3226 = vmatpush1.msra.mxu0 0.0
    %3227 = vmatprep.subr.mxu0 0.0
    %3228 = vmatpush1.msra.mxu0 0.0
    %3229 = vmatprep.subr.mxu0 0.0
    %3230 = vmatpush1.msra.mxu0 0.0
    %3231 = vmatprep.subr.mxu0 0.0
    %3232 = vmatpush1.msra.mxu0 0.0
    %3233 = vmatprep.subr.mxu0 0.0
    %3234 = vmatpush1.msra.mxu0 0.0
    %3235 = vmatprep.subr.mxu0 0.0
    %3236 = vmatpush1.msra.mxu0 0.0
    %3237 = vmatprep.subr.mxu0 0.0
    %3238 = vmatpush1.msra.mxu0 0.0
    %3239 = vmatprep.subr.mxu0 0.0
    %3240 = vmatpush1.msra.mxu0 0.0
    %3241 = vmatprep.subr.mxu0 0.0
    %3242 = vmatpush1.msra.mxu0 0.0
    %3243 = vmatprep.mubr.f32.mxu0 0.0
    %3244 = vmatmul.mubr.f32.gmra.mrb[0].mxu0 %v3177
    %v3245 = vpop.f32.mrb[0].mxu0
    %v3246 = vadd.f32 %v2571, %v3245
    %v3247 = vpop.f32.mrb[0].mxu0
    %3248 = vdwg.mxu0
    %v3249 = vadd.f32 %v2542, %v3246
    %v3250 = vsub.f32 0.0, %v3249
    %v3251 = vmul.f32 %v3250, 1.442695
    %v3252 = vpow.pop %v3251
    %v3253 = vadd.f32 %v3252, 1.0
    %v3254 = vrcp.pop %v3253
    %v3255 = vmul.f32 1.0, %v3254
    %3257 = vrot.lane.b32.xlu0 %v3246, 64
    %v3258 = vpop.permute.xlu0 %3257
    %v3260 = vmul.f32 %v3255, %v3258
    %3262 = vrot.lane.b32.xlu0 %v3260, 64
    %v3263 = vpop.permute.xlu0 %3262
    %v3265 = vadd.f32 %v2542, %v3263
    %v3266 = vtanh.pop %v3265
    %v3267 = vsub.f32 1.0, %v3255
    %3269 = vrot.lane.b32.xlu0 %v3266, 96
    %v3270 = vpop.permute.xlu0 %3269
    %v3272 = vmul.f32 %v3267, %v3270
    %v3273 = vmul.f32 %v3255, %v3173
    %v3274 = vadd.f32 %v3272, %v3273
    %3276 = vrot.lane.b32.xlu0 %v3274, 96
    %v3277 = vpop.permute.xlu0 %3276
    %v3278 = vsel %vm268, %v3277, 0
    %3280 = vmatprep.subr.mxu0 0.0
    %3281 = vmatpush1.msra.mxu0 %v2561
    %3282 = vmatprep.subr.mxu0 0.0
    %3283 = vmatpush1.msra.mxu0 %v2562
    %3284 = vmatprep.subr.mxu0 0.0
    %3285 = vmatpush1.msra.mxu0 %v2563
    %3286 = vmatprep.subr.mxu0 0.0
    %3287 = vmatpush1.msra.mxu0 %v2564
    %3288 = vmatprep.subr.mxu0 0.0
    %3289 = vmatpush1.msra.mxu0 0.0
    %3290 = vmatprep.subr.mxu0 0.0
    %3291 = vmatpush1.msra.mxu0 0.0
    %3292 = vmatprep.subr.mxu0 0.0
    %3293 = vmatpush1.msra.mxu0 0.0
    %3294 = vmatprep.subr.mxu0 0.0
    %3295 = vmatpush1.msra.mxu0 0.0
    %3296 = vmatprep.subr.mxu0 0.0
    %3297 = vmatpush1.msra.mxu0 0.0
    %3298 = vmatprep.subr.mxu0 0.0
    %3299 = vmatpush1.msra.mxu0 0.0
    %3300 = vmatprep.subr.mxu0 0.0
    %3301 = vmatpush1.msra.mxu0 0.0
    %3302 = vmatprep.subr.mxu0 0.0
    %3303 = vmatpush1.msra.mxu0 0.0
    %3304 = vmatprep.subr.mxu0 0.0
    %3305 = vmatpush1.msra.mxu0 0.0
    %3306 = vmatprep.subr.mxu0 0.0
    %3307 = vmatpush1.msra.mxu0 0.0
    %3308 = vmatprep.subr.mxu0 0.0
    %3309 = vmatpush1.msra.mxu0 0.0
    %3310 = vmatprep.subr.mxu0 0.0
    %3311 = vmatpush1.msra.mxu0 0.0
    %3312 = vmatprep.subr.mxu0 0.0
    %3313 = vmatpush1.msra.mxu0 0.0
    %3314 = vmatprep.subr.mxu0 0.0
    %3315 = vmatpush1.msra.mxu0 0.0
    %3316 = vmatprep.subr.mxu0 0.0
    %3317 = vmatpush1.msra.mxu0 0.0
    %3318 = vmatprep.subr.mxu0 0.0
    %3319 = vmatpush1.msra.mxu0 0.0
    %3320 = vmatprep.subr.mxu0 0.0
    %3321 = vmatpush1.msra.mxu0 0.0
    %3322 = vmatprep.subr.mxu0 0.0
    %3323 = vmatpush1.msra.mxu0 0.0
    %3324 = vmatprep.subr.mxu0 0.0
    %3325 = vmatpush1.msra.mxu0 0.0
    %3326 = vmatprep.subr.mxu0 0.0
    %3327 = vmatpush1.msra.mxu0 0.0
    %3328 = vmatprep.subr.mxu0 0.0
    %3329 = vmatpush1.msra.mxu0 0.0
    %3330 = vmatprep.subr.mxu0 0.0
    %3331 = vmatpush1.msra.mxu0 0.0
    %3332 = vmatprep.subr.mxu0 0.0
    %3333 = vmatpush1.msra.mxu0 0.0
    %3334 = vmatprep.subr.mxu0 0.0
    %3335 = vmatpush1.msra.mxu0 0.0
    %3336 = vmatprep.subr.mxu0 0.0
    %3337 = vmatpush1.msra.mxu0 0.0
    %3338 = vmatprep.subr.mxu0 0.0
    %3339 = vmatpush1.msra.mxu0 0.0
    %3340 = vmatprep.subr.mxu0 0.0
    %3341 = vmatpush1.msra.mxu0 0.0
    %3342 = vmatprep.subr.mxu0 0.0
    %3343 = vmatpush1.msra.mxu0 0.0
    %3344 = vmatprep.mubr.f32.mxu0 0.0
    %3345 = vmatmul.mubr.f32.gmra.mrb[0].mxu0 %v3278
    %v3346 = vpop.f32.mrb[0].mxu0
    %v3347 = vadd.f32 %v2571, %v3346
    %v3348 = vpop.f32.mrb[0].mxu0
    %3349 = vdwg.mxu0
    %v3350 = vadd.f32 %v2547, %v3347
    %v3351 = vsub.f32 0.0, %v3350
    %v3352 = vmul.f32 %v3351, 1.442695
    %v3353 = vpow.pop %v3352
    %v3354 = vadd.f32 %v3353, 1.0
    %v3355 = vrcp.pop %v3354
    %v3356 = vmul.f32 1.0, %v3355
    %3358 = vrot.lane.b32.xlu0 %v3347, 64
    %v3359 = vpop.permute.xlu0 %3358
    %v3361 = vmul.f32 %v3356, %v3359
    %3363 = vrot.lane.b32.xlu0 %v3361, 64
    %v3364 = vpop.permute.xlu0 %3363
    %v3366 = vadd.f32 %v2547, %v3364
    %v3367 = vtanh.pop %v3366
    %v3368 = vsub.f32 1.0, %v3356
    %3370 = vrot.lane.b32.xlu0 %v3367, 96
    %v3371 = vpop.permute.xlu0 %3370
    %v3373 = vmul.f32 %v3368, %v3371
    %v3374 = vmul.f32 %v3356, %v3274
    %v3375 = vadd.f32 %v3373, %v3374
    %3377 = vrot.lane.b32.xlu0 %v3375, 96
    %v3378 = vpop.permute.xlu0 %3377
    %v3379 = vsel %vm268, %v3378, 0
    %3381 = vmatprep.subr.mxu0 0.0
    %3382 = vmatpush1.msra.mxu0 %v2561
    %3383 = vmatprep.subr.mxu0 0.0
    %3384 = vmatpush1.msra.mxu0 %v2562
    %3385 = vmatprep.subr.mxu0 0.0
    %3386 = vmatpush1.msra.mxu0 %v2563
    %3387 = vmatprep.subr.mxu0 0.0
    %3388 = vmatpush1.msra.mxu0 %v2564
    %3389 = vmatprep.subr.mxu0 0.0
    %3390 = vmatpush1.msra.mxu0 0.0
    %3391 = vmatprep.subr.mxu0 0.0
    %3392 = vmatpush1.msra.mxu0 0.0
    %3393 = vmatprep.subr.mxu0 0.0
    %3394 = vmatpush1.msra.mxu0 0.0
    %3395 = vmatprep.subr.mxu0 0.0
    %3396 = vmatpush1.msra.mxu0 0.0
    %3397 = vmatprep.subr.mxu0 0.0
    %3398 = vmatpush1.msra.mxu0 0.0
    %3399 = vmatprep.subr.mxu0 0.0
    %3400 = vmatpush1.msra.mxu0 0.0
    %3401 = vmatprep.subr.mxu0 0.0
    %3402 = vmatpush1.msra.mxu0 0.0
    %3403 = vmatprep.subr.mxu0 0.0
    %3404 = vmatpush1.msra.mxu0 0.0
    %3405 = vmatprep.subr.mxu0 0.0
    %3406 = vmatpush1.msra.mxu0 0.0
    %3407 = vmatprep.subr.mxu0 0.0
    %3408 = vmatpush1.msra.mxu0 0.0
    %3409 = vmatprep.subr.mxu0 0.0
    %3410 = vmatpush1.msra.mxu0 0.0
    %3411 = vmatprep.subr.mxu0 0.0
    %3412 = vmatpush1.msra.mxu0 0.0
    %3413 = vmatprep.subr.mxu0 0.0
    %3414 = vmatpush1.msra.mxu0 0.0
    %3415 = vmatprep.subr.mxu0 0.0
    %3416 = vmatpush1.msra.mxu0 0.0
    %3417 = vmatprep.subr.mxu0 0.0
    %3418 = vmatpush1.msra.mxu0 0.0
    %3419 = vmatprep.subr.mxu0 0.0
    %3420 = vmatpush1.msra.mxu0 0.0
    %3421 = vmatprep.subr.mxu0 0.0
    %3422 = vmatpush1.msra.mxu0 0.0
    %3423 = vmatprep.subr.mxu0 0.0
    %3424 = vmatpush1.msra.mxu0 0.0
    %3425 = vmatprep.subr.mxu0 0.0
    %3426 = vmatpush1.msra.mxu0 0.0
    %3427 = vmatprep.subr.mxu0 0.0
    %3428 = vmatpush1.msra.mxu0 0.0
    %3429 = vmatprep.subr.mxu0 0.0
    %3430 = vmatpush1.msra.mxu0 0.0
    %3431 = vmatprep.subr.mxu0 0.0
    %3432 = vmatpush1.msra.mxu0 0.0
    %3433 = vmatprep.subr.mxu0 0.0
    %3434 = vmatpush1.msra.mxu0 0.0
    %3435 = vmatprep.subr.mxu0 0.0
    %3436 = vmatpush1.msra.mxu0 0.0
    %3437 = vmatprep.subr.mxu0 0.0
    %3438 = vmatpush1.msra.mxu0 0.0
    %3439 = vmatprep.subr.mxu0 0.0
    %3440 = vmatpush1.msra.mxu0 0.0
    %3441 = vmatprep.subr.mxu0 0.0
    %3442 = vmatpush1.msra.mxu0 0.0
    %3443 = vmatprep.subr.mxu0 0.0
    %3444 = vmatpush1.msra.mxu0 0.0
    %3445 = vmatprep.mubr.f32.mxu0 0.0
    %3446 = vmatmul.mubr.f32.gmra.mrb[0].mxu0 %v3379
    %v3447 = vpop.f32.mrb[0].mxu0
    %v3448 = vadd.f32 %v2571, %v3447
    %v3449 = vpop.f32.mrb[0].mxu0
    %3450 = vdwg.mxu0
    %v3451 = vadd.f32 %v2552, %v3448
    %v3452 = vsub.f32 0.0, %v3451
    %v3453 = vmul.f32 %v3452, 1.442695
    %v3454 = vpow.pop %v3453
    %v3455 = vadd.f32 %v3454, 1.0
    %v3456 = vrcp.pop %v3455
    %v3457 = vmul.f32 1.0, %v3456
    %3459 = vrot.lane.b32.xlu0 %v3448, 64
    %v3460 = vpop.permute.xlu0 %3459
    %v3462 = vmul.f32 %v3457, %v3460
    %3464 = vrot.lane.b32.xlu0 %v3462, 64
    %v3465 = vpop.permute.xlu0 %3464
    %v3467 = vadd.f32 %v2552, %v3465
    %v3468 = vtanh.pop %v3467
    %v3469 = vsub.f32 1.0, %v3457
    %3471 = vrot.lane.b32.xlu0 %v3468, 96
    %v3472 = vpop.permute.xlu0 %3471
    %v3474 = vmul.f32 %v3469, %v3472
    %v3475 = vmul.f32 %v3457, %v3375
    %v3476 = vadd.f32 %v3474, %v3475
    %3478 = vrot.lane.b32.xlu0 %v3476, 96
    %v3479 = vpop.permute.xlu0 %3478
    %v3480 = vsel %vm268, %v3479, 0
    %3482 = vmatprep.subr.mxu0 0.0
    %3483 = vmatpush1.msra.mxu0 %v2561
    %3484 = vmatprep.subr.mxu0 0.0
    %3485 = vmatpush1.msra.mxu0 %v2562
    %3486 = vmatprep.subr.mxu0 0.0
    %3487 = vmatpush1.msra.mxu0 %v2563
    %3488 = vmatprep.subr.mxu0 0.0
    %3489 = vmatpush1.msra.mxu0 %v2564
    %3490 = vmatprep.subr.mxu0 0.0
    %3491 = vmatpush1.msra.mxu0 0.0
    %3492 = vmatprep.subr.mxu0 0.0
    %3493 = vmatpush1.msra.mxu0 0.0
    %3494 = vmatprep.subr.mxu0 0.0
    %3495 = vmatpush1.msra.mxu0 0.0
    %3496 = vmatprep.subr.mxu0 0.0
    %3497 = vmatpush1.msra.mxu0 0.0
    %3498 = vmatprep.subr.mxu0 0.0
    %3499 = vmatpush1.msra.mxu0 0.0
    %3500 = vmatprep.subr.mxu0 0.0
    %3501 = vmatpush1.msra.mxu0 0.0
    %3502 = vmatprep.subr.mxu0 0.0
    %3503 = vmatpush1.msra.mxu0 0.0
    %3504 = vmatprep.subr.mxu0 0.0
    %3505 = vmatpush1.msra.mxu0 0.0
    %3506 = vmatprep.subr.mxu0 0.0
    %3507 = vmatpush1.msra.mxu0 0.0
    %3508 = vmatprep.subr.mxu0 0.0
    %3509 = vmatpush1.msra.mxu0 0.0
    %3510 = vmatprep.subr.mxu0 0.0
    %3511 = vmatpush1.msra.mxu0 0.0
    %3512 = vmatprep.subr.mxu0 0.0
    %3513 = vmatpush1.msra.mxu0 0.0
    %3514 = vmatprep.subr.mxu0 0.0
    %3515 = vmatpush1.msra.mxu0 0.0
    %3516 = vmatprep.subr.mxu0 0.0
    %3517 = vmatpush1.msra.mxu0 0.0
    %3518 = vmatprep.subr.mxu0 0.0
    %3519 = vmatpush1.msra.mxu0 0.0
    %3520 = vmatprep.subr.mxu0 0.0
    %3521 = vmatpush1.msra.mxu0 0.0
    %3522 = vmatprep.subr.mxu0 0.0
    %3523 = vmatpush1.msra.mxu0 0.0
    %3524 = vmatprep.subr.mxu0 0.0
    %3525 = vmatpush1.msra.mxu0 0.0
    %3526 = vmatprep.subr.mxu0 0.0
    %3527 = vmatpush1.msra.mxu0 0.0
    %3528 = vmatprep.subr.mxu0 0.0
    %3529 = vmatpush1.msra.mxu0 0.0
    %3530 = vmatprep.subr.mxu0 0.0
    %3531 = vmatpush1.msra.mxu0 0.0
    %3532 = vmatprep.subr.mxu0 0.0
    %3533 = vmatpush1.msra.mxu0 0.0
    %3534 = vmatprep.subr.mxu0 0.0
    %3535 = vmatpush1.msra.mxu0 0.0
    %3536 = vmatprep.subr.mxu0 0.0
    %3537 = vmatpush1.msra.mxu0 0.0
    %3538 = vmatprep.subr.mxu0 0.0
    %3539 = vmatpush1.msra.mxu0 0.0
    %3540 = vmatprep.subr.mxu0 0.0
    %3541 = vmatpush1.msra.mxu0 0.0
    %3542 = vmatprep.subr.mxu0 0.0
    %3543 = vmatpush1.msra.mxu0 0.0
    %3544 = vmatprep.subr.mxu0 0.0
    %3545 = vmatpush1.msra.mxu0 0.0
    %3546 = vmatprep.mubr.f32.mxu0 0.0
    %3547 = vmatmul.mubr.f32.gmra.mrb[0].mxu0 %v3480
    %v3548 = vpop.f32.mrb[0].mxu0
    %v3549 = vadd.f32 %v2571, %v3548
    %v3550 = vpop.f32.mrb[0].mxu0
    %3551 = vdwg.mxu0
    %v3552 = vadd.f32 %v2557, %v3549
    %v3553 = vsub.f32 0.0, %v3552
    %v3554 = vmul.f32 %v3553, 1.442695
    %v3555 = vpow.pop %v3554
    %v3556 = vadd.f32 %v3555, 1.0
    %v3557 = vrcp.pop %v3556
    %v3558 = vmul.f32 1.0, %v3557
    %3560 = vrot.lane.b32.xlu0 %v3549, 64
    %v3561 = vpop.permute.xlu0 %3560
    %v3563 = vmul.f32 %v3558, %v3561
    %3565 = vrot.lane.b32.xlu0 %v3563, 64
    %v3566 = vpop.permute.xlu0 %3565
    %v3568 = vadd.f32 %v2557, %v3566
    %v3569 = vtanh.pop %v3568
    %v3570 = vsub.f32 1.0, %v3558
    %3572 = vrot.lane.b32.xlu0 %v3569, 96
    %v3573 = vpop.permute.xlu0 %3572
    %v3575 = vmul.f32 %v3570, %v3573
    %v3576 = vmul.f32 %v3558, %v3476
    %v3577 = vadd.f32 %v3575, %v3576
    %s3578 = scalar_lea.vmem [#allocation5], 64
    %v3579 = vld [vmem:[%s3578] sm:$0xff]
    %v3580 = vld [vmem:[%s3578 + $0x8] sm:$0xff]
    %v3581 = vld [vmem:[%s3578 + $0x10] sm:$0xff]
    %v3582 = vld [vmem:[%s3578 + $0x18] sm:$0xff]
    %s3583 = scalar_lea.vmem [#allocation7], 3
    %v3584 = vld [vmem:[%s3583] sm:$0x1]
    %v3586 = vlaneseq
    %v3587 = vshrl.u32 %v3586, 7
    %v3588 = vsub.s32 0, %v3587
    %v3589 = vrot.slane %v3584, %v3588
    %3592 = vrot.lane.b32.xlu0 %v3577, 96
    %v3593 = vpop.permute.xlu0 %3592
    %v3594 = vsel %vm268, %v3593, 0
    %3596 = vmatprep.subr.mxu0 0.0
    %3597 = vmatpush1.msra.mxu0 %v3579
    %3598 = vmatprep.subr.mxu0 0.0
    %3599 = vmatpush1.msra.mxu0 %v3580
    %3600 = vmatprep.subr.mxu0 0.0
    %3601 = vmatpush1.msra.mxu0 %v3581
    %3602 = vmatprep.subr.mxu0 0.0
    %3603 = vmatpush1.msra.mxu0 %v3582
    %3604 = vmatprep.subr.mxu0 0.0
    %3605 = vmatpush1.msra.mxu0 0.0
    %3606 = vmatprep.subr.mxu0 0.0
    %3607 = vmatpush1.msra.mxu0 0.0
    %3608 = vmatprep.subr.mxu0 0.0
    %3609 = vmatpush1.msra.mxu0 0.0
    %3610 = vmatprep.subr.mxu0 0.0
    %3611 = vmatpush1.msra.mxu0 0.0
    %3612 = vmatprep.subr.mxu0 0.0
    %3613 = vmatpush1.msra.mxu0 0.0
    %3614 = vmatprep.subr.mxu0 0.0
    %3615 = vmatpush1.msra.mxu0 0.0
    %3616 = vmatprep.subr.mxu0 0.0
    %3617 = vmatpush1.msra.mxu0 0.0
    %3618 = vmatprep.subr.mxu0 0.0
    %3619 = vmatpush1.msra.mxu0 0.0
    %3620 = vmatprep.subr.mxu0 0.0
    %3621 = vmatpush1.msra.mxu0 0.0
    %3622 = vmatprep.subr.mxu0 0.0
    %3623 = vmatpush1.msra.mxu0 0.0
    %3624 = vmatprep.subr.mxu0 0.0
    %3625 = vmatpush1.msra.mxu0 0.0
    %3626 = vmatprep.subr.mxu0 0.0
    %3627 = vmatpush1.msra.mxu0 0.0
    %3628 = vmatprep.subr.mxu0 0.0
    %3629 = vmatpush1.msra.mxu0 0.0
    %3630 = vmatprep.subr.mxu0 0.0
    %3631 = vmatpush1.msra.mxu0 0.0
    %3632 = vmatprep.subr.mxu0 0.0
    %3633 = vmatpush1.msra.mxu0 0.0
    %3634 = vmatprep.subr.mxu0 0.0
    %3635 = vmatpush1.msra.mxu0 0.0
    %3636 = vmatprep.subr.mxu0 0.0
    %3637 = vmatpush1.msra.mxu0 0.0
    %3638 = vmatprep.subr.mxu0 0.0
    %3639 = vmatpush1.msra.mxu0 0.0
    %3640 = vmatprep.subr.mxu0 0.0
    %3641 = vmatpush1.msra.mxu0 0.0
    %3642 = vmatprep.subr.mxu0 0.0
    %3643 = vmatpush1.msra.mxu0 0.0
    %3644 = vmatprep.subr.mxu0 0.0
    %3645 = vmatpush1.msra.mxu0 0.0
    %3646 = vmatprep.subr.mxu0 0.0
    %3647 = vmatpush1.msra.mxu0 0.0
    %3648 = vmatprep.subr.mxu0 0.0
    %3649 = vmatpush1.msra.mxu0 0.0
    %3650 = vmatprep.subr.mxu0 0.0
    %3651 = vmatpush1.msra.mxu0 0.0
    %3652 = vmatprep.subr.mxu0 0.0
    %3653 = vmatpush1.msra.mxu0 0.0
    %3654 = vmatprep.subr.mxu0 0.0
    %3655 = vmatpush1.msra.mxu0 0.0
    %3656 = vmatprep.subr.mxu0 0.0
    %3657 = vmatpush1.msra.mxu0 0.0
    %3658 = vmatprep.subr.mxu0 0.0
    %3659 = vmatpush1.msra.mxu0 0.0
    %3660 = vmatprep.mubr.f32.mxu0 0.0
    %3661 = vmatmul.mubr.f32.gmra.mrb[0].mxu0 %v2672
    %v3662 = vpop.f32.mrb[0].mxu0
    %v3663 = vadd.f32 %v3589, %v3662
    %v3664 = vpop.f32.mrb[0].mxu0
    %3665 = vmatprep.mubr.f32.mxu0 0.0
    %3666 = vmatmul.mubr.f32.gmra.mrb[0].mxu0 %v2773
    %v3667 = vpop.f32.mrb[0].mxu0
    %v3668 = vadd.f32 %v3589, %v3667
    %v3669 = vpop.f32.mrb[0].mxu0
    %3670 = vmatprep.mubr.f32.mxu0 0.0
    %3671 = vmatmul.mubr.f32.gmra.mrb[0].mxu0 %v2874
    %v3672 = vpop.f32.mrb[0].mxu0
    %v3673 = vadd.f32 %v3589, %v3672
    %v3674 = vpop.f32.mrb[0].mxu0
    %3675 = vmatprep.mubr.f32.mxu0 0.0
    %3676 = vmatmul.mubr.f32.gmra.mrb[0].mxu0 %v2975
    %v3677 = vpop.f32.mrb[0].mxu0
    %v3678 = vadd.f32 %v3589, %v3677
    %v3679 = vpop.f32.mrb[0].mxu0
    %3680 = vmatprep.mubr.f32.mxu0 0.0
    %3681 = vmatmul.mubr.f32.gmra.mrb[0].mxu0 %v3076
    %v3682 = vpop.f32.mrb[0].mxu0
    %v3683 = vadd.f32 %v3589, %v3682
    %v3684 = vpop.f32.mrb[0].mxu0
    %3685 = vmatprep.mubr.f32.mxu0 0.0
    %3686 = vmatmul.mubr.f32.gmra.mrb[0].mxu0 %v3177
    %v3687 = vpop.f32.mrb[0].mxu0
    %v3688 = vadd.f32 %v3589, %v3687
    %v3689 = vpop.f32.mrb[0].mxu0
    %3690 = vmatprep.mubr.f32.mxu0 0.0
    %3691 = vmatmul.mubr.f32.gmra.mrb[0].mxu0 %v3278
    %v3692 = vpop.f32.mrb[0].mxu0
    %v3693 = vadd.f32 %v3589, %v3692
    %v3694 = vpop.f32.mrb[0].mxu0
    %3695 = vmatprep.mubr.f32.mxu0 0.0
    %3696 = vmatmul.mubr.f32.gmra.mrb[0].mxu0 %v3379
    %v3697 = vpop.f32.mrb[0].mxu0
    %v3698 = vadd.f32 %v3589, %v3697
    %v3699 = vpop.f32.mrb[0].mxu0
    %3700 = vmatprep.mubr.f32.mxu0 0.0
    %3701 = vmatmul.mubr.f32.gmra.mrb[0].mxu0 %v3480
    %v3702 = vpop.f32.mrb[0].mxu0
    %v3703 = vadd.f32 %v3589, %v3702
    %v3704 = vpop.f32.mrb[0].mxu0
    %3705 = vmatprep.mubr.f32.mxu0 0.0
    %3706 = vmatmul.mubr.f32.gmra.mrb[0].mxu0 %v3594
    %v3707 = vpop.f32.mrb[0].mxu0
    %v3708 = vadd.f32 %v3589, %v3707
    %v3709 = vpop.f32.mrb[0].mxu0
    %3710 = vdwg.mxu0
    %s3711 = scalar_lea.vmem %s3, 96
    %v3712 = vld [vmem:[%s3711] sm:$0xff]
    %v3713 = vld [vmem:[%s3711 + $0x8] sm:$0xff]
    %v3714 = vld [vmem:[%s3711 + $0x10] sm:$0xff]
    %v3715 = vld [vmem:[%s3711 + $0x18] sm:$0xff]
    %s3716 = scalar_lea.vmem [#allocation8], 3
    %v3717 = vld [vmem:[%s3716] sm:$0x1]
    %v3719 = vlaneseq
    %v3720 = vshrl.u32 %v3719, 7
    %v3721 = vsub.s32 0, %v3720
    %v3722 = vrot.slane %v3717, %v3721
    %3724 = vmatprep.subr.mxu0 0.0
    %3725 = vmatpush1.msra.mxu0 %v3712
    %3726 = vmatprep.subr.mxu0 0.0
    %3727 = vmatpush1.msra.mxu0 %v3713
    %3728 = vmatprep.subr.mxu0 0.0
    %3729 = vmatpush1.msra.mxu0 %v3714
    %3730 = vmatprep.subr.mxu0 0.0
    %3731 = vmatpush1.msra.mxu0 %v3715
    %3732 = vmatprep.subr.mxu0 0.0
    %3733 = vmatpush1.msra.mxu0 0.0
    %3734 = vmatprep.subr.mxu0 0.0
    %3735 = vmatpush1.msra.mxu0 0.0
    %3736 = vmatprep.subr.mxu0 0.0
    %3737 = vmatpush1.msra.mxu0 0.0
    %3738 = vmatprep.subr.mxu0 0.0
    %3739 = vmatpush1.msra.mxu0 0.0
    %3740 = vmatprep.subr.mxu0 0.0
    %3741 = vmatpush1.msra.mxu0 0.0
    %3742 = vmatprep.subr.mxu0 0.0
    %3743 = vmatpush1.msra.mxu0 0.0
    %3744 = vmatprep.subr.mxu0 0.0
    %3745 = vmatpush1.msra.mxu0 0.0
    %3746 = vmatprep.subr.mxu0 0.0
    %3747 = vmatpush1.msra.mxu0 0.0
    %3748 = vmatprep.subr.mxu0 0.0
    %3749 = vmatpush1.msra.mxu0 0.0
    %3750 = vmatprep.subr.mxu0 0.0
    %3751 = vmatpush1.msra.mxu0 0.0
    %3752 = vmatprep.subr.mxu0 0.0
    %3753 = vmatpush1.msra.mxu0 0.0
    %3754 = vmatprep.subr.mxu0 0.0
    %3755 = vmatpush1.msra.mxu0 0.0
    %3756 = vmatprep.subr.mxu0 0.0
    %3757 = vmatpush1.msra.mxu0 0.0
    %3758 = vmatprep.subr.mxu0 0.0
    %3759 = vmatpush1.msra.mxu0 0.0
    %3760 = vmatprep.subr.mxu0 0.0
    %3761 = vmatpush1.msra.mxu0 0.0
    %3762 = vmatprep.subr.mxu0 0.0
    %3763 = vmatpush1.msra.mxu0 0.0
    %3764 = vmatprep.subr.mxu0 0.0
    %3765 = vmatpush1.msra.mxu0 0.0
    %3766 = vmatprep.subr.mxu0 0.0
    %3767 = vmatpush1.msra.mxu0 0.0
    %3768 = vmatprep.subr.mxu0 0.0
    %3769 = vmatpush1.msra.mxu0 0.0
    %3770 = vmatprep.subr.mxu0 0.0
    %3771 = vmatpush1.msra.mxu0 0.0
    %3772 = vmatprep.subr.mxu0 0.0
    %3773 = vmatpush1.msra.mxu0 0.0
    %3774 = vmatprep.subr.mxu0 0.0
    %3775 = vmatpush1.msra.mxu0 0.0
    %3776 = vmatprep.subr.mxu0 0.0
    %3777 = vmatpush1.msra.mxu0 0.0
    %3778 = vmatprep.subr.mxu0 0.0
    %3779 = vmatpush1.msra.mxu0 0.0
    %3780 = vmatprep.subr.mxu0 0.0
    %3781 = vmatpush1.msra.mxu0 0.0
    %3782 = vmatprep.subr.mxu0 0.0
    %3783 = vmatpush1.msra.mxu0 0.0
    %3784 = vmatprep.subr.mxu0 0.0
    %3785 = vmatpush1.msra.mxu0 0.0
    %3786 = vmatprep.subr.mxu0 0.0
    %3787 = vmatpush1.msra.mxu0 0.0
    %3788 = vmatprep.mubr.f32.mxu0 0.0
    %3789 = vmatmul.mubr.f32.gmra.mrb[0].mxu0 %v270
    %v3790 = vpop.f32.mrb[0].mxu0
    %v3791 = vadd.f32 %v3722, %v3790
    %v3792 = vpop.f32.mrb[0].mxu0
    %3793 = vdwg.mxu0
    %v3794 = vadd.f32 %v3663, %v3791
    %v3795 = vsub.f32 0.0, %v3794
    %v3796 = vmul.f32 %v3795, 1.442695
    %v3797 = vpow.pop %v3796
    %v3798 = vadd.f32 %v3797, 1.0
    %v3799 = vrcp.pop %v3798
    %v3800 = vmul.f32 1.0, %v3799
    %3802 = vrot.lane.b32.xlu0 %v3791, 64
    %v3803 = vpop.permute.xlu0 %3802
    %v3805 = vmul.f32 %v3800, %v3803
    %3807 = vrot.lane.b32.xlu0 %v3805, 64
    %v3808 = vpop.permute.xlu0 %3807
    %v3810 = vadd.f32 %v3663, %v3808
    %v3811 = vtanh.pop %v3810
    %v3812 = vsub.f32 1.0, %v3800
    %3814 = vrot.lane.b32.xlu0 %v3811, 96
    %v3815 = vpop.permute.xlu0 %3814
    %v3817 = vmul.f32 %v3812, %v3815
    %v3818 = vmul.f32 %v3800, 0.0
    %v3819 = vadd.f32 %v3817, %v3818
    %3821 = vrot.lane.b32.xlu0 %v3819, 96
    %v3822 = vpop.permute.xlu0 %3821
    %v3823 = vsel %vm268, %v3822, 0
    %3825 = vmatprep.subr.mxu0 0.0
    %3826 = vmatpush1.msra.mxu0 %v3712
    %3827 = vmatprep.subr.mxu0 0.0
    %3828 = vmatpush1.msra.mxu0 %v3713
    %3829 = vmatprep.subr.mxu0 0.0
    %3830 = vmatpush1.msra.mxu0 %v3714
    %3831 = vmatprep.subr.mxu0 0.0
    %3832 = vmatpush1.msra.mxu0 %v3715
    %3833 = vmatprep.subr.mxu0 0.0
    %3834 = vmatpush1.msra.mxu0 0.0
    %3835 = vmatprep.subr.mxu0 0.0
    %3836 = vmatpush1.msra.mxu0 0.0
    %3837 = vmatprep.subr.mxu0 0.0
    %3838 = vmatpush1.msra.mxu0 0.0
    %3839 = vmatprep.subr.mxu0 0.0
    %3840 = vmatpush1.msra.mxu0 0.0
    %3841 = vmatprep.subr.mxu0 0.0
    %3842 = vmatpush1.msra.mxu0 0.0
    %3843 = vmatprep.subr.mxu0 0.0
    %3844 = vmatpush1.msra.mxu0 0.0
    %3845 = vmatprep.subr.mxu0 0.0
    %3846 = vmatpush1.msra.mxu0 0.0
    %3847 = vmatprep.subr.mxu0 0.0
    %3848 = vmatpush1.msra.mxu0 0.0
    %3849 = vmatprep.subr.mxu0 0.0
    %3850 = vmatpush1.msra.mxu0 0.0
    %3851 = vmatprep.subr.mxu0 0.0
    %3852 = vmatpush1.msra.mxu0 0.0
    %3853 = vmatprep.subr.mxu0 0.0
    %3854 = vmatpush1.msra.mxu0 0.0
    %3855 = vmatprep.subr.mxu0 0.0
    %3856 = vmatpush1.msra.mxu0 0.0
    %3857 = vmatprep.subr.mxu0 0.0
    %3858 = vmatpush1.msra.mxu0 0.0
    %3859 = vmatprep.subr.mxu0 0.0
    %3860 = vmatpush1.msra.mxu0 0.0
    %3861 = vmatprep.subr.mxu0 0.0
    %3862 = vmatpush1.msra.mxu0 0.0
    %3863 = vmatprep.subr.mxu0 0.0
    %3864 = vmatpush1.msra.mxu0 0.0
    %3865 = vmatprep.subr.mxu0 0.0
    %3866 = vmatpush1.msra.mxu0 0.0
    %3867 = vmatprep.subr.mxu0 0.0
    %3868 = vmatpush1.msra.mxu0 0.0
    %3869 = vmatprep.subr.mxu0 0.0
    %3870 = vmatpush1.msra.mxu0 0.0
    %3871 = vmatprep.subr.mxu0 0.0
    %3872 = vmatpush1.msra.mxu0 0.0
    %3873 = vmatprep.subr.mxu0 0.0
    %3874 = vmatpush1.msra.mxu0 0.0
    %3875 = vmatprep.subr.mxu0 0.0
    %3876 = vmatpush1.msra.mxu0 0.0
    %3877 = vmatprep.subr.mxu0 0.0
    %3878 = vmatpush1.msra.mxu0 0.0
    %3879 = vmatprep.subr.mxu0 0.0
    %3880 = vmatpush1.msra.mxu0 0.0
    %3881 = vmatprep.subr.mxu0 0.0
    %3882 = vmatpush1.msra.mxu0 0.0
    %3883 = vmatprep.subr.mxu0 0.0
    %3884 = vmatpush1.msra.mxu0 0.0
    %3885 = vmatprep.subr.mxu0 0.0
    %3886 = vmatpush1.msra.mxu0 0.0
    %3887 = vmatprep.subr.mxu0 0.0
    %3888 = vmatpush1.msra.mxu0 0.0
    %3889 = vmatprep.mubr.f32.mxu0 0.0
    %3890 = vmatmul.mubr.f32.gmra.mrb[0].mxu0 %v3823
    %v3891 = vpop.f32.mrb[0].mxu0
    %v3892 = vadd.f32 %v3722, %v3891
    %v3893 = vpop.f32.mrb[0].mxu0
    %3894 = vdwg.mxu0
    %v3895 = vadd.f32 %v3668, %v3892
    %v3896 = vsub.f32 0.0, %v3895
    %v3897 = vmul.f32 %v3896, 1.442695
    %v3898 = vpow.pop %v3897
    %v3899 = vadd.f32 %v3898, 1.0
    %v3900 = vrcp.pop %v3899
    %v3901 = vmul.f32 1.0, %v3900
    %3903 = vrot.lane.b32.xlu0 %v3892, 64
    %v3904 = vpop.permute.xlu0 %3903
    %v3906 = vmul.f32 %v3901, %v3904
    %3908 = vrot.lane.b32.xlu0 %v3906, 64
    %v3909 = vpop.permute.xlu0 %3908
    %v3911 = vadd.f32 %v3668, %v3909
    %v3912 = vtanh.pop %v3911
    %v3913 = vsub.f32 1.0, %v3901
    %3915 = vrot.lane.b32.xlu0 %v3912, 96
    %v3916 = vpop.permute.xlu0 %3915
    %v3918 = vmul.f32 %v3913, %v3916
    %v3919 = vmul.f32 %v3901, %v3819
    %v3920 = vadd.f32 %v3918, %v3919
    %3922 = vrot.lane.b32.xlu0 %v3920, 96
    %v3923 = vpop.permute.xlu0 %3922
    %v3924 = vsel %vm268, %v3923, 0
    %3926 = vmatprep.subr.mxu0 0.0
    %3927 = vmatpush1.msra.mxu0 %v3712
    %3928 = vmatprep.subr.mxu0 0.0
    %3929 = vmatpush1.msra.mxu0 %v3713
    %3930 = vmatprep.subr.mxu0 0.0
    %3931 = vmatpush1.msra.mxu0 %v3714
    %3932 = vmatprep.subr.mxu0 0.0
    %3933 = vmatpush1.msra.mxu0 %v3715
    %3934 = vmatprep.subr.mxu0 0.0
    %3935 = vmatpush1.msra.mxu0 0.0
    %3936 = vmatprep.subr.mxu0 0.0
    %3937 = vmatpush1.msra.mxu0 0.0
    %3938 = vmatprep.subr.mxu0 0.0
    %3939 = vmatpush1.msra.mxu0 0.0
    %3940 = vmatprep.subr.mxu0 0.0
    %3941 = vmatpush1.msra.mxu0 0.0
    %3942 = vmatprep.subr.mxu0 0.0
    %3943 = vmatpush1.msra.mxu0 0.0
    %3944 = vmatprep.subr.mxu0 0.0
    %3945 = vmatpush1.msra.mxu0 0.0
    %3946 = vmatprep.subr.mxu0 0.0
    %3947 = vmatpush1.msra.mxu0 0.0
    %3948 = vmatprep.subr.mxu0 0.0
    %3949 = vmatpush1.msra.mxu0 0.0
    %3950 = vmatprep.subr.mxu0 0.0
    %3951 = vmatpush1.msra.mxu0 0.0
    %3952 = vmatprep.subr.mxu0 0.0
    %3953 = vmatpush1.msra.mxu0 0.0
    %3954 = vmatprep.subr.mxu0 0.0
    %3955 = vmatpush1.msra.mxu0 0.0
    %3956 = vmatprep.subr.mxu0 0.0
    %3957 = vmatpush1.msra.mxu0 0.0
    %3958 = vmatprep.subr.mxu0 0.0
    %3959 = vmatpush1.msra.mxu0 0.0
    %3960 = vmatprep.subr.mxu0 0.0
    %3961 = vmatpush1.msra.mxu0 0.0
    %3962 = vmatprep.subr.mxu0 0.0
    %3963 = vmatpush1.msra.mxu0 0.0
    %3964 = vmatprep.subr.mxu0 0.0
    %3965 = vmatpush1.msra.mxu0 0.0
    %3966 = vmatprep.subr.mxu0 0.0
    %3967 = vmatpush1.msra.mxu0 0.0
    %3968 = vmatprep.subr.mxu0 0.0
    %3969 = vmatpush1.msra.mxu0 0.0
    %3970 = vmatprep.subr.mxu0 0.0
    %3971 = vmatpush1.msra.mxu0 0.0
    %3972 = vmatprep.subr.mxu0 0.0
    %3973 = vmatpush1.msra.mxu0 0.0
    %3974 = vmatprep.subr.mxu0 0.0
    %3975 = vmatpush1.msra.mxu0 0.0
    %3976 = vmatprep.subr.mxu0 0.0
    %3977 = vmatpush1.msra.mxu0 0.0
    %3978 = vmatprep.subr.mxu0 0.0
    %3979 = vmatpush1.msra.mxu0 0.0
    %3980 = vmatprep.subr.mxu0 0.0
    %3981 = vmatpush1.msra.mxu0 0.0
    %3982 = vmatprep.subr.mxu0 0.0
    %3983 = vmatpush1.msra.mxu0 0.0
    %3984 = vmatprep.subr.mxu0 0.0
    %3985 = vmatpush1.msra.mxu0 0.0
    %3986 = vmatprep.subr.mxu0 0.0
    %3987 = vmatpush1.msra.mxu0 0.0
    %3988 = vmatprep.subr.mxu0 0.0
    %3989 = vmatpush1.msra.mxu0 0.0
    %3990 = vmatprep.mubr.f32.mxu0 0.0
    %3991 = vmatmul.mubr.f32.gmra.mrb[0].mxu0 %v3924
    %v3992 = vpop.f32.mrb[0].mxu0
    %v3993 = vadd.f32 %v3722, %v3992
    %v3994 = vpop.f32.mrb[0].mxu0
    %3995 = vdwg.mxu0
    %v3996 = vadd.f32 %v3673, %v3993
    %v3997 = vsub.f32 0.0, %v3996
    %v3998 = vmul.f32 %v3997, 1.442695
    %v3999 = vpow.pop %v3998
    %v4000 = vadd.f32 %v3999, 1.0
    %v4001 = vrcp.pop %v4000
    %v4002 = vmul.f32 1.0, %v4001
    %4004 = vrot.lane.b32.xlu0 %v3993, 64
    %v4005 = vpop.permute.xlu0 %4004
    %v4007 = vmul.f32 %v4002, %v4005
    %4009 = vrot.lane.b32.xlu0 %v4007, 64
    %v4010 = vpop.permute.xlu0 %4009
    %v4012 = vadd.f32 %v3673, %v4010
    %v4013 = vtanh.pop %v4012
    %v4014 = vsub.f32 1.0, %v4002
    %4016 = vrot.lane.b32.xlu0 %v4013, 96
    %v4017 = vpop.permute.xlu0 %4016
    %v4019 = vmul.f32 %v4014, %v4017
    %v4020 = vmul.f32 %v4002, %v3920
    %v4021 = vadd.f32 %v4019, %v4020
    %4023 = vrot.lane.b32.xlu0 %v4021, 96
    %v4024 = vpop.permute.xlu0 %4023
    %v4025 = vsel %vm268, %v4024, 0
    %4027 = vmatprep.subr.mxu0 0.0
    %4028 = vmatpush1.msra.mxu0 %v3712
    %4029 = vmatprep.subr.mxu0 0.0
    %4030 = vmatpush1.msra.mxu0 %v3713
    %4031 = vmatprep.subr.mxu0 0.0
    %4032 = vmatpush1.msra.mxu0 %v3714
    %4033 = vmatprep.subr.mxu0 0.0
    %4034 = vmatpush1.msra.mxu0 %v3715
    %4035 = vmatprep.subr.mxu0 0.0
    %4036 = vmatpush1.msra.mxu0 0.0
    %4037 = vmatprep.subr.mxu0 0.0
    %4038 = vmatpush1.msra.mxu0 0.0
    %4039 = vmatprep.subr.mxu0 0.0
    %4040 = vmatpush1.msra.mxu0 0.0
    %4041 = vmatprep.subr.mxu0 0.0
    %4042 = vmatpush1.msra.mxu0 0.0
    %4043 = vmatprep.subr.mxu0 0.0
    %4044 = vmatpush1.msra.mxu0 0.0
    %4045 = vmatprep.subr.mxu0 0.0
    %4046 = vmatpush1.msra.mxu0 0.0
    %4047 = vmatprep.subr.mxu0 0.0
    %4048 = vmatpush1.msra.mxu0 0.0
    %4049 = vmatprep.subr.mxu0 0.0
    %4050 = vmatpush1.msra.mxu0 0.0
    %4051 = vmatprep.subr.mxu0 0.0
    %4052 = vmatpush1.msra.mxu0 0.0
    %4053 = vmatprep.subr.mxu0 0.0
    %4054 = vmatpush1.msra.mxu0 0.0
    %4055 = vmatprep.subr.mxu0 0.0
    %4056 = vmatpush1.msra.mxu0 0.0
    %4057 = vmatprep.subr.mxu0 0.0
    %4058 = vmatpush1.msra.mxu0 0.0
    %4059 = vmatprep.subr.mxu0 0.0
    %4060 = vmatpush1.msra.mxu0 0.0
    %4061 = vmatprep.subr.mxu0 0.0
    %4062 = vmatpush1.msra.mxu0 0.0
    %4063 = vmatprep.subr.mxu0 0.0
    %4064 = vmatpush1.msra.mxu0 0.0
    %4065 = vmatprep.subr.mxu0 0.0
    %4066 = vmatpush1.msra.mxu0 0.0
    %4067 = vmatprep.subr.mxu0 0.0
    %4068 = vmatpush1.msra.mxu0 0.0
    %4069 = vmatprep.subr.mxu0 0.0
    %4070 = vmatpush1.msra.mxu0 0.0
    %4071 = vmatprep.subr.mxu0 0.0
    %4072 = vmatpush1.msra.mxu0 0.0
    %4073 = vmatprep.subr.mxu0 0.0
    %4074 = vmatpush1.msra.mxu0 0.0
    %4075 = vmatprep.subr.mxu0 0.0
    %4076 = vmatpush1.msra.mxu0 0.0
    %4077 = vmatprep.subr.mxu0 0.0
    %4078 = vmatpush1.msra.mxu0 0.0
    %4079 = vmatprep.subr.mxu0 0.0
    %4080 = vmatpush1.msra.mxu0 0.0
    %4081 = vmatprep.subr.mxu0 0.0
    %4082 = vmatpush1.msra.mxu0 0.0
    %4083 = vmatprep.subr.mxu0 0.0
    %4084 = vmatpush1.msra.mxu0 0.0
    %4085 = vmatprep.subr.mxu0 0.0
    %4086 = vmatpush1.msra.mxu0 0.0
    %4087 = vmatprep.subr.mxu0 0.0
    %4088 = vmatpush1.msra.mxu0 0.0
    %4089 = vmatprep.subr.mxu0 0.0
    %4090 = vmatpush1.msra.mxu0 0.0
    %4091 = vmatprep.mubr.f32.mxu0 0.0
    %4092 = vmatmul.mubr.f32.gmra.mrb[0].mxu0 %v4025
    %v4093 = vpop.f32.mrb[0].mxu0
    %v4094 = vadd.f32 %v3722, %v4093
    %v4095 = vpop.f32.mrb[0].mxu0
    %4096 = vdwg.mxu0
    %v4097 = vadd.f32 %v3678, %v4094
    %v4098 = vsub.f32 0.0, %v4097
    %v4099 = vmul.f32 %v4098, 1.442695
    %v4100 = vpow.pop %v4099
    %v4101 = vadd.f32 %v4100, 1.0
    %v4102 = vrcp.pop %v4101
    %v4103 = vmul.f32 1.0, %v4102
    %4105 = vrot.lane.b32.xlu0 %v4094, 64
    %v4106 = vpop.permute.xlu0 %4105
    %v4108 = vmul.f32 %v4103, %v4106
    %4110 = vrot.lane.b32.xlu0 %v4108, 64
    %v4111 = vpop.permute.xlu0 %4110
    %v4113 = vadd.f32 %v3678, %v4111
    %v4114 = vtanh.pop %v4113
    %v4115 = vsub.f32 1.0, %v4103
    %4117 = vrot.lane.b32.xlu0 %v4114, 96
    %v4118 = vpop.permute.xlu0 %4117
    %v4120 = vmul.f32 %v4115, %v4118
    %v4121 = vmul.f32 %v4103, %v4021
    %v4122 = vadd.f32 %v4120, %v4121
    %4124 = vrot.lane.b32.xlu0 %v4122, 96
    %v4125 = vpop.permute.xlu0 %4124
    %v4126 = vsel %vm268, %v4125, 0
    %4128 = vmatprep.subr.mxu0 0.0
    %4129 = vmatpush1.msra.mxu0 %v3712
    %4130 = vmatprep.subr.mxu0 0.0
    %4131 = vmatpush1.msra.mxu0 %v3713
    %4132 = vmatprep.subr.mxu0 0.0
    %4133 = vmatpush1.msra.mxu0 %v3714
    %4134 = vmatprep.subr.mxu0 0.0
    %4135 = vmatpush1.msra.mxu0 %v3715
    %4136 = vmatprep.subr.mxu0 0.0
    %4137 = vmatpush1.msra.mxu0 0.0
    %4138 = vmatprep.subr.mxu0 0.0
    %4139 = vmatpush1.msra.mxu0 0.0
    %4140 = vmatprep.subr.mxu0 0.0
    %4141 = vmatpush1.msra.mxu0 0.0
    %4142 = vmatprep.subr.mxu0 0.0
    %4143 = vmatpush1.msra.mxu0 0.0
    %4144 = vmatprep.subr.mxu0 0.0
    %4145 = vmatpush1.msra.mxu0 0.0
    %4146 = vmatprep.subr.mxu0 0.0
    %4147 = vmatpush1.msra.mxu0 0.0
    %4148 = vmatprep.subr.mxu0 0.0
    %4149 = vmatpush1.msra.mxu0 0.0
    %4150 = vmatprep.subr.mxu0 0.0
    %4151 = vmatpush1.msra.mxu0 0.0
    %4152 = vmatprep.subr.mxu0 0.0
    %4153 = vmatpush1.msra.mxu0 0.0
    %4154 = vmatprep.subr.mxu0 0.0
    %4155 = vmatpush1.msra.mxu0 0.0
    %4156 = vmatprep.subr.mxu0 0.0
    %4157 = vmatpush1.msra.mxu0 0.0
    %4158 = vmatprep.subr.mxu0 0.0
    %4159 = vmatpush1.msra.mxu0 0.0
    %4160 = vmatprep.subr.mxu0 0.0
    %4161 = vmatpush1.msra.mxu0 0.0
    %4162 = vmatprep.subr.mxu0 0.0
    %4163 = vmatpush1.msra.mxu0 0.0
    %4164 = vmatprep.subr.mxu0 0.0
    %4165 = vmatpush1.msra.mxu0 0.0
    %4166 = vmatprep.subr.mxu0 0.0
    %4167 = vmatpush1.msra.mxu0 0.0
    %4168 = vmatprep.subr.mxu0 0.0
    %4169 = vmatpush1.msra.mxu0 0.0
    %4170 = vmatprep.subr.mxu0 0.0
    %4171 = vmatpush1.msra.mxu0 0.0
    %4172 = vmatprep.subr.mxu0 0.0
    %4173 = vmatpush1.msra.mxu0 0.0
    %4174 = vmatprep.subr.mxu0 0.0
    %4175 = vmatpush1.msra.mxu0 0.0
    %4176 = vmatprep.subr.mxu0 0.0
    %4177 = vmatpush1.msra.mxu0 0.0
    %4178 = vmatprep.subr.mxu0 0.0
    %4179 = vmatpush1.msra.mxu0 0.0
    %4180 = vmatprep.subr.mxu0 0.0
    %4181 = vmatpush1.msra.mxu0 0.0
    %4182 = vmatprep.subr.mxu0 0.0
    %4183 = vmatpush1.msra.mxu0 0.0
    %4184 = vmatprep.subr.mxu0 0.0
    %4185 = vmatpush1.msra.mxu0 0.0
    %4186 = vmatprep.subr.mxu0 0.0
    %4187 = vmatpush1.msra.mxu0 0.0
    %4188 = vmatprep.subr.mxu0 0.0
    %4189 = vmatpush1.msra.mxu0 0.0
    %4190 = vmatprep.subr.mxu0 0.0
    %4191 = vmatpush1.msra.mxu0 0.0
    %4192 = vmatprep.mubr.f32.mxu0 0.0
    %4193 = vmatmul.mubr.f32.gmra.mrb[0].mxu0 %v4126
    %v4194 = vpop.f32.mrb[0].mxu0
    %v4195 = vadd.f32 %v3722, %v4194
    %v4196 = vpop.f32.mrb[0].mxu0
    %4197 = vdwg.mxu0
    %v4198 = vadd.f32 %v3683, %v4195
    %v4199 = vsub.f32 0.0, %v4198
    %v4200 = vmul.f32 %v4199, 1.442695
    %v4201 = vpow.pop %v4200
    %v4202 = vadd.f32 %v4201, 1.0
    %v4203 = vrcp.pop %v4202
    %v4204 = vmul.f32 1.0, %v4203
    %4206 = vrot.lane.b32.xlu0 %v4195, 64
    %v4207 = vpop.permute.xlu0 %4206
    %v4209 = vmul.f32 %v4204, %v4207
    %4211 = vrot.lane.b32.xlu0 %v4209, 64
    %v4212 = vpop.permute.xlu0 %4211
    %v4214 = vadd.f32 %v3683, %v4212
    %v4215 = vtanh.pop %v4214
    %v4216 = vsub.f32 1.0, %v4204
    %4218 = vrot.lane.b32.xlu0 %v4215, 96
    %v4219 = vpop.permute.xlu0 %4218
    %v4221 = vmul.f32 %v4216, %v4219
    %v4222 = vmul.f32 %v4204, %v4122
    %v4223 = vadd.f32 %v4221, %v4222
    %4225 = vrot.lane.b32.xlu0 %v4223, 96
    %v4226 = vpop.permute.xlu0 %4225
    %v4227 = vsel %vm268, %v4226, 0
    %4229 = vmatprep.subr.mxu0 0.0
    %4230 = vmatpush1.msra.mxu0 %v3712
    %4231 = vmatprep.subr.mxu0 0.0
    %4232 = vmatpush1.msra.mxu0 %v3713
    %4233 = vmatprep.subr.mxu0 0.0
    %4234 = vmatpush1.msra.mxu0 %v3714
    %4235 = vmatprep.subr.mxu0 0.0
    %4236 = vmatpush1.msra.mxu0 %v3715
    %4237 = vmatprep.subr.mxu0 0.0
    %4238 = vmatpush1.msra.mxu0 0.0
    %4239 = vmatprep.subr.mxu0 0.0
    %4240 = vmatpush1.msra.mxu0 0.0
    %4241 = vmatprep.subr.mxu0 0.0
    %4242 = vmatpush1.msra.mxu0 0.0
    %4243 = vmatprep.subr.mxu0 0.0
    %4244 = vmatpush1.msra.mxu0 0.0
    %4245 = vmatprep.subr.mxu0 0.0
    %4246 = vmatpush1.msra.mxu0 0.0
    %4247 = vmatprep.subr.mxu0 0.0
    %4248 = vmatpush1.msra.mxu0 0.0
    %4249 = vmatprep.subr.mxu0 0.0
    %4250 = vmatpush1.msra.mxu0 0.0
    %4251 = vmatprep.subr.mxu0 0.0
    %4252 = vmatpush1.msra.mxu0 0.0
    %4253 = vmatprep.subr.mxu0 0.0
    %4254 = vmatpush1.msra.mxu0 0.0
    %4255 = vmatprep.subr.mxu0 0.0
    %4256 = vmatpush1.msra.mxu0 0.0
    %4257 = vmatprep.subr.mxu0 0.0
    %4258 = vmatpush1.msra.mxu0 0.0
    %4259 = vmatprep.subr.mxu0 0.0
    %4260 = vmatpush1.msra.mxu0 0.0
    %4261 = vmatprep.subr.mxu0 0.0
    %4262 = vmatpush1.msra.mxu0 0.0
    %4263 = vmatprep.subr.mxu0 0.0
    %4264 = vmatpush1.msra.mxu0 0.0
    %4265 = vmatprep.subr.mxu0 0.0
    %4266 = vmatpush1.msra.mxu0 0.0
    %4267 = vmatprep.subr.mxu0 0.0
    %4268 = vmatpush1.msra.mxu0 0.0
    %4269 = vmatprep.subr.mxu0 0.0
    %4270 = vmatpush1.msra.mxu0 0.0
    %4271 = vmatprep.subr.mxu0 0.0
    %4272 = vmatpush1.msra.mxu0 0.0
    %4273 = vmatprep.subr.mxu0 0.0
    %4274 = vmatpush1.msra.mxu0 0.0
    %4275 = vmatprep.subr.mxu0 0.0
    %4276 = vmatpush1.msra.mxu0 0.0
    %4277 = vmatprep.subr.mxu0 0.0
    %4278 = vmatpush1.msra.mxu0 0.0
    %4279 = vmatprep.subr.mxu0 0.0
    %4280 = vmatpush1.msra.mxu0 0.0
    %4281 = vmatprep.subr.mxu0 0.0
    %4282 = vmatpush1.msra.mxu0 0.0
    %4283 = vmatprep.subr.mxu0 0.0
    %4284 = vmatpush1.msra.mxu0 0.0
    %4285 = vmatprep.subr.mxu0 0.0
    %4286 = vmatpush1.msra.mxu0 0.0
    %4287 = vmatprep.subr.mxu0 0.0
    %4288 = vmatpush1.msra.mxu0 0.0
    %4289 = vmatprep.subr.mxu0 0.0
    %4290 = vmatpush1.msra.mxu0 0.0
    %4291 = vmatprep.subr.mxu0 0.0
    %4292 = vmatpush1.msra.mxu0 0.0
    %4293 = vmatprep.mubr.f32.mxu0 0.0
    %4294 = vmatmul.mubr.f32.gmra.mrb[0].mxu0 %v4227
    %v4295 = vpop.f32.mrb[0].mxu0
    %v4296 = vadd.f32 %v3722, %v4295
    %v4297 = vpop.f32.mrb[0].mxu0
    %4298 = vdwg.mxu0
    %v4299 = vadd.f32 %v3688, %v4296
    %v4300 = vsub.f32 0.0, %v4299
    %v4301 = vmul.f32 %v4300, 1.442695
    %v4302 = vpow.pop %v4301
    %v4303 = vadd.f32 %v4302, 1.0
    %v4304 = vrcp.pop %v4303
    %v4305 = vmul.f32 1.0, %v4304
    %4307 = vrot.lane.b32.xlu0 %v4296, 64
    %v4308 = vpop.permute.xlu0 %4307
    %v4310 = vmul.f32 %v4305, %v4308
    %4312 = vrot.lane.b32.xlu0 %v4310, 64
    %v4313 = vpop.permute.xlu0 %4312
    %v4315 = vadd.f32 %v3688, %v4313
    %v4316 = vtanh.pop %v4315
    %v4317 = vsub.f32 1.0, %v4305
    %4319 = vrot.lane.b32.xlu0 %v4316, 96
    %v4320 = vpop.permute.xlu0 %4319
    %v4322 = vmul.f32 %v4317, %v4320
    %v4323 = vmul.f32 %v4305, %v4223
    %v4324 = vadd.f32 %v4322, %v4323
    %4326 = vrot.lane.b32.xlu0 %v4324, 96
    %v4327 = vpop.permute.xlu0 %4326
    %v4328 = vsel %vm268, %v4327, 0
    %4330 = vmatprep.subr.mxu0 0.0
    %4331 = vmatpush1.msra.mxu0 %v3712
    %4332 = vmatprep.subr.mxu0 0.0
    %4333 = vmatpush1.msra.mxu0 %v3713
    %4334 = vmatprep.subr.mxu0 0.0
    %4335 = vmatpush1.msra.mxu0 %v3714
    %4336 = vmatprep.subr.mxu0 0.0
    %4337 = vmatpush1.msra.mxu0 %v3715
    %4338 = vmatprep.subr.mxu0 0.0
    %4339 = vmatpush1.msra.mxu0 0.0
    %4340 = vmatprep.subr.mxu0 0.0
    %4341 = vmatpush1.msra.mxu0 0.0
    %4342 = vmatprep.subr.mxu0 0.0
    %4343 = vmatpush1.msra.mxu0 0.0
    %4344 = vmatprep.subr.mxu0 0.0
    %4345 = vmatpush1.msra.mxu0 0.0
    %4346 = vmatprep.subr.mxu0 0.0
    %4347 = vmatpush1.msra.mxu0 0.0
    %4348 = vmatprep.subr.mxu0 0.0
    %4349 = vmatpush1.msra.mxu0 0.0
    %4350 = vmatprep.subr.mxu0 0.0
    %4351 = vmatpush1.msra.mxu0 0.0
    %4352 = vmatprep.subr.mxu0 0.0
    %4353 = vmatpush1.msra.mxu0 0.0
    %4354 = vmatprep.subr.mxu0 0.0
    %4355 = vmatpush1.msra.mxu0 0.0
    %4356 = vmatprep.subr.mxu0 0.0
    %4357 = vmatpush1.msra.mxu0 0.0
    %4358 = vmatprep.subr.mxu0 0.0
    %4359 = vmatpush1.msra.mxu0 0.0
    %4360 = vmatprep.subr.mxu0 0.0
    %4361 = vmatpush1.msra.mxu0 0.0
    %4362 = vmatprep.subr.mxu0 0.0
    %4363 = vmatpush1.msra.mxu0 0.0
    %4364 = vmatprep.subr.mxu0 0.0
    %4365 = vmatpush1.msra.mxu0 0.0
    %4366 = vmatprep.subr.mxu0 0.0
    %4367 = vmatpush1.msra.mxu0 0.0
    %4368 = vmatprep.subr.mxu0 0.0
    %4369 = vmatpush1.msra.mxu0 0.0
    %4370 = vmatprep.subr.mxu0 0.0
    %4371 = vmatpush1.msra.mxu0 0.0
    %4372 = vmatprep.subr.mxu0 0.0
    %4373 = vmatpush1.msra.mxu0 0.0
    %4374 = vmatprep.subr.mxu0 0.0
    %4375 = vmatpush1.msra.mxu0 0.0
    %4376 = vmatprep.subr.mxu0 0.0
    %4377 = vmatpush1.msra.mxu0 0.0
    %4378 = vmatprep.subr.mxu0 0.0
    %4379 = vmatpush1.msra.mxu0 0.0
    %4380 = vmatprep.subr.mxu0 0.0
    %4381 = vmatpush1.msra.mxu0 0.0
    %4382 = vmatprep.subr.mxu0 0.0
    %4383 = vmatpush1.msra.mxu0 0.0
    %4384 = vmatprep.subr.mxu0 0.0
    %4385 = vmatpush1.msra.mxu0 0.0
    %4386 = vmatprep.subr.mxu0 0.0
    %4387 = vmatpush1.msra.mxu0 0.0
    %4388 = vmatprep.subr.mxu0 0.0
    %4389 = vmatpush1.msra.mxu0 0.0
    %4390 = vmatprep.subr.mxu0 0.0
    %4391 = vmatpush1.msra.mxu0 0.0
    %4392 = vmatprep.subr.mxu0 0.0
    %4393 = vmatpush1.msra.mxu0 0.0
    %4394 = vmatprep.mubr.f32.mxu0 0.0
    %4395 = vmatmul.mubr.f32.gmra.mrb[0].mxu0 %v4328
    %v4396 = vpop.f32.mrb[0].mxu0
    %v4397 = vadd.f32 %v3722, %v4396
    %v4398 = vpop.f32.mrb[0].mxu0
    %4399 = vdwg.mxu0
    %v4400 = vadd.f32 %v3693, %v4397
    %v4401 = vsub.f32 0.0, %v4400
    %v4402 = vmul.f32 %v4401, 1.442695
    %v4403 = vpow.pop %v4402
    %v4404 = vadd.f32 %v4403, 1.0
    %v4405 = vrcp.pop %v4404
    %v4406 = vmul.f32 1.0, %v4405
    %4408 = vrot.lane.b32.xlu0 %v4397, 64
    %v4409 = vpop.permute.xlu0 %4408
    %v4411 = vmul.f32 %v4406, %v4409
    %4413 = vrot.lane.b32.xlu0 %v4411, 64
    %v4414 = vpop.permute.xlu0 %4413
    %v4416 = vadd.f32 %v3693, %v4414
    %v4417 = vtanh.pop %v4416
    %v4418 = vsub.f32 1.0, %v4406
    %4420 = vrot.lane.b32.xlu0 %v4417, 96
    %v4421 = vpop.permute.xlu0 %4420
    %v4423 = vmul.f32 %v4418, %v4421
    %v4424 = vmul.f32 %v4406, %v4324
    %v4425 = vadd.f32 %v4423, %v4424
    %4427 = vrot.lane.b32.xlu0 %v4425, 96
    %v4428 = vpop.permute.xlu0 %4427
    %v4429 = vsel %vm268, %v4428, 0
    %4431 = vmatprep.subr.mxu0 0.0
    %4432 = vmatpush1.msra.mxu0 %v3712
    %4433 = vmatprep.subr.mxu0 0.0
    %4434 = vmatpush1.msra.mxu0 %v3713
    %4435 = vmatprep.subr.mxu0 0.0
    %4436 = vmatpush1.msra.mxu0 %v3714
    %4437 = vmatprep.subr.mxu0 0.0
    %4438 = vmatpush1.msra.mxu0 %v3715
    %4439 = vmatprep.subr.mxu0 0.0
    %4440 = vmatpush1.msra.mxu0 0.0
    %4441 = vmatprep.subr.mxu0 0.0
    %4442 = vmatpush1.msra.mxu0 0.0
    %4443 = vmatprep.subr.mxu0 0.0
    %4444 = vmatpush1.msra.mxu0 0.0
    %4445 = vmatprep.subr.mxu0 0.0
    %4446 = vmatpush1.msra.mxu0 0.0
    %4447 = vmatprep.subr.mxu0 0.0
    %4448 = vmatpush1.msra.mxu0 0.0
    %4449 = vmatprep.subr.mxu0 0.0
    %4450 = vmatpush1.msra.mxu0 0.0
    %4451 = vmatprep.subr.mxu0 0.0
    %4452 = vmatpush1.msra.mxu0 0.0
    %4453 = vmatprep.subr.mxu0 0.0
    %4454 = vmatpush1.msra.mxu0 0.0
    %4455 = vmatprep.subr.mxu0 0.0
    %4456 = vmatpush1.msra.mxu0 0.0
    %4457 = vmatprep.subr.mxu0 0.0
    %4458 = vmatpush1.msra.mxu0 0.0
    %4459 = vmatprep.subr.mxu0 0.0
    %4460 = vmatpush1.msra.mxu0 0.0
    %4461 = vmatprep.subr.mxu0 0.0
    %4462 = vmatpush1.msra.mxu0 0.0
    %4463 = vmatprep.subr.mxu0 0.0
    %4464 = vmatpush1.msra.mxu0 0.0
    %4465 = vmatprep.subr.mxu0 0.0
    %4466 = vmatpush1.msra.mxu0 0.0
    %4467 = vmatprep.subr.mxu0 0.0
    %4468 = vmatpush1.msra.mxu0 0.0
    %4469 = vmatprep.subr.mxu0 0.0
    %4470 = vmatpush1.msra.mxu0 0.0
    %4471 = vmatprep.subr.mxu0 0.0
    %4472 = vmatpush1.msra.mxu0 0.0
    %4473 = vmatprep.subr.mxu0 0.0
    %4474 = vmatpush1.msra.mxu0 0.0
    %4475 = vmatprep.subr.mxu0 0.0
    %4476 = vmatpush1.msra.mxu0 0.0
    %4477 = vmatprep.subr.mxu0 0.0
    %4478 = vmatpush1.msra.mxu0 0.0
    %4479 = vmatprep.subr.mxu0 0.0
    %4480 = vmatpush1.msra.mxu0 0.0
    %4481 = vmatprep.subr.mxu0 0.0
    %4482 = vmatpush1.msra.mxu0 0.0
    %4483 = vmatprep.subr.mxu0 0.0
    %4484 = vmatpush1.msra.mxu0 0.0
    %4485 = vmatprep.subr.mxu0 0.0
    %4486 = vmatpush1.msra.mxu0 0.0
    %4487 = vmatprep.subr.mxu0 0.0
    %4488 = vmatpush1.msra.mxu0 0.0
    %4489 = vmatprep.subr.mxu0 0.0
    %4490 = vmatpush1.msra.mxu0 0.0
    %4491 = vmatprep.subr.mxu0 0.0
    %4492 = vmatpush1.msra.mxu0 0.0
    %4493 = vmatprep.subr.mxu0 0.0
    %4494 = vmatpush1.msra.mxu0 0.0
    %4495 = vmatprep.mubr.f32.mxu0 0.0
    %4496 = vmatmul.mubr.f32.gmra.mrb[0].mxu0 %v4429
    %v4497 = vpop.f32.mrb[0].mxu0
    %v4498 = vadd.f32 %v3722, %v4497
    %v4499 = vpop.f32.mrb[0].mxu0
    %4500 = vdwg.mxu0
    %v4501 = vadd.f32 %v3698, %v4498
    %v4502 = vsub.f32 0.0, %v4501
    %v4503 = vmul.f32 %v4502, 1.442695
    %v4504 = vpow.pop %v4503
    %v4505 = vadd.f32 %v4504, 1.0
    %v4506 = vrcp.pop %v4505
    %v4507 = vmul.f32 1.0, %v4506
    %4509 = vrot.lane.b32.xlu0 %v4498, 64
    %v4510 = vpop.permute.xlu0 %4509
    %v4512 = vmul.f32 %v4507, %v4510
    %4514 = vrot.lane.b32.xlu0 %v4512, 64
    %v4515 = vpop.permute.xlu0 %4514
    %v4517 = vadd.f32 %v3698, %v4515
    %v4518 = vtanh.pop %v4517
    %v4519 = vsub.f32 1.0, %v4507
    %4521 = vrot.lane.b32.xlu0 %v4518, 96
    %v4522 = vpop.permute.xlu0 %4521
    %v4524 = vmul.f32 %v4519, %v4522
    %v4525 = vmul.f32 %v4507, %v4425
    %v4526 = vadd.f32 %v4524, %v4525
    %4528 = vrot.lane.b32.xlu0 %v4526, 96
    %v4529 = vpop.permute.xlu0 %4528
    %v4530 = vsel %vm268, %v4529, 0
    %4532 = vmatprep.subr.mxu0 0.0
    %4533 = vmatpush1.msra.mxu0 %v3712
    %4534 = vmatprep.subr.mxu0 0.0
    %4535 = vmatpush1.msra.mxu0 %v3713
    %4536 = vmatprep.subr.mxu0 0.0
    %4537 = vmatpush1.msra.mxu0 %v3714
    %4538 = vmatprep.subr.mxu0 0.0
    %4539 = vmatpush1.msra.mxu0 %v3715
    %4540 = vmatprep.subr.mxu0 0.0
    %4541 = vmatpush1.msra.mxu0 0.0
    %4542 = vmatprep.subr.mxu0 0.0
    %4543 = vmatpush1.msra.mxu0 0.0
    %4544 = vmatprep.subr.mxu0 0.0
    %4545 = vmatpush1.msra.mxu0 0.0
    %4546 = vmatprep.subr.mxu0 0.0
    %4547 = vmatpush1.msra.mxu0 0.0
    %4548 = vmatprep.subr.mxu0 0.0
    %4549 = vmatpush1.msra.mxu0 0.0
    %4550 = vmatprep.subr.mxu0 0.0
    %4551 = vmatpush1.msra.mxu0 0.0
    %4552 = vmatprep.subr.mxu0 0.0
    %4553 = vmatpush1.msra.mxu0 0.0
    %4554 = vmatprep.subr.mxu0 0.0
    %4555 = vmatpush1.msra.mxu0 0.0
    %4556 = vmatprep.subr.mxu0 0.0
    %4557 = vmatpush1.msra.mxu0 0.0
    %4558 = vmatprep.subr.mxu0 0.0
    %4559 = vmatpush1.msra.mxu0 0.0
    %4560 = vmatprep.subr.mxu0 0.0
    %4561 = vmatpush1.msra.mxu0 0.0
    %4562 = vmatprep.subr.mxu0 0.0
    %4563 = vmatpush1.msra.mxu0 0.0
    %4564 = vmatprep.subr.mxu0 0.0
    %4565 = vmatpush1.msra.mxu0 0.0
    %4566 = vmatprep.subr.mxu0 0.0
    %4567 = vmatpush1.msra.mxu0 0.0
    %4568 = vmatprep.subr.mxu0 0.0
    %4569 = vmatpush1.msra.mxu0 0.0
    %4570 = vmatprep.subr.mxu0 0.0
    %4571 = vmatpush1.msra.mxu0 0.0
    %4572 = vmatprep.subr.mxu0 0.0
    %4573 = vmatpush1.msra.mxu0 0.0
    %4574 = vmatprep.subr.mxu0 0.0
    %4575 = vmatpush1.msra.mxu0 0.0
    %4576 = vmatprep.subr.mxu0 0.0
    %4577 = vmatpush1.msra.mxu0 0.0
    %4578 = vmatprep.subr.mxu0 0.0
    %4579 = vmatpush1.msra.mxu0 0.0
    %4580 = vmatprep.subr.mxu0 0.0
    %4581 = vmatpush1.msra.mxu0 0.0
    %4582 = vmatprep.subr.mxu0 0.0
    %4583 = vmatpush1.msra.mxu0 0.0
    %4584 = vmatprep.subr.mxu0 0.0
    %4585 = vmatpush1.msra.mxu0 0.0
    %4586 = vmatprep.subr.mxu0 0.0
    %4587 = vmatpush1.msra.mxu0 0.0
    %4588 = vmatprep.subr.mxu0 0.0
    %4589 = vmatpush1.msra.mxu0 0.0
    %4590 = vmatprep.subr.mxu0 0.0
    %4591 = vmatpush1.msra.mxu0 0.0
    %4592 = vmatprep.subr.mxu0 0.0
    %4593 = vmatpush1.msra.mxu0 0.0
    %4594 = vmatprep.subr.mxu0 0.0
    %4595 = vmatpush1.msra.mxu0 0.0
    %4596 = vmatprep.mubr.f32.mxu0 0.0
    %4597 = vmatmul.mubr.f32.gmra.mrb[0].mxu0 %v4530
    %v4598 = vpop.f32.mrb[0].mxu0
    %v4599 = vadd.f32 %v3722, %v4598
    %v4600 = vpop.f32.mrb[0].mxu0
    %4601 = vdwg.mxu0
    %v4602 = vadd.f32 %v3703, %v4599
    %v4603 = vsub.f32 0.0, %v4602
    %v4604 = vmul.f32 %v4603, 1.442695
    %v4605 = vpow.pop %v4604
    %v4606 = vadd.f32 %v4605, 1.0
    %v4607 = vrcp.pop %v4606
    %v4608 = vmul.f32 1.0, %v4607
    %4610 = vrot.lane.b32.xlu0 %v4599, 64
    %v4611 = vpop.permute.xlu0 %4610
    %v4613 = vmul.f32 %v4608, %v4611
    %4615 = vrot.lane.b32.xlu0 %v4613, 64
    %v4616 = vpop.permute.xlu0 %4615
    %v4618 = vadd.f32 %v3703, %v4616
    %v4619 = vtanh.pop %v4618
    %v4620 = vsub.f32 1.0, %v4608
    %4622 = vrot.lane.b32.xlu0 %v4619, 96
    %v4623 = vpop.permute.xlu0 %4622
    %v4625 = vmul.f32 %v4620, %v4623
    %v4626 = vmul.f32 %v4608, %v4526
    %v4627 = vadd.f32 %v4625, %v4626
    %4629 = vrot.lane.b32.xlu0 %v4627, 96
    %v4630 = vpop.permute.xlu0 %4629
    %v4631 = vsel %vm268, %v4630, 0
    %4633 = vmatprep.subr.mxu0 0.0
    %4634 = vmatpush1.msra.mxu0 %v3712
    %4635 = vmatprep.subr.mxu0 0.0
    %4636 = vmatpush1.msra.mxu0 %v3713
    %4637 = vmatprep.subr.mxu0 0.0
    %4638 = vmatpush1.msra.mxu0 %v3714
    %4639 = vmatprep.subr.mxu0 0.0
    %4640 = vmatpush1.msra.mxu0 %v3715
    %4641 = vmatprep.subr.mxu0 0.0
    %4642 = vmatpush1.msra.mxu0 0.0
    %4643 = vmatprep.subr.mxu0 0.0
    %4644 = vmatpush1.msra.mxu0 0.0
    %4645 = vmatprep.subr.mxu0 0.0
    %4646 = vmatpush1.msra.mxu0 0.0
    %4647 = vmatprep.subr.mxu0 0.0
    %4648 = vmatpush1.msra.mxu0 0.0
    %4649 = vmatprep.subr.mxu0 0.0
    %4650 = vmatpush1.msra.mxu0 0.0
    %4651 = vmatprep.subr.mxu0 0.0
    %4652 = vmatpush1.msra.mxu0 0.0
    %4653 = vmatprep.subr.mxu0 0.0
    %4654 = vmatpush1.msra.mxu0 0.0
    %4655 = vmatprep.subr.mxu0 0.0
    %4656 = vmatpush1.msra.mxu0 0.0
    %4657 = vmatprep.subr.mxu0 0.0
    %4658 = vmatpush1.msra.mxu0 0.0
    %4659 = vmatprep.subr.mxu0 0.0
    %4660 = vmatpush1.msra.mxu0 0.0
    %4661 = vmatprep.subr.mxu0 0.0
    %4662 = vmatpush1.msra.mxu0 0.0
    %4663 = vmatprep.subr.mxu0 0.0
    %4664 = vmatpush1.msra.mxu0 0.0
    %4665 = vmatprep.subr.mxu0 0.0
    %4666 = vmatpush1.msra.mxu0 0.0
    %4667 = vmatprep.subr.mxu0 0.0
    %4668 = vmatpush1.msra.mxu0 0.0
    %4669 = vmatprep.subr.mxu0 0.0
    %4670 = vmatpush1.msra.mxu0 0.0
    %4671 = vmatprep.subr.mxu0 0.0
    %4672 = vmatpush1.msra.mxu0 0.0
    %4673 = vmatprep.subr.mxu0 0.0
    %4674 = vmatpush1.msra.mxu0 0.0
    %4675 = vmatprep.subr.mxu0 0.0
    %4676 = vmatpush1.msra.mxu0 0.0
    %4677 = vmatprep.subr.mxu0 0.0
    %4678 = vmatpush1.msra.mxu0 0.0
    %4679 = vmatprep.subr.mxu0 0.0
    %4680 = vmatpush1.msra.mxu0 0.0
    %4681 = vmatprep.subr.mxu0 0.0
    %4682 = vmatpush1.msra.mxu0 0.0
    %4683 = vmatprep.subr.mxu0 0.0
    %4684 = vmatpush1.msra.mxu0 0.0
    %4685 = vmatprep.subr.mxu0 0.0
    %4686 = vmatpush1.msra.mxu0 0.0
    %4687 = vmatprep.subr.mxu0 0.0
    %4688 = vmatpush1.msra.mxu0 0.0
    %4689 = vmatprep.subr.mxu0 0.0
    %4690 = vmatpush1.msra.mxu0 0.0
    %4691 = vmatprep.subr.mxu0 0.0
    %4692 = vmatpush1.msra.mxu0 0.0
    %4693 = vmatprep.subr.mxu0 0.0
    %4694 = vmatpush1.msra.mxu0 0.0
    %4695 = vmatprep.subr.mxu0 0.0
    %4696 = vmatpush1.msra.mxu0 0.0
    %4697 = vmatprep.mubr.f32.mxu0 0.0
    %4698 = vmatmul.mubr.f32.gmra.mrb[0].mxu0 %v4631
    %v4699 = vpop.f32.mrb[0].mxu0
    %v4700 = vadd.f32 %v3722, %v4699
    %v4701 = vpop.f32.mrb[0].mxu0
    %4702 = vdwg.mxu0
    %v4703 = vadd.f32 %v3708, %v4700
    %v4704 = vsub.f32 0.0, %v4703
    %v4705 = vmul.f32 %v4704, 1.442695
    %v4706 = vpow.pop %v4705
    %v4707 = vadd.f32 %v4706, 1.0
    %v4708 = vrcp.pop %v4707
    %v4709 = vmul.f32 1.0, %v4708
    %4711 = vrot.lane.b32.xlu0 %v4700, 64
    %v4712 = vpop.permute.xlu0 %4711
    %v4714 = vmul.f32 %v4709, %v4712
    %4716 = vrot.lane.b32.xlu0 %v4714, 64
    %v4717 = vpop.permute.xlu0 %4716
    %v4719 = vadd.f32 %v3708, %v4717
    %v4720 = vtanh.pop %v4719
    %v4721 = vsub.f32 1.0, %v4709
    %4723 = vrot.lane.b32.xlu0 %v4720, 96
    %v4724 = vpop.permute.xlu0 %4723
    %v4726 = vmul.f32 %v4721, %v4724
    %v4727 = vmul.f32 %v4709, %v4627
    %v4728 = vadd.f32 %v4726, %v4727
    %v4729 = vld [vmem:[%s6] sm:$0xff]
    %v4730 = vld [vmem:[%s6 + $0x8] sm:$0xff]
    %v4731 = vld [vmem:[%s6 + $0x10] sm:$0xff]
    %v4732 = vld [vmem:[%s6 + $0x18] sm:$0xff]
    %v4733 = vld [vmem:[#allocation10] sm:$0x1]
    %v4735 = vlaneseq
    %v4736 = vshrl.u32 %v4735, 7
    %v4737 = vsub.s32 0, %v4736
    %v4738 = vrot.slane %v4733, %v4737
    %4741 = vrot.lane.b32.xlu0 %v4728, 96
    %v4742 = vpop.permute.xlu0 %4741
    %v4743 = vsel %vm268, %v4742, 0
    %4745 = vmatprep.subr.mxu0 0.0
    %4746 = vmatpush1.msra.mxu0 %v4729
    %4747 = vmatprep.subr.mxu0 0.0
    %4748 = vmatpush1.msra.mxu0 %v4730
    %4749 = vmatprep.subr.mxu0 0.0
    %4750 = vmatpush1.msra.mxu0 %v4731
    %4751 = vmatprep.subr.mxu0 0.0
    %4752 = vmatpush1.msra.mxu0 %v4732
    %4753 = vmatprep.subr.mxu0 0.0
    %4754 = vmatpush1.msra.mxu0 0.0
    %4755 = vmatprep.subr.mxu0 0.0
    %4756 = vmatpush1.msra.mxu0 0.0
    %4757 = vmatprep.subr.mxu0 0.0
    %4758 = vmatpush1.msra.mxu0 0.0
    %4759 = vmatprep.subr.mxu0 0.0
    %4760 = vmatpush1.msra.mxu0 0.0
    %4761 = vmatprep.subr.mxu0 0.0
    %4762 = vmatpush1.msra.mxu0 0.0
    %4763 = vmatprep.subr.mxu0 0.0
    %4764 = vmatpush1.msra.mxu0 0.0
    %4765 = vmatprep.subr.mxu0 0.0
    %4766 = vmatpush1.msra.mxu0 0.0
    %4767 = vmatprep.subr.mxu0 0.0
    %4768 = vmatpush1.msra.mxu0 0.0
    %4769 = vmatprep.subr.mxu0 0.0
    %4770 = vmatpush1.msra.mxu0 0.0
    %4771 = vmatprep.subr.mxu0 0.0
    %4772 = vmatpush1.msra.mxu0 0.0
    %4773 = vmatprep.subr.mxu0 0.0
    %4774 = vmatpush1.msra.mxu0 0.0
    %4775 = vmatprep.subr.mxu0 0.0
    %4776 = vmatpush1.msra.mxu0 0.0
    %4777 = vmatprep.subr.mxu0 0.0
    %4778 = vmatpush1.msra.mxu0 0.0
    %4779 = vmatprep.subr.mxu0 0.0
    %4780 = vmatpush1.msra.mxu0 0.0
    %4781 = vmatprep.subr.mxu0 0.0
    %4782 = vmatpush1.msra.mxu0 0.0
    %4783 = vmatprep.subr.mxu0 0.0
    %4784 = vmatpush1.msra.mxu0 0.0
    %4785 = vmatprep.subr.mxu0 0.0
    %4786 = vmatpush1.msra.mxu0 0.0
    %4787 = vmatprep.subr.mxu0 0.0
    %4788 = vmatpush1.msra.mxu0 0.0
    %4789 = vmatprep.subr.mxu0 0.0
    %4790 = vmatpush1.msra.mxu0 0.0
    %4791 = vmatprep.subr.mxu0 0.0
    %4792 = vmatpush1.msra.mxu0 0.0
    %4793 = vmatprep.subr.mxu0 0.0
    %4794 = vmatpush1.msra.mxu0 0.0
    %4795 = vmatprep.subr.mxu0 0.0
    %4796 = vmatpush1.msra.mxu0 0.0
    %4797 = vmatprep.subr.mxu0 0.0
    %4798 = vmatpush1.msra.mxu0 0.0
    %4799 = vmatprep.subr.mxu0 0.0
    %4800 = vmatpush1.msra.mxu0 0.0
    %4801 = vmatprep.subr.mxu0 0.0
    %4802 = vmatpush1.msra.mxu0 0.0
    %4803 = vmatprep.subr.mxu0 0.0
    %4804 = vmatpush1.msra.mxu0 0.0
    %4805 = vmatprep.subr.mxu0 0.0
    %4806 = vmatpush1.msra.mxu0 0.0
    %4807 = vmatprep.subr.mxu0 0.0
    %4808 = vmatpush1.msra.mxu0 0.0
    %4809 = vmatprep.mubr.f32.mxu0 0.0
    %4810 = vmatmul.mubr.f32.gmra.mrb[0].mxu0 %v3823
    %v4811 = vpop.f32.mrb[0].mxu0
    %v4812 = vadd.f32 %v4738, %v4811
    %v4813 = vpop.f32.mrb[0].mxu0
    %4814 = vmatprep.mubr.f32.mxu0 0.0
    %4815 = vmatmul.mubr.f32.gmra.mrb[0].mxu0 %v3924
    %v4816 = vpop.f32.mrb[0].mxu0
    %v4817 = vadd.f32 %v4738, %v4816
    %v4818 = vpop.f32.mrb[0].mxu0
    %4819 = vmatprep.mubr.f32.mxu0 0.0
    %4820 = vmatmul.mubr.f32.gmra.mrb[0].mxu0 %v4025
    %v4821 = vpop.f32.mrb[0].mxu0
    %v4822 = vadd.f32 %v4738, %v4821
    %v4823 = vpop.f32.mrb[0].mxu0
    %4824 = vmatprep.mubr.f32.mxu0 0.0
    %4825 = vmatmul.mubr.f32.gmra.mrb[0].mxu0 %v4126
    %v4826 = vpop.f32.mrb[0].mxu0
    %v4827 = vadd.f32 %v4738, %v4826
    %v4828 = vpop.f32.mrb[0].mxu0
    %4829 = vmatprep.mubr.f32.mxu0 0.0
    %4830 = vmatmul.mubr.f32.gmra.mrb[0].mxu0 %v4227
    %v4831 = vpop.f32.mrb[0].mxu0
    %v4832 = vadd.f32 %v4738, %v4831
    %v4833 = vpop.f32.mrb[0].mxu0
    %4834 = vmatprep.mubr.f32.mxu0 0.0
    %4835 = vmatmul.mubr.f32.gmra.mrb[0].mxu0 %v4328
    %v4836 = vpop.f32.mrb[0].mxu0
    %v4837 = vadd.f32 %v4738, %v4836
    %v4838 = vpop.f32.mrb[0].mxu0
    %4839 = vmatprep.mubr.f32.mxu0 0.0
    %4840 = vmatmul.mubr.f32.gmra.mrb[0].mxu0 %v4429
    %v4841 = vpop.f32.mrb[0].mxu0
    %v4842 = vadd.f32 %v4738, %v4841
    %v4843 = vpop.f32.mrb[0].mxu0
    %4844 = vmatprep.mubr.f32.mxu0 0.0
    %4845 = vmatmul.mubr.f32.gmra.mrb[0].mxu0 %v4530
    %v4846 = vpop.f32.mrb[0].mxu0
    %v4847 = vadd.f32 %v4738, %v4846
    %v4848 = vpop.f32.mrb[0].mxu0
    %4849 = vmatprep.mubr.f32.mxu0 0.0
    %4850 = vmatmul.mubr.f32.gmra.mrb[0].mxu0 %v4631
    %v4851 = vpop.f32.mrb[0].mxu0
    %v4852 = vadd.f32 %v4738, %v4851
    %v4853 = vpop.f32.mrb[0].mxu0
    %4854 = vmatprep.mubr.f32.mxu0 0.0
    %4855 = vmatmul.mubr.f32.gmra.mrb[0].mxu0 %v4743
    %v4856 = vpop.f32.mrb[0].mxu0
    %v4857 = vadd.f32 %v4738, %v4856
    %v4858 = vpop.f32.mrb[0].mxu0
    %4859 = vdwg.mxu0
    %v4860 = vmax.f32 %v4812, %v4817
    %v4861 = vmax.f32 %v4860, %v4822
    %v4862 = vmax.f32 %v4861, %v4827
    %v4863 = vmax.f32 %v4862, %v4832
    %v4864 = vmax.f32 %v4863, %v4837
    %v4865 = vmax.f32 %v4864, %v4842
    %v4866 = vmax.f32 %v4865, %v4847
    %v4867 = vmax.f32 %v4866, %v4852
    %v4868 = vmax.f32 %v4867, %v4857
    %v4869 = vsub.f32 %v4812, %v4868
    %v4870 = vmul.f32 %v4869, 1.442695
    %v4871 = vpow.pop %v4870
    %v4872 = vadd.f32 %v4871, 0.0
    %4874 = vset.pattern.permute.xlu0 0
    %4875 = vperm.xlu0 %4874, %v4871
    %v4876 = vpop.permute.xlu0 %4875
    %v4878 = vmul.f32 %v3819, %v4876
    %v4879 = vadd.f32 %v4878, 0.0
    %4880 = vset.pattern.permute.xlu0 1
    %4881 = vperm.xlu0 %4880, %v4871
    %v4882 = vpop.permute.xlu0 %4881
    %v4884 = vmul.f32 %v3819, %v4882
    %v4885 = vadd.f32 %v4884, 0.0
    %v4886 = vsub.f32 %v4817, %v4868
    %v4887 = vmul.f32 %v4886, 1.442695
    %v4888 = vpow.pop %v4887
    %v4889 = vadd.f32 %v4872, %v4888
    %4891 = vset.pattern.permute.xlu0 0
    %4892 = vperm.xlu0 %4891, %v4888
    %v4893 = vpop.permute.xlu0 %4892
    %v4895 = vmul.f32 %v3920, %v4893
    %v4896 = vadd.f32 %v4879, %v4895
    %4897 = vset.pattern.permute.xlu0 1
    %4898 = vperm.xlu0 %4897, %v4888
    %v4899 = vpop.permute.xlu0 %4898
    %v4901 = vmul.f32 %v3920, %v4899
    %v4902 = vadd.f32 %v4885, %v4901
    %v4903 = vsub.f32 %v4822, %v4868
    %v4904 = vmul.f32 %v4903, 1.442695
    %v4905 = vpow.pop %v4904
    %v4906 = vadd.f32 %v4889, %v4905
    %4908 = vset.pattern.permute.xlu0 0
    %4909 = vperm.xlu0 %4908, %v4905
    %v4910 = vpop.permute.xlu0 %4909
    %v4912 = vmul.f32 %v4021, %v4910
    %v4913 = vadd.f32 %v4896, %v4912
    %4914 = vset.pattern.permute.xlu0 1
    %4915 = vperm.xlu0 %4914, %v4905
    %v4916 = vpop.permute.xlu0 %4915
    %v4918 = vmul.f32 %v4021, %v4916
    %v4919 = vadd.f32 %v4902, %v4918
    %v4920 = vsub.f32 %v4827, %v4868
    %v4921 = vmul.f32 %v4920, 1.442695
    %v4922 = vpow.pop %v4921
    %v4923 = vadd.f32 %v4906, %v4922
    %4925 = vset.pattern.permute.xlu0 0
    %4926 = vperm.xlu0 %4925, %v4922
    %v4927 = vpop.permute.xlu0 %4926
    %v4929 = vmul.f32 %v4122, %v4927
    %v4930 = vadd.f32 %v4913, %v4929
    %4931 = vset.pattern.permute.xlu0 1
    %4932 = vperm.xlu0 %4931, %v4922
    %v4933 = vpop.permute.xlu0 %4932
    %v4935 = vmul.f32 %v4122, %v4933
    %v4936 = vadd.f32 %v4919, %v4935
    %v4937 = vsub.f32 %v4832, %v4868
    %v4938 = vmul.f32 %v4937, 1.442695
    %v4939 = vpow.pop %v4938
    %v4940 = vadd.f32 %v4923, %v4939
    %4942 = vset.pattern.permute.xlu0 0
    %4943 = vperm.xlu0 %4942, %v4939
    %v4944 = vpop.permute.xlu0 %4943
    %v4946 = vmul.f32 %v4223, %v4944
    %v4947 = vadd.f32 %v4930, %v4946
    %4948 = vset.pattern.permute.xlu0 1
    %4949 = vperm.xlu0 %4948, %v4939
    %v4950 = vpop.permute.xlu0 %4949
    %v4952 = vmul.f32 %v4223, %v4950
    %v4953 = vadd.f32 %v4936, %v4952
    %v4954 = vsub.f32 %v4837, %v4868
    %v4955 = vmul.f32 %v4954, 1.442695
    %v4956 = vpow.pop %v4955
    %v4957 = vadd.f32 %v4940, %v4956
    %4959 = vset.pattern.permute.xlu0 0
    %4960 = vperm.xlu0 %4959, %v4956
    %v4961 = vpop.permute.xlu0 %4960
    %v4963 = vmul.f32 %v4324, %v4961
    %v4964 = vadd.f32 %v4947, %v4963
    %4965 = vset.pattern.permute.xlu0 1
    %4966 = vperm.xlu0 %4965, %v4956
    %v4967 = vpop.permute.xlu0 %4966
    %v4969 = vmul.f32 %v4324, %v4967
    %v4970 = vadd.f32 %v4953, %v4969
    %v4971 = vsub.f32 %v4842, %v4868
    %v4972 = vmul.f32 %v4971, 1.442695
    %v4973 = vpow.pop %v4972
    %v4974 = vadd.f32 %v4957, %v4973
    %4976 = vset.pattern.permute.xlu0 0
    %4977 = vperm.xlu0 %4976, %v4973
    %v4978 = vpop.permute.xlu0 %4977
    %v4980 = vmul.f32 %v4425, %v4978
    %v4981 = vadd.f32 %v4964, %v4980
    %4982 = vset.pattern.permute.xlu0 1
    %4983 = vperm.xlu0 %4982, %v4973
    %v4984 = vpop.permute.xlu0 %4983
    %v4986 = vmul.f32 %v4425, %v4984
    %v4987 = vadd.f32 %v4970, %v4986
    %v4988 = vsub.f32 %v4847, %v4868
    %v4989 = vmul.f32 %v4988, 1.442695
    %v4990 = vpow.pop %v4989
    %v4991 = vadd.f32 %v4974, %v4990
    %4993 = vset.pattern.permute.xlu0 0
    %4994 = vperm.xlu0 %4993, %v4990
    %v4995 = vpop.permute.xlu0 %4994
    %v4997 = vmul.f32 %v4526, %v4995
    %v4998 = vadd.f32 %v4981, %v4997
    %4999 = vset.pattern.permute.xlu0 1
    %5000 = vperm.xlu0 %4999, %v4990
    %v5001 = vpop.permute.xlu0 %5000
    %v5003 = vmul.f32 %v4526, %v5001
    %v5004 = vadd.f32 %v4987, %v5003
    %v5005 = vsub.f32 %v4852, %v4868
    %v5006 = vmul.f32 %v5005, 1.442695
    %v5007 = vpow.pop %v5006
    %v5008 = vadd.f32 %v4991, %v5007
    %5010 = vset.pattern.permute.xlu0 0
    %5011 = vperm.xlu0 %5010, %v5007
    %v5012 = vpop.permute.xlu0 %5011
    %v5014 = vmul.f32 %v4627, %v5012
    %v5015 = vadd.f32 %v4998, %v5014
    %5016 = vset.pattern.permute.xlu0 1
    %5017 = vperm.xlu0 %5016, %v5007
    %v5018 = vpop.permute.xlu0 %5017
    %v5020 = vmul.f32 %v4627, %v5018
    %v5021 = vadd.f32 %v5004, %v5020
    %v5022 = vsub.f32 %v4857, %v4868
    %v5023 = vmul.f32 %v5022, 1.442695
    %v5024 = vpow.pop %v5023
    %v5025 = vadd.f32 %v5008, %v5024
    %5027 = vset.pattern.permute.xlu0 0
    %5028 = vperm.xlu0 %5027, %v5024
    %v5029 = vpop.permute.xlu0 %5028
    %v5031 = vmul.f32 %v4728, %v5029
    %v5032 = vadd.f32 %v5015, %v5031
    %5033 = vset.pattern.permute.xlu0 1
    %5034 = vperm.xlu0 %5033, %v5024
    %v5035 = vpop.permute.xlu0 %5034
    %v5037 = vmul.f32 %v4728, %v5035
    %v5038 = vadd.f32 %v5021, %v5037
    %v5039 = vrcp.pop %v5025
    %5041 = vset.pattern.permute.xlu0 0
    %5042 = vperm.xlu0 %5041, %v5039
    %v5043 = vpop.permute.xlu0 %5042
    %v5045 = vmul.f32 %v5032, %v5043
    %5046 = vset.pattern.permute.xlu0 1
    %5047 = vperm.xlu0 %5046, %v5039
    %v5048 = vpop.permute.xlu0 %5047
    %v5050 = vmul.f32 %v5038, %v5048
    %v5051 = vld [vmem:[%s16] sm:$0xff]
    %v5052 = vld [vmem:[%s8] sm:$0xff]
    %v5053 = vld [vmem:[%s8 + $0x8] sm:$0xff]
    %v5054 = vld [vmem:[%s8 + $0x10] sm:$0xff]
    %v5055 = vld [vmem:[%s8 + $0x18] sm:$0xff]
    %v5056 = vld [vmem:[%s9] sm:$0xff]
    %v5057 = vld [vmem:[%s9 + $0x8] sm:$0xff]
    %v5058 = vld [vmem:[%s9 + $0x10] sm:$0xff]
    %v5059 = vld [vmem:[%s9 + $0x18] sm:$0xff]
    %5061 = vrot.lane.b32.xlu0 %v5050, 96
    %v5062 = vpop.permute.xlu0 %5061
    %v5063 = vsel %vm268, %v5062, 0
    %5065 = vmatprep.subr.mxu0 0.0
    %5066 = vmatpush1.msra.mxu0 %v5056
    %5067 = vmatprep.subr.mxu0 0.0
    %5068 = vmatpush1.msra.mxu0 %v5057
    %5069 = vmatprep.subr.mxu0 0.0
    %5070 = vmatpush1.msra.mxu0 %v5058
    %5071 = vmatprep.subr.mxu0 0.0
    %5072 = vmatpush1.msra.mxu0 %v5059
    %5073 = vmatprep.subr.mxu0 0.0
    %5074 = vmatpush1.msra.mxu0 0.0
    %5075 = vmatprep.subr.mxu0 0.0
    %5076 = vmatpush1.msra.mxu0 0.0
    %5077 = vmatprep.subr.mxu0 0.0
    %5078 = vmatpush1.msra.mxu0 0.0
    %5079 = vmatprep.subr.mxu0 0.0
    %5080 = vmatpush1.msra.mxu0 0.0
    %5081 = vmatprep.subr.mxu0 0.0
    %5082 = vmatpush1.msra.mxu0 0.0
    %5083 = vmatprep.subr.mxu0 0.0
    %5084 = vmatpush1.msra.mxu0 0.0
    %5085 = vmatprep.subr.mxu0 0.0
    %5086 = vmatpush1.msra.mxu0 0.0
    %5087 = vmatprep.subr.mxu0 0.0
    %5088 = vmatpush1.msra.mxu0 0.0
    %5089 = vmatprep.subr.mxu0 0.0
    %5090 = vmatpush1.msra.mxu0 0.0
    %5091 = vmatprep.subr.mxu0 0.0
    %5092 = vmatpush1.msra.mxu0 0.0
    %5093 = vmatprep.subr.mxu0 0.0
    %5094 = vmatpush1.msra.mxu0 0.0
    %5095 = vmatprep.subr.mxu0 0.0
    %5096 = vmatpush1.msra.mxu0 0.0
    %5097 = vmatprep.subr.mxu0 0.0
    %5098 = vmatpush1.msra.mxu0 0.0
    %5099 = vmatprep.subr.mxu0 0.0
    %5100 = vmatpush1.msra.mxu0 0.0
    %5101 = vmatprep.subr.mxu0 0.0
    %5102 = vmatpush1.msra.mxu0 0.0
    %5103 = vmatprep.subr.mxu0 0.0
    %5104 = vmatpush1.msra.mxu0 0.0
    %5105 = vmatprep.subr.mxu0 0.0
    %5106 = vmatpush1.msra.mxu0 0.0
    %5107 = vmatprep.subr.mxu0 0.0
    %5108 = vmatpush1.msra.mxu0 0.0
    %5109 = vmatprep.subr.mxu0 0.0
    %5110 = vmatpush1.msra.mxu0 0.0
    %5111 = vmatprep.subr.mxu0 0.0
    %5112 = vmatpush1.msra.mxu0 0.0
    %5113 = vmatprep.subr.mxu0 0.0
    %5114 = vmatpush1.msra.mxu0 0.0
    %5115 = vmatprep.subr.mxu0 0.0
    %5116 = vmatpush1.msra.mxu0 0.0
    %5117 = vmatprep.subr.mxu0 0.0
    %5118 = vmatpush1.msra.mxu0 0.0
    %5119 = vmatprep.subr.mxu0 0.0
    %5120 = vmatpush1.msra.mxu0 0.0
    %5121 = vmatprep.subr.mxu0 0.0
    %5122 = vmatpush1.msra.mxu0 0.0
    %5123 = vmatprep.subr.mxu0 0.0
    %5124 = vmatpush1.msra.mxu0 0.0
    %5125 = vmatprep.subr.mxu0 0.0
    %5126 = vmatpush1.msra.mxu0 0.0
    %5127 = vmatprep.subr.mxu0 0.0
    %5128 = vmatpush1.msra.mxu0 0.0
    %5129 = vmatprep.mubr.f32.mxu0 0.0
    %5130 = vmatmul.mubr.f32.gmra.mrb[0].mxu0 %v5063
    %v5131 = vpop.f32.mrb[0].mxu0
    %v5132 = vadd.f32 0.0, %v5131
    %v5133 = vpop.f32.mrb[0].mxu0
    %5134 = vdwg.mxu0
    %5136 = vrot.lane.b32.xlu0 %v5045, 96
    %v5137 = vpop.permute.xlu0 %5136
    %v5138 = vsel %vm268, %v5137, 0
    %5140 = vmatprep.subr.mxu0 0.0
    %5141 = vmatpush1.msra.mxu0 %v5052
    %5142 = vmatprep.subr.mxu0 0.0
    %5143 = vmatpush1.msra.mxu0 %v5053
    %5144 = vmatprep.subr.mxu0 0.0
    %5145 = vmatpush1.msra.mxu0 %v5054
    %5146 = vmatprep.subr.mxu0 0.0
    %5147 = vmatpush1.msra.mxu0 %v5055
    %5148 = vmatprep.subr.mxu0 0.0
    %5149 = vmatpush1.msra.mxu0 0.0
    %5150 = vmatprep.subr.mxu0 0.0
    %5151 = vmatpush1.msra.mxu0 0.0
    %5152 = vmatprep.subr.mxu0 0.0
    %5153 = vmatpush1.msra.mxu0 0.0
    %5154 = vmatprep.subr.mxu0 0.0
    %5155 = vmatpush1.msra.mxu0 0.0
    %5156 = vmatprep.subr.mxu0 0.0
    %5157 = vmatpush1.msra.mxu0 0.0
    %5158 = vmatprep.subr.mxu0 0.0
    %5159 = vmatpush1.msra.mxu0 0.0
    %5160 = vmatprep.subr.mxu0 0.0
    %5161 = vmatpush1.msra.mxu0 0.0
    %5162 = vmatprep.subr.mxu0 0.0
    %5163 = vmatpush1.msra.mxu0 0.0
    %5164 = vmatprep.subr.mxu0 0.0
    %5165 = vmatpush1.msra.mxu0 0.0
    %5166 = vmatprep.subr.mxu0 0.0
    %5167 = vmatpush1.msra.mxu0 0.0
    %5168 = vmatprep.subr.mxu0 0.0
    %5169 = vmatpush1.msra.mxu0 0.0
    %5170 = vmatprep.subr.mxu0 0.0
    %5171 = vmatpush1.msra.mxu0 0.0
    %5172 = vmatprep.subr.mxu0 0.0
    %5173 = vmatpush1.msra.mxu0 0.0
    %5174 = vmatprep.subr.mxu0 0.0
    %5175 = vmatpush1.msra.mxu0 0.0
    %5176 = vmatprep.subr.mxu0 0.0
    %5177 = vmatpush1.msra.mxu0 0.0
    %5178 = vmatprep.subr.mxu0 0.0
    %5179 = vmatpush1.msra.mxu0 0.0
    %5180 = vmatprep.subr.mxu0 0.0
    %5181 = vmatpush1.msra.mxu0 0.0
    %5182 = vmatprep.subr.mxu0 0.0
    %5183 = vmatpush1.msra.mxu0 0.0
    %5184 = vmatprep.subr.mxu0 0.0
    %5185 = vmatpush1.msra.mxu0 0.0
    %5186 = vmatprep.subr.mxu0 0.0
    %5187 = vmatpush1.msra.mxu0 0.0
    %5188 = vmatprep.subr.mxu0 0.0
    %5189 = vmatpush1.msra.mxu0 0.0
    %5190 = vmatprep.subr.mxu0 0.0
    %5191 = vmatpush1.msra.mxu0 0.0
    %5192 = vmatprep.subr.mxu0 0.0
    %5193 = vmatpush1.msra.mxu0 0.0
    %5194 = vmatprep.subr.mxu0 0.0
    %5195 = vmatpush1.msra.mxu0 0.0
    %5196 = vmatprep.subr.mxu0 0.0
    %5197 = vmatpush1.msra.mxu0 0.0
    %5198 = vmatprep.subr.mxu0 0.0
    %5199 = vmatpush1.msra.mxu0 0.0
    %5200 = vmatprep.subr.mxu0 0.0
    %5201 = vmatpush1.msra.mxu0 0.0
    %5202 = vmatprep.subr.mxu0 0.0
    %5203 = vmatpush1.msra.mxu0 0.0
    %5204 = vmatprep.mubr.f32.mxu0 0.0
    %5205 = vmatmul.mubr.f32.gmra.mrb[0].mxu0 %v5138
    %v5206 = vpop.f32.mrb[0].mxu0
    %v5207 = vadd.f32 %v5132, %v5206
    %v5208 = vpop.f32.mrb[0].mxu0
    %5209 = vdwg.mxu0
    %v5210 = vld [vmem:[%s10] sm:$0xff]
    %v5211 = vld [vmem:[%s10 + $0x8] sm:$0x3]
    %vm5212 = vcmask 80896
    %v5214 = vsel %vm5212, %v5051, 0
    %vm5216 = vcmask 1041408
    %v5218 = vsel %vm5216, %v5211, 0
    %5220 = vmatprep.subr.mxu0 0.0
    %5221 = vmatpush1.msra.mxu0 %v5210
    %5222 = vmatprep.subr.mxu0 0.0
    %5223 = vmatpush1.msra.mxu0 %v5218
    %5224 = vmatprep.subr.mxu0 0.0
    %5225 = vmatpush1.msra.mxu0 0.0
    %5226 = vmatprep.subr.mxu0 0.0
    %5227 = vmatpush1.msra.mxu0 0.0
    %5228 = vmatprep.subr.mxu0 0.0
    %5229 = vmatpush1.msra.mxu0 0.0
    %5230 = vmatprep.subr.mxu0 0.0
    %5231 = vmatpush1.msra.mxu0 0.0
    %5232 = vmatprep.subr.mxu0 0.0
    %5233 = vmatpush1.msra.mxu0 0.0
    %5234 = vmatprep.subr.mxu0 0.0
    %5235 = vmatpush1.msra.mxu0 0.0
    %5236 = vmatprep.subr.mxu0 0.0
    %5237 = vmatpush1.msra.mxu0 0.0
    %5238 = vmatprep.subr.mxu0 0.0
    %5239 = vmatpush1.msra.mxu0 0.0
    %5240 = vmatprep.subr.mxu0 0.0
    %5241 = vmatpush1.msra.mxu0 0.0
    %5242 = vmatprep.subr.mxu0 0.0
    %5243 = vmatpush1.msra.mxu0 0.0
    %5244 = vmatprep.subr.mxu0 0.0
    %5245 = vmatpush1.msra.mxu0 0.0
    %5246 = vmatprep.subr.mxu0 0.0
    %5247 = vmatpush1.msra.mxu0 0.0
    %5248 = vmatprep.subr.mxu0 0.0
    %5249 = vmatpush1.msra.mxu0 0.0
    %5250 = vmatprep.subr.mxu0 0.0
    %5251 = vmatpush1.msra.mxu0 0.0
    %5252 = vmatprep.subr.mxu0 0.0
    %5253 = vmatpush1.msra.mxu0 0.0
    %5254 = vmatprep.subr.mxu0 0.0
    %5255 = vmatpush1.msra.mxu0 0.0
    %5256 = vmatprep.subr.mxu0 0.0
    %5257 = vmatpush1.msra.mxu0 0.0
    %5258 = vmatprep.subr.mxu0 0.0
    %5259 = vmatpush1.msra.mxu0 0.0
    %5260 = vmatprep.subr.mxu0 0.0
    %5261 = vmatpush1.msra.mxu0 0.0
    %5262 = vmatprep.subr.mxu0 0.0
    %5263 = vmatpush1.msra.mxu0 0.0
    %5264 = vmatprep.subr.mxu0 0.0
    %5265 = vmatpush1.msra.mxu0 0.0
    %5266 = vmatprep.subr.mxu0 0.0
    %5267 = vmatpush1.msra.mxu0 0.0
    %5268 = vmatprep.subr.mxu0 0.0
    %5269 = vmatpush1.msra.mxu0 0.0
    %5270 = vmatprep.subr.mxu0 0.0
    %5271 = vmatpush1.msra.mxu0 0.0
    %5272 = vmatprep.subr.mxu0 0.0
    %5273 = vmatpush1.msra.mxu0 0.0
    %5274 = vmatprep.subr.mxu0 0.0
    %5275 = vmatpush1.msra.mxu0 0.0
    %5276 = vmatprep.subr.mxu0 0.0
    %5277 = vmatpush1.msra.mxu0 0.0
    %5278 = vmatprep.subr.mxu0 0.0
    %5279 = vmatpush1.msra.mxu0 0.0
    %5280 = vmatprep.subr.mxu0 0.0
    %5281 = vmatpush1.msra.mxu0 0.0
    %5282 = vmatprep.subr.mxu0 0.0
    %5283 = vmatpush1.msra.mxu0 0.0
    %5284 = vmatprep.mubr.f32.mxu0 0.0
    %5285 = vmatmul.mubr.f32.gmra.mrb[0].mxu0 %v5214
    %v5286 = vpop.f32.mrb[0].mxu0
    %v5287 = vadd.f32 0.0, %v5286
    %v5288 = vpop.f32.mrb[0].mxu0
    %5289 = vdwg.mxu0
    %v5290 = vadd.f32 %v5207, %v5287
    %v5291 = vld [vmem:[#allocation11] sm:$0x1]
    %v5293 = vlaneseq
    %v5294 = vshrl.u32 %v5293, 7
    %v5295 = vsub.s32 0, %v5294
    %v5296 = vrot.slane %v5291, %v5295
    %v5298 = vadd.f32 %v5290, %v5296
    %vm5299 = vcmp.gt.f32.partialorder %v5298, 0.0
    %v5300 = vmin.f32 %v5298, 0.0
    %v5301 = vmul.f32 %v5300, 1.442695
    %v5302 = vpow.pop %v5301
    %v5303 = vsub.f32 %v5302, 1.0
    %v5304 = vsel %vm5299, %v5298, %v5303
    %v5305 = vld [vmem:[%s12] sm:$0xff]
    %v5306 = vld [vmem:[%s12 + $0x8] sm:$0xff]
    %v5307 = vld [vmem:[%s12 + $0x10] sm:$0xff]
    %v5308 = vld [vmem:[%s12 + $0x18] sm:$0xff]
    %v5309 = vld [vmem:[%s12 + $0x20] sm:$0xff]
    %v5310 = vld [vmem:[%s12 + $0x28] sm:$0x3]
    %v5311 = vld [vmem:[#allocation13] sm:$0x1]
    %v5313 = vlaneseq
    %v5314 = vshrl.u32 %v5313, 7
    %v5315 = vsub.s32 0, %v5314
    %v5316 = vrot.slane %v5311, %v5315
    %vm5318 = vcmask 343040
    %v5320 = vsel %vm5318, %v5304, 0
    %v5323 = vsel %vm5216, %v5310, 0
    %5325 = vmatprep.subr.mxu0 0.0
    %5326 = vmatpush1.msra.mxu0 %v5305
    %5327 = vmatprep.subr.mxu0 0.0
    %5328 = vmatpush1.msra.mxu0 %v5306
    %5329 = vmatprep.subr.mxu0 0.0
    %5330 = vmatpush1.msra.mxu0 %v5307
    %5331 = vmatprep.subr.mxu0 0.0
    %5332 = vmatpush1.msra.mxu0 %v5308
    %5333 = vmatprep.subr.mxu0 0.0
    %5334 = vmatpush1.msra.mxu0 %v5309
    %5335 = vmatprep.subr.mxu0 0.0
    %5336 = vmatpush1.msra.mxu0 %v5323
    %5337 = vmatprep.subr.mxu0 0.0
    %5338 = vmatpush1.msra.mxu0 0.0
    %5339 = vmatprep.subr.mxu0 0.0
    %5340 = vmatpush1.msra.mxu0 0.0
    %5341 = vmatprep.subr.mxu0 0.0
    %5342 = vmatpush1.msra.mxu0 0.0
    %5343 = vmatprep.subr.mxu0 0.0
    %5344 = vmatpush1.msra.mxu0 0.0
    %5345 = vmatprep.subr.mxu0 0.0
    %5346 = vmatpush1.msra.mxu0 0.0
    %5347 = vmatprep.subr.mxu0 0.0
    %5348 = vmatpush1.msra.mxu0 0.0
    %5349 = vmatprep.subr.mxu0 0.0
    %5350 = vmatpush1.msra.mxu0 0.0
    %5351 = vmatprep.subr.mxu0 0.0
    %5352 = vmatpush1.msra.mxu0 0.0
    %5353 = vmatprep.subr.mxu0 0.0
    %5354 = vmatpush1.msra.mxu0 0.0
    %5355 = vmatprep.subr.mxu0 0.0
    %5356 = vmatpush1.msra.mxu0 0.0
    %5357 = vmatprep.subr.mxu0 0.0
    %5358 = vmatpush1.msra.mxu0 0.0
    %5359 = vmatprep.subr.mxu0 0.0
    %5360 = vmatpush1.msra.mxu0 0.0
    %5361 = vmatprep.subr.mxu0 0.0
    %5362 = vmatpush1.msra.mxu0 0.0
    %5363 = vmatprep.subr.mxu0 0.0
    %5364 = vmatpush1.msra.mxu0 0.0
    %5365 = vmatprep.subr.mxu0 0.0
    %5366 = vmatpush1.msra.mxu0 0.0
    %5367 = vmatprep.subr.mxu0 0.0
    %5368 = vmatpush1.msra.mxu0 0.0
    %5369 = vmatprep.subr.mxu0 0.0
    %5370 = vmatpush1.msra.mxu0 0.0
    %5371 = vmatprep.subr.mxu0 0.0
    %5372 = vmatpush1.msra.mxu0 0.0
    %5373 = vmatprep.subr.mxu0 0.0
    %5374 = vmatpush1.msra.mxu0 0.0
    %5375 = vmatprep.subr.mxu0 0.0
    %5376 = vmatpush1.msra.mxu0 0.0
    %5377 = vmatprep.subr.mxu0 0.0
    %5378 = vmatpush1.msra.mxu0 0.0
    %5379 = vmatprep.subr.mxu0 0.0
    %5380 = vmatpush1.msra.mxu0 0.0
    %5381 = vmatprep.subr.mxu0 0.0
    %5382 = vmatpush1.msra.mxu0 0.0
    %5383 = vmatprep.subr.mxu0 0.0
    %5384 = vmatpush1.msra.mxu0 0.0
    %5385 = vmatprep.subr.mxu0 0.0
    %5386 = vmatpush1.msra.mxu0 0.0
    %5387 = vmatprep.subr.mxu0 0.0
    %5388 = vmatpush1.msra.mxu0 0.0
    %5389 = vmatprep.mubr.f32.mxu0 0.0
    %5390 = vmatmul.mubr.f32.gmra.mrb[0].mxu0 %v5320
    %v5391 = vpop.f32.mrb[0].mxu0
    %v5392 = vadd.f32 %v5316, %v5391
    %v5393 = vpop.f32.mrb[0].mxu0
    %5394 = vdwg.mxu0
    %v5395 = vld [vmem:[%s14] sm:$0x1]
    %v5396 = vsub.f32 0.0, %v5392
    %v5397 = vmul.f32 %v5396, 1.442695
    %v5398 = vpow.pop %v5397
    %v5399 = vadd.f32 %v5398, 1.0
    %v5400 = vrcp.pop %v5399
    %v5401 = vmul.f32 1.0, %v5400
    %v5402 = vld [vmem:[%s15] sm:$0x1]
    %v5404 = vlaneseq
    %v5405 = vshrl.u32 %v5404, 7
    %v5406 = vsub.s32 0, %v5405
    %v5407 = vrot.slane %v5402, %v5406
    %v5409 = vmul.f32 %v5401, %v5407
    %v5411 = vlaneseq
    %v5412 = vshrl.u32 %v5411, 7
    %v5413 = vsub.s32 0, %v5412
    %v5414 = vrot.slane %v5395, %v5413
    %v5416 = vadd.f32 %v5414, %v5409
    %vm5417 = vcmask 15360
    %5418 = vst.msk [vmem:[%s24] sm:$0xff] %vm5417, %v5416
    %v5419 = vrcp.pop %v5416
    %v5420 = vmul.f32 1.0, %v5419
    %v5421 = vld [vmem:[%s19] sm:$0xff]
    %v5422 = vsub.f32 0.0, %v5421
    %v5423 = vmul.f32 %v5422, %v5420
    %v5424 = vmul.f32 %v5423, 1.442695
    %v5425 = vpow.pop %v5424
    %v5426 = vsub.f32 1.0, %v5425
    %v5427 = vld [vmem:[%s17] sm:$0xff]
    %5429 = vset.pattern.permute.xlu0 0
    %5430 = vperm.xlu0 %5429, %v5426
    %v5431 = vpop.permute.xlu0 %5430
    %v5433 = vmul.f32 %v5431, %v5427
    %v5434 = vld [vmem:[%s18] sm:$0xff]
    %5436 = vset.pattern.permute.xlu0 0
    %5437 = vperm.xlu0 %5436, %v5425
    %v5438 = vpop.permute.xlu0 %5437
    %v5440 = vmul.f32 %v5434, %v5438
    %v5441 = vsub.f32 1.0, %v5440
    %v5442 = vrcp.pop %v5441
    %v5443 = vmul.f32 %v5433, %v5442
    %5445 = vset.pattern.permute.xlu0 1
    %5446 = vperm.xlu0 %5445, %v5416
    %v5447 = vpop.permute.xlu0 %5446
    %v5449 = vmul.f32 %v5443, %v5447
    %5450 = vst.msk [vmem:[#allocation14] sm:$0xff] %vm5212, %v5449
    %v5451 = vld [vmem:[%s20] sm:$0xff]
    %v5452 = vld [vmem:[%s21] sm:$0xff]
    %5454 = vset.pattern.permute.xlu0 0
    %5455 = vperm.xlu0 %5454, %v5452
    %v5456 = vpop.permute.xlu0 %5455
    %v5458 = vrcp.pop %v5456
    %v5459 = vmul.f32 %v5451, %v5458
    %v5460 = vsub.f32 0.0, %v5420
    %v5461 = vmul.f32 %v5460, 0.005
    %v5462 = vmul.f32 %v5461, 1.442695
    %v5463 = vpow.pop %v5462
    %v5464 = vsub.f32 1.0, %v5459
    %5466 = vset.pattern.permute.xlu0 0
    %5467 = vperm.xlu0 %5466, %v5463
    %v5468 = vpop.permute.xlu0 %5467
    %v5470 = vmul.f32 %v5459, %v5468
    %v5471 = vadd.f32 %v5464, %v5470
    %v5472 = vmul.f32 %v5463, 0.9396926
    %5474 = vset.pattern.permute.xlu0 0
    %5475 = vperm.xlu0 %5474, %v5472
    %v5476 = vpop.permute.xlu0 %5475
    %v5478 = vsub.f32 %v5471, %v5476
    %v5479 = vmul.f32 %v5459, 0.9396926
    %v5480 = vsub.f32 1.0, %v5479
    %v5481 = vmul.f32 %v5470, 0.9396926
    %v5482 = vadd.f32 %v5480, %v5481
    %v5483 = vsub.f32 %v5482, %v5476
    %v5484 = vrcp.pop %v5483
    %v5485 = vmul.f32 %v5478, %v5484
    %v5486 = vlog2.pop %v5485
    %v5487 = vmul.f32 %v5486, 0.6931472
    %v5488 = vmul.f32 %v5487, -200.0
    %5490 = vset.pattern.permute.xlu0 0
    %5491 = vperm.xlu0 %5490, %v5420
    %v5492 = vpop.permute.xlu0 %5491
    %v5494 = vsub.f32 %v5488, %v5492
    %v5495 = vrcp.pop 4.5
    %v5496 = vmul.f32 %v5494, %v5495
    %vm5497 = vcmp.ne.f32.partialorder %v5496, %v5496
    %v5498 = vsel %vm5497, 0.0, %v5496
    %vm5499 = vcmask 130048
    %5500 = vst.msk [vmem:[#allocation15] sm:$0xff] %vm5499, %v5498
    // Predicated region
    $region118: #{tpu_custom_call.1} parent=1 // pred_check
      _
    $region119: #{tpu_custom_call.1} parent=1 // pred_check_branch
      %5502 = sbr.rel (0) target = $region121
    $region120: #{tpu_custom_call.1} parent=1 // pred_region
      %s5504 = ssub.s32 128, 128
      %5505 = vsyncadd [#allocation4], %s5504
      %s5507 = sshll.u32 [#allocation14], 4
      %s5508 = int_to_ptr.vmem [resolvable:$true] %s5507
      %5510 = dma.vmem_to_hbm [thread:$0]  %s5508, 128, %s22, [#allocation4]
    $region121: #{tpu_custom_call.1} parent=1 // pred_fallthru
      _
    // Predicated region
    $region122: #{tpu_custom_call.1} parent=1 // pred_check
      _
    $region123: #{tpu_custom_call.1} parent=1 // pred_check_branch
      %5512 = sbr.rel (0) target = $region125
    $region124: #{tpu_custom_call.1} parent=1 // pred_region
      %s5514 = ssub.s32 128, 128
      %5515 = vsyncadd [#allocation16], %s5514
      %s5517 = sshll.u32 [#allocation15], 4
      %s5518 = int_to_ptr.vmem [resolvable:$true] %s5517
      %5520 = dma.vmem_to_hbm [thread:$0]  %s5518, 128, %s23, [#allocation16]
    $region125: #{tpu_custom_call.1} parent=1 // pred_fallthru
      _
    // Predicated region
    $region126: #{tpu_custom_call.1} parent=1 // pred_check
      _
    $region127: #{tpu_custom_call.1} parent=1 // pred_check_branch
      %5522 = sbr.rel (0) target = $region129
    $region128: #{tpu_custom_call.1} parent=1 // pred_region
      _
    $region129: #{tpu_custom_call.1} parent=1 // pred_fallthru
      _
    // Predicated region
    $region130: #{tpu_custom_call.1} parent=1 // pred_check
      _
    $region131: #{tpu_custom_call.1} parent=1 // pred_check_branch
      %5524 = sbr.rel (0) target = $region133
    $region132: #{tpu_custom_call.1} parent=1 // pred_region
      %5525 = dma.done [#allocation4], 128
    $region133: #{tpu_custom_call.1} parent=1 // pred_fallthru
      _
    // Predicated region
    $region134: #{tpu_custom_call.1} parent=1 // pred_check
      _
    $region135: #{tpu_custom_call.1} parent=1 // pred_check_branch
      %5527 = sbr.rel (0) target = $region137
    $region136: #{tpu_custom_call.1} parent=1 // pred_region
      %5528 = dma.done [#allocation16], 128
    $region137: #{tpu_custom_call.1} parent=1 // pred_fallthru
      _
    // Predicated region
    $region138: #{tpu_custom_call.1} parent=1 // pred_check
      _
    $region139: #{tpu_custom_call.1} parent=1 // pred_check_branch
      %5530 = sbr.rel (0) target = $region141
    $region140: #{tpu_custom_call.1} parent=1 // pred_region
      _
    $region141: #{tpu_custom_call.1} parent=1 // pred_fallthru
      _
    %5531 = vsyncpa [#allocation3], 1
    %5532 = vsyncpa [#allocation6], 1
    %5533 = vsyncpa [#allocation9], 1
    %5534 = vsyncpa [#allocation12], 1
    %5535 = vsyncpa [#allocation4], 1
    %5536 = vsyncpa [#allocation16], 1

</llo_original>
